<compile_context>
chip_gen: v7x
topology: tpu7x:2x2x1
jax: 0.10.0
libtpu: 0.0.40
codegen_flags: <defaults>
</compile_context>

<pallas_src>
import math

import jax
import jax.numpy as jnp
import numpy as np
from jax import lax
from jax.experimental import pallas as pl
from jax.experimental.pallas import tpu as pltpu


# ---------------- host-side helpers ----------------

def _interp_matrix_1d(out_size: int, in_size: int) -> np.ndarray:
    """(out_size, in_size) matrix for 1-D linear resize, PyTorch align_corners=True."""
    A = np.zeros((out_size, in_size), np.float32)
    if out_size == 1:
        coords = np.zeros((1,), np.float64)
    else:
        coords = np.arange(out_size, dtype=np.float64) * (in_size - 1) / (out_size - 1)
    lo = np.clip(np.floor(coords).astype(np.int64), 0, in_size - 1)
    hi = np.minimum(lo + 1, in_size - 1)
    w_hi = (coords - lo).astype(np.float32)
    w_lo = (1.0 - w_hi).astype(np.float32)
    rows = np.arange(out_size)
    np.add.at(A, (rows, lo), w_lo)
    np.add.at(A, (rows, hi), w_hi)
    return A


def _const_spec(shape):
    """BlockSpec for an operand whose block never changes across the grid (single buffer)."""
    zeros = (0,) * len(shape)
    index_map = lambda n, _z=zeros: _z
    try:
        return pl.BlockSpec(shape, index_map, pipeline_mode=pl.Buffered(1))
    except TypeError:  # older BlockSpec signature without pipeline_mode
        return pl.BlockSpec(shape, index_map)


# ---------------- fused Pallas kernel ----------------

def _make_cond_msf_kernel(branch_meta, Ho, Wo, F, cdtype):
    """branch_meta: tuple of dicts {'H','W','C','need_w','need_h'} (static trace-time info)."""

    taps = [(ky, kx) for ky in range(3) for kx in range(3)]

    def kernel(*refs):
        bsum_ref = refs[0]
        out_ref = refs[-1]
        # Accumulate straight into the VMEM-resident output block (feedback item); the hoisted
        # bias sum initializes it once per grid step.
        out_ref[0] = jnp.broadcast_to(bsum_ref[...].astype(jnp.float32), (Wo, Ho, F))

        idx = 1
        for bm in branch_meta:
            H, W, C = bm["H"], bm["W"], bm["C"]
            x_ref, emb_ref, w_ref = refs[idx], refs[idx + 1], refs[idx + 2]
            idx += 3
            mw_ref = mh_ref = None
            if bm["need_w"]:
                mw_ref = refs[idx]
                idx += 1
            if bm["need_h"]:
                mh_ref = refs[idx]
                idx += 1

            # ---- ConditionalInstanceNorm2dPlus (one batch element, NHWC, f32) ----
            x = x_ref[0].astype(jnp.float32)                        # (H, W, C)
            mean_c = jnp.mean(x, axis=(0, 1), keepdims=True)        # (1, 1, C)
            xc = x - mean_c
            var_c = jnp.mean(xc * xc, axis=(0, 1), keepdims=True)   # biased, like InstanceNorm2d
            h = xc * lax.rsqrt(var_c + 1e-5)

            m = jnp.mean(mean_c, axis=-1, keepdims=True)            # (1, 1, 1)
            d = mean_c - m
            v = jnp.sum(d * d, axis=-1, keepdims=True) / max(C - 1, 1)   # unbiased channel var
            mean_n = d * lax.rsqrt(v + 1e-5)                        # (1, 1, C)

            e = emb_ref[...].astype(jnp.float32)                    # (1, 1, 3C)
            gamma = e[:, :, 0:C]
            alpha = e[:, :, C:2 * C]
            beta = e[:, :, 2 * C:3 * C]
            h = gamma * (h + mean_n * alpha) + beta                 # (H, W, C)

            # ---- conv3x3 (stride 1, pad 1; bias hoisted): 9 accumulated MXU dots ----
            hp = jnp.pad(h, ((1, 1), (1, 1), (0, 0)))               # zero pad, f32
            conv = None
            for t, (ky, kx) in enumerate(taps):
                col = hp[ky:ky + H, kx:kx + W, :].reshape(H * W, C).astype(cdtype)
                part = jnp.dot(col, w_ref[t], preferred_element_type=jnp.float32)
                conv = part if conv is None else conv + part        # (H*W, F) f32

            # ---- separable bilinear align_corners=True resize (feedback item) ----
            x3 = conv.reshape(H, W, F)                              # (H, W, F) f32
            if mw_ref is not None:
                # W-pass: batch over H, contract W : (H,Wo,W) @ (H,W,F) -> (H, Wo, F)
                mwb = jnp.broadcast_to(mw_ref[...], (H, Wo, W))
                r1 = lax.dot_general(mwb, x3.astype(cdtype),
                                     (((2,), (1,)), ((0,), (0,))),
                                     preferred_element_type=jnp.float32)
            else:
                r1 = x3                                             # W already == Wo
            r1t = pltpu.einshape("hwf->whf", r1)                    # (Wo, H, F)
            if mh_ref is not None:
                # H-pass: batch over Wo, contract H : (Wo,Ho,H) @ (Wo,H,F) -> (Wo, Ho, F)
                mhb = jnp.broadcast_to(mh_ref[...], (Wo, Ho, H))
                r2 = lax.dot_general(mhb, r1t.astype(cdtype),
                                     (((2,), (1,)), ((0,), (0,))),
                                     preferred_element_type=jnp.float32)
            else:
                r2 = r1t                                            # H already == Ho

            out_ref[0] += r2.astype(jnp.float32)

    return kernel


# ---------------- wrapper ----------------

def cond_msf_block(xs_nchw, y, shape, conv_weights, conv_biases, embed_weights, features,
                   mxu_dtype=jnp.bfloat16):
    """Fused CondMSFBlock forward.

    xs_nchw       : list of (N, C_i, H_i, W_i) float32 arrays (PyTorch NCHW)
    y             : (N,) int32 class labels
    shape         : (Ho, Wo) target spatial shape
    conv_weights  : list of (features, C_i, 3, 3) OIHW conv kernels
    conv_biases   : list of (features,)
    embed_weights : list of (num_classes, 3*C_i) conditional-norm embeddings (gamma|alpha|beta)
    mxu_dtype     : dtype for MXU operands (bf16 by default; accumulation is always f32)
    returns       : (N, features, Ho, Wo) float32
    """
    Ho, Wo = int(shape[0]), int(shape[1])
    N = int(xs_nchw[0].shape[0])
    F = int(features)
    isz = jnp.dtype(mxu_dtype).itemsize

    # Hoisted bias: align_corners interp rows sum to 1, so biases commute through the resize.
    bias_sum = jnp.zeros((F,), jnp.float32)
    for b in conv_biases:
        bias_sum = bias_sum + b.astype(jnp.float32)
    bias_sum = bias_sum.reshape(1, 1, F)

    inputs = [bias_sum]
    in_specs = [_const_spec((1, 1, F))]
    branch_meta = []

    flops = 0
    trans = 0
    per_n_bytes = 4 * Wo * Ho * F        # output block per batch element
    const_bytes = 4 * F
    tmp_max = 0

    for i, x in enumerate(xs_nchw):
        _, C, Hi, Wi = (int(s) for s in x.shape)
        x_nhwc = jnp.transpose(x, (0, 2, 3, 1)).astype(jnp.float32)         # (N, Hi, Wi, C)
        emb = embed_weights[i][y].reshape(N, 1, 3 * C).astype(jnp.float32)  # gather done in XLA
        # HWIO (ky, kx, c, f) flattened per-tap -> (9, C, F), MXU dtype
        w = jnp.transpose(conv_weights[i], (2, 3, 1, 0)).reshape(9, C, F).astype(mxu_dtype)

        inputs += [x_nhwc, emb, w]
        in_specs += [
            pl.BlockSpec((1, Hi, Wi, C), lambda n: (n, 0, 0, 0)),
            pl.BlockSpec((1, 1, 3 * C), lambda n: (n, 0, 0)),
            _const_spec((9, C, F)),
        ]

        need_w = Wi != Wo
        need_h = Hi != Ho
        if need_w:
            inputs.append(jnp.asarray(_interp_matrix_1d(Wo, Wi)).astype(mxu_dtype))
            in_specs.append(_const_spec((Wo, Wi)))
        if need_h:
            inputs.append(jnp.asarray(_interp_matrix_1d(Ho, Hi)).astype(mxu_dtype))
            in_specs.append(_const_spec((Ho, Hi)))
        branch_meta.append(dict(H=Hi, W=Wi, C=C, need_w=need_w, need_h=need_h))

        flops += N * 2 * Hi * Wi * 9 * C * F
        if need_w:
            flops += N * 2 * Hi * Wo * Wi * F
        if need_h:
            flops += N * 2 * Wo * Ho * Hi * F
        trans += N * (C + 1)
        per_n_bytes += 4 * Hi * Wi * C + 4 * 3 * C
        const_bytes += isz * (9 * C * F
                              + (Wo * Wi if need_w else 0)
                              + (Ho * Hi if need_h else 0))
        tmp = (4 * ((Hi + 2) * (Wi + 2) * C + 3 * Hi * Wi * C
                    + 2 * Hi * max(Wi, Wo) * F + 2 * Wo * Ho * F)
               + isz * (Hi * Wo * Wi + Wo * Ho * Hi))
        tmp_max = max(tmp_max, tmp)

    # VMEM budget: double-buffered per-n blocks + output, constants counted 2x as a safety
    # margin (they are requested single-buffered), plus in-kernel temporaries.  Clamp to the
    # chip's capacity minus headroom so v6e/v5e can use >64 MiB while v7x never over-asks.
    vmem_needed = 2 * per_n_bytes + 2 * const_bytes + tmp_max
    try:
        vmem_cap = int(pltpu.get_tpu_info().vmem_capacity_bytes)
    except Exception:
        vmem_cap = 64 * 2 ** 20
    vmem_limit = int(max(32 * 2 ** 20, min(vmem_cap - 8 * 2 ** 20, 2 * vmem_needed)))

    cost = pl.CostEstimate(
        flops=int(flops),
        transcendentals=int(trans),
        bytes_accessed=int(N * per_n_bytes + const_bytes))   # constants counted once

    kernel = _make_cond_msf_kernel(tuple(branch_meta), Ho, Wo, F, mxu_dtype)
    out = pl.pallas_call(
        kernel,
        out_shape=jax.ShapeDtypeStruct((N, Wo, Ho, F), jnp.float32),
        grid=(N,),
        in_specs=in_specs,
        out_specs=pl.BlockSpec((1, Wo, Ho, F), lambda n: (n, 0, 0, 0)),
        compiler_params=pltpu.CompilerParams(
            dimension_semantics=("parallel",),
            vmem_limit_bytes=vmem_limit),
        cost_estimate=cost,
    )(*inputs)

    # (N, Wo, Ho, F) -> NCHW (N, F, Ho, Wo); pure layout plumbing done by XLA.
    return jnp.transpose(out, (0, 3, 2, 1))


# ---------------- pure-JAX reference (verification only) ----------------

def _bilinear_align_corners_nchw(x, out_hw):
    N, C, H, W = x.shape
    Ho, Wo = out_hw

    def _coords(o, i):
        if o == 1:
            return np.zeros((1,), np.float64)
        return np.arange(o, dtype=np.float64) * (i - 1) / (o - 1)

    ys, xs_ = _coords(Ho, H), _coords(Wo, W)
    y0 = np.clip(np.floor(ys).astype(np.int32), 0, H - 1)
    x0 = np.clip(np.floor(xs_).astype(np.int32), 0, W - 1)
    y1 = np.minimum(y0 + 1, H - 1)
    x1 = np.minimum(x0 + 1, W - 1)
    wy = jnp.asarray((ys - y0).astype(np.float32))[None, None, :, None]
    wx = jnp.asarray((xs_ - x0).astype(np.float32))[None, None, None, :]

    def g(yi, xi):
        return x[:, :, yi, :][:, :, :, xi]

    top = g(y0, x0) * (1 - wx) + g(y0, x1) * wx
    bot = g(y1, x0) * (1 - wx) + g(y1, x1) * wx
    return top * (1 - wy) + bot * wy


def ref_cond_msf(xs_nchw, y, shape, conv_weights, conv_biases, embed_weights, features):
    N = xs_nchw[0].shape[0]
    Ho, Wo = shape
    sums = jnp.zeros((N, features, Ho, Wo), jnp.float32)
    for i, x in enumerate(xs_nchw):
        means = jnp.mean(x, axis=(2, 3), keepdims=True)                 # (N,C,1,1)
        m = jnp.mean(means, axis=1, keepdims=True)
        v = jnp.var(means, axis=1, keepdims=True, ddof=1)
        means_n = (means - m) / jnp.sqrt(v + 1e-5)
        inst = (x - means) / jnp.sqrt(jnp.var(x, axis=(2, 3), keepdims=True) + 1e-5)
        emb = embed_weights[i][y]                                       # (N, 3C)
        gamma, alpha, beta = jnp.split(emb, 3, axis=-1)
        h = gamma[:, :, None, None] * (inst + means_n * alpha[:, :, None, None]) \
            + beta[:, :, None, None]
        h = lax.conv_general_dilated(h, conv_weights[i], (1, 1), ((1, 1), (1, 1)),
                                     dimension_numbers=("NCHW", "OIHW", "NCHW"))
        h = h + conv_biases[i][None, :, None, None]
        h = _bilinear_align_corners_nchw(h, (Ho, Wo))
        sums = sums + h
    return sums


if __name__ == "__main__":
    key = jax.random.PRNGKey(0)
    N = 2
    num_classes = 10
    features = 8
    in_planes = (4, 8)
    spatials = ((16, 16), (8, 8))
    shape = (16, 16)

    ks = jax.random.split(key, 12)
    xs = [jax.random.normal(ks[i], (N, in_planes[i], *spatials[i]), jnp.float32)
          for i in range(len(in_planes))]
    y = jax.random.randint(ks[2], (N,), 0, num_classes)

    conv_w, conv_b, embed_w = [], [], []
    for i, C in enumerate(in_planes):
        kw, kb, ke = ks[4 + 3 * i], ks[5 + 3 * i], ks[6 + 3 * i]
        bound = 1.0 / math.sqrt(C * 9)        # PyTorch Conv2d default init bound
        conv_w.append(jax.random.uniform(kw, (features, C, 3, 3), jnp.float32,
                                         minval=-bound, maxval=bound))
        conv_b.append(jax.random.uniform(kb, (features,), jnp.float32,
                                         minval=-bound, maxval=bound))
        # ConditionalInstanceNorm2dPlus init: embed[:, :2C] ~ N(1, 0.02), embed[:, 2C:] = 0
        ew = jnp.concatenate(
            [1.0 + 0.02 * jax.random.normal(ke, (num_classes, 2 * C), jnp.float32),
             jnp.zeros((num_classes, C), jnp.float32)], axis=-1)
        embed_w.append(ew)

    ref = ref_cond_msf(xs, y, shape, conv_w, conv_b, embed_w, features)

    # Primary (bf16 MXU operands, f32 accumulation) run.
    out = cond_msf_block(xs, y, shape, conv_w, conv_b, embed_w, features)
    out = jax.block_until_ready(out)
    assert out.shape == (N, features, *shape)
    np.testing.assert_allclose(np.asarray(out), np.asarray(ref), rtol=8e-2, atol=8e-2)

    # f32 MXU run for a tight numerical check of the fused math.
    out32 = cond_msf_block(xs, y, shape, conv_w, conv_b, embed_w, features,
                           mxu_dtype=jnp.float32)
    out32 = jax.block_until_ready(out32)
    np.testing.assert_allclose(np.asarray(out32), np.asarray(ref), rtol=5e-3, atol=5e-3)

    print("KERNEL_OK")
</pallas_src>

<mosaic_0001>
module attributes {stable_mosaic.version = 11 : i64} {
  func.func @kernel(%arg0: i32, %arg1: memref<1x1x8xf32, #tpu.memory_space<vmem>>, %arg2: memref<1x16x16x4xf32, #tpu.memory_space<vmem>>, %arg3: memref<1x1x12xf32, #tpu.memory_space<vmem>>, %arg4: memref<9x4x8xbf16, #tpu.memory_space<vmem>>, %arg5: memref<1x8x8x8xf32, #tpu.memory_space<vmem>>, %arg6: memref<1x1x24xf32, #tpu.memory_space<vmem>>, %arg7: memref<9x8x8xbf16, #tpu.memory_space<vmem>>, %arg8: memref<16x8xbf16, #tpu.memory_space<vmem>>, %arg9: memref<16x8xbf16, #tpu.memory_space<vmem>>, %arg10: memref<1x16x16x8xf32, #tpu.memory_space<vmem>>) attributes {dimension_semantics = [#tpu.dimension_semantics<parallel>], iteration_bounds = array<i64: 2>, scalar_prefetch = 0 : i64, scratch_operands = 0 : i64, tpu.core_type = #tpu.core_type<tc>, window_params = [{pipeline_mode = #tpu.pipeline_mode<synchronous>, transform_indices = @transform_0, window_bounds = array<i64: 1, 1, 8>}, {transform_indices = @transform_1, window_bounds = array<i64: 1, 16, 16, 4>}, {transform_indices = @transform_2, window_bounds = array<i64: 1, 1, 12>}, {pipeline_mode = #tpu.pipeline_mode<synchronous>, transform_indices = @transform_3, window_bounds = array<i64: 9, 4, 8>}, {transform_indices = @transform_4, window_bounds = array<i64: 1, 8, 8, 8>}, {transform_indices = @transform_5, window_bounds = array<i64: 1, 1, 24>}, {pipeline_mode = #tpu.pipeline_mode<synchronous>, transform_indices = @transform_6, window_bounds = array<i64: 9, 8, 8>}, {pipeline_mode = #tpu.pipeline_mode<synchronous>, transform_indices = @transform_7, window_bounds = array<i64: 16, 8>}, {pipeline_mode = #tpu.pipeline_mode<synchronous>, transform_indices = @transform_8, window_bounds = array<i64: 16, 8>}, {transform_indices = @transform_9, window_bounds = array<i64: 1, 16, 16, 8>}]} {
    %c0 = arith.constant 0 : index
    %c0_0 = arith.constant 0 : index
    %c0_1 = arith.constant 0 : index
    %0 = vector.load %arg1[%c0, %c0_0, %c0_1] : memref<1x1x8xf32, #tpu.memory_space<vmem>>, vector<1x1x8xf32>
    %1 = vector.shape_cast %0 : vector<1x1x8xf32> to vector<1x1x8xf32>
    %2 = vector.broadcast %1 : vector<1x1x8xf32> to vector<16x16x8xf32>
    %c0_2 = arith.constant 0 : index
    %c0_3 = arith.constant 0 : index
    %c0_4 = arith.constant 0 : index
    %c0_5 = arith.constant 0 : index
    %3 = vector.load %arg10[%c0_2, %c0_3, %c0_4, %c0_5] : memref<1x16x16x8xf32, #tpu.memory_space<vmem>>, vector<1x16x16x8xf32>
    %4 = vector.shape_cast %3 : vector<1x16x16x8xf32> to vector<16x16x8xf32>
    %5 = vector.shape_cast %2 : vector<16x16x8xf32> to vector<1x16x16x8xf32>
    tpu.vector_store %arg10[%c0_2, %c0_3, %c0_4, %c0_5], %5 {strides = array<i32>} : memref<1x16x16x8xf32, #tpu.memory_space<vmem>>, vector<1x16x16x8xf32>,
    %c0_6 = arith.constant 0 : index
    %c0_7 = arith.constant 0 : index
    %c0_8 = arith.constant 0 : index
    %c0_9 = arith.constant 0 : index
    %6 = vector.load %arg2[%c0_6, %c0_7, %c0_8, %c0_9] : memref<1x16x16x4xf32, #tpu.memory_space<vmem>>, vector<1x16x16x4xf32>
    %7 = vector.shape_cast %6 : vector<1x16x16x4xf32> to vector<16x16x4xf32>
    %cst = arith.constant dense<0.000000e+00> : vector<4xf32>
    %8 = vector.multi_reduction <add>, %7, %cst [0, 1] : vector<16x16x4xf32> to vector<4xf32>
    %9 = vector.shape_cast %8 : vector<4xf32> to vector<1x1x4xf32>
    %cst_10 = arith.constant 2.560000e+02 : f32
    %10 = vector.broadcast %cst_10 : f32 to vector<1x1x4xf32>
    %11 = arith.divf %9, %10 : vector<1x1x4xf32>
    %12 = vector.broadcast %11 : vector<1x1x4xf32> to vector<16x16x4xf32>
    %13 = arith.subf %7, %12 : vector<16x16x4xf32>
    %14 = arith.mulf %13, %13 : vector<16x16x4xf32>
    %cst_11 = arith.constant dense<0.000000e+00> : vector<4xf32>
    %15 = vector.multi_reduction <add>, %14, %cst_11 [0, 1] : vector<16x16x4xf32> to vector<4xf32>
    %16 = vector.shape_cast %15 : vector<4xf32> to vector<1x1x4xf32>
    %cst_12 = arith.constant 2.560000e+02 : f32
    %17 = vector.broadcast %cst_12 : f32 to vector<1x1x4xf32>
    %18 = arith.divf %16, %17 : vector<1x1x4xf32>
    %cst_13 = arith.constant 9.99999974E-6 : f32
    %19 = vector.broadcast %cst_13 : f32 to vector<1x1x4xf32>
    %20 = arith.addf %18, %19 : vector<1x1x4xf32>
    %21 = math.rsqrt %20 : vector<1x1x4xf32>
    %22 = vector.broadcast %21 : vector<1x1x4xf32> to vector<16x16x4xf32>
    %23 = arith.mulf %13, %22 : vector<16x16x4xf32>
    %cst_14 = arith.constant dense<0.000000e+00> : vector<1x1xf32>
    %24 = vector.multi_reduction <add>, %11, %cst_14 [2] : vector<1x1x4xf32> to vector<1x1xf32>
    %25 = vector.shape_cast %24 : vector<1x1xf32> to vector<1x1x1xf32>
    %cst_15 = arith.constant 4.000000e+00 : f32
    %26 = vector.broadcast %cst_15 : f32 to vector<1x1x1xf32>
    %27 = arith.divf %25, %26 : vector<1x1x1xf32>
    %28 = vector.broadcast %27 : vector<1x1x1xf32> to vector<1x1x4xf32>
    %29 = arith.subf %11, %28 : vector<1x1x4xf32>
    %30 = arith.mulf %29, %29 : vector<1x1x4xf32>
    %cst_16 = arith.constant dense<0.000000e+00> : vector<1x1xf32>
    %31 = vector.multi_reduction <add>, %30, %cst_16 [2] : vector<1x1x4xf32> to vector<1x1xf32>
    %32 = vector.shape_cast %31 : vector<1x1xf32> to vector<1x1x1xf32>
    %cst_17 = arith.constant 3.000000e+00 : f32
    %33 = vector.broadcast %cst_17 : f32 to vector<1x1x1xf32>
    %34 = arith.divf %32, %33 : vector<1x1x1xf32>
    %cst_18 = arith.constant 9.99999974E-6 : f32
    %35 = vector.broadcast %cst_18 : f32 to vector<1x1x1xf32>
    %36 = arith.addf %34, %35 : vector<1x1x1xf32>
    %37 = math.rsqrt %36 : vector<1x1x1xf32>
    %38 = vector.broadcast %37 : vector<1x1x1xf32> to vector<1x1x4xf32>
    %39 = arith.mulf %29, %38 : vector<1x1x4xf32>
    %c0_19 = arith.constant 0 : index
    %c0_20 = arith.constant 0 : index
    %c0_21 = arith.constant 0 : index
    %40 = vector.load %arg3[%c0_19, %c0_20, %c0_21] : memref<1x1x12xf32, #tpu.memory_space<vmem>>, vector<1x1x12xf32>
    %41 = vector.extract_strided_slice %40 {offsets = [0, 0, 0], sizes = [1, 1, 4], strides = [1, 1, 1]} : vector<1x1x12xf32> to vector<1x1x4xf32>
    %42 = vector.extract_strided_slice %40 {offsets = [0, 0, 4], sizes = [1, 1, 4], strides = [1, 1, 1]} : vector<1x1x12xf32> to vector<1x1x4xf32>
    %43 = vector.extract_strided_slice %40 {offsets = [0, 0, 8], sizes = [1, 1, 4], strides = [1, 1, 1]} : vector<1x1x12xf32> to vector<1x1x4xf32>
    %44 = arith.mulf %39, %42 : vector<1x1x4xf32>
    %45 = vector.broadcast %44 : vector<1x1x4xf32> to vector<16x16x4xf32>
    %46 = arith.addf %23, %45 : vector<16x16x4xf32>
    %47 = vector.broadcast %41 : vector<1x1x4xf32> to vector<16x16x4xf32>
    %48 = arith.mulf %47, %46 : vector<16x16x4xf32>
    %49 = vector.broadcast %43 : vector<1x1x4xf32> to vector<16x16x4xf32>
    %50 = arith.addf %48, %49 : vector<16x16x4xf32>
    %c0_i32 = arith.constant 0 : i32
    %51 = arith.sitofp %c0_i32 : i32 to f32
    %52 = vector.broadcast %51 : f32 to vector<1x16x4xf32>
    %53 = tpu.concatenate %52, %50 in 0 : vector<1x16x4xf32>, vector<16x16x4xf32> -> vector<17x16x4xf32>
    %54 = vector.broadcast %51 : f32 to vector<1x16x4xf32>
    %55 = tpu.concatenate %53, %54 in 0 : vector<17x16x4xf32>, vector<1x16x4xf32> -> vector<18x16x4xf32>
    %56 = vector.broadcast %51 : f32 to vector<18x1x4xf32>
    %57 = tpu.concatenate %56, %55 in 1 : vector<18x1x4xf32>, vector<18x16x4xf32> -> vector<18x17x4xf32>
    %58 = vector.broadcast %51 : f32 to vector<18x1x4xf32>
    %59 = tpu.concatenate %57, %58 in 1 : vector<18x17x4xf32>, vector<18x1x4xf32> -> vector<18x18x4xf32>
    %60 = vector.extract_strided_slice %59 {offsets = [0, 0, 0], sizes = [16, 16, 4], strides = [1, 1, 1]} : vector<18x18x4xf32> to vector<16x16x4xf32>
    %61 = vector.shape_cast %60 : vector<16x16x4xf32> to vector<256x4xf32>
    %62 = arith.truncf %61 : vector<256x4xf32> to vector<256x4xbf16>
    %c0_22 = arith.constant 0 : index
    %c0_23 = arith.constant 0 : index
    %c0_24 = arith.constant 0 : index
    %63 = vector.load %arg4[%c0_22, %c0_23, %c0_24] : memref<9x4x8xbf16, #tpu.memory_space<vmem>>, vector<1x4x8xbf16>
    %64 = vector.shape_cast %63 : vector<1x4x8xbf16> to vector<4x8xbf16>
    %cst_25 = arith.constant dense<0.000000e+00> : vector<256x8xf32>
    %65 = tpu.matmul %62, %64, %cst_25 {dimension_numbers = #tpu.dot_dimension_numbers<[1], [0], [0], [1], [0, 0, 1, 1], [], []>} : vector<256x4xbf16>, vector<4x8xbf16>, vector<256x8xf32> -> vector<256x8xf32>
    %66 = vector.extract_strided_slice %59 {offsets = [0, 1, 0], sizes = [16, 16, 4], strides = [1, 1, 1]} : vector<18x18x4xf32> to vector<16x16x4xf32>
    %67 = vector.shape_cast %66 : vector<16x16x4xf32> to vector<256x4xf32>
    %68 = arith.truncf %67 : vector<256x4xf32> to vector<256x4xbf16>
    %c1 = arith.constant 1 : index
    %c0_26 = arith.constant 0 : index
    %c0_27 = arith.constant 0 : index
    %69 = vector.load %arg4[%c1, %c0_26, %c0_27] : memref<9x4x8xbf16, #tpu.memory_space<vmem>>, vector<1x4x8xbf16>
    %70 = vector.shape_cast %69 : vector<1x4x8xbf16> to vector<4x8xbf16>
    %cst_28 = arith.constant dense<0.000000e+00> : vector<256x8xf32>
    %71 = tpu.matmul %68, %70, %cst_28 {dimension_numbers = #tpu.dot_dimension_numbers<[1], [0], [0], [1], [0, 0, 1, 1], [], []>} : vector<256x4xbf16>, vector<4x8xbf16>, vector<256x8xf32> -> vector<256x8xf32>
    %72 = arith.addf %65, %71 : vector<256x8xf32>
    %73 = vector.extract_strided_slice %59 {offsets = [0, 2, 0], sizes = [16, 16, 4], strides = [1, 1, 1]} : vector<18x18x4xf32> to vector<16x16x4xf32>
    %74 = vector.shape_cast %73 : vector<16x16x4xf32> to vector<256x4xf32>
    %75 = arith.truncf %74 : vector<256x4xf32> to vector<256x4xbf16>
    %c2 = arith.constant 2 : index
    %c0_29 = arith.constant 0 : index
    %c0_30 = arith.constant 0 : index
    %76 = vector.load %arg4[%c2, %c0_29, %c0_30] : memref<9x4x8xbf16, #tpu.memory_space<vmem>>, vector<1x4x8xbf16>
    %77 = vector.shape_cast %76 : vector<1x4x8xbf16> to vector<4x8xbf16>
    %cst_31 = arith.constant dense<0.000000e+00> : vector<256x8xf32>
    %78 = tpu.matmul %75, %77, %cst_31 {dimension_numbers = #tpu.dot_dimension_numbers<[1], [0], [0], [1], [0, 0, 1, 1], [], []>} : vector<256x4xbf16>, vector<4x8xbf16>, vector<256x8xf32> -> vector<256x8xf32>
    %79 = arith.addf %72, %78 : vector<256x8xf32>
    %80 = vector.extract_strided_slice %59 {offsets = [1, 0, 0], sizes = [16, 16, 4], strides = [1, 1, 1]} : vector<18x18x4xf32> to vector<16x16x4xf32>
    %81 = vector.shape_cast %80 : vector<16x16x4xf32> to vector<256x4xf32>
    %82 = arith.truncf %81 : vector<256x4xf32> to vector<256x4xbf16>
    %c3 = arith.constant 3 : index
    %c0_32 = arith.constant 0 : index
    %c0_33 = arith.constant 0 : index
    %83 = vector.load %arg4[%c3, %c0_32, %c0_33] : memref<9x4x8xbf16, #tpu.memory_space<vmem>>, vector<1x4x8xbf16>
    %84 = vector.shape_cast %83 : vector<1x4x8xbf16> to vector<4x8xbf16>
    %cst_34 = arith.constant dense<0.000000e+00> : vector<256x8xf32>
    %85 = tpu.matmul %82, %84, %cst_34 {dimension_numbers = #tpu.dot_dimension_numbers<[1], [0], [0], [1], [0, 0, 1, 1], [], []>} : vector<256x4xbf16>, vector<4x8xbf16>, vector<256x8xf32> -> vector<256x8xf32>
    %86 = arith.addf %79, %85 : vector<256x8xf32>
    %87 = vector.extract_strided_slice %59 {offsets = [1, 1, 0], sizes = [16, 16, 4], strides = [1, 1, 1]} : vector<18x18x4xf32> to vector<16x16x4xf32>
    %88 = vector.shape_cast %87 : vector<16x16x4xf32> to vector<256x4xf32>
    %89 = arith.truncf %88 : vector<256x4xf32> to vector<256x4xbf16>
    %c4 = arith.constant 4 : index
    %c0_35 = arith.constant 0 : index
    %c0_36 = arith.constant 0 : index
    %90 = vector.load %arg4[%c4, %c0_35, %c0_36] : memref<9x4x8xbf16, #tpu.memory_space<vmem>>, vector<1x4x8xbf16>
    %91 = vector.shape_cast %90 : vector<1x4x8xbf16> to vector<4x8xbf16>
    %cst_37 = arith.constant dense<0.000000e+00> : vector<256x8xf32>
    %92 = tpu.matmul %89, %91, %cst_37 {dimension_numbers = #tpu.dot_dimension_numbers<[1], [0], [0], [1], [0, 0, 1, 1], [], []>} : vector<256x4xbf16>, vector<4x8xbf16>, vector<256x8xf32> -> vector<256x8xf32>
    %93 = arith.addf %86, %92 : vector<256x8xf32>
    %94 = vector.extract_strided_slice %59 {offsets = [1, 2, 0], sizes = [16, 16, 4], strides = [1, 1, 1]} : vector<18x18x4xf32> to vector<16x16x4xf32>
    %95 = vector.shape_cast %94 : vector<16x16x4xf32> to vector<256x4xf32>
    %96 = arith.truncf %95 : vector<256x4xf32> to vector<256x4xbf16>
    %c5 = arith.constant 5 : index
    %c0_38 = arith.constant 0 : index
    %c0_39 = arith.constant 0 : index
    %97 = vector.load %arg4[%c5, %c0_38, %c0_39] : memref<9x4x8xbf16, #tpu.memory_space<vmem>>, vector<1x4x8xbf16>
    %98 = vector.shape_cast %97 : vector<1x4x8xbf16> to vector<4x8xbf16>
    %cst_40 = arith.constant dense<0.000000e+00> : vector<256x8xf32>
    %99 = tpu.matmul %96, %98, %cst_40 {dimension_numbers = #tpu.dot_dimension_numbers<[1], [0], [0], [1], [0, 0, 1, 1], [], []>} : vector<256x4xbf16>, vector<4x8xbf16>, vector<256x8xf32> -> vector<256x8xf32>
    %100 = arith.addf %93, %99 : vector<256x8xf32>
    %101 = vector.extract_strided_slice %59 {offsets = [2, 0, 0], sizes = [16, 16, 4], strides = [1, 1, 1]} : vector<18x18x4xf32> to vector<16x16x4xf32>
    %102 = vector.shape_cast %101 : vector<16x16x4xf32> to vector<256x4xf32>
    %103 = arith.truncf %102 : vector<256x4xf32> to vector<256x4xbf16>
    %c6 = arith.constant 6 : index
    %c0_41 = arith.constant 0 : index
    %c0_42 = arith.constant 0 : index
    %104 = vector.load %arg4[%c6, %c0_41, %c0_42] : memref<9x4x8xbf16, #tpu.memory_space<vmem>>, vector<1x4x8xbf16>
    %105 = vector.shape_cast %104 : vector<1x4x8xbf16> to vector<4x8xbf16>
    %cst_43 = arith.constant dense<0.000000e+00> : vector<256x8xf32>
    %106 = tpu.matmul %103, %105, %cst_43 {dimension_numbers = #tpu.dot_dimension_numbers<[1], [0], [0], [1], [0, 0, 1, 1], [], []>} : vector<256x4xbf16>, vector<4x8xbf16>, vector<256x8xf32> -> vector<256x8xf32>
    %107 = arith.addf %100, %106 : vector<256x8xf32>
    %108 = vector.extract_strided_slice %59 {offsets = [2, 1, 0], sizes = [16, 16, 4], strides = [1, 1, 1]} : vector<18x18x4xf32> to vector<16x16x4xf32>
    %109 = vector.shape_cast %108 : vector<16x16x4xf32> to vector<256x4xf32>
    %110 = arith.truncf %109 : vector<256x4xf32> to vector<256x4xbf16>
    %c7 = arith.constant 7 : index
    %c0_44 = arith.constant 0 : index
    %c0_45 = arith.constant 0 : index
    %111 = vector.load %arg4[%c7, %c0_44, %c0_45] : memref<9x4x8xbf16, #tpu.memory_space<vmem>>, vector<1x4x8xbf16>
    %112 = vector.shape_cast %111 : vector<1x4x8xbf16> to vector<4x8xbf16>
    %cst_46 = arith.constant dense<0.000000e+00> : vector<256x8xf32>
    %113 = tpu.matmul %110, %112, %cst_46 {dimension_numbers = #tpu.dot_dimension_numbers<[1], [0], [0], [1], [0, 0, 1, 1], [], []>} : vector<256x4xbf16>, vector<4x8xbf16>, vector<256x8xf32> -> vector<256x8xf32>
    %114 = arith.addf %107, %113 : vector<256x8xf32>
    %115 = vector.extract_strided_slice %59 {offsets = [2, 2, 0], sizes = [16, 16, 4], strides = [1, 1, 1]} : vector<18x18x4xf32> to vector<16x16x4xf32>
    %116 = vector.shape_cast %115 : vector<16x16x4xf32> to vector<256x4xf32>
    %117 = arith.truncf %116 : vector<256x4xf32> to vector<256x4xbf16>
    %c8 = arith.constant 8 : index
    %c0_47 = arith.constant 0 : index
    %c0_48 = arith.constant 0 : index
    %118 = vector.load %arg4[%c8, %c0_47, %c0_48] : memref<9x4x8xbf16, #tpu.memory_space<vmem>>, vector<1x4x8xbf16>
    %119 = vector.shape_cast %118 : vector<1x4x8xbf16> to vector<4x8xbf16>
    %cst_49 = arith.constant dense<0.000000e+00> : vector<256x8xf32>
    %120 = tpu.matmul %117, %119, %cst_49 {dimension_numbers = #tpu.dot_dimension_numbers<[1], [0], [0], [1], [0, 0, 1, 1], [], []>} : vector<256x4xbf16>, vector<4x8xbf16>, vector<256x8xf32> -> vector<256x8xf32>
    %121 = arith.addf %114, %120 : vector<256x8xf32>
    %122 = vector.shape_cast %121 : vector<256x8xf32> to vector<16x16x8xf32>
    %123 = tpu.transpose %122, [1, 0, 2] : vector<16x16x8xf32> -> vector<16x16x8xf32>
    %c0_50 = arith.constant 0 : index
    %c0_51 = arith.constant 0 : index
    %c0_52 = arith.constant 0 : index
    %c0_53 = arith.constant 0 : index
    %124 = vector.load %arg10[%c0_50, %c0_51, %c0_52, %c0_53] : memref<1x16x16x8xf32, #tpu.memory_space<vmem>>, vector<1x16x16x8xf32>
    %125 = vector.shape_cast %124 : vector<1x16x16x8xf32> to vector<16x16x8xf32>
    %126 = arith.addf %125, %123 : vector<16x16x8xf32>
    %c0_54 = arith.constant 0 : index
    %c0_55 = arith.constant 0 : index
    %c0_56 = arith.constant 0 : index
    %c0_57 = arith.constant 0 : index
    %127 = vector.load %arg10[%c0_54, %c0_55, %c0_56, %c0_57] : memref<1x16x16x8xf32, #tpu.memory_space<vmem>>, vector<1x16x16x8xf32>
    %128 = vector.shape_cast %127 : vector<1x16x16x8xf32> to vector<16x16x8xf32>
    %129 = vector.shape_cast %126 : vector<16x16x8xf32> to vector<1x16x16x8xf32>
    tpu.vector_store %arg10[%c0_54, %c0_55, %c0_56, %c0_57], %129 {strides = array<i32>} : memref<1x16x16x8xf32, #tpu.memory_space<vmem>>, vector<1x16x16x8xf32>,
    %c0_58 = arith.constant 0 : index
    %c0_59 = arith.constant 0 : index
    %c0_60 = arith.constant 0 : index
    %c0_61 = arith.constant 0 : index
    %130 = vector.load %arg5[%c0_58, %c0_59, %c0_60, %c0_61] : memref<1x8x8x8xf32, #tpu.memory_space<vmem>>, vector<1x8x8x8xf32>
    %131 = vector.shape_cast %130 : vector<1x8x8x8xf32> to vector<8x8x8xf32>
    %cst_62 = arith.constant dense<0.000000e+00> : vector<8xf32>
    %132 = vector.multi_reduction <add>, %131, %cst_62 [0, 1] : vector<8x8x8xf32> to vector<8xf32>
    %133 = vector.shape_cast %132 : vector<8xf32> to vector<1x1x8xf32>
    %cst_63 = arith.constant 6.400000e+01 : f32
    %134 = vector.broadcast %cst_63 : f32 to vector<1x1x8xf32>
    %135 = arith.divf %133, %134 : vector<1x1x8xf32>
    %136 = vector.broadcast %135 : vector<1x1x8xf32> to vector<8x8x8xf32>
    %137 = arith.subf %131, %136 : vector<8x8x8xf32>
    %138 = arith.mulf %137, %137 : vector<8x8x8xf32>
    %cst_64 = arith.constant dense<0.000000e+00> : vector<8xf32>
    %139 = vector.multi_reduction <add>, %138, %cst_64 [0, 1] : vector<8x8x8xf32> to vector<8xf32>
    %140 = vector.shape_cast %139 : vector<8xf32> to vector<1x1x8xf32>
    %cst_65 = arith.constant 6.400000e+01 : f32
    %141 = vector.broadcast %cst_65 : f32 to vector<1x1x8xf32>
    %142 = arith.divf %140, %141 : vector<1x1x8xf32>
    %cst_66 = arith.constant 9.99999974E-6 : f32
    %143 = vector.broadcast %cst_66 : f32 to vector<1x1x8xf32>
    %144 = arith.addf %142, %143 : vector<1x1x8xf32>
    %145 = math.rsqrt %144 : vector<1x1x8xf32>
    %146 = vector.broadcast %145 : vector<1x1x8xf32> to vector<8x8x8xf32>
    %147 = arith.mulf %137, %146 : vector<8x8x8xf32>
    %cst_67 = arith.constant dense<0.000000e+00> : vector<1x1xf32>
    %148 = vector.multi_reduction <add>, %135, %cst_67 [2] : vector<1x1x8xf32> to vector<1x1xf32>
    %149 = vector.shape_cast %148 : vector<1x1xf32> to vector<1x1x1xf32>
    %cst_68 = arith.constant 8.000000e+00 : f32
    %150 = vector.broadcast %cst_68 : f32 to vector<1x1x1xf32>
    %151 = arith.divf %149, %150 : vector<1x1x1xf32>
    %152 = vector.broadcast %151 : vector<1x1x1xf32> to vector<1x1x8xf32>
    %153 = arith.subf %135, %152 : vector<1x1x8xf32>
    %154 = arith.mulf %153, %153 : vector<1x1x8xf32>
    %cst_69 = arith.constant dense<0.000000e+00> : vector<1x1xf32>
    %155 = vector.multi_reduction <add>, %154, %cst_69 [2] : vector<1x1x8xf32> to vector<1x1xf32>
    %156 = vector.shape_cast %155 : vector<1x1xf32> to vector<1x1x1xf32>
    %cst_70 = arith.constant 7.000000e+00 : f32
    %157 = vector.broadcast %cst_70 : f32 to vector<1x1x1xf32>
    %158 = arith.divf %156, %157 : vector<1x1x1xf32>
    %cst_71 = arith.constant 9.99999974E-6 : f32
    %159 = vector.broadcast %cst_71 : f32 to vector<1x1x1xf32>
    %160 = arith.addf %158, %159 : vector<1x1x1xf32>
    %161 = math.rsqrt %160 : vector<1x1x1xf32>
    %162 = vector.broadcast %161 : vector<1x1x1xf32> to vector<1x1x8xf32>
    %163 = arith.mulf %153, %162 : vector<1x1x8xf32>
    %c0_72 = arith.constant 0 : index
    %c0_73 = arith.constant 0 : index
    %c0_74 = arith.constant 0 : index
    %164 = vector.load %arg6[%c0_72, %c0_73, %c0_74] : memref<1x1x24xf32, #tpu.memory_space<vmem>>, vector<1x1x24xf32>
    %165 = vector.extract_strided_slice %164 {offsets = [0, 0, 0], sizes = [1, 1, 8], strides = [1, 1, 1]} : vector<1x1x24xf32> to vector<1x1x8xf32>
    %166 = vector.extract_strided_slice %164 {offsets = [0, 0, 8], sizes = [1, 1, 8], strides = [1, 1, 1]} : vector<1x1x24xf32> to vector<1x1x8xf32>
    %167 = vector.extract_strided_slice %164 {offsets = [0, 0, 16], sizes = [1, 1, 8], strides = [1, 1, 1]} : vector<1x1x24xf32> to vector<1x1x8xf32>
    %168 = arith.mulf %163, %166 : vector<1x1x8xf32>
    %169 = vector.broadcast %168 : vector<1x1x8xf32> to vector<8x8x8xf32>
    %170 = arith.addf %147, %169 : vector<8x8x8xf32>
    %171 = vector.broadcast %165 : vector<1x1x8xf32> to vector<8x8x8xf32>
    %172 = arith.mulf %171, %170 : vector<8x8x8xf32>
    %173 = vector.broadcast %167 : vector<1x1x8xf32> to vector<8x8x8xf32>
    %174 = arith.addf %172, %173 : vector<8x8x8xf32>
    %c0_i32_75 = arith.constant 0 : i32
    %175 = arith.sitofp %c0_i32_75 : i32 to f32
    %176 = vector.broadcast %175 : f32 to vector<1x8x8xf32>
    %177 = tpu.concatenate %176, %174 in 0 : vector<1x8x8xf32>, vector<8x8x8xf32> -> vector<9x8x8xf32>
    %178 = vector.broadcast %175 : f32 to vector<1x8x8xf32>
    %179 = tpu.concatenate %177, %178 in 0 : vector<9x8x8xf32>, vector<1x8x8xf32> -> vector<10x8x8xf32>
    %180 = vector.broadcast %175 : f32 to vector<10x1x8xf32>
    %181 = tpu.concatenate %180, %179 in 1 : vector<10x1x8xf32>, vector<10x8x8xf32> -> vector<10x9x8xf32>
    %182 = vector.broadcast %175 : f32 to vector<10x1x8xf32>
    %183 = tpu.concatenate %181, %182 in 1 : vector<10x9x8xf32>, vector<10x1x8xf32> -> vector<10x10x8xf32>
    %184 = vector.extract_strided_slice %183 {offsets = [0, 0, 0], sizes = [8, 8, 8], strides = [1, 1, 1]} : vector<10x10x8xf32> to vector<8x8x8xf32>
    %185 = vector.shape_cast %184 : vector<8x8x8xf32> to vector<64x8xf32>
    %186 = arith.truncf %185 : vector<64x8xf32> to vector<64x8xbf16>
    %c0_76 = arith.constant 0 : index
    %c0_77 = arith.constant 0 : index
    %c0_78 = arith.constant 0 : index
    %187 = vector.load %arg7[%c0_76, %c0_77, %c0_78] : memref<9x8x8xbf16, #tpu.memory_space<vmem>>, vector<1x8x8xbf16>
    %188 = vector.shape_cast %187 : vector<1x8x8xbf16> to vector<8x8xbf16>
    %cst_79 = arith.constant dense<0.000000e+00> : vector<64x8xf32>
    %189 = tpu.matmul %186, %188, %cst_79 {dimension_numbers = #tpu.dot_dimension_numbers<[1], [0], [0], [1], [0, 0, 1, 1], [], []>} : vector<64x8xbf16>, vector<8x8xbf16>, vector<64x8xf32> -> vector<64x8xf32>
    %190 = vector.extract_strided_slice %183 {offsets = [0, 1, 0], sizes = [8, 8, 8], strides = [1, 1, 1]} : vector<10x10x8xf32> to vector<8x8x8xf32>
    %191 = vector.shape_cast %190 : vector<8x8x8xf32> to vector<64x8xf32>
    %192 = arith.truncf %191 : vector<64x8xf32> to vector<64x8xbf16>
    %c1_80 = arith.constant 1 : index
    %c0_81 = arith.constant 0 : index
    %c0_82 = arith.constant 0 : index
    %193 = vector.load %arg7[%c1_80, %c0_81, %c0_82] : memref<9x8x8xbf16, #tpu.memory_space<vmem>>, vector<1x8x8xbf16>
    %194 = vector.shape_cast %193 : vector<1x8x8xbf16> to vector<8x8xbf16>
    %cst_83 = arith.constant dense<0.000000e+00> : vector<64x8xf32>
    %195 = tpu.matmul %192, %194, %cst_83 {dimension_numbers = #tpu.dot_dimension_numbers<[1], [0], [0], [1], [0, 0, 1, 1], [], []>} : vector<64x8xbf16>, vector<8x8xbf16>, vector<64x8xf32> -> vector<64x8xf32>
    %196 = arith.addf %189, %195 : vector<64x8xf32>
    %197 = vector.extract_strided_slice %183 {offsets = [0, 2, 0], sizes = [8, 8, 8], strides = [1, 1, 1]} : vector<10x10x8xf32> to vector<8x8x8xf32>
    %198 = vector.shape_cast %197 : vector<8x8x8xf32> to vector<64x8xf32>
    %199 = arith.truncf %198 : vector<64x8xf32> to vector<64x8xbf16>
    %c2_84 = arith.constant 2 : index
    %c0_85 = arith.constant 0 : index
    %c0_86 = arith.constant 0 : index
    %200 = vector.load %arg7[%c2_84, %c0_85, %c0_86] : memref<9x8x8xbf16, #tpu.memory_space<vmem>>, vector<1x8x8xbf16>
    %201 = vector.shape_cast %200 : vector<1x8x8xbf16> to vector<8x8xbf16>
    %cst_87 = arith.constant dense<0.000000e+00> : vector<64x8xf32>
    %202 = tpu.matmul %199, %201, %cst_87 {dimension_numbers = #tpu.dot_dimension_numbers<[1], [0], [0], [1], [0, 0, 1, 1], [], []>} : vector<64x8xbf16>, vector<8x8xbf16>, vector<64x8xf32> -> vector<64x8xf32>
    %203 = arith.addf %196, %202 : vector<64x8xf32>
    %204 = vector.extract_strided_slice %183 {offsets = [1, 0, 0], sizes = [8, 8, 8], strides = [1, 1, 1]} : vector<10x10x8xf32> to vector<8x8x8xf32>
    %205 = vector.shape_cast %204 : vector<8x8x8xf32> to vector<64x8xf32>
    %206 = arith.truncf %205 : vector<64x8xf32> to vector<64x8xbf16>
    %c3_88 = arith.constant 3 : index
    %c0_89 = arith.constant 0 : index
    %c0_90 = arith.constant 0 : index
    %207 = vector.load %arg7[%c3_88, %c0_89, %c0_90] : memref<9x8x8xbf16, #tpu.memory_space<vmem>>, vector<1x8x8xbf16>
    %208 = vector.shape_cast %207 : vector<1x8x8xbf16> to vector<8x8xbf16>
    %cst_91 = arith.constant dense<0.000000e+00> : vector<64x8xf32>
    %209 = tpu.matmul %206, %208, %cst_91 {dimension_numbers = #tpu.dot_dimension_numbers<[1], [0], [0], [1], [0, 0, 1, 1], [], []>} : vector<64x8xbf16>, vector<8x8xbf16>, vector<64x8xf32> -> vector<64x8xf32>
    %210 = arith.addf %203, %209 : vector<64x8xf32>
    %211 = vector.extract_strided_slice %183 {offsets = [1, 1, 0], sizes = [8, 8, 8], strides = [1, 1, 1]} : vector<10x10x8xf32> to vector<8x8x8xf32>
    %212 = vector.shape_cast %211 : vector<8x8x8xf32> to vector<64x8xf32>
    %213 = arith.truncf %212 : vector<64x8xf32> to vector<64x8xbf16>
    %c4_92 = arith.constant 4 : index
    %c0_93 = arith.constant 0 : index
    %c0_94 = arith.constant 0 : index
    %214 = vector.load %arg7[%c4_92, %c0_93, %c0_94] : memref<9x8x8xbf16, #tpu.memory_space<vmem>>, vector<1x8x8xbf16>
    %215 = vector.shape_cast %214 : vector<1x8x8xbf16> to vector<8x8xbf16>
    %cst_95 = arith.constant dense<0.000000e+00> : vector<64x8xf32>
    %216 = tpu.matmul %213, %215, %cst_95 {dimension_numbers = #tpu.dot_dimension_numbers<[1], [0], [0], [1], [0, 0, 1, 1], [], []>} : vector<64x8xbf16>, vector<8x8xbf16>, vector<64x8xf32> -> vector<64x8xf32>
    %217 = arith.addf %210, %216 : vector<64x8xf32>
    %218 = vector.extract_strided_slice %183 {offsets = [1, 2, 0], sizes = [8, 8, 8], strides = [1, 1, 1]} : vector<10x10x8xf32> to vector<8x8x8xf32>
    %219 = vector.shape_cast %218 : vector<8x8x8xf32> to vector<64x8xf32>
    %220 = arith.truncf %219 : vector<64x8xf32> to vector<64x8xbf16>
    %c5_96 = arith.constant 5 : index
    %c0_97 = arith.constant 0 : index
    %c0_98 = arith.constant 0 : index
    %221 = vector.load %arg7[%c5_96, %c0_97, %c0_98] : memref<9x8x8xbf16, #tpu.memory_space<vmem>>, vector<1x8x8xbf16>
    %222 = vector.shape_cast %221 : vector<1x8x8xbf16> to vector<8x8xbf16>
    %cst_99 = arith.constant dense<0.000000e+00> : vector<64x8xf32>
    %223 = tpu.matmul %220, %222, %cst_99 {dimension_numbers = #tpu.dot_dimension_numbers<[1], [0], [0], [1], [0, 0, 1, 1], [], []>} : vector<64x8xbf16>, vector<8x8xbf16>, vector<64x8xf32> -> vector<64x8xf32>
    %224 = arith.addf %217, %223 : vector<64x8xf32>
    %225 = vector.extract_strided_slice %183 {offsets = [2, 0, 0], sizes = [8, 8, 8], strides = [1, 1, 1]} : vector<10x10x8xf32> to vector<8x8x8xf32>
    %226 = vector.shape_cast %225 : vector<8x8x8xf32> to vector<64x8xf32>
    %227 = arith.truncf %226 : vector<64x8xf32> to vector<64x8xbf16>
    %c6_100 = arith.constant 6 : index
    %c0_101 = arith.constant 0 : index
    %c0_102 = arith.constant 0 : index
    %228 = vector.load %arg7[%c6_100, %c0_101, %c0_102] : memref<9x8x8xbf16, #tpu.memory_space<vmem>>, vector<1x8x8xbf16>
    %229 = vector.shape_cast %228 : vector<1x8x8xbf16> to vector<8x8xbf16>
    %cst_103 = arith.constant dense<0.000000e+00> : vector<64x8xf32>
    %230 = tpu.matmul %227, %229, %cst_103 {dimension_numbers = #tpu.dot_dimension_numbers<[1], [0], [0], [1], [0, 0, 1, 1], [], []>} : vector<64x8xbf16>, vector<8x8xbf16>, vector<64x8xf32> -> vector<64x8xf32>
    %231 = arith.addf %224, %230 : vector<64x8xf32>
    %232 = vector.extract_strided_slice %183 {offsets = [2, 1, 0], sizes = [8, 8, 8], strides = [1, 1, 1]} : vector<10x10x8xf32> to vector<8x8x8xf32>
    %233 = vector.shape_cast %232 : vector<8x8x8xf32> to vector<64x8xf32>
    %234 = arith.truncf %233 : vector<64x8xf32> to vector<64x8xbf16>
    %c7_104 = arith.constant 7 : index
    %c0_105 = arith.constant 0 : index
    %c0_106 = arith.constant 0 : index
    %235 = vector.load %arg7[%c7_104, %c0_105, %c0_106] : memref<9x8x8xbf16, #tpu.memory_space<vmem>>, vector<1x8x8xbf16>
    %236 = vector.shape_cast %235 : vector<1x8x8xbf16> to vector<8x8xbf16>
    %cst_107 = arith.constant dense<0.000000e+00> : vector<64x8xf32>
    %237 = tpu.matmul %234, %236, %cst_107 {dimension_numbers = #tpu.dot_dimension_numbers<[1], [0], [0], [1], [0, 0, 1, 1], [], []>} : vector<64x8xbf16>, vector<8x8xbf16>, vector<64x8xf32> -> vector<64x8xf32>
    %238 = arith.addf %231, %237 : vector<64x8xf32>
    %239 = vector.extract_strided_slice %183 {offsets = [2, 2, 0], sizes = [8, 8, 8], strides = [1, 1, 1]} : vector<10x10x8xf32> to vector<8x8x8xf32>
    %240 = vector.shape_cast %239 : vector<8x8x8xf32> to vector<64x8xf32>
    %241 = arith.truncf %240 : vector<64x8xf32> to vector<64x8xbf16>
    %c8_108 = arith.constant 8 : index
    %c0_109 = arith.constant 0 : index
    %c0_110 = arith.constant 0 : index
    %242 = vector.load %arg7[%c8_108, %c0_109, %c0_110] : memref<9x8x8xbf16, #tpu.memory_space<vmem>>, vector<1x8x8xbf16>
    %243 = vector.shape_cast %242 : vector<1x8x8xbf16> to vector<8x8xbf16>
    %cst_111 = arith.constant dense<0.000000e+00> : vector<64x8xf32>
    %244 = tpu.matmul %241, %243, %cst_111 {dimension_numbers = #tpu.dot_dimension_numbers<[1], [0], [0], [1], [0, 0, 1, 1], [], []>} : vector<64x8xbf16>, vector<8x8xbf16>, vector<64x8xf32> -> vector<64x8xf32>
    %245 = arith.addf %238, %244 : vector<64x8xf32>
    %246 = vector.shape_cast %245 : vector<64x8xf32> to vector<8x8x8xf32>
    %c0_112 = arith.constant 0 : index
    %c0_113 = arith.constant 0 : index
    %247 = vector.load %arg8[%c0_112, %c0_113] : memref<16x8xbf16, #tpu.memory_space<vmem>>, vector<16x8xbf16>
    %248 = vector.shape_cast %247 : vector<16x8xbf16> to vector<1x16x8xbf16>
    %249 = vector.broadcast %248 : vector<1x16x8xbf16> to vector<8x16x8xbf16>
    %250 = arith.truncf %246 : vector<8x8x8xf32> to vector<8x8x8xbf16>
    %cst_114 = arith.constant dense<0.000000e+00> : vector<8x16x8xf32>
    %251 = tpu.matmul %249, %250, %cst_114 {dimension_numbers = #tpu.dot_dimension_numbers<[2], [1], [1], [2], [0, 0, 0, 1, 1, 2], [0], [0]>} : vector<8x16x8xbf16>, vector<8x8x8xbf16>, vector<8x16x8xf32> -> vector<8x16x8xf32>
    %252 = tpu.transpose %251, [1, 0, 2] : vector<8x16x8xf32> -> vector<16x8x8xf32>
    %c0_115 = arith.constant 0 : index
    %c0_116 = arith.constant 0 : index
    %253 = vector.load %arg9[%c0_115, %c0_116] : memref<16x8xbf16, #tpu.memory_space<vmem>>, vector<16x8xbf16>
    %254 = vector.shape_cast %253 : vector<16x8xbf16> to vector<1x16x8xbf16>
    %255 = vector.broadcast %254 : vector<1x16x8xbf16> to vector<16x16x8xbf16>
    %256 = arith.truncf %252 : vector<16x8x8xf32> to vector<16x8x8xbf16>
    %cst_117 = arith.constant dense<0.000000e+00> : vector<16x16x8xf32>
    %257 = tpu.matmul %255, %256, %cst_117 {dimension_numbers = #tpu.dot_dimension_numbers<[2], [1], [1], [2], [0, 0, 0, 1, 1, 2], [0], [0]>} : vector<16x16x8xbf16>, vector<16x8x8xbf16>, vector<16x16x8xf32> -> vector<16x16x8xf32>
    %c0_118 = arith.constant 0 : index
    %c0_119 = arith.constant 0 : index
    %c0_120 = arith.constant 0 : index
    %c0_121 = arith.constant 0 : index
    %258 = vector.load %arg10[%c0_118, %c0_119, %c0_120, %c0_121] : memref<1x16x16x8xf32, #tpu.memory_space<vmem>>, vector<1x16x16x8xf32>
    %259 = vector.shape_cast %258 : vector<1x16x16x8xf32> to vector<16x16x8xf32>
    %260 = arith.addf %259, %257 : vector<16x16x8xf32>
    %c0_122 = arith.constant 0 : index
    %c0_123 = arith.constant 0 : index
    %c0_124 = arith.constant 0 : index
    %c0_125 = arith.constant 0 : index
    %261 = vector.load %arg10[%c0_122, %c0_123, %c0_124, %c0_125] : memref<1x16x16x8xf32, #tpu.memory_space<vmem>>, vector<1x16x16x8xf32>
    %262 = vector.shape_cast %261 : vector<1x16x16x8xf32> to vector<16x16x8xf32>
    %263 = vector.shape_cast %260 : vector<16x16x8xf32> to vector<1x16x16x8xf32>
    tpu.vector_store %arg10[%c0_122, %c0_123, %c0_124, %c0_125], %263 {strides = array<i32>} : memref<1x16x16x8xf32, #tpu.memory_space<vmem>>, vector<1x16x16x8xf32>,
    return
  }
  func.func @transform_0(%arg0: i32) -> (i32, i32, i32) {
    %c0_i32 = arith.constant 0 : i32
    %c0_i32_0 = arith.constant 0 : i32
    %c0_i32_1 = arith.constant 0 : i32
    %c0_i32_2 = arith.constant 0 : i32
    return %c0_i32, %c0_i32_0, %c0_i32_1 : i32, i32, i32
  }
  func.func @transform_1(%arg0: i32) -> (i32, i32, i32, i32) {
    %c0_i32 = arith.constant 0 : i32
    %c0_i32_0 = arith.constant 0 : i32
    %c0_i32_1 = arith.constant 0 : i32
    %c0_i32_2 = arith.constant 0 : i32
    return %arg0, %c0_i32, %c0_i32_0, %c0_i32_1 : i32, i32, i32, i32
  }
  func.func @transform_2(%arg0: i32) -> (i32, i32, i32) {
    %c0_i32 = arith.constant 0 : i32
    %c0_i32_0 = arith.constant 0 : i32
    %c0_i32_1 = arith.constant 0 : i32
    return %arg0, %c0_i32, %c0_i32_0 : i32, i32, i32
  }
  func.func @transform_3(%arg0: i32) -> (i32, i32, i32) {
    %c0_i32 = arith.constant 0 : i32
    %c0_i32_0 = arith.constant 0 : i32
    %c0_i32_1 = arith.constant 0 : i32
    %c0_i32_2 = arith.constant 0 : i32
    return %c0_i32, %c0_i32_0, %c0_i32_1 : i32, i32, i32
  }
  func.func @transform_4(%arg0: i32) -> (i32, i32, i32, i32) {
    %c0_i32 = arith.constant 0 : i32
    %c0_i32_0 = arith.constant 0 : i32
    %c0_i32_1 = arith.constant 0 : i32
    %c0_i32_2 = arith.constant 0 : i32
    return %arg0, %c0_i32, %c0_i32_0, %c0_i32_1 : i32, i32, i32, i32
  }
  func.func @transform_5(%arg0: i32) -> (i32, i32, i32) {
    %c0_i32 = arith.constant 0 : i32
    %c0_i32_0 = arith.constant 0 : i32
    %c0_i32_1 = arith.constant 0 : i32
    return %arg0, %c0_i32, %c0_i32_0 : i32, i32, i32
  }
  func.func @transform_6(%arg0: i32) -> (i32, i32, i32) {
    %c0_i32 = arith.constant 0 : i32
    %c0_i32_0 = arith.constant 0 : i32
    %c0_i32_1 = arith.constant 0 : i32
    %c0_i32_2 = arith.constant 0 : i32
    return %c0_i32, %c0_i32_0, %c0_i32_1 : i32, i32, i32
  }
  func.func @transform_7(%arg0: i32) -> (i32, i32) {
    %c0_i32 = arith.constant 0 : i32
    %c0_i32_0 = arith.constant 0 : i32
    %c0_i32_1 = arith.constant 0 : i32
    return %c0_i32, %c0_i32_0 : i32, i32
  }
  func.func @transform_8(%arg0: i32) -> (i32, i32) {
    %c0_i32 = arith.constant 0 : i32
    %c0_i32_0 = arith.constant 0 : i32
    %c0_i32_1 = arith.constant 0 : i32
    return %c0_i32, %c0_i32_0 : i32, i32
  }
  func.func @transform_9(%arg0: i32) -> (i32, i32, i32, i32) {
    %c0_i32 = arith.constant 0 : i32
    %c0_i32_0 = arith.constant 0 : i32
    %c0_i32_1 = arith.constant 0 : i32
    %c0_i32_2 = arith.constant 0 : i32
    return %arg0, %c0_i32, %c0_i32_0, %c0_i32_1 : i32, i32, i32, i32
  }
}

</mosaic_0001>

<llo_original>
// kernel: tpu_custom_call.1
$region0: #{tpu_custom_call.1}
  #allocation0 [shape = 'u32[]', space=smem, size = 0x4, offset = 0x4, fixed_abs, tag = 'smem constant byte address 0x4 - core index']
  #allocation1 [shape = 'u32[144,128]{1,0:T(1,128)}', space=vmem, size = 0x12000, scoped, tag = 'internal scratch']
  %s0 = inlined_call_operand.vmem [shape: f32[1,1,8], index: 0, kind: input, shape index: {}]
  %s1 = inlined_call_operand.vmem [shape: f32[2,16,16,4], index: 1, kind: input, shape index: {}]
  %s2 = inlined_call_operand.vmem [shape: f32[2,1,12], index: 2, kind: input, shape index: {}]
  %s3 = inlined_call_operand.vmem [shape: bf16[9,4,8], index: 3, kind: input, shape index: {}]
  %s4 = inlined_call_operand.vmem [shape: f32[2,8,8,8], index: 4, kind: input, shape index: {}]
  %s5 = inlined_call_operand.vmem [shape: f32[2,1,24], index: 5, kind: input, shape index: {}]
  %s6 = inlined_call_operand.vmem [shape: bf16[9,8,8], index: 6, kind: input, shape index: {}]
  %s7 = inlined_call_operand.vmem [shape: bf16[16,8], index: 7, kind: input, shape index: {}]
  %s8 = inlined_call_operand.vmem [shape: bf16[16,8], index: 8, kind: input, shape index: {}]
  %s9 = inlined_call_operand.vmem [shape: f32[2,16,16,8], index: 9, kind: output, shape index: {}]
  %s10 = sld [smem:[#allocation0]]
  $region69: #{tpu_custom_call.1} parent=0
    _
  %s12 = ssub.s32 1, %s10
  %s13 = scalar_select 0, %s12, %s10
  loop: start=0, step=1, limit=4
  $region2: #{tpu_custom_call.1} parent=0 // loop_pre_header
    _
  $region3: #{tpu_custom_call.1} parent=0 // loop_header
    %s15 = sphi 0, %s19
    %p16 = scmp.ge.s32.totalorder %s15, 4
    %s23 = sphi 0, %s23
    %s25 = sphi 0, %s23
    %s26 = sphi 0, %s25
    %s40 = sphi 0, %s26
    %s46 = sphi 0, %s48
    %s49 = sphi 0, %s46
    %s50 = sphi 0, %s49
    %s66 = sphi 0, %s50
    %s72 = sphi 0, %s74
    %s75 = sphi 0, %s72
    %s76 = sphi 0, %s75
    %s92 = sphi 0, %s76
    %s96 = sphi 0, %s96
    %s98 = sphi 0, %s96
    %s99 = sphi 0, %s98
    %s113 = sphi 0, %s99
    %s119 = sphi 0, %s121
    %s122 = sphi 0, %s119
    %s123 = sphi 0, %s122
    %s139 = sphi 0, %s123
    %s145 = sphi 0, %s147
    %s148 = sphi 0, %s145
    %s149 = sphi 0, %s148
    %s165 = sphi 0, %s149
    %s169 = sphi 0, %s169
    %s171 = sphi 0, %s169
    %s172 = sphi 0, %s171
    %s186 = sphi 0, %s172
    %s190 = sphi 0, %s190
    %s192 = sphi 0, %s190
    %s193 = sphi 0, %s192
    %s207 = sphi 0, %s193
    %s211 = sphi 0, %s211
    %s213 = sphi 0, %s211
    %s214 = sphi 0, %s213
    %s228 = sphi 0, %s214
    %s234 = sphi 0, %s236
    %s237 = sphi 0, %s234
    %s238 = sphi 0, %s237
    %s254 = sphi 0, %s238
  $region4: #{tpu_custom_call.1} parent=0 // loop_header_branch
    %18 = sbr.rel (%p16) target = $region8
  $region5: #{tpu_custom_call.1} parent=0 // loop_body
    %s20 = ssub.s32 %s15, 1
    %s21 = ssub.s32 %s15, 2
    %s22 = sadd.s32 %s15, 1
    %s24 = sadd.s32 %s23, 1
    %p27 = scmp.eq.s32.totalorder %s15, 1
    %p28 = scmp.ne.s32.totalorder %s23, %s25
    %p29 = scmp.eq.s32.totalorder %s15, 0
    %p30 = por %p28, %p29
    %p31 = scmp.ne.s32.totalorder %s23, %s25
    %p32 = scmp.eq.s32.totalorder %s20, 1
    %p33 = por %p31, %p32
    %p34 = scmp.ne.s32.totalorder %s25, %s26
    %p35 = scmp.eq.s32.totalorder %s20, 0
    %p36 = por %p34, %p35
    %p37 = scmp.ne.s32.totalorder %s25, %s26
    %p38 = scmp.eq.s32.totalorder %s21, 1
    %p39 = por %p37, %p38
    %p41 = scmp.ne.s32.totalorder %s26, %s40
    %p42 = scmp.eq.s32.totalorder %s21, 0
    %p43 = por %p41, %p42
    %s44 = ssub.s32 %s15, %s22
    %p45 = scmp.eq.s32.totalorder %s44, 0
    %s47 = sadd.s32 %s46, 1
    %s48 = scalar_select %p45, %s46, %s47
    %p51 = pneg %p45
    %p52 = scmp.eq.s32.totalorder %s15, 1
    %p53 = por %p51, %p52
    %p54 = scmp.ne.s32.totalorder %s46, %s49
    %p55 = scmp.eq.s32.totalorder %s15, 0
    %p56 = por %p54, %p55
    %p57 = scmp.ne.s32.totalorder %s46, %s49
    %p58 = scmp.eq.s32.totalorder %s20, 1
    %p59 = por %p57, %p58
    %p60 = scmp.ne.s32.totalorder %s49, %s50
    %p61 = scmp.eq.s32.totalorder %s20, 0
    %p62 = por %p60, %p61
    %p63 = scmp.ne.s32.totalorder %s49, %s50
    %p64 = scmp.eq.s32.totalorder %s21, 1
    %p65 = por %p63, %p64
    %p67 = scmp.ne.s32.totalorder %s50, %s66
    %p68 = scmp.eq.s32.totalorder %s21, 0
    %p69 = por %p67, %p68
    %s70 = ssub.s32 %s15, %s22
    %p71 = scmp.eq.s32.totalorder %s70, 0
    %s73 = sadd.s32 %s72, 1
    %s74 = scalar_select %p71, %s72, %s73
    %p77 = pneg %p71
    %p78 = scmp.eq.s32.totalorder %s15, 1
    %p79 = por %p77, %p78
    %p80 = scmp.ne.s32.totalorder %s72, %s75
    %p81 = scmp.eq.s32.totalorder %s15, 0
    %p82 = por %p80, %p81
    %p83 = scmp.ne.s32.totalorder %s72, %s75
    %p84 = scmp.eq.s32.totalorder %s20, 1
    %p85 = por %p83, %p84
    %p86 = scmp.ne.s32.totalorder %s75, %s76
    %p87 = scmp.eq.s32.totalorder %s20, 0
    %p88 = por %p86, %p87
    %p89 = scmp.ne.s32.totalorder %s75, %s76
    %p90 = scmp.eq.s32.totalorder %s21, 1
    %p91 = por %p89, %p90
    %p93 = scmp.ne.s32.totalorder %s76, %s92
    %p94 = scmp.eq.s32.totalorder %s21, 0
    %p95 = por %p93, %p94
    %s97 = sadd.s32 %s96, 1
    %p100 = scmp.eq.s32.totalorder %s15, 1
    %p101 = scmp.ne.s32.totalorder %s96, %s98
    %p102 = scmp.eq.s32.totalorder %s15, 0
    %p103 = por %p101, %p102
    %p104 = scmp.ne.s32.totalorder %s96, %s98
    %p105 = scmp.eq.s32.totalorder %s20, 1
    %p106 = por %p104, %p105
    %p107 = scmp.ne.s32.totalorder %s98, %s99
    %p108 = scmp.eq.s32.totalorder %s20, 0
    %p109 = por %p107, %p108
    %p110 = scmp.ne.s32.totalorder %s98, %s99
    %p111 = scmp.eq.s32.totalorder %s21, 1
    %p112 = por %p110, %p111
    %p114 = scmp.ne.s32.totalorder %s99, %s113
    %p115 = scmp.eq.s32.totalorder %s21, 0
    %p116 = por %p114, %p115
    %s117 = ssub.s32 %s15, %s22
    %p118 = scmp.eq.s32.totalorder %s117, 0
    %s120 = sadd.s32 %s119, 1
    %s121 = scalar_select %p118, %s119, %s120
    %p124 = pneg %p118
    %p125 = scmp.eq.s32.totalorder %s15, 1
    %p126 = por %p124, %p125
    %p127 = scmp.ne.s32.totalorder %s119, %s122
    %p128 = scmp.eq.s32.totalorder %s15, 0
    %p129 = por %p127, %p128
    %p130 = scmp.ne.s32.totalorder %s119, %s122
    %p131 = scmp.eq.s32.totalorder %s20, 1
    %p132 = por %p130, %p131
    %p133 = scmp.ne.s32.totalorder %s122, %s123
    %p134 = scmp.eq.s32.totalorder %s20, 0
    %p135 = por %p133, %p134
    %p136 = scmp.ne.s32.totalorder %s122, %s123
    %p137 = scmp.eq.s32.totalorder %s21, 1
    %p138 = por %p136, %p137
    %p140 = scmp.ne.s32.totalorder %s123, %s139
    %p141 = scmp.eq.s32.totalorder %s21, 0
    %p142 = por %p140, %p141
    %s143 = ssub.s32 %s15, %s22
    %p144 = scmp.eq.s32.totalorder %s143, 0
    %s146 = sadd.s32 %s145, 1
    %s147 = scalar_select %p144, %s145, %s146
    %p150 = pneg %p144
    %p151 = scmp.eq.s32.totalorder %s15, 1
    %p152 = por %p150, %p151
    %p153 = scmp.ne.s32.totalorder %s145, %s148
    %p154 = scmp.eq.s32.totalorder %s15, 0
    %p155 = por %p153, %p154
    %p156 = scmp.ne.s32.totalorder %s145, %s148
    %p157 = scmp.eq.s32.totalorder %s20, 1
    %p158 = por %p156, %p157
    %p159 = scmp.ne.s32.totalorder %s148, %s149
    %p160 = scmp.eq.s32.totalorder %s20, 0
    %p161 = por %p159, %p160
    %p162 = scmp.ne.s32.totalorder %s148, %s149
    %p163 = scmp.eq.s32.totalorder %s21, 1
    %p164 = por %p162, %p163
    %p166 = scmp.ne.s32.totalorder %s149, %s165
    %p167 = scmp.eq.s32.totalorder %s21, 0
    %p168 = por %p166, %p167
    %s170 = sadd.s32 %s169, 1
    %p173 = scmp.eq.s32.totalorder %s15, 1
    %p174 = scmp.ne.s32.totalorder %s169, %s171
    %p175 = scmp.eq.s32.totalorder %s15, 0
    %p176 = por %p174, %p175
    %p177 = scmp.ne.s32.totalorder %s169, %s171
    %p178 = scmp.eq.s32.totalorder %s20, 1
    %p179 = por %p177, %p178
    %p180 = scmp.ne.s32.totalorder %s171, %s172
    %p181 = scmp.eq.s32.totalorder %s20, 0
    %p182 = por %p180, %p181
    %p183 = scmp.ne.s32.totalorder %s171, %s172
    %p184 = scmp.eq.s32.totalorder %s21, 1
    %p185 = por %p183, %p184
    %p187 = scmp.ne.s32.totalorder %s172, %s186
    %p188 = scmp.eq.s32.totalorder %s21, 0
    %p189 = por %p187, %p188
    %s191 = sadd.s32 %s190, 1
    %p194 = scmp.eq.s32.totalorder %s15, 1
    %p195 = scmp.ne.s32.totalorder %s190, %s192
    %p196 = scmp.eq.s32.totalorder %s15, 0
    %p197 = por %p195, %p196
    %p198 = scmp.ne.s32.totalorder %s190, %s192
    %p199 = scmp.eq.s32.totalorder %s20, 1
    %p200 = por %p198, %p199
    %p201 = scmp.ne.s32.totalorder %s192, %s193
    %p202 = scmp.eq.s32.totalorder %s20, 0
    %p203 = por %p201, %p202
    %p204 = scmp.ne.s32.totalorder %s192, %s193
    %p205 = scmp.eq.s32.totalorder %s21, 1
    %p206 = por %p204, %p205
    %p208 = scmp.ne.s32.totalorder %s193, %s207
    %p209 = scmp.eq.s32.totalorder %s21, 0
    %p210 = por %p208, %p209
    %s212 = sadd.s32 %s211, 1
    %p215 = scmp.eq.s32.totalorder %s15, 1
    %p216 = scmp.ne.s32.totalorder %s211, %s213
    %p217 = scmp.eq.s32.totalorder %s15, 0
    %p218 = por %p216, %p217
    %p219 = scmp.ne.s32.totalorder %s211, %s213
    %p220 = scmp.eq.s32.totalorder %s20, 1
    %p221 = por %p219, %p220
    %p222 = scmp.ne.s32.totalorder %s213, %s214
    %p223 = scmp.eq.s32.totalorder %s20, 0
    %p224 = por %p222, %p223
    %p225 = scmp.ne.s32.totalorder %s213, %s214
    %p226 = scmp.eq.s32.totalorder %s21, 1
    %p227 = por %p225, %p226
    %p229 = scmp.ne.s32.totalorder %s214, %s228
    %p230 = scmp.eq.s32.totalorder %s21, 0
    %p231 = por %p229, %p230
    %s232 = ssub.s32 %s15, %s22
    %p233 = scmp.eq.s32.totalorder %s232, 0
    %s235 = sadd.s32 %s234, 1
    %s236 = scalar_select %p233, %s234, %s235
    %p239 = pneg %p233
    %p240 = scmp.eq.s32.totalorder %s15, 1
    %p241 = por %p239, %p240
    %p242 = scmp.ne.s32.totalorder %s234, %s237
    %p243 = scmp.eq.s32.totalorder %s15, 0
    %p244 = por %p242, %p243
    %p245 = scmp.ne.s32.totalorder %s234, %s237
    %p246 = scmp.eq.s32.totalorder %s20, 1
    %p247 = por %p245, %p246
    %p248 = scmp.ne.s32.totalorder %s237, %s238
    %p249 = scmp.eq.s32.totalorder %s20, 0
    %p250 = por %p248, %p249
    %p251 = scmp.ne.s32.totalorder %s237, %s238
    %p252 = scmp.eq.s32.totalorder %s21, 1
    %p253 = por %p251, %p252
    %p255 = scmp.ne.s32.totalorder %s238, %s254
    %p256 = scmp.eq.s32.totalorder %s21, 0
    %p257 = por %p255, %p256
    %p258 = scmp.le.s32.totalorder 1, %s15
    %p259 = scmp.lt.s32.totalorder %s15, 3
    %p260 = pnand %p258, %p259
    %p261 = pneg %p260
    // Predicated region
    $region9: #{tpu_custom_call.1} parent=5 // pred_check
      _
    $region10: #{tpu_custom_call.1} parent=5 // pred_check_branch
      %263 = sbr.rel (%p260) target = $region12
    $region11: #{tpu_custom_call.1} parent=5 // pred_region
      %s264 = ssub.s32 %s15, 1
      // Predicated region
      $region13: #{tpu_custom_call.1} parent=11 // pred_check
        %p265 = pneg %p36
      $region14: #{tpu_custom_call.1} parent=11 // pred_check_branch
        %267 = sbr.rel (%p265) target = $region16
      $region15: #{tpu_custom_call.1} parent=11 // pred_region
        _
      $region16: #{tpu_custom_call.1} parent=11 // pred_fallthru
        _
      // Predicated region
      $region17: #{tpu_custom_call.1} parent=11 // pred_check
        %p268 = pneg %p109
      $region18: #{tpu_custom_call.1} parent=11 // pred_check_branch
        %270 = sbr.rel (%p268) target = $region20
      $region19: #{tpu_custom_call.1} parent=11 // pred_region
        _
      $region20: #{tpu_custom_call.1} parent=11 // pred_fallthru
        _
      // Predicated region
      $region21: #{tpu_custom_call.1} parent=11 // pred_check
        %p271 = pneg %p182
      $region22: #{tpu_custom_call.1} parent=11 // pred_check_branch
        %273 = sbr.rel (%p271) target = $region24
      $region23: #{tpu_custom_call.1} parent=11 // pred_region
        _
      $region24: #{tpu_custom_call.1} parent=11 // pred_fallthru
        _
      // Predicated region
      $region25: #{tpu_custom_call.1} parent=11 // pred_check
        %p274 = pneg %p203
      $region26: #{tpu_custom_call.1} parent=11 // pred_check_branch
        %276 = sbr.rel (%p274) target = $region28
      $region27: #{tpu_custom_call.1} parent=11 // pred_region
        _
      $region28: #{tpu_custom_call.1} parent=11 // pred_fallthru
        _
      // Predicated region
      $region29: #{tpu_custom_call.1} parent=11 // pred_check
        %p277 = pneg %p224
      $region30: #{tpu_custom_call.1} parent=11 // pred_check_branch
        %279 = sbr.rel (%p277) target = $region32
      $region31: #{tpu_custom_call.1} parent=11 // pred_region
        _
      $region32: #{tpu_custom_call.1} parent=11 // pred_fallthru
        _
    $region12: #{tpu_custom_call.1} parent=5 // pred_fallthru
      _
    %p280 = scmp.lt.s32.totalorder %s15, 2
    // Predicated region
    $region33: #{tpu_custom_call.1} parent=5 // pred_check
      %p281 = pneg %p280
    $region34: #{tpu_custom_call.1} parent=5 // pred_check_branch
      %283 = sbr.rel (%p281) target = $region36
    $region35: #{tpu_custom_call.1} parent=5 // pred_region
      // Predicated region
      $region37: #{tpu_custom_call.1} parent=35 // pred_check
        %p284 = pneg %p56
      $region38: #{tpu_custom_call.1} parent=35 // pred_check_branch
        %286 = sbr.rel (%p284) target = $region40
      $region39: #{tpu_custom_call.1} parent=35 // pred_region
        %p287 = scmp.lt.s32.totalorder %s15, 1
        %s288 = scalar_select %p287, %s15, 1
        %s289 = smul.addr %s288, 32
        %s290 = smul.addr %s289, 8
        %s291 = scalar_lea.vmem %s1, %s290
      $region40: #{tpu_custom_call.1} parent=35 // pred_fallthru
        _
      // Predicated region
      $region41: #{tpu_custom_call.1} parent=35 // pred_check
        %p292 = pneg %p82
      $region42: #{tpu_custom_call.1} parent=35 // pred_check_branch
        %294 = sbr.rel (%p292) target = $region44
      $region43: #{tpu_custom_call.1} parent=35 // pred_region
        %p295 = scmp.lt.s32.totalorder %s15, 1
        %s296 = scalar_select %p295, %s15, 1
        %s297 = scalar_lea.vmem %s2, %s296
      $region44: #{tpu_custom_call.1} parent=35 // pred_fallthru
        _
      // Predicated region
      $region45: #{tpu_custom_call.1} parent=35 // pred_check
        %p298 = pneg %p129
      $region46: #{tpu_custom_call.1} parent=35 // pred_check_branch
        %300 = sbr.rel (%p298) target = $region48
      $region47: #{tpu_custom_call.1} parent=35 // pred_region
        %p301 = scmp.lt.s32.totalorder %s15, 1
        %s302 = scalar_select %p301, %s15, 1
        %s303 = smul.addr %s302, 8
        %s304 = smul.addr %s303, 8
        %s305 = scalar_lea.vmem %s4, %s304
      $region48: #{tpu_custom_call.1} parent=35 // pred_fallthru
        _
      // Predicated region
      $region49: #{tpu_custom_call.1} parent=35 // pred_check
        %p306 = pneg %p155
      $region50: #{tpu_custom_call.1} parent=35 // pred_check_branch
        %308 = sbr.rel (%p306) target = $region52
      $region51: #{tpu_custom_call.1} parent=35 // pred_region
        %p309 = scmp.lt.s32.totalorder %s15, 1
        %s310 = scalar_select %p309, %s15, 1
        %s311 = scalar_lea.vmem %s5, %s310
      $region52: #{tpu_custom_call.1} parent=35 // pred_fallthru
        _
    $region36: #{tpu_custom_call.1} parent=5 // pred_fallthru
      _
    %p312 = scmp.le.s32.totalorder 1, %s15
    %p313 = scmp.lt.s32.totalorder %s15, 3
    %p314 = pnand %p312, %p313
    %p315 = pneg %p314
    // Predicated region
    $region53: #{tpu_custom_call.1} parent=5 // pred_check
      _
    $region54: #{tpu_custom_call.1} parent=5 // pred_check_branch
      %317 = sbr.rel (%p314) target = $region56
    $region55: #{tpu_custom_call.1} parent=5 // pred_region
      %s318 = ssub.s32 %s15, 1
      %p319 = pneg %p36
      %p320 = pneg %p33
      %p321 = scmp.lt.s32.totalorder %s20, 1
      %s322 = scalar_select %p321, %s20, 1
      %s323 = smul.addr %s322, 32
      %s324 = smul.addr %s323, 8
      %s325 = scalar_lea.vmem %s1, %s324
      %p326 = pneg %p62
      %p327 = pneg %p59
      %p328 = scmp.lt.s32.totalorder %s20, 1
      %s329 = scalar_select %p328, %s20, 1
      %s330 = scalar_lea.vmem %s2, %s329
      %p331 = pneg %p88
      %p332 = pneg %p85
      %p333 = pneg %p109
      %p334 = pneg %p106
      %p335 = scmp.lt.s32.totalorder %s20, 1
      %s336 = scalar_select %p335, %s20, 1
      %s337 = smul.addr %s336, 8
      %s338 = smul.addr %s337, 8
      %s339 = scalar_lea.vmem %s4, %s338
      %p340 = pneg %p135
      %p341 = pneg %p132
      %p342 = scmp.lt.s32.totalorder %s20, 1
      %s343 = scalar_select %p342, %s20, 1
      %s344 = scalar_lea.vmem %s5, %s343
      %p345 = pneg %p161
      %p346 = pneg %p158
      %p347 = pneg %p182
      %p348 = pneg %p179
      %p349 = pneg %p203
      %p350 = pneg %p200
      %p351 = pneg %p224
      %p352 = pneg %p221
      %p353 = pneg %p250
      %p354 = pneg %p247
      %p355 = scmp.lt.s32.totalorder %s20, 1
      %s356 = scalar_select %p355, %s20, 1
      %s357 = smul.addr %s356, 32
      %s358 = smul.addr %s357, 8
      %s359 = scalar_lea.vmem %s9, %s358
      %p360 = scmp.lt.s32.totalorder %s20, 1
      %s361 = scalar_select %p360, %s20, 1
      %s362 = smul.addr %s361, 32
      %s363 = smul.addr %s362, 8
      %s364 = scalar_lea.vmem %s1, %s363
      %p365 = scmp.lt.s32.totalorder %s20, 1
      %s366 = scalar_select %p365, %s20, 1
      %s367 = scalar_lea.vmem %s2, %s366
      %p368 = scmp.lt.s32.totalorder %s20, 1
      %s369 = scalar_select %p368, %s20, 1
      %s370 = smul.addr %s369, 8
      %s371 = smul.addr %s370, 8
      %s372 = scalar_lea.vmem %s4, %s371
      %p373 = scmp.lt.s32.totalorder %s20, 1
      %s374 = scalar_select %p373, %s20, 1
      %s375 = scalar_lea.vmem %s5, %s374
      %p376 = scmp.lt.s32.totalorder %s20, 1
      %s377 = scalar_select %p376, %s20, 1
      %s378 = smul.addr %s377, 32
      %s379 = smul.addr %s378, 8
      %s380 = scalar_lea.vmem %s9, %s379
      %v382 = vld [vmem:[%s0] sm:$0x1]
      %v384 = vlaneseq
      %v385 = vshrl.u32 %v384, 7
      %v386 = vsub.s32 0, %v385
      %v387 = vrot.slane %v382, %v386
      %vm389 = vcmask 64512
      %390 = vst.msk [vmem:[%s380] sm:$0xff] %vm389, %v387
      %391 = vst.msk [vmem:[%s380 + $0x8] sm:$0xff] %vm389, %v387
      %392 = vst.msk [vmem:[%s380 + $0x10] sm:$0xff] %vm389, %v387
      %393 = vst.msk [vmem:[%s380 + $0x18] sm:$0xff] %vm389, %v387
      %394 = vst.msk [vmem:[%s380 + $0x20] sm:$0xff] %vm389, %v387
      %395 = vst.msk [vmem:[%s380 + $0x28] sm:$0xff] %vm389, %v387
      %396 = vst.msk [vmem:[%s380 + $0x30] sm:$0xff] %vm389, %v387
      %397 = vst.msk [vmem:[%s380 + $0x38] sm:$0xff] %vm389, %v387
      %398 = vst.msk [vmem:[%s380 + $0x40] sm:$0xff] %vm389, %v387
      %399 = vst.msk [vmem:[%s380 + $0x48] sm:$0xff] %vm389, %v387
      %400 = vst.msk [vmem:[%s380 + $0x50] sm:$0xff] %vm389, %v387
      %401 = vst.msk [vmem:[%s380 + $0x58] sm:$0xff] %vm389, %v387
      %402 = vst.msk [vmem:[%s380 + $0x60] sm:$0xff] %vm389, %v387
      %403 = vst.msk [vmem:[%s380 + $0x68] sm:$0xff] %vm389, %v387
      %404 = vst.msk [vmem:[%s380 + $0x70] sm:$0xff] %vm389, %v387
      %405 = vst.msk [vmem:[%s380 + $0x78] sm:$0xff] %vm389, %v387
      %406 = vst.msk [vmem:[%s380 + $0x80] sm:$0xff] %vm389, %v387
      %407 = vst.msk [vmem:[%s380 + $0x88] sm:$0xff] %vm389, %v387
      %408 = vst.msk [vmem:[%s380 + $0x90] sm:$0xff] %vm389, %v387
      %409 = vst.msk [vmem:[%s380 + $0x98] sm:$0xff] %vm389, %v387
      %410 = vst.msk [vmem:[%s380 + $0xa0] sm:$0xff] %vm389, %v387
      %411 = vst.msk [vmem:[%s380 + $0xa8] sm:$0xff] %vm389, %v387
      %412 = vst.msk [vmem:[%s380 + $0xb0] sm:$0xff] %vm389, %v387
      %413 = vst.msk [vmem:[%s380 + $0xb8] sm:$0xff] %vm389, %v387
      %414 = vst.msk [vmem:[%s380 + $0xc0] sm:$0xff] %vm389, %v387
      %415 = vst.msk [vmem:[%s380 + $0xc8] sm:$0xff] %vm389, %v387
      %416 = vst.msk [vmem:[%s380 + $0xd0] sm:$0xff] %vm389, %v387
      %417 = vst.msk [vmem:[%s380 + $0xd8] sm:$0xff] %vm389, %v387
      %418 = vst.msk [vmem:[%s380 + $0xe0] sm:$0xff] %vm389, %v387
      %419 = vst.msk [vmem:[%s380 + $0xe8] sm:$0xff] %vm389, %v387
      %420 = vst.msk [vmem:[%s380 + $0xf0] sm:$0xff] %vm389, %v387
      %421 = vst.msk [vmem:[%s380 + $0xf8] sm:$0xff] %vm389, %v387
      %v422 = vld [vmem:[%s364] sm:$0xff]
      %v423 = vld [vmem:[%s364 + $0x8] sm:$0xff]
      %v424 = vld [vmem:[%s364 + $0x10] sm:$0xff]
      %v425 = vld [vmem:[%s364 + $0x18] sm:$0xff]
      %v426 = vld [vmem:[%s364 + $0x20] sm:$0xff]
      %v427 = vld [vmem:[%s364 + $0x28] sm:$0xff]
      %v428 = vld [vmem:[%s364 + $0x30] sm:$0xff]
      %v429 = vld [vmem:[%s364 + $0x38] sm:$0xff]
      %v430 = vld [vmem:[%s364 + $0x40] sm:$0xff]
      %v431 = vld [vmem:[%s364 + $0x48] sm:$0xff]
      %v432 = vld [vmem:[%s364 + $0x50] sm:$0xff]
      %v433 = vld [vmem:[%s364 + $0x58] sm:$0xff]
      %v434 = vld [vmem:[%s364 + $0x60] sm:$0xff]
      %v435 = vld [vmem:[%s364 + $0x68] sm:$0xff]
      %v436 = vld [vmem:[%s364 + $0x70] sm:$0xff]
      %v437 = vld [vmem:[%s364 + $0x78] sm:$0xff]
      %v438 = vld [vmem:[%s364 + $0x80] sm:$0xff]
      %v439 = vld [vmem:[%s364 + $0x88] sm:$0xff]
      %v440 = vld [vmem:[%s364 + $0x90] sm:$0xff]
      %v441 = vld [vmem:[%s364 + $0x98] sm:$0xff]
      %v442 = vld [vmem:[%s364 + $0xa0] sm:$0xff]
      %v443 = vld [vmem:[%s364 + $0xa8] sm:$0xff]
      %v444 = vld [vmem:[%s364 + $0xb0] sm:$0xff]
      %v445 = vld [vmem:[%s364 + $0xb8] sm:$0xff]
      %v446 = vld [vmem:[%s364 + $0xc0] sm:$0xff]
      %v447 = vld [vmem:[%s364 + $0xc8] sm:$0xff]
      %v448 = vld [vmem:[%s364 + $0xd0] sm:$0xff]
      %v449 = vld [vmem:[%s364 + $0xd8] sm:$0xff]
      %v450 = vld [vmem:[%s364 + $0xe0] sm:$0xff]
      %v451 = vld [vmem:[%s364 + $0xe8] sm:$0xff]
      %v452 = vld [vmem:[%s364 + $0xf0] sm:$0xff]
      %v453 = vld [vmem:[%s364 + $0xf8] sm:$0xff]
      %vm454 = vcmask 31744
      %v455 = vsel %vm454, %v422, 0.0
      %v456 = vsel %vm454, %v423, 0.0
      %v457 = vadd.f32 %v455, %v456
      %v458 = vsel %vm454, %v424, 0.0
      %v459 = vadd.f32 %v457, %v458
      %v460 = vsel %vm454, %v425, 0.0
      %v461 = vadd.f32 %v459, %v460
      %v462 = vsel %vm454, %v426, 0.0
      %v463 = vadd.f32 %v461, %v462
      %v464 = vsel %vm454, %v427, 0.0
      %v465 = vadd.f32 %v463, %v464
      %v466 = vsel %vm454, %v428, 0.0
      %v467 = vadd.f32 %v465, %v466
      %v468 = vsel %vm454, %v429, 0.0
      %v469 = vadd.f32 %v467, %v468
      %v470 = vsel %vm454, %v430, 0.0
      %v471 = vadd.f32 %v469, %v470
      %v472 = vsel %vm454, %v431, 0.0
      %v473 = vadd.f32 %v471, %v472
      %v474 = vsel %vm454, %v432, 0.0
      %v475 = vadd.f32 %v473, %v474
      %v476 = vsel %vm454, %v433, 0.0
      %v477 = vadd.f32 %v475, %v476
      %v478 = vsel %vm454, %v434, 0.0
      %v479 = vadd.f32 %v477, %v478
      %v480 = vsel %vm454, %v435, 0.0
      %v481 = vadd.f32 %v479, %v480
      %v482 = vsel %vm454, %v436, 0.0
      %v483 = vadd.f32 %v481, %v482
      %v484 = vsel %vm454, %v437, 0.0
      %v485 = vadd.f32 %v483, %v484
      %v486 = vsel %vm454, %v438, 0.0
      %v487 = vadd.f32 %v485, %v486
      %v488 = vsel %vm454, %v439, 0.0
      %v489 = vadd.f32 %v487, %v488
      %v490 = vsel %vm454, %v440, 0.0
      %v491 = vadd.f32 %v489, %v490
      %v492 = vsel %vm454, %v441, 0.0
      %v493 = vadd.f32 %v491, %v492
      %v494 = vsel %vm454, %v442, 0.0
      %v495 = vadd.f32 %v493, %v494
      %v496 = vsel %vm454, %v443, 0.0
      %v497 = vadd.f32 %v495, %v496
      %v498 = vsel %vm454, %v444, 0.0
      %v499 = vadd.f32 %v497, %v498
      %v500 = vsel %vm454, %v445, 0.0
      %v501 = vadd.f32 %v499, %v500
      %v502 = vsel %vm454, %v446, 0.0
      %v503 = vadd.f32 %v501, %v502
      %v504 = vsel %vm454, %v447, 0.0
      %v505 = vadd.f32 %v503, %v504
      %v506 = vsel %vm454, %v448, 0.0
      %v507 = vadd.f32 %v505, %v506
      %v508 = vsel %vm454, %v449, 0.0
      %v509 = vadd.f32 %v507, %v508
      %v510 = vsel %vm454, %v450, 0.0
      %v511 = vadd.f32 %v509, %v510
      %v512 = vsel %vm454, %v451, 0.0
      %v513 = vadd.f32 %v511, %v512
      %v514 = vsel %vm454, %v452, 0.0
      %v515 = vadd.f32 %v513, %v514
      %v516 = vsel %vm454, %v453, 0.0
      %v517 = vadd.f32 %v515, %v516
      %v518 = vrot.slane %v517, 4
      %v519 = vadd.f32 %v517, %v518
      %v520 = vrot.slane %v519, 2
      %v521 = vadd.f32 %v519, %v520
      %v522 = vrot.slane %v521, 1
      %v523 = vadd.f32 %v521, %v522
      %v524 = vrcp.pop 256.0
      %v525 = vmul.f32 %v523, %v524
      %v526 = vsub.f32 %v422, %v525
      %v527 = vsub.f32 %v423, %v525
      %v528 = vsub.f32 %v424, %v525
      %v529 = vsub.f32 %v425, %v525
      %v530 = vsub.f32 %v426, %v525
      %v531 = vsub.f32 %v427, %v525
      %v532 = vsub.f32 %v428, %v525
      %v533 = vsub.f32 %v429, %v525
      %v534 = vsub.f32 %v430, %v525
      %v535 = vsub.f32 %v431, %v525
      %v536 = vsub.f32 %v432, %v525
      %v537 = vsub.f32 %v433, %v525
      %v538 = vsub.f32 %v434, %v525
      %v539 = vsub.f32 %v435, %v525
      %v540 = vsub.f32 %v436, %v525
      %v541 = vsub.f32 %v437, %v525
      %v542 = vsub.f32 %v438, %v525
      %v543 = vsub.f32 %v439, %v525
      %v544 = vsub.f32 %v440, %v525
      %v545 = vsub.f32 %v441, %v525
      %v546 = vsub.f32 %v442, %v525
      %v547 = vsub.f32 %v443, %v525
      %v548 = vsub.f32 %v444, %v525
      %v549 = vsub.f32 %v445, %v525
      %v550 = vsub.f32 %v446, %v525
      %v551 = vsub.f32 %v447, %v525
      %v552 = vsub.f32 %v448, %v525
      %v553 = vsub.f32 %v449, %v525
      %v554 = vsub.f32 %v450, %v525
      %v555 = vsub.f32 %v451, %v525
      %v556 = vsub.f32 %v452, %v525
      %v557 = vsub.f32 %v453, %v525
      %v558 = vmul.f32 %v526, %v526
      %v559 = vmul.f32 %v527, %v527
      %v560 = vmul.f32 %v528, %v528
      %v561 = vmul.f32 %v529, %v529
      %v562 = vmul.f32 %v530, %v530
      %v563 = vmul.f32 %v531, %v531
      %v564 = vmul.f32 %v532, %v532
      %v565 = vmul.f32 %v533, %v533
      %v566 = vmul.f32 %v534, %v534
      %v567 = vmul.f32 %v535, %v535
      %v568 = vmul.f32 %v536, %v536
      %v569 = vmul.f32 %v537, %v537
      %v570 = vmul.f32 %v538, %v538
      %v571 = vmul.f32 %v539, %v539
      %v572 = vmul.f32 %v540, %v540
      %v573 = vmul.f32 %v541, %v541
      %v574 = vmul.f32 %v542, %v542
      %v575 = vmul.f32 %v543, %v543
      %v576 = vmul.f32 %v544, %v544
      %v577 = vmul.f32 %v545, %v545
      %v578 = vmul.f32 %v546, %v546
      %v579 = vmul.f32 %v547, %v547
      %v580 = vmul.f32 %v548, %v548
      %v581 = vmul.f32 %v549, %v549
      %v582 = vmul.f32 %v550, %v550
      %v583 = vmul.f32 %v551, %v551
      %v584 = vmul.f32 %v552, %v552
      %v585 = vmul.f32 %v553, %v553
      %v586 = vmul.f32 %v554, %v554
      %v587 = vmul.f32 %v555, %v555
      %v588 = vmul.f32 %v556, %v556
      %v589 = vmul.f32 %v557, %v557
      %v590 = vsel %vm454, %v558, 0.0
      %v591 = vsel %vm454, %v559, 0.0
      %v592 = vadd.f32 %v590, %v591
      %v593 = vsel %vm454, %v560, 0.0
      %v594 = vadd.f32 %v592, %v593
      %v595 = vsel %vm454, %v561, 0.0
      %v596 = vadd.f32 %v594, %v595
      %v597 = vsel %vm454, %v562, 0.0
      %v598 = vadd.f32 %v596, %v597
      %v599 = vsel %vm454, %v563, 0.0
      %v600 = vadd.f32 %v598, %v599
      %v601 = vsel %vm454, %v564, 0.0
      %v602 = vadd.f32 %v600, %v601
      %v603 = vsel %vm454, %v565, 0.0
      %v604 = vadd.f32 %v602, %v603
      %v605 = vsel %vm454, %v566, 0.0
      %v606 = vadd.f32 %v604, %v605
      %v607 = vsel %vm454, %v567, 0.0
      %v608 = vadd.f32 %v606, %v607
      %v609 = vsel %vm454, %v568, 0.0
      %v610 = vadd.f32 %v608, %v609
      %v611 = vsel %vm454, %v569, 0.0
      %v612 = vadd.f32 %v610, %v611
      %v613 = vsel %vm454, %v570, 0.0
      %v614 = vadd.f32 %v612, %v613
      %v615 = vsel %vm454, %v571, 0.0
      %v616 = vadd.f32 %v614, %v615
      %v617 = vsel %vm454, %v572, 0.0
      %v618 = vadd.f32 %v616, %v617
      %v619 = vsel %vm454, %v573, 0.0
      %v620 = vadd.f32 %v618, %v619
      %v621 = vsel %vm454, %v574, 0.0
      %v622 = vadd.f32 %v620, %v621
      %v623 = vsel %vm454, %v575, 0.0
      %v624 = vadd.f32 %v622, %v623
      %v625 = vsel %vm454, %v576, 0.0
      %v626 = vadd.f32 %v624, %v625
      %v627 = vsel %vm454, %v577, 0.0
      %v628 = vadd.f32 %v626, %v627
      %v629 = vsel %vm454, %v578, 0.0
      %v630 = vadd.f32 %v628, %v629
      %v631 = vsel %vm454, %v579, 0.0
      %v632 = vadd.f32 %v630, %v631
      %v633 = vsel %vm454, %v580, 0.0
      %v634 = vadd.f32 %v632, %v633
      %v635 = vsel %vm454, %v581, 0.0
      %v636 = vadd.f32 %v634, %v635
      %v637 = vsel %vm454, %v582, 0.0
      %v638 = vadd.f32 %v636, %v637
      %v639 = vsel %vm454, %v583, 0.0
      %v640 = vadd.f32 %v638, %v639
      %v641 = vsel %vm454, %v584, 0.0
      %v642 = vadd.f32 %v640, %v641
      %v643 = vsel %vm454, %v585, 0.0
      %v644 = vadd.f32 %v642, %v643
      %v645 = vsel %vm454, %v586, 0.0
      %v646 = vadd.f32 %v644, %v645
      %v647 = vsel %vm454, %v587, 0.0
      %v648 = vadd.f32 %v646, %v647
      %v649 = vsel %vm454, %v588, 0.0
      %v650 = vadd.f32 %v648, %v649
      %v651 = vsel %vm454, %v589, 0.0
      %v652 = vadd.f32 %v650, %v651
      %v653 = vrot.slane %v652, 4
      %v654 = vadd.f32 %v652, %v653
      %v655 = vrot.slane %v654, 2
      %v656 = vadd.f32 %v654, %v655
      %v657 = vrot.slane %v656, 1
      %v658 = vadd.f32 %v656, %v657
      %v659 = vmul.f32 %v658, %v524
      %v660 = vadd.f32 %v659, 1e-05
      %v661 = vrsqrt.pop %v660
      %v662 = vmul.f32 %v526, %v661
      %v663 = vmul.f32 %v527, %v661
      %v664 = vmul.f32 %v528, %v661
      %v665 = vmul.f32 %v529, %v661
      %v666 = vmul.f32 %v530, %v661
      %v667 = vmul.f32 %v531, %v661
      %v668 = vmul.f32 %v532, %v661
      %v669 = vmul.f32 %v533, %v661
      %v670 = vmul.f32 %v534, %v661
      %v671 = vmul.f32 %v535, %v661
      %v672 = vmul.f32 %v536, %v661
      %v673 = vmul.f32 %v537, %v661
      %v674 = vmul.f32 %v538, %v661
      %v675 = vmul.f32 %v539, %v661
      %v676 = vmul.f32 %v540, %v661
      %v677 = vmul.f32 %v541, %v661
      %v678 = vmul.f32 %v542, %v661
      %v679 = vmul.f32 %v543, %v661
      %v680 = vmul.f32 %v544, %v661
      %v681 = vmul.f32 %v545, %v661
      %v682 = vmul.f32 %v546, %v661
      %v683 = vmul.f32 %v547, %v661
      %v684 = vmul.f32 %v548, %v661
      %v685 = vmul.f32 %v549, %v661
      %v686 = vmul.f32 %v550, %v661
      %v687 = vmul.f32 %v551, %v661
      %v688 = vmul.f32 %v552, %v661
      %v689 = vmul.f32 %v553, %v661
      %v690 = vmul.f32 %v554, %v661
      %v691 = vmul.f32 %v555, %v661
      %v692 = vmul.f32 %v556, %v661
      %v693 = vmul.f32 %v557, %v661
      %v694 = vsel %vm454, %v525, 0.0
      %695 = vadd.xlane.f32.xlu0 %v694
      %v696 = vpop.xlane.xlu0 %695
      %v697 = vrcp.pop 4.0
      %v698 = vmul.f32 %v696, %v697
      %v699 = vsub.f32 %v525, %v698
      %v700 = vmul.f32 %v699, %v699
      %v701 = vsel %vm454, %v700, 0.0
      %702 = vadd.xlane.f32.xlu0 %v701
      %v703 = vpop.xlane.xlu0 %702
      %v704 = vrcp.pop 3.0
      %v705 = vmul.f32 %v703, %v704
      %v706 = vadd.f32 %v705, 1e-05
      %v707 = vrsqrt.pop %v706
      %v708 = vmul.f32 %v699, %v707
      %v709 = vld [vmem:[%s367] sm:$0x1]
      %v711 = vlaneseq
      %v712 = vshrl.u32 %v711, 7
      %v713 = vsub.s32 0, %v712
      %v714 = vrot.slane %v709, %v713
      %715 = vrot.lane.b32.xlu0 %v714, 124
      %v716 = vpop.permute.xlu0 %715
      %v718 = vmul.f32 %v708, %v716
      %v719 = vlaneseq
      %v720 = vshrl.u32 %v719, 7
      %v721 = vsub.s32 0, %v720
      %v722 = vrot.slane %v718, %v721
      %v723 = vadd.f32 %v662, %v722
      %v724 = vadd.f32 %v663, %v722
      %v725 = vadd.f32 %v664, %v722
      %v726 = vadd.f32 %v665, %v722
      %v727 = vadd.f32 %v666, %v722
      %v728 = vadd.f32 %v667, %v722
      %v729 = vadd.f32 %v668, %v722
      %v730 = vadd.f32 %v669, %v722
      %v731 = vadd.f32 %v670, %v722
      %v732 = vadd.f32 %v671, %v722
      %v733 = vadd.f32 %v672, %v722
      %v734 = vadd.f32 %v673, %v722
      %v735 = vadd.f32 %v674, %v722
      %v736 = vadd.f32 %v675, %v722
      %v737 = vadd.f32 %v676, %v722
      %v738 = vadd.f32 %v677, %v722
      %v739 = vadd.f32 %v678, %v722
      %v740 = vadd.f32 %v679, %v722
      %v741 = vadd.f32 %v680, %v722
      %v742 = vadd.f32 %v681, %v722
      %v743 = vadd.f32 %v682, %v722
      %v744 = vadd.f32 %v683, %v722
      %v745 = vadd.f32 %v684, %v722
      %v746 = vadd.f32 %v685, %v722
      %v747 = vadd.f32 %v686, %v722
      %v748 = vadd.f32 %v687, %v722
      %v749 = vadd.f32 %v688, %v722
      %v750 = vadd.f32 %v689, %v722
      %v751 = vadd.f32 %v690, %v722
      %v752 = vadd.f32 %v691, %v722
      %v753 = vadd.f32 %v692, %v722
      %v754 = vadd.f32 %v693, %v722
      %v756 = vmul.f32 %v714, %v723
      %v757 = vmul.f32 %v714, %v724
      %v758 = vmul.f32 %v714, %v725
      %v759 = vmul.f32 %v714, %v726
      %v760 = vmul.f32 %v714, %v727
      %v761 = vmul.f32 %v714, %v728
      %v762 = vmul.f32 %v714, %v729
      %v763 = vmul.f32 %v714, %v730
      %v764 = vmul.f32 %v714, %v731
      %v765 = vmul.f32 %v714, %v732
      %v766 = vmul.f32 %v714, %v733
      %v767 = vmul.f32 %v714, %v734
      %v768 = vmul.f32 %v714, %v735
      %v769 = vmul.f32 %v714, %v736
      %v770 = vmul.f32 %v714, %v737
      %v771 = vmul.f32 %v714, %v738
      %v772 = vmul.f32 %v714, %v739
      %v773 = vmul.f32 %v714, %v740
      %v774 = vmul.f32 %v714, %v741
      %v775 = vmul.f32 %v714, %v742
      %v776 = vmul.f32 %v714, %v743
      %v777 = vmul.f32 %v714, %v744
      %v778 = vmul.f32 %v714, %v745
      %v779 = vmul.f32 %v714, %v746
      %v780 = vmul.f32 %v714, %v747
      %v781 = vmul.f32 %v714, %v748
      %v782 = vmul.f32 %v714, %v749
      %v783 = vmul.f32 %v714, %v750
      %v784 = vmul.f32 %v714, %v751
      %v785 = vmul.f32 %v714, %v752
      %v786 = vmul.f32 %v714, %v753
      %v787 = vmul.f32 %v714, %v754
      %788 = vrot.lane.b32.xlu0 %v714, 120
      %v789 = vpop.permute.xlu0 %788
      %v791 = vadd.f32 %v756, %v789
      %v792 = vadd.f32 %v757, %v789
      %v793 = vadd.f32 %v758, %v789
      %v794 = vadd.f32 %v759, %v789
      %v795 = vadd.f32 %v760, %v789
      %v796 = vadd.f32 %v761, %v789
      %v797 = vadd.f32 %v762, %v789
      %v798 = vadd.f32 %v763, %v789
      %v799 = vadd.f32 %v764, %v789
      %v800 = vadd.f32 %v765, %v789
      %v801 = vadd.f32 %v766, %v789
      %v802 = vadd.f32 %v767, %v789
      %v803 = vadd.f32 %v768, %v789
      %v804 = vadd.f32 %v769, %v789
      %v805 = vadd.f32 %v770, %v789
      %v806 = vadd.f32 %v771, %v789
      %v807 = vadd.f32 %v772, %v789
      %v808 = vadd.f32 %v773, %v789
      %v809 = vadd.f32 %v774, %v789
      %v810 = vadd.f32 %v775, %v789
      %v811 = vadd.f32 %v776, %v789
      %v812 = vadd.f32 %v777, %v789
      %v813 = vadd.f32 %v778, %v789
      %v814 = vadd.f32 %v779, %v789
      %v815 = vadd.f32 %v780, %v789
      %v816 = vadd.f32 %v781, %v789
      %v817 = vadd.f32 %v782, %v789
      %v818 = vadd.f32 %v783, %v789
      %v819 = vadd.f32 %v784, %v789
      %v820 = vadd.f32 %v785, %v789
      %v821 = vadd.f32 %v786, %v789
      %v822 = vadd.f32 %v787, %v789
      %vm856 = vcmask 1040384
      %v857 = vrot.slane 0.0, 7
      %v858 = vsel %vm856, %v857, %v857
      %v859 = vrot.slane %v791, 7
      %v860 = vrot.slane %v792, 7
      %v861 = vsel %vm856, %v859, %v860
      %v862 = vrot.slane %v793, 7
      %v863 = vrot.slane %v794, 7
      %v864 = vsel %vm856, %v862, %v863
      %v865 = vrot.slane %v795, 7
      %v866 = vrot.slane %v796, 7
      %v867 = vsel %vm856, %v865, %v866
      %v868 = vrot.slane %v797, 7
      %v869 = vrot.slane %v798, 7
      %v870 = vsel %vm856, %v868, %v869
      %v871 = vrot.slane %v799, 7
      %v872 = vrot.slane %v800, 7
      %v873 = vsel %vm856, %v871, %v872
      %v874 = vrot.slane %v801, 7
      %v875 = vrot.slane %v802, 7
      %v876 = vsel %vm856, %v874, %v875
      %v877 = vrot.slane %v803, 7
      %v878 = vrot.slane %v804, 7
      %v879 = vsel %vm856, %v877, %v878
      %v880 = vrot.slane %v805, 7
      %v881 = vrot.slane %v806, 7
      %v882 = vsel %vm856, %v880, %v881
      %v883 = vrot.slane %v807, 7
      %v884 = vrot.slane %v808, 7
      %v885 = vsel %vm856, %v883, %v884
      %v886 = vrot.slane %v809, 7
      %v887 = vrot.slane %v810, 7
      %v888 = vsel %vm856, %v886, %v887
      %v889 = vrot.slane %v811, 7
      %v890 = vrot.slane %v812, 7
      %v891 = vsel %vm856, %v889, %v890
      %v892 = vrot.slane %v813, 7
      %v893 = vrot.slane %v814, 7
      %v894 = vsel %vm856, %v892, %v893
      %v895 = vrot.slane %v815, 7
      %v896 = vrot.slane %v816, 7
      %v897 = vsel %vm856, %v895, %v896
      %v898 = vrot.slane %v817, 7
      %v899 = vrot.slane %v818, 7
      %v900 = vsel %vm856, %v898, %v899
      %v901 = vrot.slane %v819, 7
      %v902 = vrot.slane %v820, 7
      %v903 = vsel %vm856, %v901, %v902
      %v904 = vrot.slane %v821, 7
      %v905 = vrot.slane %v822, 7
      %v906 = vsel %vm856, %v904, %v905
      %v957 = vsel %vm856, 0.0, %v857
      %v958 = vsel %vm856, 0.0, %v859
      %v959 = vsel %vm856, 0.0, %v862
      %v960 = vsel %vm856, 0.0, %v865
      %v961 = vsel %vm856, 0.0, %v868
      %v962 = vsel %vm856, 0.0, %v871
      %v963 = vsel %vm856, 0.0, %v874
      %v964 = vsel %vm856, 0.0, %v877
      %v965 = vsel %vm856, 0.0, %v880
      %v966 = vsel %vm856, 0.0, %v883
      %v967 = vsel %vm856, 0.0, %v886
      %v968 = vsel %vm856, 0.0, %v889
      %v969 = vsel %vm856, 0.0, %v892
      %v970 = vsel %vm856, 0.0, %v895
      %v971 = vsel %vm856, 0.0, %v898
      %v972 = vsel %vm856, 0.0, %v901
      %v973 = vsel %vm856, 0.0, %v904
      %v974 = vsel %vm856, %v857, 0.0
      %v975 = vsel %vm856, %v860, 0.0
      %v976 = vsel %vm856, %v863, 0.0
      %v977 = vsel %vm856, %v866, 0.0
      %v978 = vsel %vm856, %v869, 0.0
      %v979 = vsel %vm856, %v872, 0.0
      %v980 = vsel %vm856, %v875, 0.0
      %v981 = vsel %vm856, %v878, 0.0
      %v982 = vsel %vm856, %v881, 0.0
      %v983 = vsel %vm856, %v884, 0.0
      %v984 = vsel %vm856, %v887, 0.0
      %v985 = vsel %vm856, %v890, 0.0
      %v986 = vsel %vm856, %v893, 0.0
      %v987 = vsel %vm856, %v896, 0.0
      %v988 = vsel %vm856, %v899, 0.0
      %v989 = vsel %vm856, %v902, 0.0
      %v990 = vsel %vm856, %v905, 0.0
      %v991 = vpack.c.bf16 %v858, %v957
      %v992 = vpack.c.bf16 %v861, %v958
      %v993 = vpack.c.bf16 %v864, %v959
      %v994 = vpack.c.bf16 %v867, %v960
      %v995 = vpack.c.bf16 %v870, %v961
      %v996 = vpack.c.bf16 %v873, %v962
      %v997 = vpack.c.bf16 %v876, %v963
      %v998 = vpack.c.bf16 %v879, %v964
      %v999 = vpack.c.bf16 %v882, %v965
      %v1000 = vpack.c.bf16 %v885, %v966
      %v1001 = vpack.c.bf16 %v888, %v967
      %v1002 = vpack.c.bf16 %v891, %v968
      %v1003 = vpack.c.bf16 %v894, %v969
      %v1004 = vpack.c.bf16 %v897, %v970
      %v1005 = vpack.c.bf16 %v900, %v971
      %v1006 = vpack.c.bf16 %v903, %v972
      %v1007 = vld [vmem:[%s3] sm:$0x3]
      %vm1040 = vcmask 1046528
      %v1041 = vrot.slane %v957, 1
      %v1042 = vrot.slane %v858, 1
      %v1043 = vsel %vm1040, %v1041, %v1042
      %v1044 = vrot.slane %v974, 1
      %v1045 = vsel %vm1040, %v1042, %v1044
      %v1046 = vrot.slane %v958, 1
      %v1047 = vrot.slane %v861, 1
      %v1048 = vsel %vm1040, %v1046, %v1047
      %v1049 = vrot.slane %v975, 1
      %v1050 = vsel %vm1040, %v1047, %v1049
      %v1051 = vrot.slane %v959, 1
      %v1052 = vrot.slane %v864, 1
      %v1053 = vsel %vm1040, %v1051, %v1052
      %v1054 = vrot.slane %v976, 1
      %v1055 = vsel %vm1040, %v1052, %v1054
      %v1056 = vrot.slane %v960, 1
      %v1057 = vrot.slane %v867, 1
      %v1058 = vsel %vm1040, %v1056, %v1057
      %v1059 = vrot.slane %v977, 1
      %v1060 = vsel %vm1040, %v1057, %v1059
      %v1061 = vrot.slane %v961, 1
      %v1062 = vrot.slane %v870, 1
      %v1063 = vsel %vm1040, %v1061, %v1062
      %v1064 = vrot.slane %v978, 1
      %v1065 = vsel %vm1040, %v1062, %v1064
      %v1066 = vrot.slane %v962, 1
      %v1067 = vrot.slane %v873, 1
      %v1068 = vsel %vm1040, %v1066, %v1067
      %v1069 = vrot.slane %v979, 1
      %v1070 = vsel %vm1040, %v1067, %v1069
      %v1071 = vrot.slane %v963, 1
      %v1072 = vrot.slane %v876, 1
      %v1073 = vsel %vm1040, %v1071, %v1072
      %v1074 = vrot.slane %v980, 1
      %v1075 = vsel %vm1040, %v1072, %v1074
      %v1076 = vrot.slane %v964, 1
      %v1077 = vrot.slane %v879, 1
      %v1078 = vsel %vm1040, %v1076, %v1077
      %v1079 = vrot.slane %v981, 1
      %v1080 = vsel %vm1040, %v1077, %v1079
      %v1081 = vrot.slane %v965, 1
      %v1082 = vrot.slane %v882, 1
      %v1083 = vsel %vm1040, %v1081, %v1082
      %v1084 = vrot.slane %v982, 1
      %v1085 = vsel %vm1040, %v1082, %v1084
      %v1086 = vrot.slane %v966, 1
      %v1087 = vrot.slane %v885, 1
      %v1088 = vsel %vm1040, %v1086, %v1087
      %v1089 = vrot.slane %v983, 1
      %v1090 = vsel %vm1040, %v1087, %v1089
      %v1091 = vrot.slane %v967, 1
      %v1092 = vrot.slane %v888, 1
      %v1093 = vsel %vm1040, %v1091, %v1092
      %v1094 = vrot.slane %v984, 1
      %v1095 = vsel %vm1040, %v1092, %v1094
      %v1096 = vrot.slane %v968, 1
      %v1097 = vrot.slane %v891, 1
      %v1098 = vsel %vm1040, %v1096, %v1097
      %v1099 = vrot.slane %v985, 1
      %v1100 = vsel %vm1040, %v1097, %v1099
      %v1101 = vrot.slane %v969, 1
      %v1102 = vrot.slane %v894, 1
      %v1103 = vsel %vm1040, %v1101, %v1102
      %v1104 = vrot.slane %v986, 1
      %v1105 = vsel %vm1040, %v1102, %v1104
      %v1106 = vrot.slane %v970, 1
      %v1107 = vrot.slane %v897, 1
      %v1108 = vsel %vm1040, %v1106, %v1107
      %v1109 = vrot.slane %v987, 1
      %v1110 = vsel %vm1040, %v1107, %v1109
      %v1111 = vrot.slane %v971, 1
      %v1112 = vrot.slane %v900, 1
      %v1113 = vsel %vm1040, %v1111, %v1112
      %v1114 = vrot.slane %v988, 1
      %v1115 = vsel %vm1040, %v1112, %v1114
      %v1116 = vrot.slane %v972, 1
      %v1117 = vrot.slane %v903, 1
      %v1118 = vsel %vm1040, %v1116, %v1117
      %v1119 = vrot.slane %v989, 1
      %v1120 = vsel %vm1040, %v1117, %v1119
      %v1153 = vpack.c.bf16 %v1045, %v1043
      %v1154 = vpack.c.bf16 %v1050, %v1048
      %v1155 = vpack.c.bf16 %v1055, %v1053
      %v1156 = vpack.c.bf16 %v1060, %v1058
      %v1157 = vpack.c.bf16 %v1065, %v1063
      %v1158 = vpack.c.bf16 %v1070, %v1068
      %v1159 = vpack.c.bf16 %v1075, %v1073
      %v1160 = vpack.c.bf16 %v1080, %v1078
      %v1161 = vpack.c.bf16 %v1085, %v1083
      %v1162 = vpack.c.bf16 %v1090, %v1088
      %v1163 = vpack.c.bf16 %v1095, %v1093
      %v1164 = vpack.c.bf16 %v1100, %v1098
      %v1165 = vpack.c.bf16 %v1105, %v1103
      %v1166 = vpack.c.bf16 %v1110, %v1108
      %v1167 = vpack.c.bf16 %v1115, %v1113
      %v1168 = vpack.c.bf16 %v1120, %v1118
      %s1169 = scalar_lea.vmem %s3, 2
      %v1170 = vld [vmem:[%s1169] sm:$0x3]
      %v1172 = vsel %vm454, %v1153, 0
      %v1175 = vsel %vm454, %v1154, 0
      %v1178 = vsel %vm454, %v1155, 0
      %v1181 = vsel %vm454, %v1156, 0
      %v1184 = vsel %vm454, %v1157, 0
      %v1187 = vsel %vm454, %v1158, 0
      %v1190 = vsel %vm454, %v1159, 0
      %v1193 = vsel %vm454, %v1160, 0
      %v1196 = vsel %vm454, %v1161, 0
      %v1199 = vsel %vm454, %v1162, 0
      %v1202 = vsel %vm454, %v1163, 0
      %v1205 = vsel %vm454, %v1164, 0
      %v1208 = vsel %vm454, %v1165, 0
      %v1211 = vsel %vm454, %v1166, 0
      %v1214 = vsel %vm454, %v1167, 0
      %v1217 = vsel %vm454, %v1168, 0
      %vm1219 = vcmask 1041408
      %v1221 = vsel %vm1219, %v1170, 0
      %1223 = vmatprep.subr.bf16.mxu0 0
      %1224 = vmatpush1.bf16.msra.mxu0 %v1221
      %1225 = vmatprep.subr.bf16.mxu0 0
      %1226 = vmatpush1.bf16.msra.mxu0 0
      %1227 = vmatprep.subr.bf16.mxu0 0
      %1228 = vmatpush1.bf16.msra.mxu0 0
      %1229 = vmatprep.subr.bf16.mxu0 0
      %1230 = vmatpush1.bf16.msra.mxu0 0
      %1231 = vmatprep.subr.bf16.mxu0 0
      %1232 = vmatpush1.bf16.msra.mxu0 0
      %1233 = vmatprep.subr.bf16.mxu0 0
      %1234 = vmatpush1.bf16.msra.mxu0 0
      %1235 = vmatprep.subr.bf16.mxu0 0
      %1236 = vmatpush1.bf16.msra.mxu0 0
      %1237 = vmatprep.subr.bf16.mxu0 0
      %1238 = vmatpush1.bf16.msra.mxu0 0
      %1239 = vmatprep.subr.bf16.mxu0 0
      %1240 = vmatpush1.bf16.msra.mxu0 0
      %1241 = vmatprep.subr.bf16.mxu0 0
      %1242 = vmatpush1.bf16.msra.mxu0 0
      %1243 = vmatprep.subr.bf16.mxu0 0
      %1244 = vmatpush1.bf16.msra.mxu0 0
      %1245 = vmatprep.subr.bf16.mxu0 0
      %1246 = vmatpush1.bf16.msra.mxu0 0
      %1247 = vmatprep.subr.bf16.mxu0 0
      %1248 = vmatpush1.bf16.msra.mxu0 0
      %1249 = vmatprep.subr.bf16.mxu0 0
      %1250 = vmatpush1.bf16.msra.mxu0 0
      %1251 = vmatprep.subr.bf16.mxu0 0
      %1252 = vmatpush1.bf16.msra.mxu0 0
      %1253 = vmatprep.subr.bf16.mxu0 0
      %1254 = vmatpush1.bf16.msra.mxu0 0
      %1255 = vmatprep.mubr.bf16.mxu0 0
      %1256 = vmatmul.mubr.bf16.gmra.mrb[0].mxu0 %v1172
      %v1257 = vpop.f32.mrb[0].mxu0
      %v1258 = vadd.f32 0.0, %v1257
      %v1259 = vpop.f32.mrb[0].mxu0
      %v1260 = vpop.f32.mrb[0].mxu0
      %v1261 = vadd.f32 0.0, %v1260
      %v1262 = vpop.f32.mrb[0].mxu0
      %1263 = vmatprep.mubr.bf16.mxu0 0
      %1264 = vmatmul.mubr.bf16.gmra.mrb[0].mxu0 %v1175
      %v1265 = vpop.f32.mrb[0].mxu0
      %v1266 = vadd.f32 0.0, %v1265
      %v1267 = vpop.f32.mrb[0].mxu0
      %v1268 = vpop.f32.mrb[0].mxu0
      %v1269 = vadd.f32 0.0, %v1268
      %v1270 = vpop.f32.mrb[0].mxu0
      %1271 = vmatprep.mubr.bf16.mxu0 0
      %1272 = vmatmul.mubr.bf16.gmra.mrb[0].mxu0 %v1178
      %v1273 = vpop.f32.mrb[0].mxu0
      %v1274 = vadd.f32 0.0, %v1273
      %v1275 = vpop.f32.mrb[0].mxu0
      %v1276 = vpop.f32.mrb[0].mxu0
      %v1277 = vadd.f32 0.0, %v1276
      %v1278 = vpop.f32.mrb[0].mxu0
      %1279 = vmatprep.mubr.bf16.mxu0 0
      %1280 = vmatmul.mubr.bf16.gmra.mrb[0].mxu0 %v1181
      %v1281 = vpop.f32.mrb[0].mxu0
      %v1282 = vadd.f32 0.0, %v1281
      %v1283 = vpop.f32.mrb[0].mxu0
      %v1284 = vpop.f32.mrb[0].mxu0
      %v1285 = vadd.f32 0.0, %v1284
      %v1286 = vpop.f32.mrb[0].mxu0
      %1287 = vmatprep.mubr.bf16.mxu0 0
      %1288 = vmatmul.mubr.bf16.gmra.mrb[0].mxu0 %v1184
      %v1289 = vpop.f32.mrb[0].mxu0
      %v1290 = vadd.f32 0.0, %v1289
      %v1291 = vpop.f32.mrb[0].mxu0
      %v1292 = vpop.f32.mrb[0].mxu0
      %v1293 = vadd.f32 0.0, %v1292
      %v1294 = vpop.f32.mrb[0].mxu0
      %1295 = vmatprep.mubr.bf16.mxu0 0
      %1296 = vmatmul.mubr.bf16.gmra.mrb[0].mxu0 %v1187
      %v1297 = vpop.f32.mrb[0].mxu0
      %v1298 = vadd.f32 0.0, %v1297
      %v1299 = vpop.f32.mrb[0].mxu0
      %v1300 = vpop.f32.mrb[0].mxu0
      %v1301 = vadd.f32 0.0, %v1300
      %v1302 = vpop.f32.mrb[0].mxu0
      %1303 = vmatprep.mubr.bf16.mxu0 0
      %1304 = vmatmul.mubr.bf16.gmra.mrb[0].mxu0 %v1190
      %v1305 = vpop.f32.mrb[0].mxu0
      %v1306 = vadd.f32 0.0, %v1305
      %v1307 = vpop.f32.mrb[0].mxu0
      %v1308 = vpop.f32.mrb[0].mxu0
      %v1309 = vadd.f32 0.0, %v1308
      %v1310 = vpop.f32.mrb[0].mxu0
      %1311 = vmatprep.mubr.bf16.mxu0 0
      %1312 = vmatmul.mubr.bf16.gmra.mrb[0].mxu0 %v1193
      %v1313 = vpop.f32.mrb[0].mxu0
      %v1314 = vadd.f32 0.0, %v1313
      %v1315 = vpop.f32.mrb[0].mxu0
      %v1316 = vpop.f32.mrb[0].mxu0
      %v1317 = vadd.f32 0.0, %v1316
      %v1318 = vpop.f32.mrb[0].mxu0
      %1319 = vmatprep.mubr.bf16.mxu0 0
      %1320 = vmatmul.mubr.bf16.gmra.mrb[0].mxu0 %v1196
      %v1321 = vpop.f32.mrb[0].mxu0
      %v1322 = vadd.f32 0.0, %v1321
      %v1323 = vpop.f32.mrb[0].mxu0
      %v1324 = vpop.f32.mrb[0].mxu0
      %v1325 = vadd.f32 0.0, %v1324
      %v1326 = vpop.f32.mrb[0].mxu0
      %1327 = vmatprep.mubr.bf16.mxu0 0
      %1328 = vmatmul.mubr.bf16.gmra.mrb[0].mxu0 %v1199
      %v1329 = vpop.f32.mrb[0].mxu0
      %v1330 = vadd.f32 0.0, %v1329
      %v1331 = vpop.f32.mrb[0].mxu0
      %v1332 = vpop.f32.mrb[0].mxu0
      %v1333 = vadd.f32 0.0, %v1332
      %v1334 = vpop.f32.mrb[0].mxu0
      %1335 = vmatprep.mubr.bf16.mxu0 0
      %1336 = vmatmul.mubr.bf16.gmra.mrb[0].mxu0 %v1202
      %v1337 = vpop.f32.mrb[0].mxu0
      %v1338 = vadd.f32 0.0, %v1337
      %v1339 = vpop.f32.mrb[0].mxu0
      %v1340 = vpop.f32.mrb[0].mxu0
      %v1341 = vadd.f32 0.0, %v1340
      %v1342 = vpop.f32.mrb[0].mxu0
      %1343 = vmatprep.mubr.bf16.mxu0 0
      %1344 = vmatmul.mubr.bf16.gmra.mrb[0].mxu0 %v1205
      %v1345 = vpop.f32.mrb[0].mxu0
      %v1346 = vadd.f32 0.0, %v1345
      %v1347 = vpop.f32.mrb[0].mxu0
      %v1348 = vpop.f32.mrb[0].mxu0
      %v1349 = vadd.f32 0.0, %v1348
      %v1350 = vpop.f32.mrb[0].mxu0
      %1351 = vmatprep.mubr.bf16.mxu0 0
      %1352 = vmatmul.mubr.bf16.gmra.mrb[0].mxu0 %v1208
      %v1353 = vpop.f32.mrb[0].mxu0
      %v1354 = vadd.f32 0.0, %v1353
      %v1355 = vpop.f32.mrb[0].mxu0
      %v1356 = vpop.f32.mrb[0].mxu0
      %v1357 = vadd.f32 0.0, %v1356
      %v1358 = vpop.f32.mrb[0].mxu0
      %1359 = vmatprep.mubr.bf16.mxu0 0
      %1360 = vmatmul.mubr.bf16.gmra.mrb[0].mxu0 %v1211
      %v1361 = vpop.f32.mrb[0].mxu0
      %v1362 = vadd.f32 0.0, %v1361
      %v1363 = vpop.f32.mrb[0].mxu0
      %v1364 = vpop.f32.mrb[0].mxu0
      %v1365 = vadd.f32 0.0, %v1364
      %v1366 = vpop.f32.mrb[0].mxu0
      %1367 = vmatprep.mubr.bf16.mxu0 0
      %1368 = vmatmul.mubr.bf16.gmra.mrb[0].mxu0 %v1214
      %v1369 = vpop.f32.mrb[0].mxu0
      %v1370 = vadd.f32 0.0, %v1369
      %v1371 = vpop.f32.mrb[0].mxu0
      %v1372 = vpop.f32.mrb[0].mxu0
      %v1373 = vadd.f32 0.0, %v1372
      %v1374 = vpop.f32.mrb[0].mxu0
      %1375 = vmatprep.mubr.bf16.mxu0 0
      %1376 = vmatmul.mubr.bf16.gmra.mrb[0].mxu0 %v1217
      %v1377 = vpop.f32.mrb[0].mxu0
      %v1378 = vadd.f32 0.0, %v1377
      %v1379 = vpop.f32.mrb[0].mxu0
      %v1380 = vpop.f32.mrb[0].mxu0
      %v1381 = vadd.f32 0.0, %v1380
      %v1382 = vpop.f32.mrb[0].mxu0
      %1383 = vdwg.mxu0
      %v1385 = vsel %vm454, %v991, 0
      %v1388 = vsel %vm454, %v992, 0
      %v1391 = vsel %vm454, %v993, 0
      %v1394 = vsel %vm454, %v994, 0
      %v1397 = vsel %vm454, %v995, 0
      %v1400 = vsel %vm454, %v996, 0
      %v1403 = vsel %vm454, %v997, 0
      %v1406 = vsel %vm454, %v998, 0
      %v1409 = vsel %vm454, %v999, 0
      %v1412 = vsel %vm454, %v1000, 0
      %v1415 = vsel %vm454, %v1001, 0
      %v1418 = vsel %vm454, %v1002, 0
      %v1421 = vsel %vm454, %v1003, 0
      %v1424 = vsel %vm454, %v1004, 0
      %v1427 = vsel %vm454, %v1005, 0
      %v1430 = vsel %vm454, %v1006, 0
      %v1433 = vsel %vm1219, %v1007, 0
      %1435 = vmatprep.subr.bf16.mxu0 0
      %1436 = vmatpush1.bf16.msra.mxu0 %v1433
      %1437 = vmatprep.subr.bf16.mxu0 0
      %1438 = vmatpush1.bf16.msra.mxu0 0
      %1439 = vmatprep.subr.bf16.mxu0 0
      %1440 = vmatpush1.bf16.msra.mxu0 0
      %1441 = vmatprep.subr.bf16.mxu0 0
      %1442 = vmatpush1.bf16.msra.mxu0 0
      %1443 = vmatprep.subr.bf16.mxu0 0
      %1444 = vmatpush1.bf16.msra.mxu0 0
      %1445 = vmatprep.subr.bf16.mxu0 0
      %1446 = vmatpush1.bf16.msra.mxu0 0
      %1447 = vmatprep.subr.bf16.mxu0 0
      %1448 = vmatpush1.bf16.msra.mxu0 0
      %1449 = vmatprep.subr.bf16.mxu0 0
      %1450 = vmatpush1.bf16.msra.mxu0 0
      %1451 = vmatprep.subr.bf16.mxu0 0
      %1452 = vmatpush1.bf16.msra.mxu0 0
      %1453 = vmatprep.subr.bf16.mxu0 0
      %1454 = vmatpush1.bf16.msra.mxu0 0
      %1455 = vmatprep.subr.bf16.mxu0 0
      %1456 = vmatpush1.bf16.msra.mxu0 0
      %1457 = vmatprep.subr.bf16.mxu0 0
      %1458 = vmatpush1.bf16.msra.mxu0 0
      %1459 = vmatprep.subr.bf16.mxu0 0
      %1460 = vmatpush1.bf16.msra.mxu0 0
      %1461 = vmatprep.subr.bf16.mxu0 0
      %1462 = vmatpush1.bf16.msra.mxu0 0
      %1463 = vmatprep.subr.bf16.mxu0 0
      %1464 = vmatpush1.bf16.msra.mxu0 0
      %1465 = vmatprep.subr.bf16.mxu0 0
      %1466 = vmatpush1.bf16.msra.mxu0 0
      %1467 = vmatprep.mubr.bf16.mxu0 0
      %1468 = vmatmul.mubr.bf16.gmra.mrb[0].mxu0 %v1385
      %v1469 = vpop.f32.mrb[0].mxu0
      %v1470 = vadd.f32 %v1258, %v1469
      %v1471 = vpop.f32.mrb[0].mxu0
      %v1472 = vpop.f32.mrb[0].mxu0
      %v1473 = vadd.f32 %v1261, %v1472
      %v1474 = vpop.f32.mrb[0].mxu0
      %1475 = vmatprep.mubr.bf16.mxu0 0
      %1476 = vmatmul.mubr.bf16.gmra.mrb[0].mxu0 %v1388
      %v1477 = vpop.f32.mrb[0].mxu0
      %v1478 = vadd.f32 %v1266, %v1477
      %v1479 = vpop.f32.mrb[0].mxu0
      %v1480 = vpop.f32.mrb[0].mxu0
      %v1481 = vadd.f32 %v1269, %v1480
      %v1482 = vpop.f32.mrb[0].mxu0
      %1483 = vmatprep.mubr.bf16.mxu0 0
      %1484 = vmatmul.mubr.bf16.gmra.mrb[0].mxu0 %v1391
      %v1485 = vpop.f32.mrb[0].mxu0
      %v1486 = vadd.f32 %v1274, %v1485
      %v1487 = vpop.f32.mrb[0].mxu0
      %v1488 = vpop.f32.mrb[0].mxu0
      %v1489 = vadd.f32 %v1277, %v1488
      %v1490 = vpop.f32.mrb[0].mxu0
      %1491 = vmatprep.mubr.bf16.mxu0 0
      %1492 = vmatmul.mubr.bf16.gmra.mrb[0].mxu0 %v1394
      %v1493 = vpop.f32.mrb[0].mxu0
      %v1494 = vadd.f32 %v1282, %v1493
      %v1495 = vpop.f32.mrb[0].mxu0
      %v1496 = vpop.f32.mrb[0].mxu0
      %v1497 = vadd.f32 %v1285, %v1496
      %v1498 = vpop.f32.mrb[0].mxu0
      %1499 = vmatprep.mubr.bf16.mxu0 0
      %1500 = vmatmul.mubr.bf16.gmra.mrb[0].mxu0 %v1397
      %v1501 = vpop.f32.mrb[0].mxu0
      %v1502 = vadd.f32 %v1290, %v1501
      %v1503 = vpop.f32.mrb[0].mxu0
      %v1504 = vpop.f32.mrb[0].mxu0
      %v1505 = vadd.f32 %v1293, %v1504
      %v1506 = vpop.f32.mrb[0].mxu0
      %1507 = vmatprep.mubr.bf16.mxu0 0
      %1508 = vmatmul.mubr.bf16.gmra.mrb[0].mxu0 %v1400
      %v1509 = vpop.f32.mrb[0].mxu0
      %v1510 = vadd.f32 %v1298, %v1509
      %v1511 = vpop.f32.mrb[0].mxu0
      %v1512 = vpop.f32.mrb[0].mxu0
      %v1513 = vadd.f32 %v1301, %v1512
      %v1514 = vpop.f32.mrb[0].mxu0
      %1515 = vmatprep.mubr.bf16.mxu0 0
      %1516 = vmatmul.mubr.bf16.gmra.mrb[0].mxu0 %v1403
      %v1517 = vpop.f32.mrb[0].mxu0
      %v1518 = vadd.f32 %v1306, %v1517
      %v1519 = vpop.f32.mrb[0].mxu0
      %v1520 = vpop.f32.mrb[0].mxu0
      %v1521 = vadd.f32 %v1309, %v1520
      %v1522 = vpop.f32.mrb[0].mxu0
      %1523 = vmatprep.mubr.bf16.mxu0 0
      %1524 = vmatmul.mubr.bf16.gmra.mrb[0].mxu0 %v1406
      %v1525 = vpop.f32.mrb[0].mxu0
      %v1526 = vadd.f32 %v1314, %v1525
      %v1527 = vpop.f32.mrb[0].mxu0
      %v1528 = vpop.f32.mrb[0].mxu0
      %v1529 = vadd.f32 %v1317, %v1528
      %v1530 = vpop.f32.mrb[0].mxu0
      %1531 = vmatprep.mubr.bf16.mxu0 0
      %1532 = vmatmul.mubr.bf16.gmra.mrb[0].mxu0 %v1409
      %v1533 = vpop.f32.mrb[0].mxu0
      %v1534 = vadd.f32 %v1322, %v1533
      %v1535 = vpop.f32.mrb[0].mxu0
      %v1536 = vpop.f32.mrb[0].mxu0
      %v1537 = vadd.f32 %v1325, %v1536
      %v1538 = vpop.f32.mrb[0].mxu0
      %1539 = vmatprep.mubr.bf16.mxu0 0
      %1540 = vmatmul.mubr.bf16.gmra.mrb[0].mxu0 %v1412
      %v1541 = vpop.f32.mrb[0].mxu0
      %v1542 = vadd.f32 %v1330, %v1541
      %v1543 = vpop.f32.mrb[0].mxu0
      %v1544 = vpop.f32.mrb[0].mxu0
      %v1545 = vadd.f32 %v1333, %v1544
      %v1546 = vpop.f32.mrb[0].mxu0
      %1547 = vmatprep.mubr.bf16.mxu0 0
      %1548 = vmatmul.mubr.bf16.gmra.mrb[0].mxu0 %v1415
      %v1549 = vpop.f32.mrb[0].mxu0
      %v1550 = vadd.f32 %v1338, %v1549
      %v1551 = vpop.f32.mrb[0].mxu0
      %v1552 = vpop.f32.mrb[0].mxu0
      %v1553 = vadd.f32 %v1341, %v1552
      %v1554 = vpop.f32.mrb[0].mxu0
      %1555 = vmatprep.mubr.bf16.mxu0 0
      %1556 = vmatmul.mubr.bf16.gmra.mrb[0].mxu0 %v1418
      %v1557 = vpop.f32.mrb[0].mxu0
      %v1558 = vadd.f32 %v1346, %v1557
      %v1559 = vpop.f32.mrb[0].mxu0
      %v1560 = vpop.f32.mrb[0].mxu0
      %v1561 = vadd.f32 %v1349, %v1560
      %v1562 = vpop.f32.mrb[0].mxu0
      %1563 = vmatprep.mubr.bf16.mxu0 0
      %1564 = vmatmul.mubr.bf16.gmra.mrb[0].mxu0 %v1421
      %v1565 = vpop.f32.mrb[0].mxu0
      %v1566 = vadd.f32 %v1354, %v1565
      %v1567 = vpop.f32.mrb[0].mxu0
      %v1568 = vpop.f32.mrb[0].mxu0
      %v1569 = vadd.f32 %v1357, %v1568
      %v1570 = vpop.f32.mrb[0].mxu0
      %1571 = vmatprep.mubr.bf16.mxu0 0
      %1572 = vmatmul.mubr.bf16.gmra.mrb[0].mxu0 %v1424
      %v1573 = vpop.f32.mrb[0].mxu0
      %v1574 = vadd.f32 %v1362, %v1573
      %v1575 = vpop.f32.mrb[0].mxu0
      %v1576 = vpop.f32.mrb[0].mxu0
      %v1577 = vadd.f32 %v1365, %v1576
      %v1578 = vpop.f32.mrb[0].mxu0
      %1579 = vmatprep.mubr.bf16.mxu0 0
      %1580 = vmatmul.mubr.bf16.gmra.mrb[0].mxu0 %v1427
      %v1581 = vpop.f32.mrb[0].mxu0
      %v1582 = vadd.f32 %v1370, %v1581
      %v1583 = vpop.f32.mrb[0].mxu0
      %v1584 = vpop.f32.mrb[0].mxu0
      %v1585 = vadd.f32 %v1373, %v1584
      %v1586 = vpop.f32.mrb[0].mxu0
      %1587 = vmatprep.mubr.bf16.mxu0 0
      %1588 = vmatmul.mubr.bf16.gmra.mrb[0].mxu0 %v1430
      %v1589 = vpop.f32.mrb[0].mxu0
      %v1590 = vadd.f32 %v1378, %v1589
      %v1591 = vpop.f32.mrb[0].mxu0
      %v1592 = vpop.f32.mrb[0].mxu0
      %v1593 = vadd.f32 %v1381, %v1592
      %v1594 = vpop.f32.mrb[0].mxu0
      %1595 = vdwg.mxu0
      %vm1596 = vcmask 1045504
      %v1597 = vrot.slane %v957, 2
      %v1598 = vrot.slane %v858, 2
      %v1599 = vsel %vm1596, %v1597, %v1598
      %v1600 = vrot.slane %v974, 2
      %v1601 = vsel %vm1596, %v1598, %v1600
      %v1602 = vrot.slane %v958, 2
      %v1603 = vrot.slane %v861, 2
      %v1604 = vsel %vm1596, %v1602, %v1603
      %v1605 = vrot.slane %v975, 2
      %v1606 = vsel %vm1596, %v1603, %v1605
      %v1607 = vrot.slane %v959, 2
      %v1608 = vrot.slane %v864, 2
      %v1609 = vsel %vm1596, %v1607, %v1608
      %v1610 = vrot.slane %v976, 2
      %v1611 = vsel %vm1596, %v1608, %v1610
      %v1612 = vrot.slane %v960, 2
      %v1613 = vrot.slane %v867, 2
      %v1614 = vsel %vm1596, %v1612, %v1613
      %v1615 = vrot.slane %v977, 2
      %v1616 = vsel %vm1596, %v1613, %v1615
      %v1617 = vrot.slane %v961, 2
      %v1618 = vrot.slane %v870, 2
      %v1619 = vsel %vm1596, %v1617, %v1618
      %v1620 = vrot.slane %v978, 2
      %v1621 = vsel %vm1596, %v1618, %v1620
      %v1622 = vrot.slane %v962, 2
      %v1623 = vrot.slane %v873, 2
      %v1624 = vsel %vm1596, %v1622, %v1623
      %v1625 = vrot.slane %v979, 2
      %v1626 = vsel %vm1596, %v1623, %v1625
      %v1627 = vrot.slane %v963, 2
      %v1628 = vrot.slane %v876, 2
      %v1629 = vsel %vm1596, %v1627, %v1628
      %v1630 = vrot.slane %v980, 2
      %v1631 = vsel %vm1596, %v1628, %v1630
      %v1632 = vrot.slane %v964, 2
      %v1633 = vrot.slane %v879, 2
      %v1634 = vsel %vm1596, %v1632, %v1633
      %v1635 = vrot.slane %v981, 2
      %v1636 = vsel %vm1596, %v1633, %v1635
      %v1637 = vrot.slane %v965, 2
      %v1638 = vrot.slane %v882, 2
      %v1639 = vsel %vm1596, %v1637, %v1638
      %v1640 = vrot.slane %v982, 2
      %v1641 = vsel %vm1596, %v1638, %v1640
      %v1642 = vrot.slane %v966, 2
      %v1643 = vrot.slane %v885, 2
      %v1644 = vsel %vm1596, %v1642, %v1643
      %v1645 = vrot.slane %v983, 2
      %v1646 = vsel %vm1596, %v1643, %v1645
      %v1647 = vrot.slane %v967, 2
      %v1648 = vrot.slane %v888, 2
      %v1649 = vsel %vm1596, %v1647, %v1648
      %v1650 = vrot.slane %v984, 2
      %v1651 = vsel %vm1596, %v1648, %v1650
      %v1652 = vrot.slane %v968, 2
      %v1653 = vrot.slane %v891, 2
      %v1654 = vsel %vm1596, %v1652, %v1653
      %v1655 = vrot.slane %v985, 2
      %v1656 = vsel %vm1596, %v1653, %v1655
      %v1657 = vrot.slane %v969, 2
      %v1658 = vrot.slane %v894, 2
      %v1659 = vsel %vm1596, %v1657, %v1658
      %v1660 = vrot.slane %v986, 2
      %v1661 = vsel %vm1596, %v1658, %v1660
      %v1662 = vrot.slane %v970, 2
      %v1663 = vrot.slane %v897, 2
      %v1664 = vsel %vm1596, %v1662, %v1663
      %v1665 = vrot.slane %v987, 2
      %v1666 = vsel %vm1596, %v1663, %v1665
      %v1667 = vrot.slane %v971, 2
      %v1668 = vrot.slane %v900, 2
      %v1669 = vsel %vm1596, %v1667, %v1668
      %v1670 = vrot.slane %v988, 2
      %v1671 = vsel %vm1596, %v1668, %v1670
      %v1672 = vrot.slane %v972, 2
      %v1673 = vrot.slane %v903, 2
      %v1674 = vsel %vm1596, %v1672, %v1673
      %v1675 = vrot.slane %v989, 2
      %v1676 = vsel %vm1596, %v1673, %v1675
      %v1709 = vpack.c.bf16 %v1601, %v1599
      %v1710 = vpack.c.bf16 %v1606, %v1604
      %v1711 = vpack.c.bf16 %v1611, %v1609
      %v1712 = vpack.c.bf16 %v1616, %v1614
      %v1713 = vpack.c.bf16 %v1621, %v1619
      %v1714 = vpack.c.bf16 %v1626, %v1624
      %v1715 = vpack.c.bf16 %v1631, %v1629
      %v1716 = vpack.c.bf16 %v1636, %v1634
      %v1717 = vpack.c.bf16 %v1641, %v1639
      %v1718 = vpack.c.bf16 %v1646, %v1644
      %v1719 = vpack.c.bf16 %v1651, %v1649
      %v1720 = vpack.c.bf16 %v1656, %v1654
      %v1721 = vpack.c.bf16 %v1661, %v1659
      %v1722 = vpack.c.bf16 %v1666, %v1664
      %v1723 = vpack.c.bf16 %v1671, %v1669
      %v1724 = vpack.c.bf16 %v1676, %v1674
      %s1725 = scalar_lea.vmem %s3, 4
      %v1726 = vld [vmem:[%s1725] sm:$0x3]
      %v1728 = vsel %vm454, %v1709, 0
      %v1731 = vsel %vm454, %v1710, 0
      %v1734 = vsel %vm454, %v1711, 0
      %v1737 = vsel %vm454, %v1712, 0
      %v1740 = vsel %vm454, %v1713, 0
      %v1743 = vsel %vm454, %v1714, 0
      %v1746 = vsel %vm454, %v1715, 0
      %v1749 = vsel %vm454, %v1716, 0
      %v1752 = vsel %vm454, %v1717, 0
      %v1755 = vsel %vm454, %v1718, 0
      %v1758 = vsel %vm454, %v1719, 0
      %v1761 = vsel %vm454, %v1720, 0
      %v1764 = vsel %vm454, %v1721, 0
      %v1767 = vsel %vm454, %v1722, 0
      %v1770 = vsel %vm454, %v1723, 0
      %v1773 = vsel %vm454, %v1724, 0
      %v1776 = vsel %vm1219, %v1726, 0
      %1778 = vmatprep.subr.bf16.mxu0 0
      %1779 = vmatpush1.bf16.msra.mxu0 %v1776
      %1780 = vmatprep.subr.bf16.mxu0 0
      %1781 = vmatpush1.bf16.msra.mxu0 0
      %1782 = vmatprep.subr.bf16.mxu0 0
      %1783 = vmatpush1.bf16.msra.mxu0 0
      %1784 = vmatprep.subr.bf16.mxu0 0
      %1785 = vmatpush1.bf16.msra.mxu0 0
      %1786 = vmatprep.subr.bf16.mxu0 0
      %1787 = vmatpush1.bf16.msra.mxu0 0
      %1788 = vmatprep.subr.bf16.mxu0 0
      %1789 = vmatpush1.bf16.msra.mxu0 0
      %1790 = vmatprep.subr.bf16.mxu0 0
      %1791 = vmatpush1.bf16.msra.mxu0 0
      %1792 = vmatprep.subr.bf16.mxu0 0
      %1793 = vmatpush1.bf16.msra.mxu0 0
      %1794 = vmatprep.subr.bf16.mxu0 0
      %1795 = vmatpush1.bf16.msra.mxu0 0
      %1796 = vmatprep.subr.bf16.mxu0 0
      %1797 = vmatpush1.bf16.msra.mxu0 0
      %1798 = vmatprep.subr.bf16.mxu0 0
      %1799 = vmatpush1.bf16.msra.mxu0 0
      %1800 = vmatprep.subr.bf16.mxu0 0
      %1801 = vmatpush1.bf16.msra.mxu0 0
      %1802 = vmatprep.subr.bf16.mxu0 0
      %1803 = vmatpush1.bf16.msra.mxu0 0
      %1804 = vmatprep.subr.bf16.mxu0 0
      %1805 = vmatpush1.bf16.msra.mxu0 0
      %1806 = vmatprep.subr.bf16.mxu0 0
      %1807 = vmatpush1.bf16.msra.mxu0 0
      %1808 = vmatprep.subr.bf16.mxu0 0
      %1809 = vmatpush1.bf16.msra.mxu0 0
      %1810 = vmatprep.mubr.bf16.mxu0 0
      %1811 = vmatmul.mubr.bf16.gmra.mrb[0].mxu0 %v1728
      %v1812 = vpop.f32.mrb[0].mxu0
      %v1813 = vadd.f32 0.0, %v1812
      %v1814 = vpop.f32.mrb[0].mxu0
      %v1815 = vpop.f32.mrb[0].mxu0
      %v1816 = vadd.f32 0.0, %v1815
      %v1817 = vpop.f32.mrb[0].mxu0
      %1818 = vmatprep.mubr.bf16.mxu0 0
      %1819 = vmatmul.mubr.bf16.gmra.mrb[0].mxu0 %v1731
      %v1820 = vpop.f32.mrb[0].mxu0
      %v1821 = vadd.f32 0.0, %v1820
      %v1822 = vpop.f32.mrb[0].mxu0
      %v1823 = vpop.f32.mrb[0].mxu0
      %v1824 = vadd.f32 0.0, %v1823
      %v1825 = vpop.f32.mrb[0].mxu0
      %1826 = vmatprep.mubr.bf16.mxu0 0
      %1827 = vmatmul.mubr.bf16.gmra.mrb[0].mxu0 %v1734
      %v1828 = vpop.f32.mrb[0].mxu0
      %v1829 = vadd.f32 0.0, %v1828
      %v1830 = vpop.f32.mrb[0].mxu0
      %v1831 = vpop.f32.mrb[0].mxu0
      %v1832 = vadd.f32 0.0, %v1831
      %v1833 = vpop.f32.mrb[0].mxu0
      %1834 = vmatprep.mubr.bf16.mxu0 0
      %1835 = vmatmul.mubr.bf16.gmra.mrb[0].mxu0 %v1737
      %v1836 = vpop.f32.mrb[0].mxu0
      %v1837 = vadd.f32 0.0, %v1836
      %v1838 = vpop.f32.mrb[0].mxu0
      %v1839 = vpop.f32.mrb[0].mxu0
      %v1840 = vadd.f32 0.0, %v1839
      %v1841 = vpop.f32.mrb[0].mxu0
      %1842 = vmatprep.mubr.bf16.mxu0 0
      %1843 = vmatmul.mubr.bf16.gmra.mrb[0].mxu0 %v1740
      %v1844 = vpop.f32.mrb[0].mxu0
      %v1845 = vadd.f32 0.0, %v1844
      %v1846 = vpop.f32.mrb[0].mxu0
      %v1847 = vpop.f32.mrb[0].mxu0
      %v1848 = vadd.f32 0.0, %v1847
      %v1849 = vpop.f32.mrb[0].mxu0
      %1850 = vmatprep.mubr.bf16.mxu0 0
      %1851 = vmatmul.mubr.bf16.gmra.mrb[0].mxu0 %v1743
      %v1852 = vpop.f32.mrb[0].mxu0
      %v1853 = vadd.f32 0.0, %v1852
      %v1854 = vpop.f32.mrb[0].mxu0
      %v1855 = vpop.f32.mrb[0].mxu0
      %v1856 = vadd.f32 0.0, %v1855
      %v1857 = vpop.f32.mrb[0].mxu0
      %1858 = vmatprep.mubr.bf16.mxu0 0
      %1859 = vmatmul.mubr.bf16.gmra.mrb[0].mxu0 %v1746
      %v1860 = vpop.f32.mrb[0].mxu0
      %v1861 = vadd.f32 0.0, %v1860
      %v1862 = vpop.f32.mrb[0].mxu0
      %v1863 = vpop.f32.mrb[0].mxu0
      %v1864 = vadd.f32 0.0, %v1863
      %v1865 = vpop.f32.mrb[0].mxu0
      %1866 = vmatprep.mubr.bf16.mxu0 0
      %1867 = vmatmul.mubr.bf16.gmra.mrb[0].mxu0 %v1749
      %v1868 = vpop.f32.mrb[0].mxu0
      %v1869 = vadd.f32 0.0, %v1868
      %v1870 = vpop.f32.mrb[0].mxu0
      %v1871 = vpop.f32.mrb[0].mxu0
      %v1872 = vadd.f32 0.0, %v1871
      %v1873 = vpop.f32.mrb[0].mxu0
      %1874 = vmatprep.mubr.bf16.mxu0 0
      %1875 = vmatmul.mubr.bf16.gmra.mrb[0].mxu0 %v1752
      %v1876 = vpop.f32.mrb[0].mxu0
      %v1877 = vadd.f32 0.0, %v1876
      %v1878 = vpop.f32.mrb[0].mxu0
      %v1879 = vpop.f32.mrb[0].mxu0
      %v1880 = vadd.f32 0.0, %v1879
      %v1881 = vpop.f32.mrb[0].mxu0
      %1882 = vmatprep.mubr.bf16.mxu0 0
      %1883 = vmatmul.mubr.bf16.gmra.mrb[0].mxu0 %v1755
      %v1884 = vpop.f32.mrb[0].mxu0
      %v1885 = vadd.f32 0.0, %v1884
      %v1886 = vpop.f32.mrb[0].mxu0
      %v1887 = vpop.f32.mrb[0].mxu0
      %v1888 = vadd.f32 0.0, %v1887
      %v1889 = vpop.f32.mrb[0].mxu0
      %1890 = vmatprep.mubr.bf16.mxu0 0
      %1891 = vmatmul.mubr.bf16.gmra.mrb[0].mxu0 %v1758
      %v1892 = vpop.f32.mrb[0].mxu0
      %v1893 = vadd.f32 0.0, %v1892
      %v1894 = vpop.f32.mrb[0].mxu0
      %v1895 = vpop.f32.mrb[0].mxu0
      %v1896 = vadd.f32 0.0, %v1895
      %v1897 = vpop.f32.mrb[0].mxu0
      %1898 = vmatprep.mubr.bf16.mxu0 0
      %1899 = vmatmul.mubr.bf16.gmra.mrb[0].mxu0 %v1761
      %v1900 = vpop.f32.mrb[0].mxu0
      %v1901 = vadd.f32 0.0, %v1900
      %v1902 = vpop.f32.mrb[0].mxu0
      %v1903 = vpop.f32.mrb[0].mxu0
      %v1904 = vadd.f32 0.0, %v1903
      %v1905 = vpop.f32.mrb[0].mxu0
      %1906 = vmatprep.mubr.bf16.mxu0 0
      %1907 = vmatmul.mubr.bf16.gmra.mrb[0].mxu0 %v1764
      %v1908 = vpop.f32.mrb[0].mxu0
      %v1909 = vadd.f32 0.0, %v1908
      %v1910 = vpop.f32.mrb[0].mxu0
      %v1911 = vpop.f32.mrb[0].mxu0
      %v1912 = vadd.f32 0.0, %v1911
      %v1913 = vpop.f32.mrb[0].mxu0
      %1914 = vmatprep.mubr.bf16.mxu0 0
      %1915 = vmatmul.mubr.bf16.gmra.mrb[0].mxu0 %v1767
      %v1916 = vpop.f32.mrb[0].mxu0
      %v1917 = vadd.f32 0.0, %v1916
      %v1918 = vpop.f32.mrb[0].mxu0
      %v1919 = vpop.f32.mrb[0].mxu0
      %v1920 = vadd.f32 0.0, %v1919
      %v1921 = vpop.f32.mrb[0].mxu0
      %1922 = vmatprep.mubr.bf16.mxu0 0
      %1923 = vmatmul.mubr.bf16.gmra.mrb[0].mxu0 %v1770
      %v1924 = vpop.f32.mrb[0].mxu0
      %v1925 = vadd.f32 0.0, %v1924
      %v1926 = vpop.f32.mrb[0].mxu0
      %v1927 = vpop.f32.mrb[0].mxu0
      %v1928 = vadd.f32 0.0, %v1927
      %v1929 = vpop.f32.mrb[0].mxu0
      %1930 = vmatprep.mubr.bf16.mxu0 0
      %1931 = vmatmul.mubr.bf16.gmra.mrb[0].mxu0 %v1773
      %v1932 = vpop.f32.mrb[0].mxu0
      %v1933 = vadd.f32 0.0, %v1932
      %v1934 = vpop.f32.mrb[0].mxu0
      %v1935 = vpop.f32.mrb[0].mxu0
      %v1936 = vadd.f32 0.0, %v1935
      %v1937 = vpop.f32.mrb[0].mxu0
      %1938 = vdwg.mxu0
      %v1939 = vadd.f32 %v1470, %v1813
      %v1940 = vadd.f32 %v1473, %v1816
      %v1941 = vadd.f32 %v1478, %v1821
      %v1942 = vadd.f32 %v1481, %v1824
      %v1943 = vadd.f32 %v1486, %v1829
      %v1944 = vadd.f32 %v1489, %v1832
      %v1945 = vadd.f32 %v1494, %v1837
      %v1946 = vadd.f32 %v1497, %v1840
      %v1947 = vadd.f32 %v1502, %v1845
      %v1948 = vadd.f32 %v1505, %v1848
      %v1949 = vadd.f32 %v1510, %v1853
      %v1950 = vadd.f32 %v1513, %v1856
      %v1951 = vadd.f32 %v1518, %v1861
      %v1952 = vadd.f32 %v1521, %v1864
      %v1953 = vadd.f32 %v1526, %v1869
      %v1954 = vadd.f32 %v1529, %v1872
      %v1955 = vadd.f32 %v1534, %v1877
      %v1956 = vadd.f32 %v1537, %v1880
      %v1957 = vadd.f32 %v1542, %v1885
      %v1958 = vadd.f32 %v1545, %v1888
      %v1959 = vadd.f32 %v1550, %v1893
      %v1960 = vadd.f32 %v1553, %v1896
      %v1961 = vadd.f32 %v1558, %v1901
      %v1962 = vadd.f32 %v1561, %v1904
      %v1963 = vadd.f32 %v1566, %v1909
      %v1964 = vadd.f32 %v1569, %v1912
      %v1965 = vadd.f32 %v1574, %v1917
      %v1966 = vadd.f32 %v1577, %v1920
      %v1967 = vadd.f32 %v1582, %v1925
      %v1968 = vadd.f32 %v1585, %v1928
      %v1969 = vadd.f32 %v1590, %v1933
      %v1970 = vadd.f32 %v1593, %v1936
      %v1971 = vpack.c.bf16 %v906, %v973
      %s1972 = scalar_lea.vmem %s3, 6
      %v1973 = vld [vmem:[%s1972] sm:$0x3]
      %v1975 = vsel %vm454, %v1971, 0
      %v1978 = vsel %vm1219, %v1973, 0
      %1980 = vmatprep.subr.bf16.mxu0 0
      %1981 = vmatpush1.bf16.msra.mxu0 %v1978
      %1982 = vmatprep.subr.bf16.mxu0 0
      %1983 = vmatpush1.bf16.msra.mxu0 0
      %1984 = vmatprep.subr.bf16.mxu0 0
      %1985 = vmatpush1.bf16.msra.mxu0 0
      %1986 = vmatprep.subr.bf16.mxu0 0
      %1987 = vmatpush1.bf16.msra.mxu0 0
      %1988 = vmatprep.subr.bf16.mxu0 0
      %1989 = vmatpush1.bf16.msra.mxu0 0
      %1990 = vmatprep.subr.bf16.mxu0 0
      %1991 = vmatpush1.bf16.msra.mxu0 0
      %1992 = vmatprep.subr.bf16.mxu0 0
      %1993 = vmatpush1.bf16.msra.mxu0 0
      %1994 = vmatprep.subr.bf16.mxu0 0
      %1995 = vmatpush1.bf16.msra.mxu0 0
      %1996 = vmatprep.subr.bf16.mxu0 0
      %1997 = vmatpush1.bf16.msra.mxu0 0
      %1998 = vmatprep.subr.bf16.mxu0 0
      %1999 = vmatpush1.bf16.msra.mxu0 0
      %2000 = vmatprep.subr.bf16.mxu0 0
      %2001 = vmatpush1.bf16.msra.mxu0 0
      %2002 = vmatprep.subr.bf16.mxu0 0
      %2003 = vmatpush1.bf16.msra.mxu0 0
      %2004 = vmatprep.subr.bf16.mxu0 0
      %2005 = vmatpush1.bf16.msra.mxu0 0
      %2006 = vmatprep.subr.bf16.mxu0 0
      %2007 = vmatpush1.bf16.msra.mxu0 0
      %2008 = vmatprep.subr.bf16.mxu0 0
      %2009 = vmatpush1.bf16.msra.mxu0 0
      %2010 = vmatprep.subr.bf16.mxu0 0
      %2011 = vmatpush1.bf16.msra.mxu0 0
      %2012 = vmatprep.mubr.bf16.mxu0 0
      %2013 = vmatmul.mubr.bf16.gmra.mrb[0].mxu0 %v1388
      %v2014 = vpop.f32.mrb[0].mxu0
      %v2015 = vadd.f32 0.0, %v2014
      %v2016 = vpop.f32.mrb[0].mxu0
      %v2017 = vpop.f32.mrb[0].mxu0
      %v2018 = vadd.f32 0.0, %v2017
      %v2019 = vpop.f32.mrb[0].mxu0
      %2020 = vmatprep.mubr.bf16.mxu0 0
      %2021 = vmatmul.mubr.bf16.gmra.mrb[0].mxu0 %v1391
      %v2022 = vpop.f32.mrb[0].mxu0
      %v2023 = vadd.f32 0.0, %v2022
      %v2024 = vpop.f32.mrb[0].mxu0
      %v2025 = vpop.f32.mrb[0].mxu0
      %v2026 = vadd.f32 0.0, %v2025
      %v2027 = vpop.f32.mrb[0].mxu0
      %2028 = vmatprep.mubr.bf16.mxu0 0
      %2029 = vmatmul.mubr.bf16.gmra.mrb[0].mxu0 %v1394
      %v2030 = vpop.f32.mrb[0].mxu0
      %v2031 = vadd.f32 0.0, %v2030
      %v2032 = vpop.f32.mrb[0].mxu0
      %v2033 = vpop.f32.mrb[0].mxu0
      %v2034 = vadd.f32 0.0, %v2033
      %v2035 = vpop.f32.mrb[0].mxu0
      %2036 = vmatprep.mubr.bf16.mxu0 0
      %2037 = vmatmul.mubr.bf16.gmra.mrb[0].mxu0 %v1397
      %v2038 = vpop.f32.mrb[0].mxu0
      %v2039 = vadd.f32 0.0, %v2038
      %v2040 = vpop.f32.mrb[0].mxu0
      %v2041 = vpop.f32.mrb[0].mxu0
      %v2042 = vadd.f32 0.0, %v2041
      %v2043 = vpop.f32.mrb[0].mxu0
      %2044 = vmatprep.mubr.bf16.mxu0 0
      %2045 = vmatmul.mubr.bf16.gmra.mrb[0].mxu0 %v1400
      %v2046 = vpop.f32.mrb[0].mxu0
      %v2047 = vadd.f32 0.0, %v2046
      %v2048 = vpop.f32.mrb[0].mxu0
      %v2049 = vpop.f32.mrb[0].mxu0
      %v2050 = vadd.f32 0.0, %v2049
      %v2051 = vpop.f32.mrb[0].mxu0
      %2052 = vmatprep.mubr.bf16.mxu0 0
      %2053 = vmatmul.mubr.bf16.gmra.mrb[0].mxu0 %v1403
      %v2054 = vpop.f32.mrb[0].mxu0
      %v2055 = vadd.f32 0.0, %v2054
      %v2056 = vpop.f32.mrb[0].mxu0
      %v2057 = vpop.f32.mrb[0].mxu0
      %v2058 = vadd.f32 0.0, %v2057
      %v2059 = vpop.f32.mrb[0].mxu0
      %2060 = vmatprep.mubr.bf16.mxu0 0
      %2061 = vmatmul.mubr.bf16.gmra.mrb[0].mxu0 %v1406
      %v2062 = vpop.f32.mrb[0].mxu0
      %v2063 = vadd.f32 0.0, %v2062
      %v2064 = vpop.f32.mrb[0].mxu0
      %v2065 = vpop.f32.mrb[0].mxu0
      %v2066 = vadd.f32 0.0, %v2065
      %v2067 = vpop.f32.mrb[0].mxu0
      %2068 = vmatprep.mubr.bf16.mxu0 0
      %2069 = vmatmul.mubr.bf16.gmra.mrb[0].mxu0 %v1409
      %v2070 = vpop.f32.mrb[0].mxu0
      %v2071 = vadd.f32 0.0, %v2070
      %v2072 = vpop.f32.mrb[0].mxu0
      %v2073 = vpop.f32.mrb[0].mxu0
      %v2074 = vadd.f32 0.0, %v2073
      %v2075 = vpop.f32.mrb[0].mxu0
      %2076 = vmatprep.mubr.bf16.mxu0 0
      %2077 = vmatmul.mubr.bf16.gmra.mrb[0].mxu0 %v1412
      %v2078 = vpop.f32.mrb[0].mxu0
      %v2079 = vadd.f32 0.0, %v2078
      %v2080 = vpop.f32.mrb[0].mxu0
      %v2081 = vpop.f32.mrb[0].mxu0
      %v2082 = vadd.f32 0.0, %v2081
      %v2083 = vpop.f32.mrb[0].mxu0
      %2084 = vmatprep.mubr.bf16.mxu0 0
      %2085 = vmatmul.mubr.bf16.gmra.mrb[0].mxu0 %v1415
      %v2086 = vpop.f32.mrb[0].mxu0
      %v2087 = vadd.f32 0.0, %v2086
      %v2088 = vpop.f32.mrb[0].mxu0
      %v2089 = vpop.f32.mrb[0].mxu0
      %v2090 = vadd.f32 0.0, %v2089
      %v2091 = vpop.f32.mrb[0].mxu0
      %2092 = vmatprep.mubr.bf16.mxu0 0
      %2093 = vmatmul.mubr.bf16.gmra.mrb[0].mxu0 %v1418
      %v2094 = vpop.f32.mrb[0].mxu0
      %v2095 = vadd.f32 0.0, %v2094
      %v2096 = vpop.f32.mrb[0].mxu0
      %v2097 = vpop.f32.mrb[0].mxu0
      %v2098 = vadd.f32 0.0, %v2097
      %v2099 = vpop.f32.mrb[0].mxu0
      %2100 = vmatprep.mubr.bf16.mxu0 0
      %2101 = vmatmul.mubr.bf16.gmra.mrb[0].mxu0 %v1421
      %v2102 = vpop.f32.mrb[0].mxu0
      %v2103 = vadd.f32 0.0, %v2102
      %v2104 = vpop.f32.mrb[0].mxu0
      %v2105 = vpop.f32.mrb[0].mxu0
      %v2106 = vadd.f32 0.0, %v2105
      %v2107 = vpop.f32.mrb[0].mxu0
      %2108 = vmatprep.mubr.bf16.mxu0 0
      %2109 = vmatmul.mubr.bf16.gmra.mrb[0].mxu0 %v1424
      %v2110 = vpop.f32.mrb[0].mxu0
      %v2111 = vadd.f32 0.0, %v2110
      %v2112 = vpop.f32.mrb[0].mxu0
      %v2113 = vpop.f32.mrb[0].mxu0
      %v2114 = vadd.f32 0.0, %v2113
      %v2115 = vpop.f32.mrb[0].mxu0
      %2116 = vmatprep.mubr.bf16.mxu0 0
      %2117 = vmatmul.mubr.bf16.gmra.mrb[0].mxu0 %v1427
      %v2118 = vpop.f32.mrb[0].mxu0
      %v2119 = vadd.f32 0.0, %v2118
      %v2120 = vpop.f32.mrb[0].mxu0
      %v2121 = vpop.f32.mrb[0].mxu0
      %v2122 = vadd.f32 0.0, %v2121
      %v2123 = vpop.f32.mrb[0].mxu0
      %2124 = vmatprep.mubr.bf16.mxu0 0
      %2125 = vmatmul.mubr.bf16.gmra.mrb[0].mxu0 %v1430
      %v2126 = vpop.f32.mrb[0].mxu0
      %v2127 = vadd.f32 0.0, %v2126
      %v2128 = vpop.f32.mrb[0].mxu0
      %v2129 = vpop.f32.mrb[0].mxu0
      %v2130 = vadd.f32 0.0, %v2129
      %v2131 = vpop.f32.mrb[0].mxu0
      %2132 = vmatprep.mubr.bf16.mxu0 0
      %2133 = vmatmul.mubr.bf16.gmra.mrb[0].mxu0 %v1975
      %v2134 = vpop.f32.mrb[0].mxu0
      %v2135 = vadd.f32 0.0, %v2134
      %v2136 = vpop.f32.mrb[0].mxu0
      %v2137 = vpop.f32.mrb[0].mxu0
      %v2138 = vadd.f32 0.0, %v2137
      %v2139 = vpop.f32.mrb[0].mxu0
      %2140 = vdwg.mxu0
      %v2141 = vadd.f32 %v1939, %v2015
      %v2142 = vadd.f32 %v1940, %v2018
      %v2143 = vadd.f32 %v1941, %v2023
      %v2144 = vadd.f32 %v1942, %v2026
      %v2145 = vadd.f32 %v1943, %v2031
      %v2146 = vadd.f32 %v1944, %v2034
      %v2147 = vadd.f32 %v1945, %v2039
      %v2148 = vadd.f32 %v1946, %v2042
      %v2149 = vadd.f32 %v1947, %v2047
      %v2150 = vadd.f32 %v1948, %v2050
      %v2151 = vadd.f32 %v1949, %v2055
      %v2152 = vadd.f32 %v1950, %v2058
      %v2153 = vadd.f32 %v1951, %v2063
      %v2154 = vadd.f32 %v1952, %v2066
      %v2155 = vadd.f32 %v1953, %v2071
      %v2156 = vadd.f32 %v1954, %v2074
      %v2157 = vadd.f32 %v1955, %v2079
      %v2158 = vadd.f32 %v1956, %v2082
      %v2159 = vadd.f32 %v1957, %v2087
      %v2160 = vadd.f32 %v1958, %v2090
      %v2161 = vadd.f32 %v1959, %v2095
      %v2162 = vadd.f32 %v1960, %v2098
      %v2163 = vadd.f32 %v1961, %v2103
      %v2164 = vadd.f32 %v1962, %v2106
      %v2165 = vadd.f32 %v1963, %v2111
      %v2166 = vadd.f32 %v1964, %v2114
      %v2167 = vadd.f32 %v1965, %v2119
      %v2168 = vadd.f32 %v1966, %v2122
      %v2169 = vadd.f32 %v1967, %v2127
      %v2170 = vadd.f32 %v1968, %v2130
      %v2171 = vadd.f32 %v1969, %v2135
      %v2172 = vadd.f32 %v1970, %v2138
      %v2175 = vrot.slane %v973, 1
      %v2176 = vrot.slane %v906, 1
      %v2177 = vsel %vm1040, %v2175, %v2176
      %v2178 = vrot.slane %v990, 1
      %v2179 = vsel %vm1040, %v2176, %v2178
      %v2182 = vpack.c.bf16 %v2179, %v2177
      %s2183 = scalar_lea.vmem %s3, 8
      %v2184 = vld [vmem:[%s2183] sm:$0x3]
      %v2186 = vsel %vm454, %v2182, 0
      %v2189 = vsel %vm1219, %v2184, 0
      %2191 = vmatprep.subr.bf16.mxu0 0
      %2192 = vmatpush1.bf16.msra.mxu0 %v2189
      %2193 = vmatprep.subr.bf16.mxu0 0
      %2194 = vmatpush1.bf16.msra.mxu0 0
      %2195 = vmatprep.subr.bf16.mxu0 0
      %2196 = vmatpush1.bf16.msra.mxu0 0
      %2197 = vmatprep.subr.bf16.mxu0 0
      %2198 = vmatpush1.bf16.msra.mxu0 0
      %2199 = vmatprep.subr.bf16.mxu0 0
      %2200 = vmatpush1.bf16.msra.mxu0 0
      %2201 = vmatprep.subr.bf16.mxu0 0
      %2202 = vmatpush1.bf16.msra.mxu0 0
      %2203 = vmatprep.subr.bf16.mxu0 0
      %2204 = vmatpush1.bf16.msra.mxu0 0
      %2205 = vmatprep.subr.bf16.mxu0 0
      %2206 = vmatpush1.bf16.msra.mxu0 0
      %2207 = vmatprep.subr.bf16.mxu0 0
      %2208 = vmatpush1.bf16.msra.mxu0 0
      %2209 = vmatprep.subr.bf16.mxu0 0
      %2210 = vmatpush1.bf16.msra.mxu0 0
      %2211 = vmatprep.subr.bf16.mxu0 0
      %2212 = vmatpush1.bf16.msra.mxu0 0
      %2213 = vmatprep.subr.bf16.mxu0 0
      %2214 = vmatpush1.bf16.msra.mxu0 0
      %2215 = vmatprep.subr.bf16.mxu0 0
      %2216 = vmatpush1.bf16.msra.mxu0 0
      %2217 = vmatprep.subr.bf16.mxu0 0
      %2218 = vmatpush1.bf16.msra.mxu0 0
      %2219 = vmatprep.subr.bf16.mxu0 0
      %2220 = vmatpush1.bf16.msra.mxu0 0
      %2221 = vmatprep.subr.bf16.mxu0 0
      %2222 = vmatpush1.bf16.msra.mxu0 0
      %2223 = vmatprep.mubr.bf16.mxu0 0
      %2224 = vmatmul.mubr.bf16.gmra.mrb[0].mxu0 %v1175
      %v2225 = vpop.f32.mrb[0].mxu0
      %v2226 = vadd.f32 0.0, %v2225
      %v2227 = vpop.f32.mrb[0].mxu0
      %v2228 = vpop.f32.mrb[0].mxu0
      %v2229 = vadd.f32 0.0, %v2228
      %v2230 = vpop.f32.mrb[0].mxu0
      %2231 = vmatprep.mubr.bf16.mxu0 0
      %2232 = vmatmul.mubr.bf16.gmra.mrb[0].mxu0 %v1178
      %v2233 = vpop.f32.mrb[0].mxu0
      %v2234 = vadd.f32 0.0, %v2233
      %v2235 = vpop.f32.mrb[0].mxu0
      %v2236 = vpop.f32.mrb[0].mxu0
      %v2237 = vadd.f32 0.0, %v2236
      %v2238 = vpop.f32.mrb[0].mxu0
      %2239 = vmatprep.mubr.bf16.mxu0 0
      %2240 = vmatmul.mubr.bf16.gmra.mrb[0].mxu0 %v1181
      %v2241 = vpop.f32.mrb[0].mxu0
      %v2242 = vadd.f32 0.0, %v2241
      %v2243 = vpop.f32.mrb[0].mxu0
      %v2244 = vpop.f32.mrb[0].mxu0
      %v2245 = vadd.f32 0.0, %v2244
      %v2246 = vpop.f32.mrb[0].mxu0
      %2247 = vmatprep.mubr.bf16.mxu0 0
      %2248 = vmatmul.mubr.bf16.gmra.mrb[0].mxu0 %v1184
      %v2249 = vpop.f32.mrb[0].mxu0
      %v2250 = vadd.f32 0.0, %v2249
      %v2251 = vpop.f32.mrb[0].mxu0
      %v2252 = vpop.f32.mrb[0].mxu0
      %v2253 = vadd.f32 0.0, %v2252
      %v2254 = vpop.f32.mrb[0].mxu0
      %2255 = vmatprep.mubr.bf16.mxu0 0
      %2256 = vmatmul.mubr.bf16.gmra.mrb[0].mxu0 %v1187
      %v2257 = vpop.f32.mrb[0].mxu0
      %v2258 = vadd.f32 0.0, %v2257
      %v2259 = vpop.f32.mrb[0].mxu0
      %v2260 = vpop.f32.mrb[0].mxu0
      %v2261 = vadd.f32 0.0, %v2260
      %v2262 = vpop.f32.mrb[0].mxu0
      %2263 = vmatprep.mubr.bf16.mxu0 0
      %2264 = vmatmul.mubr.bf16.gmra.mrb[0].mxu0 %v1190
      %v2265 = vpop.f32.mrb[0].mxu0
      %v2266 = vadd.f32 0.0, %v2265
      %v2267 = vpop.f32.mrb[0].mxu0
      %v2268 = vpop.f32.mrb[0].mxu0
      %v2269 = vadd.f32 0.0, %v2268
      %v2270 = vpop.f32.mrb[0].mxu0
      %2271 = vmatprep.mubr.bf16.mxu0 0
      %2272 = vmatmul.mubr.bf16.gmra.mrb[0].mxu0 %v1193
      %v2273 = vpop.f32.mrb[0].mxu0
      %v2274 = vadd.f32 0.0, %v2273
      %v2275 = vpop.f32.mrb[0].mxu0
      %v2276 = vpop.f32.mrb[0].mxu0
      %v2277 = vadd.f32 0.0, %v2276
      %v2278 = vpop.f32.mrb[0].mxu0
      %2279 = vmatprep.mubr.bf16.mxu0 0
      %2280 = vmatmul.mubr.bf16.gmra.mrb[0].mxu0 %v1196
      %v2281 = vpop.f32.mrb[0].mxu0
      %v2282 = vadd.f32 0.0, %v2281
      %v2283 = vpop.f32.mrb[0].mxu0
      %v2284 = vpop.f32.mrb[0].mxu0
      %v2285 = vadd.f32 0.0, %v2284
      %v2286 = vpop.f32.mrb[0].mxu0
      %2287 = vmatprep.mubr.bf16.mxu0 0
      %2288 = vmatmul.mubr.bf16.gmra.mrb[0].mxu0 %v1199
      %v2289 = vpop.f32.mrb[0].mxu0
      %v2290 = vadd.f32 0.0, %v2289
      %v2291 = vpop.f32.mrb[0].mxu0
      %v2292 = vpop.f32.mrb[0].mxu0
      %v2293 = vadd.f32 0.0, %v2292
      %v2294 = vpop.f32.mrb[0].mxu0
      %2295 = vmatprep.mubr.bf16.mxu0 0
      %2296 = vmatmul.mubr.bf16.gmra.mrb[0].mxu0 %v1202
      %v2297 = vpop.f32.mrb[0].mxu0
      %v2298 = vadd.f32 0.0, %v2297
      %v2299 = vpop.f32.mrb[0].mxu0
      %v2300 = vpop.f32.mrb[0].mxu0
      %v2301 = vadd.f32 0.0, %v2300
      %v2302 = vpop.f32.mrb[0].mxu0
      %2303 = vmatprep.mubr.bf16.mxu0 0
      %2304 = vmatmul.mubr.bf16.gmra.mrb[0].mxu0 %v1205
      %v2305 = vpop.f32.mrb[0].mxu0
      %v2306 = vadd.f32 0.0, %v2305
      %v2307 = vpop.f32.mrb[0].mxu0
      %v2308 = vpop.f32.mrb[0].mxu0
      %v2309 = vadd.f32 0.0, %v2308
      %v2310 = vpop.f32.mrb[0].mxu0
      %2311 = vmatprep.mubr.bf16.mxu0 0
      %2312 = vmatmul.mubr.bf16.gmra.mrb[0].mxu0 %v1208
      %v2313 = vpop.f32.mrb[0].mxu0
      %v2314 = vadd.f32 0.0, %v2313
      %v2315 = vpop.f32.mrb[0].mxu0
      %v2316 = vpop.f32.mrb[0].mxu0
      %v2317 = vadd.f32 0.0, %v2316
      %v2318 = vpop.f32.mrb[0].mxu0
      %2319 = vmatprep.mubr.bf16.mxu0 0
      %2320 = vmatmul.mubr.bf16.gmra.mrb[0].mxu0 %v1211
      %v2321 = vpop.f32.mrb[0].mxu0
      %v2322 = vadd.f32 0.0, %v2321
      %v2323 = vpop.f32.mrb[0].mxu0
      %v2324 = vpop.f32.mrb[0].mxu0
      %v2325 = vadd.f32 0.0, %v2324
      %v2326 = vpop.f32.mrb[0].mxu0
      %2327 = vmatprep.mubr.bf16.mxu0 0
      %2328 = vmatmul.mubr.bf16.gmra.mrb[0].mxu0 %v1214
      %v2329 = vpop.f32.mrb[0].mxu0
      %v2330 = vadd.f32 0.0, %v2329
      %v2331 = vpop.f32.mrb[0].mxu0
      %v2332 = vpop.f32.mrb[0].mxu0
      %v2333 = vadd.f32 0.0, %v2332
      %v2334 = vpop.f32.mrb[0].mxu0
      %2335 = vmatprep.mubr.bf16.mxu0 0
      %2336 = vmatmul.mubr.bf16.gmra.mrb[0].mxu0 %v1217
      %v2337 = vpop.f32.mrb[0].mxu0
      %v2338 = vadd.f32 0.0, %v2337
      %v2339 = vpop.f32.mrb[0].mxu0
      %v2340 = vpop.f32.mrb[0].mxu0
      %v2341 = vadd.f32 0.0, %v2340
      %v2342 = vpop.f32.mrb[0].mxu0
      %2343 = vmatprep.mubr.bf16.mxu0 0
      %2344 = vmatmul.mubr.bf16.gmra.mrb[0].mxu0 %v2186
      %v2345 = vpop.f32.mrb[0].mxu0
      %v2346 = vadd.f32 0.0, %v2345
      %v2347 = vpop.f32.mrb[0].mxu0
      %v2348 = vpop.f32.mrb[0].mxu0
      %v2349 = vadd.f32 0.0, %v2348
      %v2350 = vpop.f32.mrb[0].mxu0
      %2351 = vdwg.mxu0
      %v2352 = vadd.f32 %v2141, %v2226
      %v2353 = vadd.f32 %v2142, %v2229
      %v2354 = vadd.f32 %v2143, %v2234
      %v2355 = vadd.f32 %v2144, %v2237
      %v2356 = vadd.f32 %v2145, %v2242
      %v2357 = vadd.f32 %v2146, %v2245
      %v2358 = vadd.f32 %v2147, %v2250
      %v2359 = vadd.f32 %v2148, %v2253
      %v2360 = vadd.f32 %v2149, %v2258
      %v2361 = vadd.f32 %v2150, %v2261
      %v2362 = vadd.f32 %v2151, %v2266
      %v2363 = vadd.f32 %v2152, %v2269
      %v2364 = vadd.f32 %v2153, %v2274
      %v2365 = vadd.f32 %v2154, %v2277
      %v2366 = vadd.f32 %v2155, %v2282
      %v2367 = vadd.f32 %v2156, %v2285
      %v2368 = vadd.f32 %v2157, %v2290
      %v2369 = vadd.f32 %v2158, %v2293
      %v2370 = vadd.f32 %v2159, %v2298
      %v2371 = vadd.f32 %v2160, %v2301
      %v2372 = vadd.f32 %v2161, %v2306
      %v2373 = vadd.f32 %v2162, %v2309
      %v2374 = vadd.f32 %v2163, %v2314
      %v2375 = vadd.f32 %v2164, %v2317
      %v2376 = vadd.f32 %v2165, %v2322
      %v2377 = vadd.f32 %v2166, %v2325
      %v2378 = vadd.f32 %v2167, %v2330
      %v2379 = vadd.f32 %v2168, %v2333
      %v2380 = vadd.f32 %v2169, %v2338
      %v2381 = vadd.f32 %v2170, %v2341
      %v2382 = vadd.f32 %v2171, %v2346
      %v2383 = vadd.f32 %v2172, %v2349
      %v2384 = vrot.slane %v973, 2
      %v2385 = vrot.slane %v906, 2
      %v2386 = vsel %vm1596, %v2384, %v2385
      %v2387 = vrot.slane %v990, 2
      %v2388 = vsel %vm1596, %v2385, %v2387
      %v2391 = vpack.c.bf16 %v2388, %v2386
      %s2392 = scalar_lea.vmem %s3, 10
      %v2393 = vld [vmem:[%s2392] sm:$0x3]
      %v2395 = vsel %vm454, %v2391, 0
      %v2398 = vsel %vm1219, %v2393, 0
      %2400 = vmatprep.subr.bf16.mxu0 0
      %2401 = vmatpush1.bf16.msra.mxu0 %v2398
      %2402 = vmatprep.subr.bf16.mxu0 0
      %2403 = vmatpush1.bf16.msra.mxu0 0
      %2404 = vmatprep.subr.bf16.mxu0 0
      %2405 = vmatpush1.bf16.msra.mxu0 0
      %2406 = vmatprep.subr.bf16.mxu0 0
      %2407 = vmatpush1.bf16.msra.mxu0 0
      %2408 = vmatprep.subr.bf16.mxu0 0
      %2409 = vmatpush1.bf16.msra.mxu0 0
      %2410 = vmatprep.subr.bf16.mxu0 0
      %2411 = vmatpush1.bf16.msra.mxu0 0
      %2412 = vmatprep.subr.bf16.mxu0 0
      %2413 = vmatpush1.bf16.msra.mxu0 0
      %2414 = vmatprep.subr.bf16.mxu0 0
      %2415 = vmatpush1.bf16.msra.mxu0 0
      %2416 = vmatprep.subr.bf16.mxu0 0
      %2417 = vmatpush1.bf16.msra.mxu0 0
      %2418 = vmatprep.subr.bf16.mxu0 0
      %2419 = vmatpush1.bf16.msra.mxu0 0
      %2420 = vmatprep.subr.bf16.mxu0 0
      %2421 = vmatpush1.bf16.msra.mxu0 0
      %2422 = vmatprep.subr.bf16.mxu0 0
      %2423 = vmatpush1.bf16.msra.mxu0 0
      %2424 = vmatprep.subr.bf16.mxu0 0
      %2425 = vmatpush1.bf16.msra.mxu0 0
      %2426 = vmatprep.subr.bf16.mxu0 0
      %2427 = vmatpush1.bf16.msra.mxu0 0
      %2428 = vmatprep.subr.bf16.mxu0 0
      %2429 = vmatpush1.bf16.msra.mxu0 0
      %2430 = vmatprep.subr.bf16.mxu0 0
      %2431 = vmatpush1.bf16.msra.mxu0 0
      %2432 = vmatprep.mubr.bf16.mxu0 0
      %2433 = vmatmul.mubr.bf16.gmra.mrb[0].mxu0 %v1731
      %v2434 = vpop.f32.mrb[0].mxu0
      %v2435 = vadd.f32 0.0, %v2434
      %v2436 = vpop.f32.mrb[0].mxu0
      %v2437 = vpop.f32.mrb[0].mxu0
      %v2438 = vadd.f32 0.0, %v2437
      %v2439 = vpop.f32.mrb[0].mxu0
      %2440 = vmatprep.mubr.bf16.mxu0 0
      %2441 = vmatmul.mubr.bf16.gmra.mrb[0].mxu0 %v1734
      %v2442 = vpop.f32.mrb[0].mxu0
      %v2443 = vadd.f32 0.0, %v2442
      %v2444 = vpop.f32.mrb[0].mxu0
      %v2445 = vpop.f32.mrb[0].mxu0
      %v2446 = vadd.f32 0.0, %v2445
      %v2447 = vpop.f32.mrb[0].mxu0
      %2448 = vmatprep.mubr.bf16.mxu0 0
      %2449 = vmatmul.mubr.bf16.gmra.mrb[0].mxu0 %v1737
      %v2450 = vpop.f32.mrb[0].mxu0
      %v2451 = vadd.f32 0.0, %v2450
      %v2452 = vpop.f32.mrb[0].mxu0
      %v2453 = vpop.f32.mrb[0].mxu0
      %v2454 = vadd.f32 0.0, %v2453
      %v2455 = vpop.f32.mrb[0].mxu0
      %2456 = vmatprep.mubr.bf16.mxu0 0
      %2457 = vmatmul.mubr.bf16.gmra.mrb[0].mxu0 %v1740
      %v2458 = vpop.f32.mrb[0].mxu0
      %v2459 = vadd.f32 0.0, %v2458
      %v2460 = vpop.f32.mrb[0].mxu0
      %v2461 = vpop.f32.mrb[0].mxu0
      %v2462 = vadd.f32 0.0, %v2461
      %v2463 = vpop.f32.mrb[0].mxu0
      %2464 = vmatprep.mubr.bf16.mxu0 0
      %2465 = vmatmul.mubr.bf16.gmra.mrb[0].mxu0 %v1743
      %v2466 = vpop.f32.mrb[0].mxu0
      %v2467 = vadd.f32 0.0, %v2466
      %v2468 = vpop.f32.mrb[0].mxu0
      %v2469 = vpop.f32.mrb[0].mxu0
      %v2470 = vadd.f32 0.0, %v2469
      %v2471 = vpop.f32.mrb[0].mxu0
      %2472 = vmatprep.mubr.bf16.mxu0 0
      %2473 = vmatmul.mubr.bf16.gmra.mrb[0].mxu0 %v1746
      %v2474 = vpop.f32.mrb[0].mxu0
      %v2475 = vadd.f32 0.0, %v2474
      %v2476 = vpop.f32.mrb[0].mxu0
      %v2477 = vpop.f32.mrb[0].mxu0
      %v2478 = vadd.f32 0.0, %v2477
      %v2479 = vpop.f32.mrb[0].mxu0
      %2480 = vmatprep.mubr.bf16.mxu0 0
      %2481 = vmatmul.mubr.bf16.gmra.mrb[0].mxu0 %v1749
      %v2482 = vpop.f32.mrb[0].mxu0
      %v2483 = vadd.f32 0.0, %v2482
      %v2484 = vpop.f32.mrb[0].mxu0
      %v2485 = vpop.f32.mrb[0].mxu0
      %v2486 = vadd.f32 0.0, %v2485
      %v2487 = vpop.f32.mrb[0].mxu0
      %2488 = vmatprep.mubr.bf16.mxu0 0
      %2489 = vmatmul.mubr.bf16.gmra.mrb[0].mxu0 %v1752
      %v2490 = vpop.f32.mrb[0].mxu0
      %v2491 = vadd.f32 0.0, %v2490
      %v2492 = vpop.f32.mrb[0].mxu0
      %v2493 = vpop.f32.mrb[0].mxu0
      %v2494 = vadd.f32 0.0, %v2493
      %v2495 = vpop.f32.mrb[0].mxu0
      %2496 = vmatprep.mubr.bf16.mxu0 0
      %2497 = vmatmul.mubr.bf16.gmra.mrb[0].mxu0 %v1755
      %v2498 = vpop.f32.mrb[0].mxu0
      %v2499 = vadd.f32 0.0, %v2498
      %v2500 = vpop.f32.mrb[0].mxu0
      %v2501 = vpop.f32.mrb[0].mxu0
      %v2502 = vadd.f32 0.0, %v2501
      %v2503 = vpop.f32.mrb[0].mxu0
      %2504 = vmatprep.mubr.bf16.mxu0 0
      %2505 = vmatmul.mubr.bf16.gmra.mrb[0].mxu0 %v1758
      %v2506 = vpop.f32.mrb[0].mxu0
      %v2507 = vadd.f32 0.0, %v2506
      %v2508 = vpop.f32.mrb[0].mxu0
      %v2509 = vpop.f32.mrb[0].mxu0
      %v2510 = vadd.f32 0.0, %v2509
      %v2511 = vpop.f32.mrb[0].mxu0
      %2512 = vmatprep.mubr.bf16.mxu0 0
      %2513 = vmatmul.mubr.bf16.gmra.mrb[0].mxu0 %v1761
      %v2514 = vpop.f32.mrb[0].mxu0
      %v2515 = vadd.f32 0.0, %v2514
      %v2516 = vpop.f32.mrb[0].mxu0
      %v2517 = vpop.f32.mrb[0].mxu0
      %v2518 = vadd.f32 0.0, %v2517
      %v2519 = vpop.f32.mrb[0].mxu0
      %2520 = vmatprep.mubr.bf16.mxu0 0
      %2521 = vmatmul.mubr.bf16.gmra.mrb[0].mxu0 %v1764
      %v2522 = vpop.f32.mrb[0].mxu0
      %v2523 = vadd.f32 0.0, %v2522
      %v2524 = vpop.f32.mrb[0].mxu0
      %v2525 = vpop.f32.mrb[0].mxu0
      %v2526 = vadd.f32 0.0, %v2525
      %v2527 = vpop.f32.mrb[0].mxu0
      %2528 = vmatprep.mubr.bf16.mxu0 0
      %2529 = vmatmul.mubr.bf16.gmra.mrb[0].mxu0 %v1767
      %v2530 = vpop.f32.mrb[0].mxu0
      %v2531 = vadd.f32 0.0, %v2530
      %v2532 = vpop.f32.mrb[0].mxu0
      %v2533 = vpop.f32.mrb[0].mxu0
      %v2534 = vadd.f32 0.0, %v2533
      %v2535 = vpop.f32.mrb[0].mxu0
      %2536 = vmatprep.mubr.bf16.mxu0 0
      %2537 = vmatmul.mubr.bf16.gmra.mrb[0].mxu0 %v1770
      %v2538 = vpop.f32.mrb[0].mxu0
      %v2539 = vadd.f32 0.0, %v2538
      %v2540 = vpop.f32.mrb[0].mxu0
      %v2541 = vpop.f32.mrb[0].mxu0
      %v2542 = vadd.f32 0.0, %v2541
      %v2543 = vpop.f32.mrb[0].mxu0
      %2544 = vmatprep.mubr.bf16.mxu0 0
      %2545 = vmatmul.mubr.bf16.gmra.mrb[0].mxu0 %v1773
      %v2546 = vpop.f32.mrb[0].mxu0
      %v2547 = vadd.f32 0.0, %v2546
      %v2548 = vpop.f32.mrb[0].mxu0
      %v2549 = vpop.f32.mrb[0].mxu0
      %v2550 = vadd.f32 0.0, %v2549
      %v2551 = vpop.f32.mrb[0].mxu0
      %2552 = vmatprep.mubr.bf16.mxu0 0
      %2553 = vmatmul.mubr.bf16.gmra.mrb[0].mxu0 %v2395
      %v2554 = vpop.f32.mrb[0].mxu0
      %v2555 = vadd.f32 0.0, %v2554
      %v2556 = vpop.f32.mrb[0].mxu0
      %v2557 = vpop.f32.mrb[0].mxu0
      %v2558 = vadd.f32 0.0, %v2557
      %v2559 = vpop.f32.mrb[0].mxu0
      %2560 = vdwg.mxu0
      %v2561 = vadd.f32 %v2352, %v2435
      %v2562 = vadd.f32 %v2353, %v2438
      %v2563 = vadd.f32 %v2354, %v2443
      %v2564 = vadd.f32 %v2355, %v2446
      %v2565 = vadd.f32 %v2356, %v2451
      %v2566 = vadd.f32 %v2357, %v2454
      %v2567 = vadd.f32 %v2358, %v2459
      %v2568 = vadd.f32 %v2359, %v2462
      %v2569 = vadd.f32 %v2360, %v2467
      %v2570 = vadd.f32 %v2361, %v2470
      %v2571 = vadd.f32 %v2362, %v2475
      %v2572 = vadd.f32 %v2363, %v2478
      %v2573 = vadd.f32 %v2364, %v2483
      %v2574 = vadd.f32 %v2365, %v2486
      %v2575 = vadd.f32 %v2366, %v2491
      %v2576 = vadd.f32 %v2367, %v2494
      %v2577 = vadd.f32 %v2368, %v2499
      %v2578 = vadd.f32 %v2369, %v2502
      %v2579 = vadd.f32 %v2370, %v2507
      %v2580 = vadd.f32 %v2371, %v2510
      %v2581 = vadd.f32 %v2372, %v2515
      %v2582 = vadd.f32 %v2373, %v2518
      %v2583 = vadd.f32 %v2374, %v2523
      %v2584 = vadd.f32 %v2375, %v2526
      %v2585 = vadd.f32 %v2376, %v2531
      %v2586 = vadd.f32 %v2377, %v2534
      %v2587 = vadd.f32 %v2378, %v2539
      %v2588 = vadd.f32 %v2379, %v2542
      %v2589 = vadd.f32 %v2380, %v2547
      %v2590 = vadd.f32 %v2381, %v2550
      %v2591 = vadd.f32 %v2382, %v2555
      %v2592 = vadd.f32 %v2383, %v2558
      %s2593 = scalar_lea.vmem %s3, 12
      %v2594 = vld [vmem:[%s2593] sm:$0x3]
      %v2596 = vsel %vm1219, %v2594, 0
      %2598 = vmatprep.subr.bf16.mxu0 0
      %2599 = vmatpush1.bf16.msra.mxu0 %v2596
      %2600 = vmatprep.subr.bf16.mxu0 0
      %2601 = vmatpush1.bf16.msra.mxu0 0
      %2602 = vmatprep.subr.bf16.mxu0 0
      %2603 = vmatpush1.bf16.msra.mxu0 0
      %2604 = vmatprep.subr.bf16.mxu0 0
      %2605 = vmatpush1.bf16.msra.mxu0 0
      %2606 = vmatprep.subr.bf16.mxu0 0
      %2607 = vmatpush1.bf16.msra.mxu0 0
      %2608 = vmatprep.subr.bf16.mxu0 0
      %2609 = vmatpush1.bf16.msra.mxu0 0
      %2610 = vmatprep.subr.bf16.mxu0 0
      %2611 = vmatpush1.bf16.msra.mxu0 0
      %2612 = vmatprep.subr.bf16.mxu0 0
      %2613 = vmatpush1.bf16.msra.mxu0 0
      %2614 = vmatprep.subr.bf16.mxu0 0
      %2615 = vmatpush1.bf16.msra.mxu0 0
      %2616 = vmatprep.subr.bf16.mxu0 0
      %2617 = vmatpush1.bf16.msra.mxu0 0
      %2618 = vmatprep.subr.bf16.mxu0 0
      %2619 = vmatpush1.bf16.msra.mxu0 0
      %2620 = vmatprep.subr.bf16.mxu0 0
      %2621 = vmatpush1.bf16.msra.mxu0 0
      %2622 = vmatprep.subr.bf16.mxu0 0
      %2623 = vmatpush1.bf16.msra.mxu0 0
      %2624 = vmatprep.subr.bf16.mxu0 0
      %2625 = vmatpush1.bf16.msra.mxu0 0
      %2626 = vmatprep.subr.bf16.mxu0 0
      %2627 = vmatpush1.bf16.msra.mxu0 0
      %2628 = vmatprep.subr.bf16.mxu0 0
      %2629 = vmatpush1.bf16.msra.mxu0 0
      %2630 = vmatprep.mubr.bf16.mxu0 0
      %2631 = vmatmul.mubr.bf16.gmra.mrb[0].mxu0 %v1391
      %v2632 = vpop.f32.mrb[0].mxu0
      %v2633 = vadd.f32 0.0, %v2632
      %v2634 = vpop.f32.mrb[0].mxu0
      %v2635 = vpop.f32.mrb[0].mxu0
      %v2636 = vadd.f32 0.0, %v2635
      %v2637 = vpop.f32.mrb[0].mxu0
      %2638 = vmatprep.mubr.bf16.mxu0 0
      %2639 = vmatmul.mubr.bf16.gmra.mrb[0].mxu0 %v1394
      %v2640 = vpop.f32.mrb[0].mxu0
      %v2641 = vadd.f32 0.0, %v2640
      %v2642 = vpop.f32.mrb[0].mxu0
      %v2643 = vpop.f32.mrb[0].mxu0
      %v2644 = vadd.f32 0.0, %v2643
      %v2645 = vpop.f32.mrb[0].mxu0
      %2646 = vmatprep.mubr.bf16.mxu0 0
      %2647 = vmatmul.mubr.bf16.gmra.mrb[0].mxu0 %v1397
      %v2648 = vpop.f32.mrb[0].mxu0
      %v2649 = vadd.f32 0.0, %v2648
      %v2650 = vpop.f32.mrb[0].mxu0
      %v2651 = vpop.f32.mrb[0].mxu0
      %v2652 = vadd.f32 0.0, %v2651
      %v2653 = vpop.f32.mrb[0].mxu0
      %2654 = vmatprep.mubr.bf16.mxu0 0
      %2655 = vmatmul.mubr.bf16.gmra.mrb[0].mxu0 %v1400
      %v2656 = vpop.f32.mrb[0].mxu0
      %v2657 = vadd.f32 0.0, %v2656
      %v2658 = vpop.f32.mrb[0].mxu0
      %v2659 = vpop.f32.mrb[0].mxu0
      %v2660 = vadd.f32 0.0, %v2659
      %v2661 = vpop.f32.mrb[0].mxu0
      %2662 = vmatprep.mubr.bf16.mxu0 0
      %2663 = vmatmul.mubr.bf16.gmra.mrb[0].mxu0 %v1403
      %v2664 = vpop.f32.mrb[0].mxu0
      %v2665 = vadd.f32 0.0, %v2664
      %v2666 = vpop.f32.mrb[0].mxu0
      %v2667 = vpop.f32.mrb[0].mxu0
      %v2668 = vadd.f32 0.0, %v2667
      %v2669 = vpop.f32.mrb[0].mxu0
      %2670 = vmatprep.mubr.bf16.mxu0 0
      %2671 = vmatmul.mubr.bf16.gmra.mrb[0].mxu0 %v1406
      %v2672 = vpop.f32.mrb[0].mxu0
      %v2673 = vadd.f32 0.0, %v2672
      %v2674 = vpop.f32.mrb[0].mxu0
      %v2675 = vpop.f32.mrb[0].mxu0
      %v2676 = vadd.f32 0.0, %v2675
      %v2677 = vpop.f32.mrb[0].mxu0
      %2678 = vmatprep.mubr.bf16.mxu0 0
      %2679 = vmatmul.mubr.bf16.gmra.mrb[0].mxu0 %v1409
      %v2680 = vpop.f32.mrb[0].mxu0
      %v2681 = vadd.f32 0.0, %v2680
      %v2682 = vpop.f32.mrb[0].mxu0
      %v2683 = vpop.f32.mrb[0].mxu0
      %v2684 = vadd.f32 0.0, %v2683
      %v2685 = vpop.f32.mrb[0].mxu0
      %2686 = vmatprep.mubr.bf16.mxu0 0
      %2687 = vmatmul.mubr.bf16.gmra.mrb[0].mxu0 %v1412
      %v2688 = vpop.f32.mrb[0].mxu0
      %v2689 = vadd.f32 0.0, %v2688
      %v2690 = vpop.f32.mrb[0].mxu0
      %v2691 = vpop.f32.mrb[0].mxu0
      %v2692 = vadd.f32 0.0, %v2691
      %v2693 = vpop.f32.mrb[0].mxu0
      %2694 = vmatprep.mubr.bf16.mxu0 0
      %2695 = vmatmul.mubr.bf16.gmra.mrb[0].mxu0 %v1415
      %v2696 = vpop.f32.mrb[0].mxu0
      %v2697 = vadd.f32 0.0, %v2696
      %v2698 = vpop.f32.mrb[0].mxu0
      %v2699 = vpop.f32.mrb[0].mxu0
      %v2700 = vadd.f32 0.0, %v2699
      %v2701 = vpop.f32.mrb[0].mxu0
      %2702 = vmatprep.mubr.bf16.mxu0 0
      %2703 = vmatmul.mubr.bf16.gmra.mrb[0].mxu0 %v1418
      %v2704 = vpop.f32.mrb[0].mxu0
      %v2705 = vadd.f32 0.0, %v2704
      %v2706 = vpop.f32.mrb[0].mxu0
      %v2707 = vpop.f32.mrb[0].mxu0
      %v2708 = vadd.f32 0.0, %v2707
      %v2709 = vpop.f32.mrb[0].mxu0
      %2710 = vmatprep.mubr.bf16.mxu0 0
      %2711 = vmatmul.mubr.bf16.gmra.mrb[0].mxu0 %v1421
      %v2712 = vpop.f32.mrb[0].mxu0
      %v2713 = vadd.f32 0.0, %v2712
      %v2714 = vpop.f32.mrb[0].mxu0
      %v2715 = vpop.f32.mrb[0].mxu0
      %v2716 = vadd.f32 0.0, %v2715
      %v2717 = vpop.f32.mrb[0].mxu0
      %2718 = vmatprep.mubr.bf16.mxu0 0
      %2719 = vmatmul.mubr.bf16.gmra.mrb[0].mxu0 %v1424
      %v2720 = vpop.f32.mrb[0].mxu0
      %v2721 = vadd.f32 0.0, %v2720
      %v2722 = vpop.f32.mrb[0].mxu0
      %v2723 = vpop.f32.mrb[0].mxu0
      %v2724 = vadd.f32 0.0, %v2723
      %v2725 = vpop.f32.mrb[0].mxu0
      %2726 = vmatprep.mubr.bf16.mxu0 0
      %2727 = vmatmul.mubr.bf16.gmra.mrb[0].mxu0 %v1427
      %v2728 = vpop.f32.mrb[0].mxu0
      %v2729 = vadd.f32 0.0, %v2728
      %v2730 = vpop.f32.mrb[0].mxu0
      %v2731 = vpop.f32.mrb[0].mxu0
      %v2732 = vadd.f32 0.0, %v2731
      %v2733 = vpop.f32.mrb[0].mxu0
      %2734 = vmatprep.mubr.bf16.mxu0 0
      %2735 = vmatmul.mubr.bf16.gmra.mrb[0].mxu0 %v1430
      %v2736 = vpop.f32.mrb[0].mxu0
      %v2737 = vadd.f32 0.0, %v2736
      %v2738 = vpop.f32.mrb[0].mxu0
      %v2739 = vpop.f32.mrb[0].mxu0
      %v2740 = vadd.f32 0.0, %v2739
      %v2741 = vpop.f32.mrb[0].mxu0
      %2742 = vmatprep.mubr.bf16.mxu0 0
      %2743 = vmatmul.mubr.bf16.gmra.mrb[0].mxu0 %v1975
      %v2744 = vpop.f32.mrb[0].mxu0
      %v2745 = vadd.f32 0.0, %v2744
      %v2746 = vpop.f32.mrb[0].mxu0
      %v2747 = vpop.f32.mrb[0].mxu0
      %v2748 = vadd.f32 0.0, %v2747
      %v2749 = vpop.f32.mrb[0].mxu0
      %2750 = vmatprep.mubr.bf16.mxu0 0
      %2751 = vmatmul.mubr.bf16.gmra.mrb[0].mxu0 %v1385
      %v2752 = vpop.f32.mrb[0].mxu0
      %v2753 = vadd.f32 0.0, %v2752
      %v2754 = vpop.f32.mrb[0].mxu0
      %v2755 = vpop.f32.mrb[0].mxu0
      %v2756 = vadd.f32 0.0, %v2755
      %v2757 = vpop.f32.mrb[0].mxu0
      %2758 = vdwg.mxu0
      %v2759 = vadd.f32 %v2561, %v2633
      %v2760 = vadd.f32 %v2562, %v2636
      %v2761 = vadd.f32 %v2563, %v2641
      %v2762 = vadd.f32 %v2564, %v2644
      %v2763 = vadd.f32 %v2565, %v2649
      %v2764 = vadd.f32 %v2566, %v2652
      %v2765 = vadd.f32 %v2567, %v2657
      %v2766 = vadd.f32 %v2568, %v2660
      %v2767 = vadd.f32 %v2569, %v2665
      %v2768 = vadd.f32 %v2570, %v2668
      %v2769 = vadd.f32 %v2571, %v2673
      %v2770 = vadd.f32 %v2572, %v2676
      %v2771 = vadd.f32 %v2573, %v2681
      %v2772 = vadd.f32 %v2574, %v2684
      %v2773 = vadd.f32 %v2575, %v2689
      %v2774 = vadd.f32 %v2576, %v2692
      %v2775 = vadd.f32 %v2577, %v2697
      %v2776 = vadd.f32 %v2578, %v2700
      %v2777 = vadd.f32 %v2579, %v2705
      %v2778 = vadd.f32 %v2580, %v2708
      %v2779 = vadd.f32 %v2581, %v2713
      %v2780 = vadd.f32 %v2582, %v2716
      %v2781 = vadd.f32 %v2583, %v2721
      %v2782 = vadd.f32 %v2584, %v2724
      %v2783 = vadd.f32 %v2585, %v2729
      %v2784 = vadd.f32 %v2586, %v2732
      %v2785 = vadd.f32 %v2587, %v2737
      %v2786 = vadd.f32 %v2588, %v2740
      %v2787 = vadd.f32 %v2589, %v2745
      %v2788 = vadd.f32 %v2590, %v2748
      %v2789 = vadd.f32 %v2591, %v2753
      %v2790 = vadd.f32 %v2592, %v2756
      %s2791 = scalar_lea.vmem %s3, 14
      %v2792 = vld [vmem:[%s2791] sm:$0x3]
      %v2794 = vsel %vm1219, %v2792, 0
      %2796 = vmatprep.subr.bf16.mxu0 0
      %2797 = vmatpush1.bf16.msra.mxu0 %v2794
      %2798 = vmatprep.subr.bf16.mxu0 0
      %2799 = vmatpush1.bf16.msra.mxu0 0
      %2800 = vmatprep.subr.bf16.mxu0 0
      %2801 = vmatpush1.bf16.msra.mxu0 0
      %2802 = vmatprep.subr.bf16.mxu0 0
      %2803 = vmatpush1.bf16.msra.mxu0 0
      %2804 = vmatprep.subr.bf16.mxu0 0
      %2805 = vmatpush1.bf16.msra.mxu0 0
      %2806 = vmatprep.subr.bf16.mxu0 0
      %2807 = vmatpush1.bf16.msra.mxu0 0
      %2808 = vmatprep.subr.bf16.mxu0 0
      %2809 = vmatpush1.bf16.msra.mxu0 0
      %2810 = vmatprep.subr.bf16.mxu0 0
      %2811 = vmatpush1.bf16.msra.mxu0 0
      %2812 = vmatprep.subr.bf16.mxu0 0
      %2813 = vmatpush1.bf16.msra.mxu0 0
      %2814 = vmatprep.subr.bf16.mxu0 0
      %2815 = vmatpush1.bf16.msra.mxu0 0
      %2816 = vmatprep.subr.bf16.mxu0 0
      %2817 = vmatpush1.bf16.msra.mxu0 0
      %2818 = vmatprep.subr.bf16.mxu0 0
      %2819 = vmatpush1.bf16.msra.mxu0 0
      %2820 = vmatprep.subr.bf16.mxu0 0
      %2821 = vmatpush1.bf16.msra.mxu0 0
      %2822 = vmatprep.subr.bf16.mxu0 0
      %2823 = vmatpush1.bf16.msra.mxu0 0
      %2824 = vmatprep.subr.bf16.mxu0 0
      %2825 = vmatpush1.bf16.msra.mxu0 0
      %2826 = vmatprep.subr.bf16.mxu0 0
      %2827 = vmatpush1.bf16.msra.mxu0 0
      %2828 = vmatprep.mubr.bf16.mxu0 0
      %2829 = vmatmul.mubr.bf16.gmra.mrb[0].mxu0 %v1178
      %v2830 = vpop.f32.mrb[0].mxu0
      %v2831 = vadd.f32 0.0, %v2830
      %v2832 = vpop.f32.mrb[0].mxu0
      %v2833 = vpop.f32.mrb[0].mxu0
      %v2834 = vadd.f32 0.0, %v2833
      %v2835 = vpop.f32.mrb[0].mxu0
      %2836 = vmatprep.mubr.bf16.mxu0 0
      %2837 = vmatmul.mubr.bf16.gmra.mrb[0].mxu0 %v1181
      %v2838 = vpop.f32.mrb[0].mxu0
      %v2839 = vadd.f32 0.0, %v2838
      %v2840 = vpop.f32.mrb[0].mxu0
      %v2841 = vpop.f32.mrb[0].mxu0
      %v2842 = vadd.f32 0.0, %v2841
      %v2843 = vpop.f32.mrb[0].mxu0
      %2844 = vmatprep.mubr.bf16.mxu0 0
      %2845 = vmatmul.mubr.bf16.gmra.mrb[0].mxu0 %v1184
      %v2846 = vpop.f32.mrb[0].mxu0
      %v2847 = vadd.f32 0.0, %v2846
      %v2848 = vpop.f32.mrb[0].mxu0
      %v2849 = vpop.f32.mrb[0].mxu0
      %v2850 = vadd.f32 0.0, %v2849
      %v2851 = vpop.f32.mrb[0].mxu0
      %2852 = vmatprep.mubr.bf16.mxu0 0
      %2853 = vmatmul.mubr.bf16.gmra.mrb[0].mxu0 %v1187
      %v2854 = vpop.f32.mrb[0].mxu0
      %v2855 = vadd.f32 0.0, %v2854
      %v2856 = vpop.f32.mrb[0].mxu0
      %v2857 = vpop.f32.mrb[0].mxu0
      %v2858 = vadd.f32 0.0, %v2857
      %v2859 = vpop.f32.mrb[0].mxu0
      %2860 = vmatprep.mubr.bf16.mxu0 0
      %2861 = vmatmul.mubr.bf16.gmra.mrb[0].mxu0 %v1190
      %v2862 = vpop.f32.mrb[0].mxu0
      %v2863 = vadd.f32 0.0, %v2862
      %v2864 = vpop.f32.mrb[0].mxu0
      %v2865 = vpop.f32.mrb[0].mxu0
      %v2866 = vadd.f32 0.0, %v2865
      %v2867 = vpop.f32.mrb[0].mxu0
      %2868 = vmatprep.mubr.bf16.mxu0 0
      %2869 = vmatmul.mubr.bf16.gmra.mrb[0].mxu0 %v1193
      %v2870 = vpop.f32.mrb[0].mxu0
      %v2871 = vadd.f32 0.0, %v2870
      %v2872 = vpop.f32.mrb[0].mxu0
      %v2873 = vpop.f32.mrb[0].mxu0
      %v2874 = vadd.f32 0.0, %v2873
      %v2875 = vpop.f32.mrb[0].mxu0
      %2876 = vmatprep.mubr.bf16.mxu0 0
      %2877 = vmatmul.mubr.bf16.gmra.mrb[0].mxu0 %v1196
      %v2878 = vpop.f32.mrb[0].mxu0
      %v2879 = vadd.f32 0.0, %v2878
      %v2880 = vpop.f32.mrb[0].mxu0
      %v2881 = vpop.f32.mrb[0].mxu0
      %v2882 = vadd.f32 0.0, %v2881
      %v2883 = vpop.f32.mrb[0].mxu0
      %2884 = vmatprep.mubr.bf16.mxu0 0
      %2885 = vmatmul.mubr.bf16.gmra.mrb[0].mxu0 %v1199
      %v2886 = vpop.f32.mrb[0].mxu0
      %v2887 = vadd.f32 0.0, %v2886
      %v2888 = vpop.f32.mrb[0].mxu0
      %v2889 = vpop.f32.mrb[0].mxu0
      %v2890 = vadd.f32 0.0, %v2889
      %v2891 = vpop.f32.mrb[0].mxu0
      %2892 = vmatprep.mubr.bf16.mxu0 0
      %2893 = vmatmul.mubr.bf16.gmra.mrb[0].mxu0 %v1202
      %v2894 = vpop.f32.mrb[0].mxu0
      %v2895 = vadd.f32 0.0, %v2894
      %v2896 = vpop.f32.mrb[0].mxu0
      %v2897 = vpop.f32.mrb[0].mxu0
      %v2898 = vadd.f32 0.0, %v2897
      %v2899 = vpop.f32.mrb[0].mxu0
      %2900 = vmatprep.mubr.bf16.mxu0 0
      %2901 = vmatmul.mubr.bf16.gmra.mrb[0].mxu0 %v1205
      %v2902 = vpop.f32.mrb[0].mxu0
      %v2903 = vadd.f32 0.0, %v2902
      %v2904 = vpop.f32.mrb[0].mxu0
      %v2905 = vpop.f32.mrb[0].mxu0
      %v2906 = vadd.f32 0.0, %v2905
      %v2907 = vpop.f32.mrb[0].mxu0
      %2908 = vmatprep.mubr.bf16.mxu0 0
      %2909 = vmatmul.mubr.bf16.gmra.mrb[0].mxu0 %v1208
      %v2910 = vpop.f32.mrb[0].mxu0
      %v2911 = vadd.f32 0.0, %v2910
      %v2912 = vpop.f32.mrb[0].mxu0
      %v2913 = vpop.f32.mrb[0].mxu0
      %v2914 = vadd.f32 0.0, %v2913
      %v2915 = vpop.f32.mrb[0].mxu0
      %2916 = vmatprep.mubr.bf16.mxu0 0
      %2917 = vmatmul.mubr.bf16.gmra.mrb[0].mxu0 %v1211
      %v2918 = vpop.f32.mrb[0].mxu0
      %v2919 = vadd.f32 0.0, %v2918
      %v2920 = vpop.f32.mrb[0].mxu0
      %v2921 = vpop.f32.mrb[0].mxu0
      %v2922 = vadd.f32 0.0, %v2921
      %v2923 = vpop.f32.mrb[0].mxu0
      %2924 = vmatprep.mubr.bf16.mxu0 0
      %2925 = vmatmul.mubr.bf16.gmra.mrb[0].mxu0 %v1214
      %v2926 = vpop.f32.mrb[0].mxu0
      %v2927 = vadd.f32 0.0, %v2926
      %v2928 = vpop.f32.mrb[0].mxu0
      %v2929 = vpop.f32.mrb[0].mxu0
      %v2930 = vadd.f32 0.0, %v2929
      %v2931 = vpop.f32.mrb[0].mxu0
      %2932 = vmatprep.mubr.bf16.mxu0 0
      %2933 = vmatmul.mubr.bf16.gmra.mrb[0].mxu0 %v1217
      %v2934 = vpop.f32.mrb[0].mxu0
      %v2935 = vadd.f32 0.0, %v2934
      %v2936 = vpop.f32.mrb[0].mxu0
      %v2937 = vpop.f32.mrb[0].mxu0
      %v2938 = vadd.f32 0.0, %v2937
      %v2939 = vpop.f32.mrb[0].mxu0
      %2940 = vmatprep.mubr.bf16.mxu0 0
      %2941 = vmatmul.mubr.bf16.gmra.mrb[0].mxu0 %v2186
      %v2942 = vpop.f32.mrb[0].mxu0
      %v2943 = vadd.f32 0.0, %v2942
      %v2944 = vpop.f32.mrb[0].mxu0
      %v2945 = vpop.f32.mrb[0].mxu0
      %v2946 = vadd.f32 0.0, %v2945
      %v2947 = vpop.f32.mrb[0].mxu0
      %2948 = vmatprep.mubr.bf16.mxu0 0
      %2949 = vmatmul.mubr.bf16.gmra.mrb[0].mxu0 %v1172
      %v2950 = vpop.f32.mrb[0].mxu0
      %v2951 = vadd.f32 0.0, %v2950
      %v2952 = vpop.f32.mrb[0].mxu0
      %v2953 = vpop.f32.mrb[0].mxu0
      %v2954 = vadd.f32 0.0, %v2953
      %v2955 = vpop.f32.mrb[0].mxu0
      %2956 = vdwg.mxu0
      %v2957 = vadd.f32 %v2759, %v2831
      %v2958 = vadd.f32 %v2760, %v2834
      %v2959 = vadd.f32 %v2761, %v2839
      %v2960 = vadd.f32 %v2762, %v2842
      %v2961 = vadd.f32 %v2763, %v2847
      %v2962 = vadd.f32 %v2764, %v2850
      %v2963 = vadd.f32 %v2765, %v2855
      %v2964 = vadd.f32 %v2766, %v2858
      %v2965 = vadd.f32 %v2767, %v2863
      %v2966 = vadd.f32 %v2768, %v2866
      %v2967 = vadd.f32 %v2769, %v2871
      %v2968 = vadd.f32 %v2770, %v2874
      %v2969 = vadd.f32 %v2771, %v2879
      %v2970 = vadd.f32 %v2772, %v2882
      %v2971 = vadd.f32 %v2773, %v2887
      %v2972 = vadd.f32 %v2774, %v2890
      %v2973 = vadd.f32 %v2775, %v2895
      %v2974 = vadd.f32 %v2776, %v2898
      %v2975 = vadd.f32 %v2777, %v2903
      %v2976 = vadd.f32 %v2778, %v2906
      %v2977 = vadd.f32 %v2779, %v2911
      %v2978 = vadd.f32 %v2780, %v2914
      %v2979 = vadd.f32 %v2781, %v2919
      %v2980 = vadd.f32 %v2782, %v2922
      %v2981 = vadd.f32 %v2783, %v2927
      %v2982 = vadd.f32 %v2784, %v2930
      %v2983 = vadd.f32 %v2785, %v2935
      %v2984 = vadd.f32 %v2786, %v2938
      %v2985 = vadd.f32 %v2787, %v2943
      %v2986 = vadd.f32 %v2788, %v2946
      %v2987 = vadd.f32 %v2789, %v2951
      %v2988 = vadd.f32 %v2790, %v2954
      %s2989 = scalar_lea.vmem %s3, 16
      %v2990 = vld [vmem:[%s2989] sm:$0x3]
      %v2992 = vsel %vm1219, %v2990, 0
      %2994 = vmatprep.subr.bf16.mxu0 0
      %2995 = vmatpush1.bf16.msra.mxu0 %v2992
      %2996 = vmatprep.subr.bf16.mxu0 0
      %2997 = vmatpush1.bf16.msra.mxu0 0
      %2998 = vmatprep.subr.bf16.mxu0 0
      %2999 = vmatpush1.bf16.msra.mxu0 0
      %3000 = vmatprep.subr.bf16.mxu0 0
      %3001 = vmatpush1.bf16.msra.mxu0 0
      %3002 = vmatprep.subr.bf16.mxu0 0
      %3003 = vmatpush1.bf16.msra.mxu0 0
      %3004 = vmatprep.subr.bf16.mxu0 0
      %3005 = vmatpush1.bf16.msra.mxu0 0
      %3006 = vmatprep.subr.bf16.mxu0 0
      %3007 = vmatpush1.bf16.msra.mxu0 0
      %3008 = vmatprep.subr.bf16.mxu0 0
      %3009 = vmatpush1.bf16.msra.mxu0 0
      %3010 = vmatprep.subr.bf16.mxu0 0
      %3011 = vmatpush1.bf16.msra.mxu0 0
      %3012 = vmatprep.subr.bf16.mxu0 0
      %3013 = vmatpush1.bf16.msra.mxu0 0
      %3014 = vmatprep.subr.bf16.mxu0 0
      %3015 = vmatpush1.bf16.msra.mxu0 0
      %3016 = vmatprep.subr.bf16.mxu0 0
      %3017 = vmatpush1.bf16.msra.mxu0 0
      %3018 = vmatprep.subr.bf16.mxu0 0
      %3019 = vmatpush1.bf16.msra.mxu0 0
      %3020 = vmatprep.subr.bf16.mxu0 0
      %3021 = vmatpush1.bf16.msra.mxu0 0
      %3022 = vmatprep.subr.bf16.mxu0 0
      %3023 = vmatpush1.bf16.msra.mxu0 0
      %3024 = vmatprep.subr.bf16.mxu0 0
      %3025 = vmatpush1.bf16.msra.mxu0 0
      %3026 = vmatprep.mubr.bf16.mxu0 0
      %3027 = vmatmul.mubr.bf16.gmra.mrb[0].mxu0 %v1734
      %v3028 = vpop.f32.mrb[0].mxu0
      %v3029 = vadd.f32 0.0, %v3028
      %v3030 = vpop.f32.mrb[0].mxu0
      %v3031 = vpop.f32.mrb[0].mxu0
      %v3032 = vadd.f32 0.0, %v3031
      %v3033 = vpop.f32.mrb[0].mxu0
      %3034 = vmatprep.mubr.bf16.mxu0 0
      %3035 = vmatmul.mubr.bf16.gmra.mrb[0].mxu0 %v1737
      %v3036 = vpop.f32.mrb[0].mxu0
      %v3037 = vadd.f32 0.0, %v3036
      %v3038 = vpop.f32.mrb[0].mxu0
      %v3039 = vpop.f32.mrb[0].mxu0
      %v3040 = vadd.f32 0.0, %v3039
      %v3041 = vpop.f32.mrb[0].mxu0
      %3042 = vmatprep.mubr.bf16.mxu0 0
      %3043 = vmatmul.mubr.bf16.gmra.mrb[0].mxu0 %v1740
      %v3044 = vpop.f32.mrb[0].mxu0
      %v3045 = vadd.f32 0.0, %v3044
      %v3046 = vpop.f32.mrb[0].mxu0
      %v3047 = vpop.f32.mrb[0].mxu0
      %v3048 = vadd.f32 0.0, %v3047
      %v3049 = vpop.f32.mrb[0].mxu0
      %3050 = vmatprep.mubr.bf16.mxu0 0
      %3051 = vmatmul.mubr.bf16.gmra.mrb[0].mxu0 %v1743
      %v3052 = vpop.f32.mrb[0].mxu0
      %v3053 = vadd.f32 0.0, %v3052
      %v3054 = vpop.f32.mrb[0].mxu0
      %v3055 = vpop.f32.mrb[0].mxu0
      %v3056 = vadd.f32 0.0, %v3055
      %v3057 = vpop.f32.mrb[0].mxu0
      %3058 = vmatprep.mubr.bf16.mxu0 0
      %3059 = vmatmul.mubr.bf16.gmra.mrb[0].mxu0 %v1746
      %v3060 = vpop.f32.mrb[0].mxu0
      %v3061 = vadd.f32 0.0, %v3060
      %v3062 = vpop.f32.mrb[0].mxu0
      %v3063 = vpop.f32.mrb[0].mxu0
      %v3064 = vadd.f32 0.0, %v3063
      %v3065 = vpop.f32.mrb[0].mxu0
      %3066 = vmatprep.mubr.bf16.mxu0 0
      %3067 = vmatmul.mubr.bf16.gmra.mrb[0].mxu0 %v1749
      %v3068 = vpop.f32.mrb[0].mxu0
      %v3069 = vadd.f32 0.0, %v3068
      %v3070 = vpop.f32.mrb[0].mxu0
      %v3071 = vpop.f32.mrb[0].mxu0
      %v3072 = vadd.f32 0.0, %v3071
      %v3073 = vpop.f32.mrb[0].mxu0
      %3074 = vmatprep.mubr.bf16.mxu0 0
      %3075 = vmatmul.mubr.bf16.gmra.mrb[0].mxu0 %v1752
      %v3076 = vpop.f32.mrb[0].mxu0
      %v3077 = vadd.f32 0.0, %v3076
      %v3078 = vpop.f32.mrb[0].mxu0
      %v3079 = vpop.f32.mrb[0].mxu0
      %v3080 = vadd.f32 0.0, %v3079
      %v3081 = vpop.f32.mrb[0].mxu0
      %3082 = vmatprep.mubr.bf16.mxu0 0
      %3083 = vmatmul.mubr.bf16.gmra.mrb[0].mxu0 %v1755
      %v3084 = vpop.f32.mrb[0].mxu0
      %v3085 = vadd.f32 0.0, %v3084
      %v3086 = vpop.f32.mrb[0].mxu0
      %v3087 = vpop.f32.mrb[0].mxu0
      %v3088 = vadd.f32 0.0, %v3087
      %v3089 = vpop.f32.mrb[0].mxu0
      %3090 = vmatprep.mubr.bf16.mxu0 0
      %3091 = vmatmul.mubr.bf16.gmra.mrb[0].mxu0 %v1758
      %v3092 = vpop.f32.mrb[0].mxu0
      %v3093 = vadd.f32 0.0, %v3092
      %v3094 = vpop.f32.mrb[0].mxu0
      %v3095 = vpop.f32.mrb[0].mxu0
      %v3096 = vadd.f32 0.0, %v3095
      %v3097 = vpop.f32.mrb[0].mxu0
      %3098 = vmatprep.mubr.bf16.mxu0 0
      %3099 = vmatmul.mubr.bf16.gmra.mrb[0].mxu0 %v1761
      %v3100 = vpop.f32.mrb[0].mxu0
      %v3101 = vadd.f32 0.0, %v3100
      %v3102 = vpop.f32.mrb[0].mxu0
      %v3103 = vpop.f32.mrb[0].mxu0
      %v3104 = vadd.f32 0.0, %v3103
      %v3105 = vpop.f32.mrb[0].mxu0
      %3106 = vmatprep.mubr.bf16.mxu0 0
      %3107 = vmatmul.mubr.bf16.gmra.mrb[0].mxu0 %v1764
      %v3108 = vpop.f32.mrb[0].mxu0
      %v3109 = vadd.f32 0.0, %v3108
      %v3110 = vpop.f32.mrb[0].mxu0
      %v3111 = vpop.f32.mrb[0].mxu0
      %v3112 = vadd.f32 0.0, %v3111
      %v3113 = vpop.f32.mrb[0].mxu0
      %3114 = vmatprep.mubr.bf16.mxu0 0
      %3115 = vmatmul.mubr.bf16.gmra.mrb[0].mxu0 %v1767
      %v3116 = vpop.f32.mrb[0].mxu0
      %v3117 = vadd.f32 0.0, %v3116
      %v3118 = vpop.f32.mrb[0].mxu0
      %v3119 = vpop.f32.mrb[0].mxu0
      %v3120 = vadd.f32 0.0, %v3119
      %v3121 = vpop.f32.mrb[0].mxu0
      %3122 = vmatprep.mubr.bf16.mxu0 0
      %3123 = vmatmul.mubr.bf16.gmra.mrb[0].mxu0 %v1770
      %v3124 = vpop.f32.mrb[0].mxu0
      %v3125 = vadd.f32 0.0, %v3124
      %v3126 = vpop.f32.mrb[0].mxu0
      %v3127 = vpop.f32.mrb[0].mxu0
      %v3128 = vadd.f32 0.0, %v3127
      %v3129 = vpop.f32.mrb[0].mxu0
      %3130 = vmatprep.mubr.bf16.mxu0 0
      %3131 = vmatmul.mubr.bf16.gmra.mrb[0].mxu0 %v1773
      %v3132 = vpop.f32.mrb[0].mxu0
      %v3133 = vadd.f32 0.0, %v3132
      %v3134 = vpop.f32.mrb[0].mxu0
      %v3135 = vpop.f32.mrb[0].mxu0
      %v3136 = vadd.f32 0.0, %v3135
      %v3137 = vpop.f32.mrb[0].mxu0
      %3138 = vmatprep.mubr.bf16.mxu0 0
      %3139 = vmatmul.mubr.bf16.gmra.mrb[0].mxu0 %v2395
      %v3140 = vpop.f32.mrb[0].mxu0
      %v3141 = vadd.f32 0.0, %v3140
      %v3142 = vpop.f32.mrb[0].mxu0
      %v3143 = vpop.f32.mrb[0].mxu0
      %v3144 = vadd.f32 0.0, %v3143
      %v3145 = vpop.f32.mrb[0].mxu0
      %3146 = vmatprep.mubr.bf16.mxu0 0
      %3147 = vmatmul.mubr.bf16.gmra.mrb[0].mxu0 %v1728
      %v3148 = vpop.f32.mrb[0].mxu0
      %v3149 = vadd.f32 0.0, %v3148
      %v3150 = vpop.f32.mrb[0].mxu0
      %v3151 = vpop.f32.mrb[0].mxu0
      %v3152 = vadd.f32 0.0, %v3151
      %v3153 = vpop.f32.mrb[0].mxu0
      %3154 = vdwg.mxu0
      %v3155 = vadd.f32 %v2957, %v3029
      %v3156 = vadd.f32 %v2958, %v3032
      %v3157 = vadd.f32 %v2959, %v3037
      %v3158 = vadd.f32 %v2960, %v3040
      %v3159 = vadd.f32 %v2961, %v3045
      %v3160 = vadd.f32 %v2962, %v3048
      %v3161 = vadd.f32 %v2963, %v3053
      %v3162 = vadd.f32 %v2964, %v3056
      %v3163 = vadd.f32 %v2965, %v3061
      %v3164 = vadd.f32 %v2966, %v3064
      %v3165 = vadd.f32 %v2967, %v3069
      %v3166 = vadd.f32 %v2968, %v3072
      %v3167 = vadd.f32 %v2969, %v3077
      %v3168 = vadd.f32 %v2970, %v3080
      %v3169 = vadd.f32 %v2971, %v3085
      %v3170 = vadd.f32 %v2972, %v3088
      %v3171 = vadd.f32 %v2973, %v3093
      %v3172 = vadd.f32 %v2974, %v3096
      %v3173 = vadd.f32 %v2975, %v3101
      %v3174 = vadd.f32 %v2976, %v3104
      %v3175 = vadd.f32 %v2977, %v3109
      %v3176 = vadd.f32 %v2978, %v3112
      %v3177 = vadd.f32 %v2979, %v3117
      %v3178 = vadd.f32 %v2980, %v3120
      %v3179 = vadd.f32 %v2981, %v3125
      %v3180 = vadd.f32 %v2982, %v3128
      %v3181 = vadd.f32 %v2983, %v3133
      %v3182 = vadd.f32 %v2984, %v3136
      %v3183 = vadd.f32 %v2985, %v3141
      %v3184 = vadd.f32 %v2986, %v3144
      %v3185 = vadd.f32 %v2987, %v3149
      %v3186 = vadd.f32 %v2988, %v3152
      %v3187 = vcombine.low %v3155, %v3159
      %v3188 = vcombine.high %v3155, %v3159
      %v3190 = vunpack.c.l.s4 1983009808
      %v3191 = vunpack.c.0.s8 %v3190
      %v3192 = vlaneseq
      %v3193 = vshrl.u32 %v3192, 7
      %v3194 = vsub.s32 %v3191, %v3193
      %v3195 = vrot.slane %v3187, %v3194
      %v3197 = vunpack.c.l.s4 1983009808
      %v3198 = vunpack.c.0.s8 %v3197
      %v3199 = vlaneseq
      %v3200 = vshrl.u32 %v3199, 7
      %v3201 = vsub.s32 %v3198, %v3200
      %v3202 = vrot.slane %v3188, %v3201
      %v3203 = vcombine.low %v3157, %v3161
      %v3204 = vcombine.high %v3157, %v3161
      %v3206 = vunpack.c.l.s4 1983009808
      %v3207 = vunpack.c.0.s8 %v3206
      %v3208 = vlaneseq
      %v3209 = vshrl.u32 %v3208, 7
      %v3210 = vsub.s32 %v3207, %v3209
      %v3211 = vrot.slane %v3203, %v3210
      %v3213 = vunpack.c.l.s4 1983009808
      %v3214 = vunpack.c.0.s8 %v3213
      %v3215 = vlaneseq
      %v3216 = vshrl.u32 %v3215, 7
      %v3217 = vsub.s32 %v3214, %v3216
      %v3218 = vrot.slane %v3204, %v3217
      %v3219 = vcombine.low %v3163, %v3167
      %v3220 = vcombine.high %v3163, %v3167
      %v3222 = vunpack.c.l.s4 1983009808
      %v3223 = vunpack.c.0.s8 %v3222
      %v3224 = vlaneseq
      %v3225 = vshrl.u32 %v3224, 7
      %v3226 = vsub.s32 %v3223, %v3225
      %v3227 = vrot.slane %v3219, %v3226
      %v3229 = vunpack.c.l.s4 1983009808
      %v3230 = vunpack.c.0.s8 %v3229
      %v3231 = vlaneseq
      %v3232 = vshrl.u32 %v3231, 7
      %v3233 = vsub.s32 %v3230, %v3232
      %v3234 = vrot.slane %v3220, %v3233
      %v3235 = vcombine.low %v3165, %v3169
      %v3236 = vcombine.high %v3165, %v3169
      %v3238 = vunpack.c.l.s4 1983009808
      %v3239 = vunpack.c.0.s8 %v3238
      %v3240 = vlaneseq
      %v3241 = vshrl.u32 %v3240, 7
      %v3242 = vsub.s32 %v3239, %v3241
      %v3243 = vrot.slane %v3235, %v3242
      %v3245 = vunpack.c.l.s4 1983009808
      %v3246 = vunpack.c.0.s8 %v3245
      %v3247 = vlaneseq
      %v3248 = vshrl.u32 %v3247, 7
      %v3249 = vsub.s32 %v3246, %v3248
      %v3250 = vrot.slane %v3236, %v3249
      %v3251 = vcombine.low %v3195, %v3211
      %v3252 = vcombine.high %v3195, %v3211
      %v3254 = vunpack.c.l.s4 1934713408
      %v3255 = vunpack.c.0.s8 %v3254
      %v3256 = vlaneseq
      %v3257 = vshrl.u32 %v3256, 7
      %v3258 = vsub.s32 %v3255, %v3257
      %v3259 = vrot.slane %v3251, %v3258
      %v3261 = vunpack.c.l.s4 1934713408
      %v3262 = vunpack.c.0.s8 %v3261
      %v3263 = vlaneseq
      %v3264 = vshrl.u32 %v3263, 7
      %v3265 = vsub.s32 %v3262, %v3264
      %v3266 = vrot.slane %v3252, %v3265
      %v3267 = vcombine.low %v3202, %v3218
      %v3268 = vcombine.high %v3202, %v3218
      %v3270 = vunpack.c.l.s4 1934713408
      %v3271 = vunpack.c.0.s8 %v3270
      %v3272 = vlaneseq
      %v3273 = vshrl.u32 %v3272, 7
      %v3274 = vsub.s32 %v3271, %v3273
      %v3275 = vrot.slane %v3267, %v3274
      %v3277 = vunpack.c.l.s4 1934713408
      %v3278 = vunpack.c.0.s8 %v3277
      %v3279 = vlaneseq
      %v3280 = vshrl.u32 %v3279, 7
      %v3281 = vsub.s32 %v3278, %v3280
      %v3282 = vrot.slane %v3268, %v3281
      %v3283 = vcombine.low %v3227, %v3243
      %v3284 = vcombine.high %v3227, %v3243
      %v3286 = vunpack.c.l.s4 1934713408
      %v3287 = vunpack.c.0.s8 %v3286
      %v3288 = vlaneseq
      %v3289 = vshrl.u32 %v3288, 7
      %v3290 = vsub.s32 %v3287, %v3289
      %v3291 = vrot.slane %v3283, %v3290
      %v3293 = vunpack.c.l.s4 1934713408
      %v3294 = vunpack.c.0.s8 %v3293
      %v3295 = vlaneseq
      %v3296 = vshrl.u32 %v3295, 7
      %v3297 = vsub.s32 %v3294, %v3296
      %v3298 = vrot.slane %v3284, %v3297
      %v3299 = vcombine.low %v3234, %v3250
      %v3300 = vcombine.high %v3234, %v3250
      %v3302 = vunpack.c.l.s4 1934713408
      %v3303 = vunpack.c.0.s8 %v3302
      %v3304 = vlaneseq
      %v3305 = vshrl.u32 %v3304, 7
      %v3306 = vsub.s32 %v3303, %v3305
      %v3307 = vrot.slane %v3299, %v3306
      %v3309 = vunpack.c.l.s4 1934713408
      %v3310 = vunpack.c.0.s8 %v3309
      %v3311 = vlaneseq
      %v3312 = vshrl.u32 %v3311, 7
      %v3313 = vsub.s32 %v3310, %v3312
      %v3314 = vrot.slane %v3300, %v3313
      %v3315 = vcombine.low %v3259, %v3291
      %v3316 = vcombine.high %v3259, %v3291
      %v3317 = vcombine.low %v3266, %v3298
      %v3318 = vcombine.high %v3266, %v3298
      %v3319 = vcombine.low %v3275, %v3307
      %v3320 = vcombine.high %v3275, %v3307
      %v3321 = vcombine.low %v3282, %v3314
      %v3322 = vcombine.high %v3282, %v3314
      %v3323 = vcombine.low %v3171, %v3175
      %v3324 = vcombine.high %v3171, %v3175
      %v3326 = vunpack.c.l.s4 1983009808
      %v3327 = vunpack.c.0.s8 %v3326
      %v3328 = vlaneseq
      %v3329 = vshrl.u32 %v3328, 7
      %v3330 = vsub.s32 %v3327, %v3329
      %v3331 = vrot.slane %v3323, %v3330
      %v3333 = vunpack.c.l.s4 1983009808
      %v3334 = vunpack.c.0.s8 %v3333
      %v3335 = vlaneseq
      %v3336 = vshrl.u32 %v3335, 7
      %v3337 = vsub.s32 %v3334, %v3336
      %v3338 = vrot.slane %v3324, %v3337
      %v3339 = vcombine.low %v3173, %v3177
      %v3340 = vcombine.high %v3173, %v3177
      %v3342 = vunpack.c.l.s4 1983009808
      %v3343 = vunpack.c.0.s8 %v3342
      %v3344 = vlaneseq
      %v3345 = vshrl.u32 %v3344, 7
      %v3346 = vsub.s32 %v3343, %v3345
      %v3347 = vrot.slane %v3339, %v3346
      %v3349 = vunpack.c.l.s4 1983009808
      %v3350 = vunpack.c.0.s8 %v3349
      %v3351 = vlaneseq
      %v3352 = vshrl.u32 %v3351, 7
      %v3353 = vsub.s32 %v3350, %v3352
      %v3354 = vrot.slane %v3340, %v3353
      %v3355 = vcombine.low %v3179, %v3183
      %v3356 = vcombine.high %v3179, %v3183
      %v3358 = vunpack.c.l.s4 1983009808
      %v3359 = vunpack.c.0.s8 %v3358
      %v3360 = vlaneseq
      %v3361 = vshrl.u32 %v3360, 7
      %v3362 = vsub.s32 %v3359, %v3361
      %v3363 = vrot.slane %v3355, %v3362
      %v3365 = vunpack.c.l.s4 1983009808
      %v3366 = vunpack.c.0.s8 %v3365
      %v3367 = vlaneseq
      %v3368 = vshrl.u32 %v3367, 7
      %v3369 = vsub.s32 %v3366, %v3368
      %v3370 = vrot.slane %v3356, %v3369
      %v3371 = vcombine.low %v3181, %v3185
      %v3372 = vcombine.high %v3181, %v3185
      %v3374 = vunpack.c.l.s4 1983009808
      %v3375 = vunpack.c.0.s8 %v3374
      %v3376 = vlaneseq
      %v3377 = vshrl.u32 %v3376, 7
      %v3378 = vsub.s32 %v3375, %v3377
      %v3379 = vrot.slane %v3371, %v3378
      %v3381 = vunpack.c.l.s4 1983009808
      %v3382 = vunpack.c.0.s8 %v3381
      %v3383 = vlaneseq
      %v3384 = vshrl.u32 %v3383, 7
      %v3385 = vsub.s32 %v3382, %v3384
      %v3386 = vrot.slane %v3372, %v3385
      %v3387 = vcombine.low %v3331, %v3347
      %v3388 = vcombine.high %v3331, %v3347
      %v3390 = vunpack.c.l.s4 1934713408
      %v3391 = vunpack.c.0.s8 %v3390
      %v3392 = vlaneseq
      %v3393 = vshrl.u32 %v3392, 7
      %v3394 = vsub.s32 %v3391, %v3393
      %v3395 = vrot.slane %v3387, %v3394
      %v3397 = vunpack.c.l.s4 1934713408
      %v3398 = vunpack.c.0.s8 %v3397
      %v3399 = vlaneseq
      %v3400 = vshrl.u32 %v3399, 7
      %v3401 = vsub.s32 %v3398, %v3400
      %v3402 = vrot.slane %v3388, %v3401
      %v3403 = vcombine.low %v3338, %v3354
      %v3404 = vcombine.high %v3338, %v3354
      %v3406 = vunpack.c.l.s4 1934713408
      %v3407 = vunpack.c.0.s8 %v3406
      %v3408 = vlaneseq
      %v3409 = vshrl.u32 %v3408, 7
      %v3410 = vsub.s32 %v3407, %v3409
      %v3411 = vrot.slane %v3403, %v3410
      %v3413 = vunpack.c.l.s4 1934713408
      %v3414 = vunpack.c.0.s8 %v3413
      %v3415 = vlaneseq
      %v3416 = vshrl.u32 %v3415, 7
      %v3417 = vsub.s32 %v3414, %v3416
      %v3418 = vrot.slane %v3404, %v3417
      %v3419 = vcombine.low %v3363, %v3379
      %v3420 = vcombine.high %v3363, %v3379
      %v3422 = vunpack.c.l.s4 1934713408
      %v3423 = vunpack.c.0.s8 %v3422
      %v3424 = vlaneseq
      %v3425 = vshrl.u32 %v3424, 7
      %v3426 = vsub.s32 %v3423, %v3425
      %v3427 = vrot.slane %v3419, %v3426
      %v3429 = vunpack.c.l.s4 1934713408
      %v3430 = vunpack.c.0.s8 %v3429
      %v3431 = vlaneseq
      %v3432 = vshrl.u32 %v3431, 7
      %v3433 = vsub.s32 %v3430, %v3432
      %v3434 = vrot.slane %v3420, %v3433
      %v3435 = vcombine.low %v3370, %v3386
      %v3436 = vcombine.high %v3370, %v3386
      %v3438 = vunpack.c.l.s4 1934713408
      %v3439 = vunpack.c.0.s8 %v3438
      %v3440 = vlaneseq
      %v3441 = vshrl.u32 %v3440, 7
      %v3442 = vsub.s32 %v3439, %v3441
      %v3443 = vrot.slane %v3435, %v3442
      %v3445 = vunpack.c.l.s4 1934713408
      %v3446 = vunpack.c.0.s8 %v3445
      %v3447 = vlaneseq
      %v3448 = vshrl.u32 %v3447, 7
      %v3449 = vsub.s32 %v3446, %v3448
      %v3450 = vrot.slane %v3436, %v3449
      %v3451 = vcombine.low %v3395, %v3427
      %v3452 = vcombine.high %v3395, %v3427
      %v3453 = vcombine.low %v3402, %v3434
      %v3454 = vcombine.high %v3402, %v3434
      %v3455 = vcombine.low %v3411, %v3443
      %v3456 = vcombine.high %v3411, %v3443
      %v3457 = vcombine.low %v3418, %v3450
      %v3458 = vcombine.high %v3418, %v3450
      %v3459 = vcombine.low %v3156, %v3160
      %v3460 = vcombine.high %v3156, %v3160
      %v3462 = vunpack.c.l.s4 1983009808
      %v3463 = vunpack.c.0.s8 %v3462
      %v3464 = vlaneseq
      %v3465 = vshrl.u32 %v3464, 7
      %v3466 = vsub.s32 %v3463, %v3465
      %v3467 = vrot.slane %v3459, %v3466
      %v3469 = vunpack.c.l.s4 1983009808
      %v3470 = vunpack.c.0.s8 %v3469
      %v3471 = vlaneseq
      %v3472 = vshrl.u32 %v3471, 7
      %v3473 = vsub.s32 %v3470, %v3472
      %v3474 = vrot.slane %v3460, %v3473
      %v3475 = vcombine.low %v3158, %v3162
      %v3476 = vcombine.high %v3158, %v3162
      %v3478 = vunpack.c.l.s4 1983009808
      %v3479 = vunpack.c.0.s8 %v3478
      %v3480 = vlaneseq
      %v3481 = vshrl.u32 %v3480, 7
      %v3482 = vsub.s32 %v3479, %v3481
      %v3483 = vrot.slane %v3475, %v3482
      %v3485 = vunpack.c.l.s4 1983009808
      %v3486 = vunpack.c.0.s8 %v3485
      %v3487 = vlaneseq
      %v3488 = vshrl.u32 %v3487, 7
      %v3489 = vsub.s32 %v3486, %v3488
      %v3490 = vrot.slane %v3476, %v3489
      %v3491 = vcombine.low %v3164, %v3168
      %v3492 = vcombine.high %v3164, %v3168
      %v3494 = vunpack.c.l.s4 1983009808
      %v3495 = vunpack.c.0.s8 %v3494
      %v3496 = vlaneseq
      %v3497 = vshrl.u32 %v3496, 7
      %v3498 = vsub.s32 %v3495, %v3497
      %v3499 = vrot.slane %v3491, %v3498
      %v3501 = vunpack.c.l.s4 1983009808
      %v3502 = vunpack.c.0.s8 %v3501
      %v3503 = vlaneseq
      %v3504 = vshrl.u32 %v3503, 7
      %v3505 = vsub.s32 %v3502, %v3504
      %v3506 = vrot.slane %v3492, %v3505
      %v3507 = vcombine.low %v3166, %v3170
      %v3508 = vcombine.high %v3166, %v3170
      %v3510 = vunpack.c.l.s4 1983009808
      %v3511 = vunpack.c.0.s8 %v3510
      %v3512 = vlaneseq
      %v3513 = vshrl.u32 %v3512, 7
      %v3514 = vsub.s32 %v3511, %v3513
      %v3515 = vrot.slane %v3507, %v3514
      %v3517 = vunpack.c.l.s4 1983009808
      %v3518 = vunpack.c.0.s8 %v3517
      %v3519 = vlaneseq
      %v3520 = vshrl.u32 %v3519, 7
      %v3521 = vsub.s32 %v3518, %v3520
      %v3522 = vrot.slane %v3508, %v3521
      %v3523 = vcombine.low %v3467, %v3483
      %v3524 = vcombine.high %v3467, %v3483
      %v3526 = vunpack.c.l.s4 1934713408
      %v3527 = vunpack.c.0.s8 %v3526
      %v3528 = vlaneseq
      %v3529 = vshrl.u32 %v3528, 7
      %v3530 = vsub.s32 %v3527, %v3529
      %v3531 = vrot.slane %v3523, %v3530
      %v3533 = vunpack.c.l.s4 1934713408
      %v3534 = vunpack.c.0.s8 %v3533
      %v3535 = vlaneseq
      %v3536 = vshrl.u32 %v3535, 7
      %v3537 = vsub.s32 %v3534, %v3536
      %v3538 = vrot.slane %v3524, %v3537
      %v3539 = vcombine.low %v3474, %v3490
      %v3540 = vcombine.high %v3474, %v3490
      %v3542 = vunpack.c.l.s4 1934713408
      %v3543 = vunpack.c.0.s8 %v3542
      %v3544 = vlaneseq
      %v3545 = vshrl.u32 %v3544, 7
      %v3546 = vsub.s32 %v3543, %v3545
      %v3547 = vrot.slane %v3539, %v3546
      %v3549 = vunpack.c.l.s4 1934713408
      %v3550 = vunpack.c.0.s8 %v3549
      %v3551 = vlaneseq
      %v3552 = vshrl.u32 %v3551, 7
      %v3553 = vsub.s32 %v3550, %v3552
      %v3554 = vrot.slane %v3540, %v3553
      %v3555 = vcombine.low %v3499, %v3515
      %v3556 = vcombine.high %v3499, %v3515
      %v3558 = vunpack.c.l.s4 1934713408
      %v3559 = vunpack.c.0.s8 %v3558
      %v3560 = vlaneseq
      %v3561 = vshrl.u32 %v3560, 7
      %v3562 = vsub.s32 %v3559, %v3561
      %v3563 = vrot.slane %v3555, %v3562
      %v3565 = vunpack.c.l.s4 1934713408
      %v3566 = vunpack.c.0.s8 %v3565
      %v3567 = vlaneseq
      %v3568 = vshrl.u32 %v3567, 7
      %v3569 = vsub.s32 %v3566, %v3568
      %v3570 = vrot.slane %v3556, %v3569
      %v3571 = vcombine.low %v3506, %v3522
      %v3572 = vcombine.high %v3506, %v3522
      %v3574 = vunpack.c.l.s4 1934713408
      %v3575 = vunpack.c.0.s8 %v3574
      %v3576 = vlaneseq
      %v3577 = vshrl.u32 %v3576, 7
      %v3578 = vsub.s32 %v3575, %v3577
      %v3579 = vrot.slane %v3571, %v3578
      %v3581 = vunpack.c.l.s4 1934713408
      %v3582 = vunpack.c.0.s8 %v3581
      %v3583 = vlaneseq
      %v3584 = vshrl.u32 %v3583, 7
      %v3585 = vsub.s32 %v3582, %v3584
      %v3586 = vrot.slane %v3572, %v3585
      %v3587 = vcombine.low %v3531, %v3563
      %v3588 = vcombine.high %v3531, %v3563
      %v3589 = vcombine.low %v3538, %v3570
      %v3590 = vcombine.high %v3538, %v3570
      %v3591 = vcombine.low %v3547, %v3579
      %v3592 = vcombine.high %v3547, %v3579
      %v3593 = vcombine.low %v3554, %v3586
      %v3594 = vcombine.high %v3554, %v3586
      %v3595 = vcombine.low %v3172, %v3176
      %v3596 = vcombine.high %v3172, %v3176
      %v3598 = vunpack.c.l.s4 1983009808
      %v3599 = vunpack.c.0.s8 %v3598
      %v3600 = vlaneseq
      %v3601 = vshrl.u32 %v3600, 7
      %v3602 = vsub.s32 %v3599, %v3601
      %v3603 = vrot.slane %v3595, %v3602
      %v3605 = vunpack.c.l.s4 1983009808
      %v3606 = vunpack.c.0.s8 %v3605
      %v3607 = vlaneseq
      %v3608 = vshrl.u32 %v3607, 7
      %v3609 = vsub.s32 %v3606, %v3608
      %v3610 = vrot.slane %v3596, %v3609
      %v3611 = vcombine.low %v3174, %v3178
      %v3612 = vcombine.high %v3174, %v3178
      %v3614 = vunpack.c.l.s4 1983009808
      %v3615 = vunpack.c.0.s8 %v3614
      %v3616 = vlaneseq
      %v3617 = vshrl.u32 %v3616, 7
      %v3618 = vsub.s32 %v3615, %v3617
      %v3619 = vrot.slane %v3611, %v3618
      %v3621 = vunpack.c.l.s4 1983009808
      %v3622 = vunpack.c.0.s8 %v3621
      %v3623 = vlaneseq
      %v3624 = vshrl.u32 %v3623, 7
      %v3625 = vsub.s32 %v3622, %v3624
      %v3626 = vrot.slane %v3612, %v3625
      %v3627 = vcombine.low %v3180, %v3184
      %v3628 = vcombine.high %v3180, %v3184
      %v3630 = vunpack.c.l.s4 1983009808
      %v3631 = vunpack.c.0.s8 %v3630
      %v3632 = vlaneseq
      %v3633 = vshrl.u32 %v3632, 7
      %v3634 = vsub.s32 %v3631, %v3633
      %v3635 = vrot.slane %v3627, %v3634
      %v3637 = vunpack.c.l.s4 1983009808
      %v3638 = vunpack.c.0.s8 %v3637
      %v3639 = vlaneseq
      %v3640 = vshrl.u32 %v3639, 7
      %v3641 = vsub.s32 %v3638, %v3640
      %v3642 = vrot.slane %v3628, %v3641
      %v3643 = vcombine.low %v3182, %v3186
      %v3644 = vcombine.high %v3182, %v3186
      %v3646 = vunpack.c.l.s4 1983009808
      %v3647 = vunpack.c.0.s8 %v3646
      %v3648 = vlaneseq
      %v3649 = vshrl.u32 %v3648, 7
      %v3650 = vsub.s32 %v3647, %v3649
      %v3651 = vrot.slane %v3643, %v3650
      %v3653 = vunpack.c.l.s4 1983009808
      %v3654 = vunpack.c.0.s8 %v3653
      %v3655 = vlaneseq
      %v3656 = vshrl.u32 %v3655, 7
      %v3657 = vsub.s32 %v3654, %v3656
      %v3658 = vrot.slane %v3644, %v3657
      %v3659 = vcombine.low %v3603, %v3619
      %v3660 = vcombine.high %v3603, %v3619
      %v3662 = vunpack.c.l.s4 1934713408
      %v3663 = vunpack.c.0.s8 %v3662
      %v3664 = vlaneseq
      %v3665 = vshrl.u32 %v3664, 7
      %v3666 = vsub.s32 %v3663, %v3665
      %v3667 = vrot.slane %v3659, %v3666
      %v3669 = vunpack.c.l.s4 1934713408
      %v3670 = vunpack.c.0.s8 %v3669
      %v3671 = vlaneseq
      %v3672 = vshrl.u32 %v3671, 7
      %v3673 = vsub.s32 %v3670, %v3672
      %v3674 = vrot.slane %v3660, %v3673
      %v3675 = vcombine.low %v3610, %v3626
      %v3676 = vcombine.high %v3610, %v3626
      %v3678 = vunpack.c.l.s4 1934713408
      %v3679 = vunpack.c.0.s8 %v3678
      %v3680 = vlaneseq
      %v3681 = vshrl.u32 %v3680, 7
      %v3682 = vsub.s32 %v3679, %v3681
      %v3683 = vrot.slane %v3675, %v3682
      %v3685 = vunpack.c.l.s4 1934713408
      %v3686 = vunpack.c.0.s8 %v3685
      %v3687 = vlaneseq
      %v3688 = vshrl.u32 %v3687, 7
      %v3689 = vsub.s32 %v3686, %v3688
      %v3690 = vrot.slane %v3676, %v3689
      %v3691 = vcombine.low %v3635, %v3651
      %v3692 = vcombine.high %v3635, %v3651
      %v3694 = vunpack.c.l.s4 1934713408
      %v3695 = vunpack.c.0.s8 %v3694
      %v3696 = vlaneseq
      %v3697 = vshrl.u32 %v3696, 7
      %v3698 = vsub.s32 %v3695, %v3697
      %v3699 = vrot.slane %v3691, %v3698
      %v3701 = vunpack.c.l.s4 1934713408
      %v3702 = vunpack.c.0.s8 %v3701
      %v3703 = vlaneseq
      %v3704 = vshrl.u32 %v3703, 7
      %v3705 = vsub.s32 %v3702, %v3704
      %v3706 = vrot.slane %v3692, %v3705
      %v3707 = vcombine.low %v3642, %v3658
      %v3708 = vcombine.high %v3642, %v3658
      %v3710 = vunpack.c.l.s4 1934713408
      %v3711 = vunpack.c.0.s8 %v3710
      %v3712 = vlaneseq
      %v3713 = vshrl.u32 %v3712, 7
      %v3714 = vsub.s32 %v3711, %v3713
      %v3715 = vrot.slane %v3707, %v3714
      %v3717 = vunpack.c.l.s4 1934713408
      %v3718 = vunpack.c.0.s8 %v3717
      %v3719 = vlaneseq
      %v3720 = vshrl.u32 %v3719, 7
      %v3721 = vsub.s32 %v3718, %v3720
      %v3722 = vrot.slane %v3708, %v3721
      %v3723 = vcombine.low %v3667, %v3699
      %v3724 = vcombine.high %v3667, %v3699
      %v3725 = vcombine.low %v3674, %v3706
      %v3726 = vcombine.high %v3674, %v3706
      %v3727 = vcombine.low %v3683, %v3715
      %v3728 = vcombine.high %v3683, %v3715
      %v3729 = vcombine.low %v3690, %v3722
      %v3730 = vcombine.high %v3690, %v3722
      %v3731 = vld [vmem:[%s380] sm:$0xff]
      %v3732 = vld [vmem:[%s380 + $0x8] sm:$0xff]
      %v3733 = vld [vmem:[%s380 + $0x10] sm:$0xff]
      %v3734 = vld [vmem:[%s380 + $0x18] sm:$0xff]
      %v3735 = vld [vmem:[%s380 + $0x20] sm:$0xff]
      %v3736 = vld [vmem:[%s380 + $0x28] sm:$0xff]
      %v3737 = vld [vmem:[%s380 + $0x30] sm:$0xff]
      %v3738 = vld [vmem:[%s380 + $0x38] sm:$0xff]
      %v3739 = vld [vmem:[%s380 + $0x40] sm:$0xff]
      %v3740 = vld [vmem:[%s380 + $0x48] sm:$0xff]
      %v3741 = vld [vmem:[%s380 + $0x50] sm:$0xff]
      %v3742 = vld [vmem:[%s380 + $0x58] sm:$0xff]
      %v3743 = vld [vmem:[%s380 + $0x60] sm:$0xff]
      %v3744 = vld [vmem:[%s380 + $0x68] sm:$0xff]
      %v3745 = vld [vmem:[%s380 + $0x70] sm:$0xff]
      %v3746 = vld [vmem:[%s380 + $0x78] sm:$0xff]
      %v3747 = vld [vmem:[%s380 + $0x80] sm:$0xff]
      %v3748 = vld [vmem:[%s380 + $0x88] sm:$0xff]
      %v3749 = vld [vmem:[%s380 + $0x90] sm:$0xff]
      %v3750 = vld [vmem:[%s380 + $0x98] sm:$0xff]
      %v3751 = vld [vmem:[%s380 + $0xa0] sm:$0xff]
      %v3752 = vld [vmem:[%s380 + $0xa8] sm:$0xff]
      %v3753 = vld [vmem:[%s380 + $0xb0] sm:$0xff]
      %v3754 = vld [vmem:[%s380 + $0xb8] sm:$0xff]
      %v3755 = vld [vmem:[%s380 + $0xc0] sm:$0xff]
      %v3756 = vld [vmem:[%s380 + $0xc8] sm:$0xff]
      %v3757 = vld [vmem:[%s380 + $0xd0] sm:$0xff]
      %v3758 = vld [vmem:[%s380 + $0xd8] sm:$0xff]
      %v3759 = vld [vmem:[%s380 + $0xe0] sm:$0xff]
      %v3760 = vld [vmem:[%s380 + $0xe8] sm:$0xff]
      %v3761 = vld [vmem:[%s380 + $0xf0] sm:$0xff]
      %v3762 = vld [vmem:[%s380 + $0xf8] sm:$0xff]
      %v3763 = vadd.f32 %v3731, %v3315
      %v3764 = vadd.f32 %v3732, %v3451
      %v3765 = vadd.f32 %v3733, %v3316
      %v3766 = vadd.f32 %v3734, %v3452
      %v3767 = vadd.f32 %v3735, %v3317
      %v3768 = vadd.f32 %v3736, %v3453
      %v3769 = vadd.f32 %v3737, %v3318
      %v3770 = vadd.f32 %v3738, %v3454
      %v3771 = vadd.f32 %v3739, %v3319
      %v3772 = vadd.f32 %v3740, %v3455
      %v3773 = vadd.f32 %v3741, %v3320
      %v3774 = vadd.f32 %v3742, %v3456
      %v3775 = vadd.f32 %v3743, %v3321
      %v3776 = vadd.f32 %v3744, %v3457
      %v3777 = vadd.f32 %v3745, %v3322
      %v3778 = vadd.f32 %v3746, %v3458
      %v3779 = vadd.f32 %v3747, %v3587
      %v3780 = vadd.f32 %v3748, %v3723
      %v3781 = vadd.f32 %v3749, %v3588
      %v3782 = vadd.f32 %v3750, %v3724
      %v3783 = vadd.f32 %v3751, %v3589
      %v3784 = vadd.f32 %v3752, %v3725
      %v3785 = vadd.f32 %v3753, %v3590
      %v3786 = vadd.f32 %v3754, %v3726
      %v3787 = vadd.f32 %v3755, %v3591
      %v3788 = vadd.f32 %v3756, %v3727
      %v3789 = vadd.f32 %v3757, %v3592
      %v3790 = vadd.f32 %v3758, %v3728
      %v3791 = vadd.f32 %v3759, %v3593
      %v3792 = vadd.f32 %v3760, %v3729
      %v3793 = vadd.f32 %v3761, %v3594
      %v3794 = vadd.f32 %v3762, %v3730
      %3795 = vst.msk [vmem:[%s380] sm:$0xff] %vm389, %v3763
      %3796 = vst.msk [vmem:[%s380 + $0x8] sm:$0xff] %vm389, %v3764
      %3797 = vst.msk [vmem:[%s380 + $0x10] sm:$0xff] %vm389, %v3765
      %3798 = vst.msk [vmem:[%s380 + $0x18] sm:$0xff] %vm389, %v3766
      %3799 = vst.msk [vmem:[%s380 + $0x20] sm:$0xff] %vm389, %v3767
      %3800 = vst.msk [vmem:[%s380 + $0x28] sm:$0xff] %vm389, %v3768
      %3801 = vst.msk [vmem:[%s380 + $0x30] sm:$0xff] %vm389, %v3769
      %3802 = vst.msk [vmem:[%s380 + $0x38] sm:$0xff] %vm389, %v3770
      %3803 = vst.msk [vmem:[%s380 + $0x40] sm:$0xff] %vm389, %v3771
      %3804 = vst.msk [vmem:[%s380 + $0x48] sm:$0xff] %vm389, %v3772
      %3805 = vst.msk [vmem:[%s380 + $0x50] sm:$0xff] %vm389, %v3773
      %3806 = vst.msk [vmem:[%s380 + $0x58] sm:$0xff] %vm389, %v3774
      %3807 = vst.msk [vmem:[%s380 + $0x60] sm:$0xff] %vm389, %v3775
      %3808 = vst.msk [vmem:[%s380 + $0x68] sm:$0xff] %vm389, %v3776
      %3809 = vst.msk [vmem:[%s380 + $0x70] sm:$0xff] %vm389, %v3777
      %3810 = vst.msk [vmem:[%s380 + $0x78] sm:$0xff] %vm389, %v3778
      %3811 = vst.msk [vmem:[%s380 + $0x80] sm:$0xff] %vm389, %v3779
      %3812 = vst.msk [vmem:[%s380 + $0x88] sm:$0xff] %vm389, %v3780
      %3813 = vst.msk [vmem:[%s380 + $0x90] sm:$0xff] %vm389, %v3781
      %3814 = vst.msk [vmem:[%s380 + $0x98] sm:$0xff] %vm389, %v3782
      %3815 = vst.msk [vmem:[%s380 + $0xa0] sm:$0xff] %vm389, %v3783
      %3816 = vst.msk [vmem:[%s380 + $0xa8] sm:$0xff] %vm389, %v3784
      %3817 = vst.msk [vmem:[%s380 + $0xb0] sm:$0xff] %vm389, %v3785
      %3818 = vst.msk [vmem:[%s380 + $0xb8] sm:$0xff] %vm389, %v3786
      %3819 = vst.msk [vmem:[%s380 + $0xc0] sm:$0xff] %vm389, %v3787
      %3820 = vst.msk [vmem:[%s380 + $0xc8] sm:$0xff] %vm389, %v3788
      %3821 = vst.msk [vmem:[%s380 + $0xd0] sm:$0xff] %vm389, %v3789
      %3822 = vst.msk [vmem:[%s380 + $0xd8] sm:$0xff] %vm389, %v3790
      %3823 = vst.msk [vmem:[%s380 + $0xe0] sm:$0xff] %vm389, %v3791
      %3824 = vst.msk [vmem:[%s380 + $0xe8] sm:$0xff] %vm389, %v3792
      %3825 = vst.msk [vmem:[%s380 + $0xf0] sm:$0xff] %vm389, %v3793
      %3826 = vst.msk [vmem:[%s380 + $0xf8] sm:$0xff] %vm389, %v3794
      %v3827 = vld [vmem:[%s372] sm:$0xff]
      %v3828 = vld [vmem:[%s372 + $0x8] sm:$0xff]
      %v3829 = vld [vmem:[%s372 + $0x10] sm:$0xff]
      %v3830 = vld [vmem:[%s372 + $0x18] sm:$0xff]
      %v3831 = vld [vmem:[%s372 + $0x20] sm:$0xff]
      %v3832 = vld [vmem:[%s372 + $0x28] sm:$0xff]
      %v3833 = vld [vmem:[%s372 + $0x30] sm:$0xff]
      %v3834 = vld [vmem:[%s372 + $0x38] sm:$0xff]
      %v3835 = vsel %vm389, %v3827, 0.0
      %v3836 = vsel %vm389, %v3828, 0.0
      %v3837 = vadd.f32 %v3835, %v3836
      %v3838 = vsel %vm389, %v3829, 0.0
      %v3839 = vadd.f32 %v3837, %v3838
      %v3840 = vsel %vm389, %v3830, 0.0
      %v3841 = vadd.f32 %v3839, %v3840
      %v3842 = vsel %vm389, %v3831, 0.0
      %v3843 = vadd.f32 %v3841, %v3842
      %v3844 = vsel %vm389, %v3832, 0.0
      %v3845 = vadd.f32 %v3843, %v3844
      %v3846 = vsel %vm389, %v3833, 0.0
      %v3847 = vadd.f32 %v3845, %v3846
      %v3848 = vsel %vm389, %v3834, 0.0
      %v3849 = vadd.f32 %v3847, %v3848
      %v3850 = vrot.slane %v3849, 4
      %v3851 = vadd.f32 %v3849, %v3850
      %v3852 = vrot.slane %v3851, 2
      %v3853 = vadd.f32 %v3851, %v3852
      %v3854 = vrot.slane %v3853, 1
      %v3855 = vadd.f32 %v3853, %v3854
      %v3856 = vrcp.pop 64.0
      %v3857 = vmul.f32 %v3855, %v3856
      %v3858 = vsub.f32 %v3827, %v3857
      %v3859 = vsub.f32 %v3828, %v3857
      %v3860 = vsub.f32 %v3829, %v3857
      %v3861 = vsub.f32 %v3830, %v3857
      %v3862 = vsub.f32 %v3831, %v3857
      %v3863 = vsub.f32 %v3832, %v3857
      %v3864 = vsub.f32 %v3833, %v3857
      %v3865 = vsub.f32 %v3834, %v3857
      %v3866 = vmul.f32 %v3858, %v3858
      %v3867 = vmul.f32 %v3859, %v3859
      %v3868 = vmul.f32 %v3860, %v3860
      %v3869 = vmul.f32 %v3861, %v3861
      %v3870 = vmul.f32 %v3862, %v3862
      %v3871 = vmul.f32 %v3863, %v3863
      %v3872 = vmul.f32 %v3864, %v3864
      %v3873 = vmul.f32 %v3865, %v3865
      %v3874 = vsel %vm389, %v3866, 0.0
      %v3875 = vsel %vm389, %v3867, 0.0
      %v3876 = vadd.f32 %v3874, %v3875
      %v3877 = vsel %vm389, %v3868, 0.0
      %v3878 = vadd.f32 %v3876, %v3877
      %v3879 = vsel %vm389, %v3869, 0.0
      %v3880 = vadd.f32 %v3878, %v3879
      %v3881 = vsel %vm389, %v3870, 0.0
      %v3882 = vadd.f32 %v3880, %v3881
      %v3883 = vsel %vm389, %v3871, 0.0
      %v3884 = vadd.f32 %v3882, %v3883
      %v3885 = vsel %vm389, %v3872, 0.0
      %v3886 = vadd.f32 %v3884, %v3885
      %v3887 = vsel %vm389, %v3873, 0.0
      %v3888 = vadd.f32 %v3886, %v3887
      %v3889 = vrot.slane %v3888, 4
      %v3890 = vadd.f32 %v3888, %v3889
      %v3891 = vrot.slane %v3890, 2
      %v3892 = vadd.f32 %v3890, %v3891
      %v3893 = vrot.slane %v3892, 1
      %v3894 = vadd.f32 %v3892, %v3893
      %v3895 = vmul.f32 %v3894, %v3856
      %v3896 = vadd.f32 %v3895, 1e-05
      %v3897 = vrsqrt.pop %v3896
      %v3898 = vmul.f32 %v3858, %v3897
      %v3899 = vmul.f32 %v3859, %v3897
      %v3900 = vmul.f32 %v3860, %v3897
      %v3901 = vmul.f32 %v3861, %v3897
      %v3902 = vmul.f32 %v3862, %v3897
      %v3903 = vmul.f32 %v3863, %v3897
      %v3904 = vmul.f32 %v3864, %v3897
      %v3905 = vmul.f32 %v3865, %v3897
      %v3906 = vsel %vm389, %v3857, 0.0
      %3907 = vadd.xlane.f32.xlu0 %v3906
      %v3908 = vpop.xlane.xlu0 %3907
      %v3909 = vrcp.pop 8.0
      %v3910 = vmul.f32 %v3908, %v3909
      %v3911 = vsub.f32 %v3857, %v3910
      %v3912 = vmul.f32 %v3911, %v3911
      %v3913 = vsel %vm389, %v3912, 0.0
      %3914 = vadd.xlane.f32.xlu0 %v3913
      %v3915 = vpop.xlane.xlu0 %3914
      %v3916 = vrcp.pop 7.0
      %v3917 = vmul.f32 %v3915, %v3916
      %v3918 = vadd.f32 %v3917, 1e-05
      %v3919 = vrsqrt.pop %v3918
      %v3920 = vmul.f32 %v3911, %v3919
      %v3921 = vld [vmem:[%s375] sm:$0x1]
      %v3923 = vlaneseq
      %v3924 = vshrl.u32 %v3923, 7
      %v3925 = vsub.s32 0, %v3924
      %v3926 = vrot.slane %v3921, %v3925
      %3927 = vrot.lane.b32.xlu0 %v3926, 120
      %v3928 = vpop.permute.xlu0 %3927
      %v3930 = vmul.f32 %v3920, %v3928
      %v3931 = vlaneseq
      %v3932 = vshrl.u32 %v3931, 7
      %v3933 = vsub.s32 0, %v3932
      %v3934 = vrot.slane %v3930, %v3933
      %v3935 = vadd.f32 %v3898, %v3934
      %v3936 = vadd.f32 %v3899, %v3934
      %v3937 = vadd.f32 %v3900, %v3934
      %v3938 = vadd.f32 %v3901, %v3934
      %v3939 = vadd.f32 %v3902, %v3934
      %v3940 = vadd.f32 %v3903, %v3934
      %v3941 = vadd.f32 %v3904, %v3934
      %v3942 = vadd.f32 %v3905, %v3934
      %v3944 = vmul.f32 %v3926, %v3935
      %v3945 = vmul.f32 %v3926, %v3936
      %v3946 = vmul.f32 %v3926, %v3937
      %v3947 = vmul.f32 %v3926, %v3938
      %v3948 = vmul.f32 %v3926, %v3939
      %v3949 = vmul.f32 %v3926, %v3940
      %v3950 = vmul.f32 %v3926, %v3941
      %v3951 = vmul.f32 %v3926, %v3942
      %3952 = vrot.lane.b32.xlu0 %v3926, 112
      %v3953 = vpop.permute.xlu0 %3952
      %v3955 = vadd.f32 %v3944, %v3953
      %v3956 = vadd.f32 %v3945, %v3953
      %v3957 = vadd.f32 %v3946, %v3953
      %v3958 = vadd.f32 %v3947, %v3953
      %v3959 = vadd.f32 %v3948, %v3953
      %v3960 = vadd.f32 %v3949, %v3953
      %v3961 = vadd.f32 %v3950, %v3953
      %v3962 = vadd.f32 %v3951, %v3953
      %v3971 = vrot.slane %v3955, 7
      %v3972 = vrot.slane %v3956, 7
      %v3973 = vrot.slane %v3957, 7
      %v3974 = vrot.slane %v3958, 7
      %v3975 = vrot.slane %v3959, 7
      %v3976 = vrot.slane %v3960, 7
      %v3977 = vrot.slane %v3961, 7
      %v3978 = vrot.slane %v3962, 7
      %v3987 = vsel %vm856, 0.0, %v3971
      %v3988 = vsel %vm856, 0.0, %v3972
      %v3989 = vsel %vm856, 0.0, %v3973
      %v3990 = vsel %vm856, 0.0, %v3974
      %v3991 = vsel %vm856, 0.0, %v3975
      %v3992 = vsel %vm856, 0.0, %v3976
      %v3993 = vsel %vm856, 0.0, %v3977
      %v3994 = vsel %vm856, 0.0, %v3978
      %v3995 = vsel %vm856, %v3971, 0.0
      %v3996 = vsel %vm856, %v3972, 0.0
      %v3997 = vsel %vm856, %v3973, 0.0
      %v3998 = vsel %vm856, %v3974, 0.0
      %v3999 = vsel %vm856, %v3975, 0.0
      %v4000 = vsel %vm856, %v3976, 0.0
      %v4001 = vsel %vm856, %v3977, 0.0
      %v4002 = vsel %vm856, %v3978, 0.0
      %v4003 = vpack.c.bf16 %v3987, %v957
      %v4004 = vpack.c.bf16 %v3989, %v3988
      %v4005 = vpack.c.bf16 %v3991, %v3990
      %v4006 = vpack.c.bf16 %v3993, %v3992
      %v4007 = vld [vmem:[%s6] sm:$0xf]
      %v4022 = vsel %vm1040, %v1041, %v1044
      %v4023 = vrot.slane %v3987, 1
      %v4024 = vrot.slane %v3995, 1
      %v4025 = vsel %vm1040, %v4023, %v4024
      %v4026 = vrot.slane %v3988, 1
      %v4027 = vrot.slane %v3996, 1
      %v4028 = vsel %vm1040, %v4026, %v4027
      %v4029 = vrot.slane %v3989, 1
      %v4030 = vrot.slane %v3997, 1
      %v4031 = vsel %vm1040, %v4029, %v4030
      %v4032 = vrot.slane %v3990, 1
      %v4033 = vrot.slane %v3998, 1
      %v4034 = vsel %vm1040, %v4032, %v4033
      %v4035 = vrot.slane %v3991, 1
      %v4036 = vrot.slane %v3999, 1
      %v4037 = vsel %vm1040, %v4035, %v4036
      %v4038 = vrot.slane %v3992, 1
      %v4039 = vrot.slane %v4000, 1
      %v4040 = vsel %vm1040, %v4038, %v4039
      %v4041 = vrot.slane %v3993, 1
      %v4042 = vrot.slane %v4001, 1
      %v4043 = vsel %vm1040, %v4041, %v4042
      %v4052 = vpack.c.bf16 %v4025, %v4022
      %v4053 = vpack.c.bf16 %v4031, %v4028
      %v4054 = vpack.c.bf16 %v4037, %v4034
      %v4055 = vpack.c.bf16 %v4043, %v4040
      %s4056 = scalar_lea.vmem %s6, 4
      %v4057 = vld [vmem:[%s4056] sm:$0xf]
      %v4059 = vsel %vm389, %v4052, 0
      %v4062 = vsel %vm389, %v4053, 0
      %v4065 = vsel %vm389, %v4054, 0
      %v4068 = vsel %vm389, %v4055, 0
      %vm4070 = vcmask 1043456
      %v4072 = vsel %vm4070, %v4057, 0
      %4074 = vmatprep.subr.bf16.mxu0 0
      %4075 = vmatpush1.bf16.msra.mxu0 %v4072
      %4076 = vmatprep.subr.bf16.mxu0 0
      %4077 = vmatpush1.bf16.msra.mxu0 0
      %4078 = vmatprep.subr.bf16.mxu0 0
      %4079 = vmatpush1.bf16.msra.mxu0 0
      %4080 = vmatprep.subr.bf16.mxu0 0
      %4081 = vmatpush1.bf16.msra.mxu0 0
      %4082 = vmatprep.subr.bf16.mxu0 0
      %4083 = vmatpush1.bf16.msra.mxu0 0
      %4084 = vmatprep.subr.bf16.mxu0 0
      %4085 = vmatpush1.bf16.msra.mxu0 0
      %4086 = vmatprep.subr.bf16.mxu0 0
      %4087 = vmatpush1.bf16.msra.mxu0 0
      %4088 = vmatprep.subr.bf16.mxu0 0
      %4089 = vmatpush1.bf16.msra.mxu0 0
      %4090 = vmatprep.subr.bf16.mxu0 0
      %4091 = vmatpush1.bf16.msra.mxu0 0
      %4092 = vmatprep.subr.bf16.mxu0 0
      %4093 = vmatpush1.bf16.msra.mxu0 0
      %4094 = vmatprep.subr.bf16.mxu0 0
      %4095 = vmatpush1.bf16.msra.mxu0 0
      %4096 = vmatprep.subr.bf16.mxu0 0
      %4097 = vmatpush1.bf16.msra.mxu0 0
      %4098 = vmatprep.subr.bf16.mxu0 0
      %4099 = vmatpush1.bf16.msra.mxu0 0
      %4100 = vmatprep.subr.bf16.mxu0 0
      %4101 = vmatpush1.bf16.msra.mxu0 0
      %4102 = vmatprep.subr.bf16.mxu0 0
      %4103 = vmatpush1.bf16.msra.mxu0 0
      %4104 = vmatprep.subr.bf16.mxu0 0
      %4105 = vmatpush1.bf16.msra.mxu0 0
      %4106 = vmatprep.mubr.bf16.mxu0 0
      %4107 = vmatmul.mubr.bf16.gmra.mrb[0].mxu0 %v4059
      %v4108 = vpop.f32.mrb[0].mxu0
      %v4109 = vadd.f32 0.0, %v4108
      %v4110 = vpop.f32.mrb[0].mxu0
      %v4111 = vpop.f32.mrb[0].mxu0
      %v4112 = vadd.f32 0.0, %v4111
      %v4113 = vpop.f32.mrb[0].mxu0
      %4114 = vmatprep.mubr.bf16.mxu0 0
      %4115 = vmatmul.mubr.bf16.gmra.mrb[0].mxu0 %v4062
      %v4116 = vpop.f32.mrb[0].mxu0
      %v4117 = vadd.f32 0.0, %v4116
      %v4118 = vpop.f32.mrb[0].mxu0
      %v4119 = vpop.f32.mrb[0].mxu0
      %v4120 = vadd.f32 0.0, %v4119
      %v4121 = vpop.f32.mrb[0].mxu0
      %4122 = vmatprep.mubr.bf16.mxu0 0
      %4123 = vmatmul.mubr.bf16.gmra.mrb[0].mxu0 %v4065
      %v4124 = vpop.f32.mrb[0].mxu0
      %v4125 = vadd.f32 0.0, %v4124
      %v4126 = vpop.f32.mrb[0].mxu0
      %v4127 = vpop.f32.mrb[0].mxu0
      %v4128 = vadd.f32 0.0, %v4127
      %v4129 = vpop.f32.mrb[0].mxu0
      %4130 = vmatprep.mubr.bf16.mxu0 0
      %4131 = vmatmul.mubr.bf16.gmra.mrb[0].mxu0 %v4068
      %v4132 = vpop.f32.mrb[0].mxu0
      %v4133 = vadd.f32 0.0, %v4132
      %v4134 = vpop.f32.mrb[0].mxu0
      %v4135 = vpop.f32.mrb[0].mxu0
      %v4136 = vadd.f32 0.0, %v4135
      %v4137 = vpop.f32.mrb[0].mxu0
      %4138 = vdwg.mxu0
      %v4140 = vsel %vm389, %v4003, 0
      %v4143 = vsel %vm389, %v4004, 0
      %v4146 = vsel %vm389, %v4005, 0
      %v4149 = vsel %vm389, %v4006, 0
      %v4152 = vsel %vm4070, %v4007, 0
      %4154 = vmatprep.subr.bf16.mxu0 0
      %4155 = vmatpush1.bf16.msra.mxu0 %v4152
      %4156 = vmatprep.subr.bf16.mxu0 0
      %4157 = vmatpush1.bf16.msra.mxu0 0
      %4158 = vmatprep.subr.bf16.mxu0 0
      %4159 = vmatpush1.bf16.msra.mxu0 0
      %4160 = vmatprep.subr.bf16.mxu0 0
      %4161 = vmatpush1.bf16.msra.mxu0 0
      %4162 = vmatprep.subr.bf16.mxu0 0
      %4163 = vmatpush1.bf16.msra.mxu0 0
      %4164 = vmatprep.subr.bf16.mxu0 0
      %4165 = vmatpush1.bf16.msra.mxu0 0
      %4166 = vmatprep.subr.bf16.mxu0 0
      %4167 = vmatpush1.bf16.msra.mxu0 0
      %4168 = vmatprep.subr.bf16.mxu0 0
      %4169 = vmatpush1.bf16.msra.mxu0 0
      %4170 = vmatprep.subr.bf16.mxu0 0
      %4171 = vmatpush1.bf16.msra.mxu0 0
      %4172 = vmatprep.subr.bf16.mxu0 0
      %4173 = vmatpush1.bf16.msra.mxu0 0
      %4174 = vmatprep.subr.bf16.mxu0 0
      %4175 = vmatpush1.bf16.msra.mxu0 0
      %4176 = vmatprep.subr.bf16.mxu0 0
      %4177 = vmatpush1.bf16.msra.mxu0 0
      %4178 = vmatprep.subr.bf16.mxu0 0
      %4179 = vmatpush1.bf16.msra.mxu0 0
      %4180 = vmatprep.subr.bf16.mxu0 0
      %4181 = vmatpush1.bf16.msra.mxu0 0
      %4182 = vmatprep.subr.bf16.mxu0 0
      %4183 = vmatpush1.bf16.msra.mxu0 0
      %4184 = vmatprep.subr.bf16.mxu0 0
      %4185 = vmatpush1.bf16.msra.mxu0 0
      %4186 = vmatprep.mubr.bf16.mxu0 0
      %4187 = vmatmul.mubr.bf16.gmra.mrb[0].mxu0 %v4140
      %v4188 = vpop.f32.mrb[0].mxu0
      %v4189 = vadd.f32 %v4109, %v4188
      %v4190 = vpop.f32.mrb[0].mxu0
      %v4191 = vpop.f32.mrb[0].mxu0
      %v4192 = vadd.f32 %v4112, %v4191
      %v4193 = vpop.f32.mrb[0].mxu0
      %4194 = vmatprep.mubr.bf16.mxu0 0
      %4195 = vmatmul.mubr.bf16.gmra.mrb[0].mxu0 %v4143
      %v4196 = vpop.f32.mrb[0].mxu0
      %v4197 = vadd.f32 %v4117, %v4196
      %v4198 = vpop.f32.mrb[0].mxu0
      %v4199 = vpop.f32.mrb[0].mxu0
      %v4200 = vadd.f32 %v4120, %v4199
      %v4201 = vpop.f32.mrb[0].mxu0
      %4202 = vmatprep.mubr.bf16.mxu0 0
      %4203 = vmatmul.mubr.bf16.gmra.mrb[0].mxu0 %v4146
      %v4204 = vpop.f32.mrb[0].mxu0
      %v4205 = vadd.f32 %v4125, %v4204
      %v4206 = vpop.f32.mrb[0].mxu0
      %v4207 = vpop.f32.mrb[0].mxu0
      %v4208 = vadd.f32 %v4128, %v4207
      %v4209 = vpop.f32.mrb[0].mxu0
      %4210 = vmatprep.mubr.bf16.mxu0 0
      %4211 = vmatmul.mubr.bf16.gmra.mrb[0].mxu0 %v4149
      %v4212 = vpop.f32.mrb[0].mxu0
      %v4213 = vadd.f32 %v4133, %v4212
      %v4214 = vpop.f32.mrb[0].mxu0
      %v4215 = vpop.f32.mrb[0].mxu0
      %v4216 = vadd.f32 %v4136, %v4215
      %v4217 = vpop.f32.mrb[0].mxu0
      %4218 = vdwg.mxu0
      %v4219 = vsel %vm1596, %v1597, %v1600
      %v4220 = vrot.slane %v3987, 2
      %v4221 = vrot.slane %v3995, 2
      %v4222 = vsel %vm1596, %v4220, %v4221
      %v4223 = vrot.slane %v3988, 2
      %v4224 = vrot.slane %v3996, 2
      %v4225 = vsel %vm1596, %v4223, %v4224
      %v4226 = vrot.slane %v3989, 2
      %v4227 = vrot.slane %v3997, 2
      %v4228 = vsel %vm1596, %v4226, %v4227
      %v4229 = vrot.slane %v3990, 2
      %v4230 = vrot.slane %v3998, 2
      %v4231 = vsel %vm1596, %v4229, %v4230
      %v4232 = vrot.slane %v3991, 2
      %v4233 = vrot.slane %v3999, 2
      %v4234 = vsel %vm1596, %v4232, %v4233
      %v4235 = vrot.slane %v3992, 2
      %v4236 = vrot.slane %v4000, 2
      %v4237 = vsel %vm1596, %v4235, %v4236
      %v4238 = vrot.slane %v3993, 2
      %v4239 = vrot.slane %v4001, 2
      %v4240 = vsel %vm1596, %v4238, %v4239
      %v4249 = vpack.c.bf16 %v4222, %v4219
      %v4250 = vpack.c.bf16 %v4228, %v4225
      %v4251 = vpack.c.bf16 %v4234, %v4231
      %v4252 = vpack.c.bf16 %v4240, %v4237
      %s4253 = scalar_lea.vmem %s6, 8
      %v4254 = vld [vmem:[%s4253] sm:$0xf]
      %v4256 = vsel %vm389, %v4249, 0
      %v4259 = vsel %vm389, %v4250, 0
      %v4262 = vsel %vm389, %v4251, 0
      %v4265 = vsel %vm389, %v4252, 0
      %v4268 = vsel %vm4070, %v4254, 0
      %4270 = vmatprep.subr.bf16.mxu0 0
      %4271 = vmatpush1.bf16.msra.mxu0 %v4268
      %4272 = vmatprep.subr.bf16.mxu0 0
      %4273 = vmatpush1.bf16.msra.mxu0 0
      %4274 = vmatprep.subr.bf16.mxu0 0
      %4275 = vmatpush1.bf16.msra.mxu0 0
      %4276 = vmatprep.subr.bf16.mxu0 0
      %4277 = vmatpush1.bf16.msra.mxu0 0
      %4278 = vmatprep.subr.bf16.mxu0 0
      %4279 = vmatpush1.bf16.msra.mxu0 0
      %4280 = vmatprep.subr.bf16.mxu0 0
      %4281 = vmatpush1.bf16.msra.mxu0 0
      %4282 = vmatprep.subr.bf16.mxu0 0
      %4283 = vmatpush1.bf16.msra.mxu0 0
      %4284 = vmatprep.subr.bf16.mxu0 0
      %4285 = vmatpush1.bf16.msra.mxu0 0
      %4286 = vmatprep.subr.bf16.mxu0 0
      %4287 = vmatpush1.bf16.msra.mxu0 0
      %4288 = vmatprep.subr.bf16.mxu0 0
      %4289 = vmatpush1.bf16.msra.mxu0 0
      %4290 = vmatprep.subr.bf16.mxu0 0
      %4291 = vmatpush1.bf16.msra.mxu0 0
      %4292 = vmatprep.subr.bf16.mxu0 0
      %4293 = vmatpush1.bf16.msra.mxu0 0
      %4294 = vmatprep.subr.bf16.mxu0 0
      %4295 = vmatpush1.bf16.msra.mxu0 0
      %4296 = vmatprep.subr.bf16.mxu0 0
      %4297 = vmatpush1.bf16.msra.mxu0 0
      %4298 = vmatprep.subr.bf16.mxu0 0
      %4299 = vmatpush1.bf16.msra.mxu0 0
      %4300 = vmatprep.subr.bf16.mxu0 0
      %4301 = vmatpush1.bf16.msra.mxu0 0
      %4302 = vmatprep.mubr.bf16.mxu0 0
      %4303 = vmatmul.mubr.bf16.gmra.mrb[0].mxu0 %v4256
      %v4304 = vpop.f32.mrb[0].mxu0
      %v4305 = vadd.f32 0.0, %v4304
      %v4306 = vpop.f32.mrb[0].mxu0
      %v4307 = vpop.f32.mrb[0].mxu0
      %v4308 = vadd.f32 0.0, %v4307
      %v4309 = vpop.f32.mrb[0].mxu0
      %4310 = vmatprep.mubr.bf16.mxu0 0
      %4311 = vmatmul.mubr.bf16.gmra.mrb[0].mxu0 %v4259
      %v4312 = vpop.f32.mrb[0].mxu0
      %v4313 = vadd.f32 0.0, %v4312
      %v4314 = vpop.f32.mrb[0].mxu0
      %v4315 = vpop.f32.mrb[0].mxu0
      %v4316 = vadd.f32 0.0, %v4315
      %v4317 = vpop.f32.mrb[0].mxu0
      %4318 = vmatprep.mubr.bf16.mxu0 0
      %4319 = vmatmul.mubr.bf16.gmra.mrb[0].mxu0 %v4262
      %v4320 = vpop.f32.mrb[0].mxu0
      %v4321 = vadd.f32 0.0, %v4320
      %v4322 = vpop.f32.mrb[0].mxu0
      %v4323 = vpop.f32.mrb[0].mxu0
      %v4324 = vadd.f32 0.0, %v4323
      %v4325 = vpop.f32.mrb[0].mxu0
      %4326 = vmatprep.mubr.bf16.mxu0 0
      %4327 = vmatmul.mubr.bf16.gmra.mrb[0].mxu0 %v4265
      %v4328 = vpop.f32.mrb[0].mxu0
      %v4329 = vadd.f32 0.0, %v4328
      %v4330 = vpop.f32.mrb[0].mxu0
      %v4331 = vpop.f32.mrb[0].mxu0
      %v4332 = vadd.f32 0.0, %v4331
      %v4333 = vpop.f32.mrb[0].mxu0
      %4334 = vdwg.mxu0
      %v4335 = vadd.f32 %v4189, %v4305
      %v4336 = vadd.f32 %v4192, %v4308
      %v4337 = vadd.f32 %v4197, %v4313
      %v4338 = vadd.f32 %v4200, %v4316
      %v4339 = vadd.f32 %v4205, %v4321
      %v4340 = vadd.f32 %v4208, %v4324
      %v4341 = vadd.f32 %v4213, %v4329
      %v4342 = vadd.f32 %v4216, %v4332
      %v4343 = vpack.c.bf16 %v3988, %v3987
      %v4344 = vpack.c.bf16 %v3990, %v3989
      %v4345 = vpack.c.bf16 %v3992, %v3991
      %v4346 = vpack.c.bf16 %v3994, %v3993
      %s4347 = scalar_lea.vmem %s6, 12
      %v4348 = vld [vmem:[%s4347] sm:$0xf]
      %v4350 = vsel %vm389, %v4343, 0
      %v4353 = vsel %vm389, %v4344, 0
      %v4356 = vsel %vm389, %v4345, 0
      %v4359 = vsel %vm389, %v4346, 0
      %v4362 = vsel %vm4070, %v4348, 0
      %4364 = vmatprep.subr.bf16.mxu0 0
      %4365 = vmatpush1.bf16.msra.mxu0 %v4362
      %4366 = vmatprep.subr.bf16.mxu0 0
      %4367 = vmatpush1.bf16.msra.mxu0 0
      %4368 = vmatprep.subr.bf16.mxu0 0
      %4369 = vmatpush1.bf16.msra.mxu0 0
      %4370 = vmatprep.subr.bf16.mxu0 0
      %4371 = vmatpush1.bf16.msra.mxu0 0
      %4372 = vmatprep.subr.bf16.mxu0 0
      %4373 = vmatpush1.bf16.msra.mxu0 0
      %4374 = vmatprep.subr.bf16.mxu0 0
      %4375 = vmatpush1.bf16.msra.mxu0 0
      %4376 = vmatprep.subr.bf16.mxu0 0
      %4377 = vmatpush1.bf16.msra.mxu0 0
      %4378 = vmatprep.subr.bf16.mxu0 0
      %4379 = vmatpush1.bf16.msra.mxu0 0
      %4380 = vmatprep.subr.bf16.mxu0 0
      %4381 = vmatpush1.bf16.msra.mxu0 0
      %4382 = vmatprep.subr.bf16.mxu0 0
      %4383 = vmatpush1.bf16.msra.mxu0 0
      %4384 = vmatprep.subr.bf16.mxu0 0
      %4385 = vmatpush1.bf16.msra.mxu0 0
      %4386 = vmatprep.subr.bf16.mxu0 0
      %4387 = vmatpush1.bf16.msra.mxu0 0
      %4388 = vmatprep.subr.bf16.mxu0 0
      %4389 = vmatpush1.bf16.msra.mxu0 0
      %4390 = vmatprep.subr.bf16.mxu0 0
      %4391 = vmatpush1.bf16.msra.mxu0 0
      %4392 = vmatprep.subr.bf16.mxu0 0
      %4393 = vmatpush1.bf16.msra.mxu0 0
      %4394 = vmatprep.subr.bf16.mxu0 0
      %4395 = vmatpush1.bf16.msra.mxu0 0
      %4396 = vmatprep.mubr.bf16.mxu0 0
      %4397 = vmatmul.mubr.bf16.gmra.mrb[0].mxu0 %v4350
      %v4398 = vpop.f32.mrb[0].mxu0
      %v4399 = vadd.f32 0.0, %v4398
      %v4400 = vpop.f32.mrb[0].mxu0
      %v4401 = vpop.f32.mrb[0].mxu0
      %v4402 = vadd.f32 0.0, %v4401
      %v4403 = vpop.f32.mrb[0].mxu0
      %4404 = vmatprep.mubr.bf16.mxu0 0
      %4405 = vmatmul.mubr.bf16.gmra.mrb[0].mxu0 %v4353
      %v4406 = vpop.f32.mrb[0].mxu0
      %v4407 = vadd.f32 0.0, %v4406
      %v4408 = vpop.f32.mrb[0].mxu0
      %v4409 = vpop.f32.mrb[0].mxu0
      %v4410 = vadd.f32 0.0, %v4409
      %v4411 = vpop.f32.mrb[0].mxu0
      %4412 = vmatprep.mubr.bf16.mxu0 0
      %4413 = vmatmul.mubr.bf16.gmra.mrb[0].mxu0 %v4356
      %v4414 = vpop.f32.mrb[0].mxu0
      %v4415 = vadd.f32 0.0, %v4414
      %v4416 = vpop.f32.mrb[0].mxu0
      %v4417 = vpop.f32.mrb[0].mxu0
      %v4418 = vadd.f32 0.0, %v4417
      %v4419 = vpop.f32.mrb[0].mxu0
      %4420 = vmatprep.mubr.bf16.mxu0 0
      %4421 = vmatmul.mubr.bf16.gmra.mrb[0].mxu0 %v4359
      %v4422 = vpop.f32.mrb[0].mxu0
      %v4423 = vadd.f32 0.0, %v4422
      %v4424 = vpop.f32.mrb[0].mxu0
      %v4425 = vpop.f32.mrb[0].mxu0
      %v4426 = vadd.f32 0.0, %v4425
      %v4427 = vpop.f32.mrb[0].mxu0
      %4428 = vdwg.mxu0
      %v4429 = vadd.f32 %v4335, %v4399
      %v4430 = vadd.f32 %v4336, %v4402
      %v4431 = vadd.f32 %v4337, %v4407
      %v4432 = vadd.f32 %v4338, %v4410
      %v4433 = vadd.f32 %v4339, %v4415
      %v4434 = vadd.f32 %v4340, %v4418
      %v4435 = vadd.f32 %v4341, %v4423
      %v4436 = vadd.f32 %v4342, %v4426
      %v4439 = vrot.slane %v3994, 1
      %v4440 = vrot.slane %v4002, 1
      %v4441 = vsel %vm1040, %v4439, %v4440
      %v4443 = vpack.c.bf16 %v4028, %v4025
      %v4444 = vpack.c.bf16 %v4034, %v4031
      %v4445 = vpack.c.bf16 %v4040, %v4037
      %v4446 = vpack.c.bf16 %v4441, %v4043
      %s4447 = scalar_lea.vmem %s6, 16
      %v4448 = vld [vmem:[%s4447] sm:$0xf]
      %v4450 = vsel %vm389, %v4443, 0
      %v4453 = vsel %vm389, %v4444, 0
      %v4456 = vsel %vm389, %v4445, 0
      %v4459 = vsel %vm389, %v4446, 0
      %v4462 = vsel %vm4070, %v4448, 0
      %4464 = vmatprep.subr.bf16.mxu0 0
      %4465 = vmatpush1.bf16.msra.mxu0 %v4462
      %4466 = vmatprep.subr.bf16.mxu0 0
      %4467 = vmatpush1.bf16.msra.mxu0 0
      %4468 = vmatprep.subr.bf16.mxu0 0
      %4469 = vmatpush1.bf16.msra.mxu0 0
      %4470 = vmatprep.subr.bf16.mxu0 0
      %4471 = vmatpush1.bf16.msra.mxu0 0
      %4472 = vmatprep.subr.bf16.mxu0 0
      %4473 = vmatpush1.bf16.msra.mxu0 0
      %4474 = vmatprep.subr.bf16.mxu0 0
      %4475 = vmatpush1.bf16.msra.mxu0 0
      %4476 = vmatprep.subr.bf16.mxu0 0
      %4477 = vmatpush1.bf16.msra.mxu0 0
      %4478 = vmatprep.subr.bf16.mxu0 0
      %4479 = vmatpush1.bf16.msra.mxu0 0
      %4480 = vmatprep.subr.bf16.mxu0 0
      %4481 = vmatpush1.bf16.msra.mxu0 0
      %4482 = vmatprep.subr.bf16.mxu0 0
      %4483 = vmatpush1.bf16.msra.mxu0 0
      %4484 = vmatprep.subr.bf16.mxu0 0
      %4485 = vmatpush1.bf16.msra.mxu0 0
      %4486 = vmatprep.subr.bf16.mxu0 0
      %4487 = vmatpush1.bf16.msra.mxu0 0
      %4488 = vmatprep.subr.bf16.mxu0 0
      %4489 = vmatpush1.bf16.msra.mxu0 0
      %4490 = vmatprep.subr.bf16.mxu0 0
      %4491 = vmatpush1.bf16.msra.mxu0 0
      %4492 = vmatprep.subr.bf16.mxu0 0
      %4493 = vmatpush1.bf16.msra.mxu0 0
      %4494 = vmatprep.subr.bf16.mxu0 0
      %4495 = vmatpush1.bf16.msra.mxu0 0
      %4496 = vmatprep.mubr.bf16.mxu0 0
      %4497 = vmatmul.mubr.bf16.gmra.mrb[0].mxu0 %v4450
      %v4498 = vpop.f32.mrb[0].mxu0
      %v4499 = vadd.f32 0.0, %v4498
      %v4500 = vpop.f32.mrb[0].mxu0
      %v4501 = vpop.f32.mrb[0].mxu0
      %v4502 = vadd.f32 0.0, %v4501
      %v4503 = vpop.f32.mrb[0].mxu0
      %4504 = vmatprep.mubr.bf16.mxu0 0
      %4505 = vmatmul.mubr.bf16.gmra.mrb[0].mxu0 %v4453
      %v4506 = vpop.f32.mrb[0].mxu0
      %v4507 = vadd.f32 0.0, %v4506
      %v4508 = vpop.f32.mrb[0].mxu0
      %v4509 = vpop.f32.mrb[0].mxu0
      %v4510 = vadd.f32 0.0, %v4509
      %v4511 = vpop.f32.mrb[0].mxu0
      %4512 = vmatprep.mubr.bf16.mxu0 0
      %4513 = vmatmul.mubr.bf16.gmra.mrb[0].mxu0 %v4456
      %v4514 = vpop.f32.mrb[0].mxu0
      %v4515 = vadd.f32 0.0, %v4514
      %v4516 = vpop.f32.mrb[0].mxu0
      %v4517 = vpop.f32.mrb[0].mxu0
      %v4518 = vadd.f32 0.0, %v4517
      %v4519 = vpop.f32.mrb[0].mxu0
      %4520 = vmatprep.mubr.bf16.mxu0 0
      %4521 = vmatmul.mubr.bf16.gmra.mrb[0].mxu0 %v4459
      %v4522 = vpop.f32.mrb[0].mxu0
      %v4523 = vadd.f32 0.0, %v4522
      %v4524 = vpop.f32.mrb[0].mxu0
      %v4525 = vpop.f32.mrb[0].mxu0
      %v4526 = vadd.f32 0.0, %v4525
      %v4527 = vpop.f32.mrb[0].mxu0
      %4528 = vdwg.mxu0
      %v4529 = vadd.f32 %v4429, %v4499
      %v4530 = vadd.f32 %v4430, %v4502
      %v4531 = vadd.f32 %v4431, %v4507
      %v4532 = vadd.f32 %v4432, %v4510
      %v4533 = vadd.f32 %v4433, %v4515
      %v4534 = vadd.f32 %v4434, %v4518
      %v4535 = vadd.f32 %v4435, %v4523
      %v4536 = vadd.f32 %v4436, %v4526
      %v4537 = vrot.slane %v3994, 2
      %v4538 = vrot.slane %v4002, 2
      %v4539 = vsel %vm1596, %v4537, %v4538
      %v4541 = vpack.c.bf16 %v4225, %v4222
      %v4542 = vpack.c.bf16 %v4231, %v4228
      %v4543 = vpack.c.bf16 %v4237, %v4234
      %v4544 = vpack.c.bf16 %v4539, %v4240
      %s4545 = scalar_lea.vmem %s6, 20
      %v4546 = vld [vmem:[%s4545] sm:$0xf]
      %v4548 = vsel %vm389, %v4541, 0
      %v4551 = vsel %vm389, %v4542, 0
      %v4554 = vsel %vm389, %v4543, 0
      %v4557 = vsel %vm389, %v4544, 0
      %v4560 = vsel %vm4070, %v4546, 0
      %4562 = vmatprep.subr.bf16.mxu0 0
      %4563 = vmatpush1.bf16.msra.mxu0 %v4560
      %4564 = vmatprep.subr.bf16.mxu0 0
      %4565 = vmatpush1.bf16.msra.mxu0 0
      %4566 = vmatprep.subr.bf16.mxu0 0
      %4567 = vmatpush1.bf16.msra.mxu0 0
      %4568 = vmatprep.subr.bf16.mxu0 0
      %4569 = vmatpush1.bf16.msra.mxu0 0
      %4570 = vmatprep.subr.bf16.mxu0 0
      %4571 = vmatpush1.bf16.msra.mxu0 0
      %4572 = vmatprep.subr.bf16.mxu0 0
      %4573 = vmatpush1.bf16.msra.mxu0 0
      %4574 = vmatprep.subr.bf16.mxu0 0
      %4575 = vmatpush1.bf16.msra.mxu0 0
      %4576 = vmatprep.subr.bf16.mxu0 0
      %4577 = vmatpush1.bf16.msra.mxu0 0
      %4578 = vmatprep.subr.bf16.mxu0 0
      %4579 = vmatpush1.bf16.msra.mxu0 0
      %4580 = vmatprep.subr.bf16.mxu0 0
      %4581 = vmatpush1.bf16.msra.mxu0 0
      %4582 = vmatprep.subr.bf16.mxu0 0
      %4583 = vmatpush1.bf16.msra.mxu0 0
      %4584 = vmatprep.subr.bf16.mxu0 0
      %4585 = vmatpush1.bf16.msra.mxu0 0
      %4586 = vmatprep.subr.bf16.mxu0 0
      %4587 = vmatpush1.bf16.msra.mxu0 0
      %4588 = vmatprep.subr.bf16.mxu0 0
      %4589 = vmatpush1.bf16.msra.mxu0 0
      %4590 = vmatprep.subr.bf16.mxu0 0
      %4591 = vmatpush1.bf16.msra.mxu0 0
      %4592 = vmatprep.subr.bf16.mxu0 0
      %4593 = vmatpush1.bf16.msra.mxu0 0
      %4594 = vmatprep.mubr.bf16.mxu0 0
      %4595 = vmatmul.mubr.bf16.gmra.mrb[0].mxu0 %v4548
      %v4596 = vpop.f32.mrb[0].mxu0
      %v4597 = vadd.f32 0.0, %v4596
      %v4598 = vpop.f32.mrb[0].mxu0
      %v4599 = vpop.f32.mrb[0].mxu0
      %v4600 = vadd.f32 0.0, %v4599
      %v4601 = vpop.f32.mrb[0].mxu0
      %4602 = vmatprep.mubr.bf16.mxu0 0
      %4603 = vmatmul.mubr.bf16.gmra.mrb[0].mxu0 %v4551
      %v4604 = vpop.f32.mrb[0].mxu0
      %v4605 = vadd.f32 0.0, %v4604
      %v4606 = vpop.f32.mrb[0].mxu0
      %v4607 = vpop.f32.mrb[0].mxu0
      %v4608 = vadd.f32 0.0, %v4607
      %v4609 = vpop.f32.mrb[0].mxu0
      %4610 = vmatprep.mubr.bf16.mxu0 0
      %4611 = vmatmul.mubr.bf16.gmra.mrb[0].mxu0 %v4554
      %v4612 = vpop.f32.mrb[0].mxu0
      %v4613 = vadd.f32 0.0, %v4612
      %v4614 = vpop.f32.mrb[0].mxu0
      %v4615 = vpop.f32.mrb[0].mxu0
      %v4616 = vadd.f32 0.0, %v4615
      %v4617 = vpop.f32.mrb[0].mxu0
      %4618 = vmatprep.mubr.bf16.mxu0 0
      %4619 = vmatmul.mubr.bf16.gmra.mrb[0].mxu0 %v4557
      %v4620 = vpop.f32.mrb[0].mxu0
      %v4621 = vadd.f32 0.0, %v4620
      %v4622 = vpop.f32.mrb[0].mxu0
      %v4623 = vpop.f32.mrb[0].mxu0
      %v4624 = vadd.f32 0.0, %v4623
      %v4625 = vpop.f32.mrb[0].mxu0
      %4626 = vdwg.mxu0
      %v4627 = vadd.f32 %v4529, %v4597
      %v4628 = vadd.f32 %v4530, %v4600
      %v4629 = vadd.f32 %v4531, %v4605
      %v4630 = vadd.f32 %v4532, %v4608
      %v4631 = vadd.f32 %v4533, %v4613
      %v4632 = vadd.f32 %v4534, %v4616
      %v4633 = vadd.f32 %v4535, %v4621
      %v4634 = vadd.f32 %v4536, %v4624
      %v4635 = vpack.c.bf16 %v957, %v3994
      %s4636 = scalar_lea.vmem %s6, 24
      %v4637 = vld [vmem:[%s4636] sm:$0xf]
      %v4639 = vsel %vm389, %v4635, 0
      %v4642 = vsel %vm4070, %v4637, 0
      %4644 = vmatprep.subr.bf16.mxu0 0
      %4645 = vmatpush1.bf16.msra.mxu0 %v4642
      %4646 = vmatprep.subr.bf16.mxu0 0
      %4647 = vmatpush1.bf16.msra.mxu0 0
      %4648 = vmatprep.subr.bf16.mxu0 0
      %4649 = vmatpush1.bf16.msra.mxu0 0
      %4650 = vmatprep.subr.bf16.mxu0 0
      %4651 = vmatpush1.bf16.msra.mxu0 0
      %4652 = vmatprep.subr.bf16.mxu0 0
      %4653 = vmatpush1.bf16.msra.mxu0 0
      %4654 = vmatprep.subr.bf16.mxu0 0
      %4655 = vmatpush1.bf16.msra.mxu0 0
      %4656 = vmatprep.subr.bf16.mxu0 0
      %4657 = vmatpush1.bf16.msra.mxu0 0
      %4658 = vmatprep.subr.bf16.mxu0 0
      %4659 = vmatpush1.bf16.msra.mxu0 0
      %4660 = vmatprep.subr.bf16.mxu0 0
      %4661 = vmatpush1.bf16.msra.mxu0 0
      %4662 = vmatprep.subr.bf16.mxu0 0
      %4663 = vmatpush1.bf16.msra.mxu0 0
      %4664 = vmatprep.subr.bf16.mxu0 0
      %4665 = vmatpush1.bf16.msra.mxu0 0
      %4666 = vmatprep.subr.bf16.mxu0 0
      %4667 = vmatpush1.bf16.msra.mxu0 0
      %4668 = vmatprep.subr.bf16.mxu0 0
      %4669 = vmatpush1.bf16.msra.mxu0 0
      %4670 = vmatprep.subr.bf16.mxu0 0
      %4671 = vmatpush1.bf16.msra.mxu0 0
      %4672 = vmatprep.subr.bf16.mxu0 0
      %4673 = vmatpush1.bf16.msra.mxu0 0
      %4674 = vmatprep.subr.bf16.mxu0 0
      %4675 = vmatpush1.bf16.msra.mxu0 0
      %4676 = vmatprep.mubr.bf16.mxu0 0
      %4677 = vmatmul.mubr.bf16.gmra.mrb[0].mxu0 %v4143
      %v4678 = vpop.f32.mrb[0].mxu0
      %v4679 = vadd.f32 0.0, %v4678
      %v4680 = vpop.f32.mrb[0].mxu0
      %v4681 = vpop.f32.mrb[0].mxu0
      %v4682 = vadd.f32 0.0, %v4681
      %v4683 = vpop.f32.mrb[0].mxu0
      %4684 = vmatprep.mubr.bf16.mxu0 0
      %4685 = vmatmul.mubr.bf16.gmra.mrb[0].mxu0 %v4146
      %v4686 = vpop.f32.mrb[0].mxu0
      %v4687 = vadd.f32 0.0, %v4686
      %v4688 = vpop.f32.mrb[0].mxu0
      %v4689 = vpop.f32.mrb[0].mxu0
      %v4690 = vadd.f32 0.0, %v4689
      %v4691 = vpop.f32.mrb[0].mxu0
      %4692 = vmatprep.mubr.bf16.mxu0 0
      %4693 = vmatmul.mubr.bf16.gmra.mrb[0].mxu0 %v4149
      %v4694 = vpop.f32.mrb[0].mxu0
      %v4695 = vadd.f32 0.0, %v4694
      %v4696 = vpop.f32.mrb[0].mxu0
      %v4697 = vpop.f32.mrb[0].mxu0
      %v4698 = vadd.f32 0.0, %v4697
      %v4699 = vpop.f32.mrb[0].mxu0
      %4700 = vmatprep.mubr.bf16.mxu0 0
      %4701 = vmatmul.mubr.bf16.gmra.mrb[0].mxu0 %v4639
      %v4702 = vpop.f32.mrb[0].mxu0
      %v4703 = vadd.f32 0.0, %v4702
      %v4704 = vpop.f32.mrb[0].mxu0
      %v4705 = vpop.f32.mrb[0].mxu0
      %v4706 = vadd.f32 0.0, %v4705
      %v4707 = vpop.f32.mrb[0].mxu0
      %4708 = vdwg.mxu0
      %v4709 = vadd.f32 %v4627, %v4679
      %v4710 = vadd.f32 %v4628, %v4682
      %v4711 = vadd.f32 %v4629, %v4687
      %v4712 = vadd.f32 %v4630, %v4690
      %v4713 = vadd.f32 %v4631, %v4695
      %v4714 = vadd.f32 %v4632, %v4698
      %v4715 = vadd.f32 %v4633, %v4703
      %v4716 = vadd.f32 %v4634, %v4706
      %v4717 = vpack.c.bf16 %v4022, %v4441
      %s4718 = scalar_lea.vmem %s6, 28
      %v4719 = vld [vmem:[%s4718] sm:$0xf]
      %v4721 = vsel %vm389, %v4717, 0
      %v4724 = vsel %vm4070, %v4719, 0
      %4726 = vmatprep.subr.bf16.mxu0 0
      %4727 = vmatpush1.bf16.msra.mxu0 %v4724
      %4728 = vmatprep.subr.bf16.mxu0 0
      %4729 = vmatpush1.bf16.msra.mxu0 0
      %4730 = vmatprep.subr.bf16.mxu0 0
      %4731 = vmatpush1.bf16.msra.mxu0 0
      %4732 = vmatprep.subr.bf16.mxu0 0
      %4733 = vmatpush1.bf16.msra.mxu0 0
      %4734 = vmatprep.subr.bf16.mxu0 0
      %4735 = vmatpush1.bf16.msra.mxu0 0
      %4736 = vmatprep.subr.bf16.mxu0 0
      %4737 = vmatpush1.bf16.msra.mxu0 0
      %4738 = vmatprep.subr.bf16.mxu0 0
      %4739 = vmatpush1.bf16.msra.mxu0 0
      %4740 = vmatprep.subr.bf16.mxu0 0
      %4741 = vmatpush1.bf16.msra.mxu0 0
      %4742 = vmatprep.subr.bf16.mxu0 0
      %4743 = vmatpush1.bf16.msra.mxu0 0
      %4744 = vmatprep.subr.bf16.mxu0 0
      %4745 = vmatpush1.bf16.msra.mxu0 0
      %4746 = vmatprep.subr.bf16.mxu0 0
      %4747 = vmatpush1.bf16.msra.mxu0 0
      %4748 = vmatprep.subr.bf16.mxu0 0
      %4749 = vmatpush1.bf16.msra.mxu0 0
      %4750 = vmatprep.subr.bf16.mxu0 0
      %4751 = vmatpush1.bf16.msra.mxu0 0
      %4752 = vmatprep.subr.bf16.mxu0 0
      %4753 = vmatpush1.bf16.msra.mxu0 0
      %4754 = vmatprep.subr.bf16.mxu0 0
      %4755 = vmatpush1.bf16.msra.mxu0 0
      %4756 = vmatprep.subr.bf16.mxu0 0
      %4757 = vmatpush1.bf16.msra.mxu0 0
      %4758 = vmatprep.mubr.bf16.mxu0 0
      %4759 = vmatmul.mubr.bf16.gmra.mrb[0].mxu0 %v4062
      %v4760 = vpop.f32.mrb[0].mxu0
      %v4761 = vadd.f32 0.0, %v4760
      %v4762 = vpop.f32.mrb[0].mxu0
      %v4763 = vpop.f32.mrb[0].mxu0
      %v4764 = vadd.f32 0.0, %v4763
      %v4765 = vpop.f32.mrb[0].mxu0
      %4766 = vmatprep.mubr.bf16.mxu0 0
      %4767 = vmatmul.mubr.bf16.gmra.mrb[0].mxu0 %v4065
      %v4768 = vpop.f32.mrb[0].mxu0
      %v4769 = vadd.f32 0.0, %v4768
      %v4770 = vpop.f32.mrb[0].mxu0
      %v4771 = vpop.f32.mrb[0].mxu0
      %v4772 = vadd.f32 0.0, %v4771
      %v4773 = vpop.f32.mrb[0].mxu0
      %4774 = vmatprep.mubr.bf16.mxu0 0
      %4775 = vmatmul.mubr.bf16.gmra.mrb[0].mxu0 %v4068
      %v4776 = vpop.f32.mrb[0].mxu0
      %v4777 = vadd.f32 0.0, %v4776
      %v4778 = vpop.f32.mrb[0].mxu0
      %v4779 = vpop.f32.mrb[0].mxu0
      %v4780 = vadd.f32 0.0, %v4779
      %v4781 = vpop.f32.mrb[0].mxu0
      %4782 = vmatprep.mubr.bf16.mxu0 0
      %4783 = vmatmul.mubr.bf16.gmra.mrb[0].mxu0 %v4721
      %v4784 = vpop.f32.mrb[0].mxu0
      %v4785 = vadd.f32 0.0, %v4784
      %v4786 = vpop.f32.mrb[0].mxu0
      %v4787 = vpop.f32.mrb[0].mxu0
      %v4788 = vadd.f32 0.0, %v4787
      %v4789 = vpop.f32.mrb[0].mxu0
      %4790 = vdwg.mxu0
      %v4791 = vadd.f32 %v4709, %v4761
      %v4792 = vadd.f32 %v4710, %v4764
      %v4793 = vadd.f32 %v4711, %v4769
      %v4794 = vadd.f32 %v4712, %v4772
      %v4795 = vadd.f32 %v4713, %v4777
      %v4796 = vadd.f32 %v4714, %v4780
      %v4797 = vadd.f32 %v4715, %v4785
      %v4798 = vadd.f32 %v4716, %v4788
      %v4799 = vpack.c.bf16 %v4219, %v4539
      %s4800 = scalar_lea.vmem %s6, 32
      %v4801 = vld [vmem:[%s4800] sm:$0xf]
      %v4803 = vsel %vm389, %v4799, 0
      %v4806 = vsel %vm4070, %v4801, 0
      %4808 = vmatprep.subr.bf16.mxu0 0
      %4809 = vmatpush1.bf16.msra.mxu0 %v4806
      %4810 = vmatprep.subr.bf16.mxu0 0
      %4811 = vmatpush1.bf16.msra.mxu0 0
      %4812 = vmatprep.subr.bf16.mxu0 0
      %4813 = vmatpush1.bf16.msra.mxu0 0
      %4814 = vmatprep.subr.bf16.mxu0 0
      %4815 = vmatpush1.bf16.msra.mxu0 0
      %4816 = vmatprep.subr.bf16.mxu0 0
      %4817 = vmatpush1.bf16.msra.mxu0 0
      %4818 = vmatprep.subr.bf16.mxu0 0
      %4819 = vmatpush1.bf16.msra.mxu0 0
      %4820 = vmatprep.subr.bf16.mxu0 0
      %4821 = vmatpush1.bf16.msra.mxu0 0
      %4822 = vmatprep.subr.bf16.mxu0 0
      %4823 = vmatpush1.bf16.msra.mxu0 0
      %4824 = vmatprep.subr.bf16.mxu0 0
      %4825 = vmatpush1.bf16.msra.mxu0 0
      %4826 = vmatprep.subr.bf16.mxu0 0
      %4827 = vmatpush1.bf16.msra.mxu0 0
      %4828 = vmatprep.subr.bf16.mxu0 0
      %4829 = vmatpush1.bf16.msra.mxu0 0
      %4830 = vmatprep.subr.bf16.mxu0 0
      %4831 = vmatpush1.bf16.msra.mxu0 0
      %4832 = vmatprep.subr.bf16.mxu0 0
      %4833 = vmatpush1.bf16.msra.mxu0 0
      %4834 = vmatprep.subr.bf16.mxu0 0
      %4835 = vmatpush1.bf16.msra.mxu0 0
      %4836 = vmatprep.subr.bf16.mxu0 0
      %4837 = vmatpush1.bf16.msra.mxu0 0
      %4838 = vmatprep.subr.bf16.mxu0 0
      %4839 = vmatpush1.bf16.msra.mxu0 0
      %4840 = vmatprep.mubr.bf16.mxu0 0
      %4841 = vmatmul.mubr.bf16.gmra.mrb[0].mxu0 %v4259
      %v4842 = vpop.f32.mrb[0].mxu0
      %v4843 = vadd.f32 0.0, %v4842
      %v4844 = vpop.f32.mrb[0].mxu0
      %v4845 = vpop.f32.mrb[0].mxu0
      %v4846 = vadd.f32 0.0, %v4845
      %v4847 = vpop.f32.mrb[0].mxu0
      %4848 = vmatprep.mubr.bf16.mxu0 0
      %4849 = vmatmul.mubr.bf16.gmra.mrb[0].mxu0 %v4262
      %v4850 = vpop.f32.mrb[0].mxu0
      %v4851 = vadd.f32 0.0, %v4850
      %v4852 = vpop.f32.mrb[0].mxu0
      %v4853 = vpop.f32.mrb[0].mxu0
      %v4854 = vadd.f32 0.0, %v4853
      %v4855 = vpop.f32.mrb[0].mxu0
      %4856 = vmatprep.mubr.bf16.mxu0 0
      %4857 = vmatmul.mubr.bf16.gmra.mrb[0].mxu0 %v4265
      %v4858 = vpop.f32.mrb[0].mxu0
      %v4859 = vadd.f32 0.0, %v4858
      %v4860 = vpop.f32.mrb[0].mxu0
      %v4861 = vpop.f32.mrb[0].mxu0
      %v4862 = vadd.f32 0.0, %v4861
      %v4863 = vpop.f32.mrb[0].mxu0
      %4864 = vmatprep.mubr.bf16.mxu0 0
      %4865 = vmatmul.mubr.bf16.gmra.mrb[0].mxu0 %v4803
      %v4866 = vpop.f32.mrb[0].mxu0
      %v4867 = vadd.f32 0.0, %v4866
      %v4868 = vpop.f32.mrb[0].mxu0
      %v4869 = vpop.f32.mrb[0].mxu0
      %v4870 = vadd.f32 0.0, %v4869
      %v4871 = vpop.f32.mrb[0].mxu0
      %4872 = vdwg.mxu0
      %v4873 = vadd.f32 %v4791, %v4843
      %v4874 = vadd.f32 %v4792, %v4846
      %v4875 = vadd.f32 %v4793, %v4851
      %v4876 = vadd.f32 %v4794, %v4854
      %v4877 = vadd.f32 %v4795, %v4859
      %v4878 = vadd.f32 %v4796, %v4862
      %v4879 = vadd.f32 %v4797, %v4867
      %v4880 = vadd.f32 %v4798, %v4870
      %v4881 = vld [vmem:[%s7] sm:$0xf]
      %v4882 = vld [vmem:[%s7 + $0x4] sm:$0xf]
      %v4883 = vpack.c.bf16 %v4873, %v4873
      %v4884 = vpack.c.bf16 %v4874, %v4874
      %v4885 = vpack.c.bf16 %v4875, %v4875
      %v4886 = vpack.c.bf16 %v4876, %v4876
      %v4887 = vpack.c.bf16 %v4877, %v4877
      %v4888 = vpack.c.bf16 %v4878, %v4878
      %v4889 = vpack.c.bf16 %v4879, %v4879
      %v4890 = vpack.c.bf16 %v4880, %v4880
      %v4893 = vunpack.c.l.b16 %v4881
      %v4894 = vunpack.c.l.b16 %v4882
      %v4895 = vpack.c.b16 %v4894, %v4893
      %v4897 = vsel %vm389, %v4895, 0
      %v4900 = vsel %vm4070, %v4883, 0
      %4902 = vmatprep.subr.bf16.mxu0 0
      %4903 = vmatpush1.bf16.msra.mxu0 %v4900
      %4904 = vmatprep.subr.bf16.mxu0 0
      %4905 = vmatpush1.bf16.msra.mxu0 0
      %4906 = vmatprep.subr.bf16.mxu0 0
      %4907 = vmatpush1.bf16.msra.mxu0 0
      %4908 = vmatprep.subr.bf16.mxu0 0
      %4909 = vmatpush1.bf16.msra.mxu0 0
      %4910 = vmatprep.subr.bf16.mxu0 0
      %4911 = vmatpush1.bf16.msra.mxu0 0
      %4912 = vmatprep.subr.bf16.mxu0 0
      %4913 = vmatpush1.bf16.msra.mxu0 0
      %4914 = vmatprep.subr.bf16.mxu0 0
      %4915 = vmatpush1.bf16.msra.mxu0 0
      %4916 = vmatprep.subr.bf16.mxu0 0
      %4917 = vmatpush1.bf16.msra.mxu0 0
      %4918 = vmatprep.subr.bf16.mxu0 0
      %4919 = vmatpush1.bf16.msra.mxu0 0
      %4920 = vmatprep.subr.bf16.mxu0 0
      %4921 = vmatpush1.bf16.msra.mxu0 0
      %4922 = vmatprep.subr.bf16.mxu0 0
      %4923 = vmatpush1.bf16.msra.mxu0 0
      %4924 = vmatprep.subr.bf16.mxu0 0
      %4925 = vmatpush1.bf16.msra.mxu0 0
      %4926 = vmatprep.subr.bf16.mxu0 0
      %4927 = vmatpush1.bf16.msra.mxu0 0
      %4928 = vmatprep.subr.bf16.mxu0 0
      %4929 = vmatpush1.bf16.msra.mxu0 0
      %4930 = vmatprep.subr.bf16.mxu0 0
      %4931 = vmatpush1.bf16.msra.mxu0 0
      %4932 = vmatprep.subr.bf16.mxu0 0
      %4933 = vmatpush1.bf16.msra.mxu0 0
      %4934 = vmatprep.mubr.bf16.mxu0 0
      %4935 = vmatmul.mubr.bf16.gmra.mrb[0].mxu0 %v4897
      %v4936 = vpop.f32.mrb[0].mxu0
      %v4937 = vadd.f32 0.0, %v4936
      %v4938 = vpop.f32.mrb[0].mxu0
      %v4939 = vpop.f32.mrb[0].mxu0
      %v4940 = vadd.f32 0.0, %v4939
      %v4941 = vpop.f32.mrb[0].mxu0
      %4942 = vdwg.mxu0
      %v4944 = vsel %vm4070, %v4884, 0
      %4946 = vmatprep.subr.bf16.mxu0 0
      %4947 = vmatpush1.bf16.msra.mxu0 %v4944
      %4948 = vmatprep.subr.bf16.mxu0 0
      %4949 = vmatpush1.bf16.msra.mxu0 0
      %4950 = vmatprep.subr.bf16.mxu0 0
      %4951 = vmatpush1.bf16.msra.mxu0 0
      %4952 = vmatprep.subr.bf16.mxu0 0
      %4953 = vmatpush1.bf16.msra.mxu0 0
      %4954 = vmatprep.subr.bf16.mxu0 0
      %4955 = vmatpush1.bf16.msra.mxu0 0
      %4956 = vmatprep.subr.bf16.mxu0 0
      %4957 = vmatpush1.bf16.msra.mxu0 0
      %4958 = vmatprep.subr.bf16.mxu0 0
      %4959 = vmatpush1.bf16.msra.mxu0 0
      %4960 = vmatprep.subr.bf16.mxu0 0
      %4961 = vmatpush1.bf16.msra.mxu0 0
      %4962 = vmatprep.subr.bf16.mxu0 0
      %4963 = vmatpush1.bf16.msra.mxu0 0
      %4964 = vmatprep.subr.bf16.mxu0 0
      %4965 = vmatpush1.bf16.msra.mxu0 0
      %4966 = vmatprep.subr.bf16.mxu0 0
      %4967 = vmatpush1.bf16.msra.mxu0 0
      %4968 = vmatprep.subr.bf16.mxu0 0
      %4969 = vmatpush1.bf16.msra.mxu0 0
      %4970 = vmatprep.subr.bf16.mxu0 0
      %4971 = vmatpush1.bf16.msra.mxu0 0
      %4972 = vmatprep.subr.bf16.mxu0 0
      %4973 = vmatpush1.bf16.msra.mxu0 0
      %4974 = vmatprep.subr.bf16.mxu0 0
      %4975 = vmatpush1.bf16.msra.mxu0 0
      %4976 = vmatprep.subr.bf16.mxu0 0
      %4977 = vmatpush1.bf16.msra.mxu0 0
      %4978 = vmatprep.mubr.bf16.mxu0 0
      %4979 = vmatmul.mubr.bf16.gmra.mrb[0].mxu0 %v4897
      %v4980 = vpop.f32.mrb[0].mxu0
      %v4981 = vadd.f32 0.0, %v4980
      %v4982 = vpop.f32.mrb[0].mxu0
      %v4983 = vpop.f32.mrb[0].mxu0
      %v4984 = vadd.f32 0.0, %v4983
      %v4985 = vpop.f32.mrb[0].mxu0
      %4986 = vdwg.mxu0
      %v4988 = vsel %vm4070, %v4885, 0
      %4990 = vmatprep.subr.bf16.mxu0 0
      %4991 = vmatpush1.bf16.msra.mxu0 %v4988
      %4992 = vmatprep.subr.bf16.mxu0 0
      %4993 = vmatpush1.bf16.msra.mxu0 0
      %4994 = vmatprep.subr.bf16.mxu0 0
      %4995 = vmatpush1.bf16.msra.mxu0 0
      %4996 = vmatprep.subr.bf16.mxu0 0
      %4997 = vmatpush1.bf16.msra.mxu0 0
      %4998 = vmatprep.subr.bf16.mxu0 0
      %4999 = vmatpush1.bf16.msra.mxu0 0
      %5000 = vmatprep.subr.bf16.mxu0 0
      %5001 = vmatpush1.bf16.msra.mxu0 0
      %5002 = vmatprep.subr.bf16.mxu0 0
      %5003 = vmatpush1.bf16.msra.mxu0 0
      %5004 = vmatprep.subr.bf16.mxu0 0
      %5005 = vmatpush1.bf16.msra.mxu0 0
      %5006 = vmatprep.subr.bf16.mxu0 0
      %5007 = vmatpush1.bf16.msra.mxu0 0
      %5008 = vmatprep.subr.bf16.mxu0 0
      %5009 = vmatpush1.bf16.msra.mxu0 0
      %5010 = vmatprep.subr.bf16.mxu0 0
      %5011 = vmatpush1.bf16.msra.mxu0 0
      %5012 = vmatprep.subr.bf16.mxu0 0
      %5013 = vmatpush1.bf16.msra.mxu0 0
      %5014 = vmatprep.subr.bf16.mxu0 0
      %5015 = vmatpush1.bf16.msra.mxu0 0
      %5016 = vmatprep.subr.bf16.mxu0 0
      %5017 = vmatpush1.bf16.msra.mxu0 0
      %5018 = vmatprep.subr.bf16.mxu0 0
      %5019 = vmatpush1.bf16.msra.mxu0 0
      %5020 = vmatprep.subr.bf16.mxu0 0
      %5021 = vmatpush1.bf16.msra.mxu0 0
      %5022 = vmatprep.mubr.bf16.mxu0 0
      %5023 = vmatmul.mubr.bf16.gmra.mrb[0].mxu0 %v4897
      %v5024 = vpop.f32.mrb[0].mxu0
      %v5025 = vadd.f32 0.0, %v5024
      %v5026 = vpop.f32.mrb[0].mxu0
      %v5027 = vpop.f32.mrb[0].mxu0
      %v5028 = vadd.f32 0.0, %v5027
      %v5029 = vpop.f32.mrb[0].mxu0
      %5030 = vdwg.mxu0
      %v5032 = vsel %vm4070, %v4886, 0
      %5034 = vmatprep.subr.bf16.mxu0 0
      %5035 = vmatpush1.bf16.msra.mxu0 %v5032
      %5036 = vmatprep.subr.bf16.mxu0 0
      %5037 = vmatpush1.bf16.msra.mxu0 0
      %5038 = vmatprep.subr.bf16.mxu0 0
      %5039 = vmatpush1.bf16.msra.mxu0 0
      %5040 = vmatprep.subr.bf16.mxu0 0
      %5041 = vmatpush1.bf16.msra.mxu0 0
      %5042 = vmatprep.subr.bf16.mxu0 0
      %5043 = vmatpush1.bf16.msra.mxu0 0
      %5044 = vmatprep.subr.bf16.mxu0 0
      %5045 = vmatpush1.bf16.msra.mxu0 0
      %5046 = vmatprep.subr.bf16.mxu0 0
      %5047 = vmatpush1.bf16.msra.mxu0 0
      %5048 = vmatprep.subr.bf16.mxu0 0
      %5049 = vmatpush1.bf16.msra.mxu0 0
      %5050 = vmatprep.subr.bf16.mxu0 0
      %5051 = vmatpush1.bf16.msra.mxu0 0
      %5052 = vmatprep.subr.bf16.mxu0 0
      %5053 = vmatpush1.bf16.msra.mxu0 0
      %5054 = vmatprep.subr.bf16.mxu0 0
      %5055 = vmatpush1.bf16.msra.mxu0 0
      %5056 = vmatprep.subr.bf16.mxu0 0
      %5057 = vmatpush1.bf16.msra.mxu0 0
      %5058 = vmatprep.subr.bf16.mxu0 0
      %5059 = vmatpush1.bf16.msra.mxu0 0
      %5060 = vmatprep.subr.bf16.mxu0 0
      %5061 = vmatpush1.bf16.msra.mxu0 0
      %5062 = vmatprep.subr.bf16.mxu0 0
      %5063 = vmatpush1.bf16.msra.mxu0 0
      %5064 = vmatprep.subr.bf16.mxu0 0
      %5065 = vmatpush1.bf16.msra.mxu0 0
      %5066 = vmatprep.mubr.bf16.mxu0 0
      %5067 = vmatmul.mubr.bf16.gmra.mrb[0].mxu0 %v4897
      %v5068 = vpop.f32.mrb[0].mxu0
      %v5069 = vadd.f32 0.0, %v5068
      %v5070 = vpop.f32.mrb[0].mxu0
      %v5071 = vpop.f32.mrb[0].mxu0
      %v5072 = vadd.f32 0.0, %v5071
      %v5073 = vpop.f32.mrb[0].mxu0
      %5074 = vdwg.mxu0
      %v5076 = vsel %vm4070, %v4887, 0
      %5078 = vmatprep.subr.bf16.mxu0 0
      %5079 = vmatpush1.bf16.msra.mxu0 %v5076
      %5080 = vmatprep.subr.bf16.mxu0 0
      %5081 = vmatpush1.bf16.msra.mxu0 0
      %5082 = vmatprep.subr.bf16.mxu0 0
      %5083 = vmatpush1.bf16.msra.mxu0 0
      %5084 = vmatprep.subr.bf16.mxu0 0
      %5085 = vmatpush1.bf16.msra.mxu0 0
      %5086 = vmatprep.subr.bf16.mxu0 0
      %5087 = vmatpush1.bf16.msra.mxu0 0
      %5088 = vmatprep.subr.bf16.mxu0 0
      %5089 = vmatpush1.bf16.msra.mxu0 0
      %5090 = vmatprep.subr.bf16.mxu0 0
      %5091 = vmatpush1.bf16.msra.mxu0 0
      %5092 = vmatprep.subr.bf16.mxu0 0
      %5093 = vmatpush1.bf16.msra.mxu0 0
      %5094 = vmatprep.subr.bf16.mxu0 0
      %5095 = vmatpush1.bf16.msra.mxu0 0
      %5096 = vmatprep.subr.bf16.mxu0 0
      %5097 = vmatpush1.bf16.msra.mxu0 0
      %5098 = vmatprep.subr.bf16.mxu0 0
      %5099 = vmatpush1.bf16.msra.mxu0 0
      %5100 = vmatprep.subr.bf16.mxu0 0
      %5101 = vmatpush1.bf16.msra.mxu0 0
      %5102 = vmatprep.subr.bf16.mxu0 0
      %5103 = vmatpush1.bf16.msra.mxu0 0
      %5104 = vmatprep.subr.bf16.mxu0 0
      %5105 = vmatpush1.bf16.msra.mxu0 0
      %5106 = vmatprep.subr.bf16.mxu0 0
      %5107 = vmatpush1.bf16.msra.mxu0 0
      %5108 = vmatprep.subr.bf16.mxu0 0
      %5109 = vmatpush1.bf16.msra.mxu0 0
      %5110 = vmatprep.mubr.bf16.mxu0 0
      %5111 = vmatmul.mubr.bf16.gmra.mrb[0].mxu0 %v4897
      %v5112 = vpop.f32.mrb[0].mxu0
      %v5113 = vadd.f32 0.0, %v5112
      %v5114 = vpop.f32.mrb[0].mxu0
      %v5115 = vpop.f32.mrb[0].mxu0
      %v5116 = vadd.f32 0.0, %v5115
      %v5117 = vpop.f32.mrb[0].mxu0
      %5118 = vdwg.mxu0
      %v5120 = vsel %vm4070, %v4888, 0
      %5122 = vmatprep.subr.bf16.mxu0 0
      %5123 = vmatpush1.bf16.msra.mxu0 %v5120
      %5124 = vmatprep.subr.bf16.mxu0 0
      %5125 = vmatpush1.bf16.msra.mxu0 0
      %5126 = vmatprep.subr.bf16.mxu0 0
      %5127 = vmatpush1.bf16.msra.mxu0 0
      %5128 = vmatprep.subr.bf16.mxu0 0
      %5129 = vmatpush1.bf16.msra.mxu0 0
      %5130 = vmatprep.subr.bf16.mxu0 0
      %5131 = vmatpush1.bf16.msra.mxu0 0
      %5132 = vmatprep.subr.bf16.mxu0 0
      %5133 = vmatpush1.bf16.msra.mxu0 0
      %5134 = vmatprep.subr.bf16.mxu0 0
      %5135 = vmatpush1.bf16.msra.mxu0 0
      %5136 = vmatprep.subr.bf16.mxu0 0
      %5137 = vmatpush1.bf16.msra.mxu0 0
      %5138 = vmatprep.subr.bf16.mxu0 0
      %5139 = vmatpush1.bf16.msra.mxu0 0
      %5140 = vmatprep.subr.bf16.mxu0 0
      %5141 = vmatpush1.bf16.msra.mxu0 0
      %5142 = vmatprep.subr.bf16.mxu0 0
      %5143 = vmatpush1.bf16.msra.mxu0 0
      %5144 = vmatprep.subr.bf16.mxu0 0
      %5145 = vmatpush1.bf16.msra.mxu0 0
      %5146 = vmatprep.subr.bf16.mxu0 0
      %5147 = vmatpush1.bf16.msra.mxu0 0
      %5148 = vmatprep.subr.bf16.mxu0 0
      %5149 = vmatpush1.bf16.msra.mxu0 0
      %5150 = vmatprep.subr.bf16.mxu0 0
      %5151 = vmatpush1.bf16.msra.mxu0 0
      %5152 = vmatprep.subr.bf16.mxu0 0
      %5153 = vmatpush1.bf16.msra.mxu0 0
      %5154 = vmatprep.mubr.bf16.mxu0 0
      %5155 = vmatmul.mubr.bf16.gmra.mrb[0].mxu0 %v4897
      %v5156 = vpop.f32.mrb[0].mxu0
      %v5157 = vadd.f32 0.0, %v5156
      %v5158 = vpop.f32.mrb[0].mxu0
      %v5159 = vpop.f32.mrb[0].mxu0
      %v5160 = vadd.f32 0.0, %v5159
      %v5161 = vpop.f32.mrb[0].mxu0
      %5162 = vdwg.mxu0
      %v5164 = vsel %vm4070, %v4889, 0
      %5166 = vmatprep.subr.bf16.mxu0 0
      %5167 = vmatpush1.bf16.msra.mxu0 %v5164
      %5168 = vmatprep.subr.bf16.mxu0 0
      %5169 = vmatpush1.bf16.msra.mxu0 0
      %5170 = vmatprep.subr.bf16.mxu0 0
      %5171 = vmatpush1.bf16.msra.mxu0 0
      %5172 = vmatprep.subr.bf16.mxu0 0
      %5173 = vmatpush1.bf16.msra.mxu0 0
      %5174 = vmatprep.subr.bf16.mxu0 0
      %5175 = vmatpush1.bf16.msra.mxu0 0
      %5176 = vmatprep.subr.bf16.mxu0 0
      %5177 = vmatpush1.bf16.msra.mxu0 0
      %5178 = vmatprep.subr.bf16.mxu0 0
      %5179 = vmatpush1.bf16.msra.mxu0 0
      %5180 = vmatprep.subr.bf16.mxu0 0
      %5181 = vmatpush1.bf16.msra.mxu0 0
      %5182 = vmatprep.subr.bf16.mxu0 0
      %5183 = vmatpush1.bf16.msra.mxu0 0
      %5184 = vmatprep.subr.bf16.mxu0 0
      %5185 = vmatpush1.bf16.msra.mxu0 0
      %5186 = vmatprep.subr.bf16.mxu0 0
      %5187 = vmatpush1.bf16.msra.mxu0 0
      %5188 = vmatprep.subr.bf16.mxu0 0
      %5189 = vmatpush1.bf16.msra.mxu0 0
      %5190 = vmatprep.subr.bf16.mxu0 0
      %5191 = vmatpush1.bf16.msra.mxu0 0
      %5192 = vmatprep.subr.bf16.mxu0 0
      %5193 = vmatpush1.bf16.msra.mxu0 0
      %5194 = vmatprep.subr.bf16.mxu0 0
      %5195 = vmatpush1.bf16.msra.mxu0 0
      %5196 = vmatprep.subr.bf16.mxu0 0
      %5197 = vmatpush1.bf16.msra.mxu0 0
      %5198 = vmatprep.mubr.bf16.mxu0 0
      %5199 = vmatmul.mubr.bf16.gmra.mrb[0].mxu0 %v4897
      %v5200 = vpop.f32.mrb[0].mxu0
      %v5201 = vadd.f32 0.0, %v5200
      %v5202 = vpop.f32.mrb[0].mxu0
      %v5203 = vpop.f32.mrb[0].mxu0
      %v5204 = vadd.f32 0.0, %v5203
      %v5205 = vpop.f32.mrb[0].mxu0
      %5206 = vdwg.mxu0
      %v5208 = vsel %vm4070, %v4890, 0
      %5210 = vmatprep.subr.bf16.mxu0 0
      %5211 = vmatpush1.bf16.msra.mxu0 %v5208
      %5212 = vmatprep.subr.bf16.mxu0 0
      %5213 = vmatpush1.bf16.msra.mxu0 0
      %5214 = vmatprep.subr.bf16.mxu0 0
      %5215 = vmatpush1.bf16.msra.mxu0 0
      %5216 = vmatprep.subr.bf16.mxu0 0
      %5217 = vmatpush1.bf16.msra.mxu0 0
      %5218 = vmatprep.subr.bf16.mxu0 0
      %5219 = vmatpush1.bf16.msra.mxu0 0
      %5220 = vmatprep.subr.bf16.mxu0 0
      %5221 = vmatpush1.bf16.msra.mxu0 0
      %5222 = vmatprep.subr.bf16.mxu0 0
      %5223 = vmatpush1.bf16.msra.mxu0 0
      %5224 = vmatprep.subr.bf16.mxu0 0
      %5225 = vmatpush1.bf16.msra.mxu0 0
      %5226 = vmatprep.subr.bf16.mxu0 0
      %5227 = vmatpush1.bf16.msra.mxu0 0
      %5228 = vmatprep.subr.bf16.mxu0 0
      %5229 = vmatpush1.bf16.msra.mxu0 0
      %5230 = vmatprep.subr.bf16.mxu0 0
      %5231 = vmatpush1.bf16.msra.mxu0 0
      %5232 = vmatprep.subr.bf16.mxu0 0
      %5233 = vmatpush1.bf16.msra.mxu0 0
      %5234 = vmatprep.subr.bf16.mxu0 0
      %5235 = vmatpush1.bf16.msra.mxu0 0
      %5236 = vmatprep.subr.bf16.mxu0 0
      %5237 = vmatpush1.bf16.msra.mxu0 0
      %5238 = vmatprep.subr.bf16.mxu0 0
      %5239 = vmatpush1.bf16.msra.mxu0 0
      %5240 = vmatprep.subr.bf16.mxu0 0
      %5241 = vmatpush1.bf16.msra.mxu0 0
      %5242 = vmatprep.mubr.bf16.mxu0 0
      %5243 = vmatmul.mubr.bf16.gmra.mrb[0].mxu0 %v4897
      %v5244 = vpop.f32.mrb[0].mxu0
      %v5245 = vadd.f32 0.0, %v5244
      %v5246 = vpop.f32.mrb[0].mxu0
      %v5247 = vpop.f32.mrb[0].mxu0
      %v5248 = vadd.f32 0.0, %v5247
      %v5249 = vpop.f32.mrb[0].mxu0
      %5250 = vdwg.mxu0
      %v5251 = vcombine.low %v4937, %v5025
      %v5252 = vcombine.high %v4937, %v5025
      %v5254 = vunpack.c.l.s4 1983009808
      %v5255 = vunpack.c.0.s8 %v5254
      %v5256 = vlaneseq
      %v5257 = vshrl.u32 %v5256, 7
      %v5258 = vsub.s32 %v5255, %v5257
      %v5259 = vrot.slane %v5251, %v5258
      %v5261 = vunpack.c.l.s4 1983009808
      %v5262 = vunpack.c.0.s8 %v5261
      %v5263 = vlaneseq
      %v5264 = vshrl.u32 %v5263, 7
      %v5265 = vsub.s32 %v5262, %v5264
      %v5266 = vrot.slane %v5252, %v5265
      %v5267 = vcombine.low %v4981, %v5069
      %v5268 = vcombine.high %v4981, %v5069
      %v5270 = vunpack.c.l.s4 1983009808
      %v5271 = vunpack.c.0.s8 %v5270
      %v5272 = vlaneseq
      %v5273 = vshrl.u32 %v5272, 7
      %v5274 = vsub.s32 %v5271, %v5273
      %v5275 = vrot.slane %v5267, %v5274
      %v5277 = vunpack.c.l.s4 1983009808
      %v5278 = vunpack.c.0.s8 %v5277
      %v5279 = vlaneseq
      %v5280 = vshrl.u32 %v5279, 7
      %v5281 = vsub.s32 %v5278, %v5280
      %v5282 = vrot.slane %v5268, %v5281
      %v5283 = vcombine.low %v5113, %v5201
      %v5284 = vcombine.high %v5113, %v5201
      %v5286 = vunpack.c.l.s4 1983009808
      %v5287 = vunpack.c.0.s8 %v5286
      %v5288 = vlaneseq
      %v5289 = vshrl.u32 %v5288, 7
      %v5290 = vsub.s32 %v5287, %v5289
      %v5291 = vrot.slane %v5283, %v5290
      %v5293 = vunpack.c.l.s4 1983009808
      %v5294 = vunpack.c.0.s8 %v5293
      %v5295 = vlaneseq
      %v5296 = vshrl.u32 %v5295, 7
      %v5297 = vsub.s32 %v5294, %v5296
      %v5298 = vrot.slane %v5284, %v5297
      %v5299 = vcombine.low %v5157, %v5245
      %v5300 = vcombine.high %v5157, %v5245
      %v5302 = vunpack.c.l.s4 1983009808
      %v5303 = vunpack.c.0.s8 %v5302
      %v5304 = vlaneseq
      %v5305 = vshrl.u32 %v5304, 7
      %v5306 = vsub.s32 %v5303, %v5305
      %v5307 = vrot.slane %v5299, %v5306
      %v5309 = vunpack.c.l.s4 1983009808
      %v5310 = vunpack.c.0.s8 %v5309
      %v5311 = vlaneseq
      %v5312 = vshrl.u32 %v5311, 7
      %v5313 = vsub.s32 %v5310, %v5312
      %v5314 = vrot.slane %v5300, %v5313
      %v5315 = vcombine.low %v5259, %v5275
      %v5316 = vcombine.high %v5259, %v5275
      %v5318 = vunpack.c.l.s4 1934713408
      %v5319 = vunpack.c.0.s8 %v5318
      %v5320 = vlaneseq
      %v5321 = vshrl.u32 %v5320, 7
      %v5322 = vsub.s32 %v5319, %v5321
      %v5323 = vrot.slane %v5315, %v5322
      %v5325 = vunpack.c.l.s4 1934713408
      %v5326 = vunpack.c.0.s8 %v5325
      %v5327 = vlaneseq
      %v5328 = vshrl.u32 %v5327, 7
      %v5329 = vsub.s32 %v5326, %v5328
      %v5330 = vrot.slane %v5316, %v5329
      %v5331 = vcombine.low %v5266, %v5282
      %v5332 = vcombine.high %v5266, %v5282
      %v5334 = vunpack.c.l.s4 1934713408
      %v5335 = vunpack.c.0.s8 %v5334
      %v5336 = vlaneseq
      %v5337 = vshrl.u32 %v5336, 7
      %v5338 = vsub.s32 %v5335, %v5337
      %v5339 = vrot.slane %v5331, %v5338
      %v5341 = vunpack.c.l.s4 1934713408
      %v5342 = vunpack.c.0.s8 %v5341
      %v5343 = vlaneseq
      %v5344 = vshrl.u32 %v5343, 7
      %v5345 = vsub.s32 %v5342, %v5344
      %v5346 = vrot.slane %v5332, %v5345
      %v5347 = vcombine.low %v5291, %v5307
      %v5348 = vcombine.high %v5291, %v5307
      %v5350 = vunpack.c.l.s4 1934713408
      %v5351 = vunpack.c.0.s8 %v5350
      %v5352 = vlaneseq
      %v5353 = vshrl.u32 %v5352, 7
      %v5354 = vsub.s32 %v5351, %v5353
      %v5355 = vrot.slane %v5347, %v5354
      %v5357 = vunpack.c.l.s4 1934713408
      %v5358 = vunpack.c.0.s8 %v5357
      %v5359 = vlaneseq
      %v5360 = vshrl.u32 %v5359, 7
      %v5361 = vsub.s32 %v5358, %v5360
      %v5362 = vrot.slane %v5348, %v5361
      %v5363 = vcombine.low %v5298, %v5314
      %v5364 = vcombine.high %v5298, %v5314
      %v5366 = vunpack.c.l.s4 1934713408
      %v5367 = vunpack.c.0.s8 %v5366
      %v5368 = vlaneseq
      %v5369 = vshrl.u32 %v5368, 7
      %v5370 = vsub.s32 %v5367, %v5369
      %v5371 = vrot.slane %v5363, %v5370
      %v5373 = vunpack.c.l.s4 1934713408
      %v5374 = vunpack.c.0.s8 %v5373
      %v5375 = vlaneseq
      %v5376 = vshrl.u32 %v5375, 7
      %v5377 = vsub.s32 %v5374, %v5376
      %v5378 = vrot.slane %v5364, %v5377
      %v5379 = vcombine.low %v5323, %v5355
      %v5380 = vcombine.high %v5323, %v5355
      %v5381 = vcombine.low %v5330, %v5362
      %v5382 = vcombine.high %v5330, %v5362
      %v5383 = vcombine.low %v5339, %v5371
      %v5384 = vcombine.high %v5339, %v5371
      %v5385 = vcombine.low %v5346, %v5378
      %v5386 = vcombine.high %v5346, %v5378
      %v5387 = vcombine.low %v4940, %v5028
      %v5388 = vcombine.high %v4940, %v5028
      %v5390 = vunpack.c.l.s4 1983009808
      %v5391 = vunpack.c.0.s8 %v5390
      %v5392 = vlaneseq
      %v5393 = vshrl.u32 %v5392, 7
      %v5394 = vsub.s32 %v5391, %v5393
      %v5395 = vrot.slane %v5387, %v5394
      %v5397 = vunpack.c.l.s4 1983009808
      %v5398 = vunpack.c.0.s8 %v5397
      %v5399 = vlaneseq
      %v5400 = vshrl.u32 %v5399, 7
      %v5401 = vsub.s32 %v5398, %v5400
      %v5402 = vrot.slane %v5388, %v5401
      %v5403 = vcombine.low %v4984, %v5072
      %v5404 = vcombine.high %v4984, %v5072
      %v5406 = vunpack.c.l.s4 1983009808
      %v5407 = vunpack.c.0.s8 %v5406
      %v5408 = vlaneseq
      %v5409 = vshrl.u32 %v5408, 7
      %v5410 = vsub.s32 %v5407, %v5409
      %v5411 = vrot.slane %v5403, %v5410
      %v5413 = vunpack.c.l.s4 1983009808
      %v5414 = vunpack.c.0.s8 %v5413
      %v5415 = vlaneseq
      %v5416 = vshrl.u32 %v5415, 7
      %v5417 = vsub.s32 %v5414, %v5416
      %v5418 = vrot.slane %v5404, %v5417
      %v5419 = vcombine.low %v5116, %v5204
      %v5420 = vcombine.high %v5116, %v5204
      %v5422 = vunpack.c.l.s4 1983009808
      %v5423 = vunpack.c.0.s8 %v5422
      %v5424 = vlaneseq
      %v5425 = vshrl.u32 %v5424, 7
      %v5426 = vsub.s32 %v5423, %v5425
      %v5427 = vrot.slane %v5419, %v5426
      %v5429 = vunpack.c.l.s4 1983009808
      %v5430 = vunpack.c.0.s8 %v5429
      %v5431 = vlaneseq
      %v5432 = vshrl.u32 %v5431, 7
      %v5433 = vsub.s32 %v5430, %v5432
      %v5434 = vrot.slane %v5420, %v5433
      %v5435 = vcombine.low %v5160, %v5248
      %v5436 = vcombine.high %v5160, %v5248
      %v5438 = vunpack.c.l.s4 1983009808
      %v5439 = vunpack.c.0.s8 %v5438
      %v5440 = vlaneseq
      %v5441 = vshrl.u32 %v5440, 7
      %v5442 = vsub.s32 %v5439, %v5441
      %v5443 = vrot.slane %v5435, %v5442
      %v5445 = vunpack.c.l.s4 1983009808
      %v5446 = vunpack.c.0.s8 %v5445
      %v5447 = vlaneseq
      %v5448 = vshrl.u32 %v5447, 7
      %v5449 = vsub.s32 %v5446, %v5448
      %v5450 = vrot.slane %v5436, %v5449
      %v5451 = vcombine.low %v5395, %v5411
      %v5452 = vcombine.high %v5395, %v5411
      %v5454 = vunpack.c.l.s4 1934713408
      %v5455 = vunpack.c.0.s8 %v5454
      %v5456 = vlaneseq
      %v5457 = vshrl.u32 %v5456, 7
      %v5458 = vsub.s32 %v5455, %v5457
      %v5459 = vrot.slane %v5451, %v5458
      %v5461 = vunpack.c.l.s4 1934713408
      %v5462 = vunpack.c.0.s8 %v5461
      %v5463 = vlaneseq
      %v5464 = vshrl.u32 %v5463, 7
      %v5465 = vsub.s32 %v5462, %v5464
      %v5466 = vrot.slane %v5452, %v5465
      %v5467 = vcombine.low %v5402, %v5418
      %v5468 = vcombine.high %v5402, %v5418
      %v5470 = vunpack.c.l.s4 1934713408
      %v5471 = vunpack.c.0.s8 %v5470
      %v5472 = vlaneseq
      %v5473 = vshrl.u32 %v5472, 7
      %v5474 = vsub.s32 %v5471, %v5473
      %v5475 = vrot.slane %v5467, %v5474
      %v5477 = vunpack.c.l.s4 1934713408
      %v5478 = vunpack.c.0.s8 %v5477
      %v5479 = vlaneseq
      %v5480 = vshrl.u32 %v5479, 7
      %v5481 = vsub.s32 %v5478, %v5480
      %v5482 = vrot.slane %v5468, %v5481
      %v5483 = vcombine.low %v5427, %v5443
      %v5484 = vcombine.high %v5427, %v5443
      %v5486 = vunpack.c.l.s4 1934713408
      %v5487 = vunpack.c.0.s8 %v5486
      %v5488 = vlaneseq
      %v5489 = vshrl.u32 %v5488, 7
      %v5490 = vsub.s32 %v5487, %v5489
      %v5491 = vrot.slane %v5483, %v5490
      %v5493 = vunpack.c.l.s4 1934713408
      %v5494 = vunpack.c.0.s8 %v5493
      %v5495 = vlaneseq
      %v5496 = vshrl.u32 %v5495, 7
      %v5497 = vsub.s32 %v5494, %v5496
      %v5498 = vrot.slane %v5484, %v5497
      %v5499 = vcombine.low %v5434, %v5450
      %v5500 = vcombine.high %v5434, %v5450
      %v5502 = vunpack.c.l.s4 1934713408
      %v5503 = vunpack.c.0.s8 %v5502
      %v5504 = vlaneseq
      %v5505 = vshrl.u32 %v5504, 7
      %v5506 = vsub.s32 %v5503, %v5505
      %v5507 = vrot.slane %v5499, %v5506
      %v5509 = vunpack.c.l.s4 1934713408
      %v5510 = vunpack.c.0.s8 %v5509
      %v5511 = vlaneseq
      %v5512 = vshrl.u32 %v5511, 7
      %v5513 = vsub.s32 %v5510, %v5512
      %v5514 = vrot.slane %v5500, %v5513
      %v5515 = vcombine.low %v5459, %v5491
      %v5516 = vcombine.high %v5459, %v5491
      %v5517 = vcombine.low %v5466, %v5498
      %v5518 = vcombine.high %v5466, %v5498
      %v5519 = vcombine.low %v5475, %v5507
      %v5520 = vcombine.high %v5475, %v5507
      %v5521 = vcombine.low %v5482, %v5514
      %v5522 = vcombine.high %v5482, %v5514
      %v5523 = vld [vmem:[%s8] sm:$0xf]
      %v5524 = vld [vmem:[%s8 + $0x4] sm:$0xf]
      %v5525 = vpack.c.bf16 %v5379, %v5379
      %v5526 = vpack.c.bf16 %v5380, %v5380
      %v5527 = vpack.c.bf16 %v5381, %v5381
      %v5528 = vpack.c.bf16 %v5382, %v5382
      %v5529 = vpack.c.bf16 %v5383, %v5383
      %v5530 = vpack.c.bf16 %v5384, %v5384
      %v5531 = vpack.c.bf16 %v5385, %v5385
      %v5532 = vpack.c.bf16 %v5386, %v5386
      %v5533 = vpack.c.bf16 %v5515, %v5515
      %v5534 = vpack.c.bf16 %v5516, %v5516
      %v5535 = vpack.c.bf16 %v5517, %v5517
      %v5536 = vpack.c.bf16 %v5518, %v5518
      %v5537 = vpack.c.bf16 %v5519, %v5519
      %v5538 = vpack.c.bf16 %v5520, %v5520
      %v5539 = vpack.c.bf16 %v5521, %v5521
      %v5540 = vpack.c.bf16 %v5522, %v5522
      %v5543 = vunpack.c.l.b16 %v5523
      %v5544 = vunpack.c.l.b16 %v5524
      %v5545 = vpack.c.b16 %v5544, %v5543
      %v5547 = vsel %vm389, %v5545, 0
      %v5550 = vsel %vm4070, %v5525, 0
      %5552 = vmatprep.subr.bf16.mxu0 0
      %5553 = vmatpush1.bf16.msra.mxu0 %v5550
      %5554 = vmatprep.subr.bf16.mxu0 0
      %5555 = vmatpush1.bf16.msra.mxu0 0
      %5556 = vmatprep.subr.bf16.mxu0 0
      %5557 = vmatpush1.bf16.msra.mxu0 0
      %5558 = vmatprep.subr.bf16.mxu0 0
      %5559 = vmatpush1.bf16.msra.mxu0 0
      %5560 = vmatprep.subr.bf16.mxu0 0
      %5561 = vmatpush1.bf16.msra.mxu0 0
      %5562 = vmatprep.subr.bf16.mxu0 0
      %5563 = vmatpush1.bf16.msra.mxu0 0
      %5564 = vmatprep.subr.bf16.mxu0 0
      %5565 = vmatpush1.bf16.msra.mxu0 0
      %5566 = vmatprep.subr.bf16.mxu0 0
      %5567 = vmatpush1.bf16.msra.mxu0 0
      %5568 = vmatprep.subr.bf16.mxu0 0
      %5569 = vmatpush1.bf16.msra.mxu0 0
      %5570 = vmatprep.subr.bf16.mxu0 0
      %5571 = vmatpush1.bf16.msra.mxu0 0
      %5572 = vmatprep.subr.bf16.mxu0 0
      %5573 = vmatpush1.bf16.msra.mxu0 0
      %5574 = vmatprep.subr.bf16.mxu0 0
      %5575 = vmatpush1.bf16.msra.mxu0 0
      %5576 = vmatprep.subr.bf16.mxu0 0
      %5577 = vmatpush1.bf16.msra.mxu0 0
      %5578 = vmatprep.subr.bf16.mxu0 0
      %5579 = vmatpush1.bf16.msra.mxu0 0
      %5580 = vmatprep.subr.bf16.mxu0 0
      %5581 = vmatpush1.bf16.msra.mxu0 0
      %5582 = vmatprep.subr.bf16.mxu0 0
      %5583 = vmatpush1.bf16.msra.mxu0 0
      %5584 = vmatprep.mubr.bf16.mxu0 0
      %5585 = vmatmul.mubr.bf16.gmra.mrb[0].mxu0 %v5547
      %v5586 = vpop.f32.mrb[0].mxu0
      %v5587 = vadd.f32 0.0, %v5586
      %v5588 = vpop.f32.mrb[0].mxu0
      %v5589 = vpop.f32.mrb[0].mxu0
      %v5590 = vadd.f32 0.0, %v5589
      %v5591 = vpop.f32.mrb[0].mxu0
      %5592 = vdwg.mxu0
      %v5594 = vsel %vm4070, %v5526, 0
      %5596 = vmatprep.subr.bf16.mxu0 0
      %5597 = vmatpush1.bf16.msra.mxu0 %v5594
      %5598 = vmatprep.subr.bf16.mxu0 0
      %5599 = vmatpush1.bf16.msra.mxu0 0
      %5600 = vmatprep.subr.bf16.mxu0 0
      %5601 = vmatpush1.bf16.msra.mxu0 0
      %5602 = vmatprep.subr.bf16.mxu0 0
      %5603 = vmatpush1.bf16.msra.mxu0 0
      %5604 = vmatprep.subr.bf16.mxu0 0
      %5605 = vmatpush1.bf16.msra.mxu0 0
      %5606 = vmatprep.subr.bf16.mxu0 0
      %5607 = vmatpush1.bf16.msra.mxu0 0
      %5608 = vmatprep.subr.bf16.mxu0 0
      %5609 = vmatpush1.bf16.msra.mxu0 0
      %5610 = vmatprep.subr.bf16.mxu0 0
      %5611 = vmatpush1.bf16.msra.mxu0 0
      %5612 = vmatprep.subr.bf16.mxu0 0
      %5613 = vmatpush1.bf16.msra.mxu0 0
      %5614 = vmatprep.subr.bf16.mxu0 0
      %5615 = vmatpush1.bf16.msra.mxu0 0
      %5616 = vmatprep.subr.bf16.mxu0 0
      %5617 = vmatpush1.bf16.msra.mxu0 0
      %5618 = vmatprep.subr.bf16.mxu0 0
      %5619 = vmatpush1.bf16.msra.mxu0 0
      %5620 = vmatprep.subr.bf16.mxu0 0
      %5621 = vmatpush1.bf16.msra.mxu0 0
      %5622 = vmatprep.subr.bf16.mxu0 0
      %5623 = vmatpush1.bf16.msra.mxu0 0
      %5624 = vmatprep.subr.bf16.mxu0 0
      %5625 = vmatpush1.bf16.msra.mxu0 0
      %5626 = vmatprep.subr.bf16.mxu0 0
      %5627 = vmatpush1.bf16.msra.mxu0 0
      %5628 = vmatprep.mubr.bf16.mxu0 0
      %5629 = vmatmul.mubr.bf16.gmra.mrb[0].mxu0 %v5547
      %v5630 = vpop.f32.mrb[0].mxu0
      %v5631 = vadd.f32 0.0, %v5630
      %v5632 = vpop.f32.mrb[0].mxu0
      %v5633 = vpop.f32.mrb[0].mxu0
      %v5634 = vadd.f32 0.0, %v5633
      %v5635 = vpop.f32.mrb[0].mxu0
      %5636 = vdwg.mxu0
      %v5638 = vsel %vm4070, %v5527, 0
      %5640 = vmatprep.subr.bf16.mxu0 0
      %5641 = vmatpush1.bf16.msra.mxu0 %v5638
      %5642 = vmatprep.subr.bf16.mxu0 0
      %5643 = vmatpush1.bf16.msra.mxu0 0
      %5644 = vmatprep.subr.bf16.mxu0 0
      %5645 = vmatpush1.bf16.msra.mxu0 0
      %5646 = vmatprep.subr.bf16.mxu0 0
      %5647 = vmatpush1.bf16.msra.mxu0 0
      %5648 = vmatprep.subr.bf16.mxu0 0
      %5649 = vmatpush1.bf16.msra.mxu0 0
      %5650 = vmatprep.subr.bf16.mxu0 0
      %5651 = vmatpush1.bf16.msra.mxu0 0
      %5652 = vmatprep.subr.bf16.mxu0 0
      %5653 = vmatpush1.bf16.msra.mxu0 0
      %5654 = vmatprep.subr.bf16.mxu0 0
      %5655 = vmatpush1.bf16.msra.mxu0 0
      %5656 = vmatprep.subr.bf16.mxu0 0
      %5657 = vmatpush1.bf16.msra.mxu0 0
      %5658 = vmatprep.subr.bf16.mxu0 0
      %5659 = vmatpush1.bf16.msra.mxu0 0
      %5660 = vmatprep.subr.bf16.mxu0 0
      %5661 = vmatpush1.bf16.msra.mxu0 0
      %5662 = vmatprep.subr.bf16.mxu0 0
      %5663 = vmatpush1.bf16.msra.mxu0 0
      %5664 = vmatprep.subr.bf16.mxu0 0
      %5665 = vmatpush1.bf16.msra.mxu0 0
      %5666 = vmatprep.subr.bf16.mxu0 0
      %5667 = vmatpush1.bf16.msra.mxu0 0
      %5668 = vmatprep.subr.bf16.mxu0 0
      %5669 = vmatpush1.bf16.msra.mxu0 0
      %5670 = vmatprep.subr.bf16.mxu0 0
      %5671 = vmatpush1.bf16.msra.mxu0 0
      %5672 = vmatprep.mubr.bf16.mxu0 0
      %5673 = vmatmul.mubr.bf16.gmra.mrb[0].mxu0 %v5547
      %v5674 = vpop.f32.mrb[0].mxu0
      %v5675 = vadd.f32 0.0, %v5674
      %v5676 = vpop.f32.mrb[0].mxu0
      %v5677 = vpop.f32.mrb[0].mxu0
      %v5678 = vadd.f32 0.0, %v5677
      %v5679 = vpop.f32.mrb[0].mxu0
      %5680 = vdwg.mxu0
      %v5682 = vsel %vm4070, %v5528, 0
      %5684 = vmatprep.subr.bf16.mxu0 0
      %5685 = vmatpush1.bf16.msra.mxu0 %v5682
      %5686 = vmatprep.subr.bf16.mxu0 0
      %5687 = vmatpush1.bf16.msra.mxu0 0
      %5688 = vmatprep.subr.bf16.mxu0 0
      %5689 = vmatpush1.bf16.msra.mxu0 0
      %5690 = vmatprep.subr.bf16.mxu0 0
      %5691 = vmatpush1.bf16.msra.mxu0 0
      %5692 = vmatprep.subr.bf16.mxu0 0
      %5693 = vmatpush1.bf16.msra.mxu0 0
      %5694 = vmatprep.subr.bf16.mxu0 0
      %5695 = vmatpush1.bf16.msra.mxu0 0
      %5696 = vmatprep.subr.bf16.mxu0 0
      %5697 = vmatpush1.bf16.msra.mxu0 0
      %5698 = vmatprep.subr.bf16.mxu0 0
      %5699 = vmatpush1.bf16.msra.mxu0 0
      %5700 = vmatprep.subr.bf16.mxu0 0
      %5701 = vmatpush1.bf16.msra.mxu0 0
      %5702 = vmatprep.subr.bf16.mxu0 0
      %5703 = vmatpush1.bf16.msra.mxu0 0
      %5704 = vmatprep.subr.bf16.mxu0 0
      %5705 = vmatpush1.bf16.msra.mxu0 0
      %5706 = vmatprep.subr.bf16.mxu0 0
      %5707 = vmatpush1.bf16.msra.mxu0 0
      %5708 = vmatprep.subr.bf16.mxu0 0
      %5709 = vmatpush1.bf16.msra.mxu0 0
      %5710 = vmatprep.subr.bf16.mxu0 0
      %5711 = vmatpush1.bf16.msra.mxu0 0
      %5712 = vmatprep.subr.bf16.mxu0 0
      %5713 = vmatpush1.bf16.msra.mxu0 0
      %5714 = vmatprep.subr.bf16.mxu0 0
      %5715 = vmatpush1.bf16.msra.mxu0 0
      %5716 = vmatprep.mubr.bf16.mxu0 0
      %5717 = vmatmul.mubr.bf16.gmra.mrb[0].mxu0 %v5547
      %v5718 = vpop.f32.mrb[0].mxu0
      %v5719 = vadd.f32 0.0, %v5718
      %v5720 = vpop.f32.mrb[0].mxu0
      %v5721 = vpop.f32.mrb[0].mxu0
      %v5722 = vadd.f32 0.0, %v5721
      %v5723 = vpop.f32.mrb[0].mxu0
      %5724 = vdwg.mxu0
      %v5726 = vsel %vm4070, %v5529, 0
      %5728 = vmatprep.subr.bf16.mxu0 0
      %5729 = vmatpush1.bf16.msra.mxu0 %v5726
      %5730 = vmatprep.subr.bf16.mxu0 0
      %5731 = vmatpush1.bf16.msra.mxu0 0
      %5732 = vmatprep.subr.bf16.mxu0 0
      %5733 = vmatpush1.bf16.msra.mxu0 0
      %5734 = vmatprep.subr.bf16.mxu0 0
      %5735 = vmatpush1.bf16.msra.mxu0 0
      %5736 = vmatprep.subr.bf16.mxu0 0
      %5737 = vmatpush1.bf16.msra.mxu0 0
      %5738 = vmatprep.subr.bf16.mxu0 0
      %5739 = vmatpush1.bf16.msra.mxu0 0
      %5740 = vmatprep.subr.bf16.mxu0 0
      %5741 = vmatpush1.bf16.msra.mxu0 0
      %5742 = vmatprep.subr.bf16.mxu0 0
      %5743 = vmatpush1.bf16.msra.mxu0 0
      %5744 = vmatprep.subr.bf16.mxu0 0
      %5745 = vmatpush1.bf16.msra.mxu0 0
      %5746 = vmatprep.subr.bf16.mxu0 0
      %5747 = vmatpush1.bf16.msra.mxu0 0
      %5748 = vmatprep.subr.bf16.mxu0 0
      %5749 = vmatpush1.bf16.msra.mxu0 0
      %5750 = vmatprep.subr.bf16.mxu0 0
      %5751 = vmatpush1.bf16.msra.mxu0 0
      %5752 = vmatprep.subr.bf16.mxu0 0
      %5753 = vmatpush1.bf16.msra.mxu0 0
      %5754 = vmatprep.subr.bf16.mxu0 0
      %5755 = vmatpush1.bf16.msra.mxu0 0
      %5756 = vmatprep.subr.bf16.mxu0 0
      %5757 = vmatpush1.bf16.msra.mxu0 0
      %5758 = vmatprep.subr.bf16.mxu0 0
      %5759 = vmatpush1.bf16.msra.mxu0 0
      %5760 = vmatprep.mubr.bf16.mxu0 0
      %5761 = vmatmul.mubr.bf16.gmra.mrb[0].mxu0 %v5547
      %v5762 = vpop.f32.mrb[0].mxu0
      %v5763 = vadd.f32 0.0, %v5762
      %v5764 = vpop.f32.mrb[0].mxu0
      %v5765 = vpop.f32.mrb[0].mxu0
      %v5766 = vadd.f32 0.0, %v5765
      %v5767 = vpop.f32.mrb[0].mxu0
      %5768 = vdwg.mxu0
      %v5770 = vsel %vm4070, %v5530, 0
      %5772 = vmatprep.subr.bf16.mxu0 0
      %5773 = vmatpush1.bf16.msra.mxu0 %v5770
      %5774 = vmatprep.subr.bf16.mxu0 0
      %5775 = vmatpush1.bf16.msra.mxu0 0
      %5776 = vmatprep.subr.bf16.mxu0 0
      %5777 = vmatpush1.bf16.msra.mxu0 0
      %5778 = vmatprep.subr.bf16.mxu0 0
      %5779 = vmatpush1.bf16.msra.mxu0 0
      %5780 = vmatprep.subr.bf16.mxu0 0
      %5781 = vmatpush1.bf16.msra.mxu0 0
      %5782 = vmatprep.subr.bf16.mxu0 0
      %5783 = vmatpush1.bf16.msra.mxu0 0
      %5784 = vmatprep.subr.bf16.mxu0 0
      %5785 = vmatpush1.bf16.msra.mxu0 0
      %5786 = vmatprep.subr.bf16.mxu0 0
      %5787 = vmatpush1.bf16.msra.mxu0 0
      %5788 = vmatprep.subr.bf16.mxu0 0
      %5789 = vmatpush1.bf16.msra.mxu0 0
      %5790 = vmatprep.subr.bf16.mxu0 0
      %5791 = vmatpush1.bf16.msra.mxu0 0
      %5792 = vmatprep.subr.bf16.mxu0 0
      %5793 = vmatpush1.bf16.msra.mxu0 0
      %5794 = vmatprep.subr.bf16.mxu0 0
      %5795 = vmatpush1.bf16.msra.mxu0 0
      %5796 = vmatprep.subr.bf16.mxu0 0
      %5797 = vmatpush1.bf16.msra.mxu0 0
      %5798 = vmatprep.subr.bf16.mxu0 0
      %5799 = vmatpush1.bf16.msra.mxu0 0
      %5800 = vmatprep.subr.bf16.mxu0 0
      %5801 = vmatpush1.bf16.msra.mxu0 0
      %5802 = vmatprep.subr.bf16.mxu0 0
      %5803 = vmatpush1.bf16.msra.mxu0 0
      %5804 = vmatprep.mubr.bf16.mxu0 0
      %5805 = vmatmul.mubr.bf16.gmra.mrb[0].mxu0 %v5547
      %v5806 = vpop.f32.mrb[0].mxu0
      %v5807 = vadd.f32 0.0, %v5806
      %v5808 = vpop.f32.mrb[0].mxu0
      %v5809 = vpop.f32.mrb[0].mxu0
      %v5810 = vadd.f32 0.0, %v5809
      %v5811 = vpop.f32.mrb[0].mxu0
      %5812 = vdwg.mxu0
      %v5814 = vsel %vm4070, %v5531, 0
      %5816 = vmatprep.subr.bf16.mxu0 0
      %5817 = vmatpush1.bf16.msra.mxu0 %v5814
      %5818 = vmatprep.subr.bf16.mxu0 0
      %5819 = vmatpush1.bf16.msra.mxu0 0
      %5820 = vmatprep.subr.bf16.mxu0 0
      %5821 = vmatpush1.bf16.msra.mxu0 0
      %5822 = vmatprep.subr.bf16.mxu0 0
      %5823 = vmatpush1.bf16.msra.mxu0 0
      %5824 = vmatprep.subr.bf16.mxu0 0
      %5825 = vmatpush1.bf16.msra.mxu0 0
      %5826 = vmatprep.subr.bf16.mxu0 0
      %5827 = vmatpush1.bf16.msra.mxu0 0
      %5828 = vmatprep.subr.bf16.mxu0 0
      %5829 = vmatpush1.bf16.msra.mxu0 0
      %5830 = vmatprep.subr.bf16.mxu0 0
      %5831 = vmatpush1.bf16.msra.mxu0 0
      %5832 = vmatprep.subr.bf16.mxu0 0
      %5833 = vmatpush1.bf16.msra.mxu0 0
      %5834 = vmatprep.subr.bf16.mxu0 0
      %5835 = vmatpush1.bf16.msra.mxu0 0
      %5836 = vmatprep.subr.bf16.mxu0 0
      %5837 = vmatpush1.bf16.msra.mxu0 0
      %5838 = vmatprep.subr.bf16.mxu0 0
      %5839 = vmatpush1.bf16.msra.mxu0 0
      %5840 = vmatprep.subr.bf16.mxu0 0
      %5841 = vmatpush1.bf16.msra.mxu0 0
      %5842 = vmatprep.subr.bf16.mxu0 0
      %5843 = vmatpush1.bf16.msra.mxu0 0
      %5844 = vmatprep.subr.bf16.mxu0 0
      %5845 = vmatpush1.bf16.msra.mxu0 0
      %5846 = vmatprep.subr.bf16.mxu0 0
      %5847 = vmatpush1.bf16.msra.mxu0 0
      %5848 = vmatprep.mubr.bf16.mxu0 0
      %5849 = vmatmul.mubr.bf16.gmra.mrb[0].mxu0 %v5547
      %v5850 = vpop.f32.mrb[0].mxu0
      %v5851 = vadd.f32 0.0, %v5850
      %v5852 = vpop.f32.mrb[0].mxu0
      %v5853 = vpop.f32.mrb[0].mxu0
      %v5854 = vadd.f32 0.0, %v5853
      %v5855 = vpop.f32.mrb[0].mxu0
      %5856 = vdwg.mxu0
      %v5858 = vsel %vm4070, %v5532, 0
      %5860 = vmatprep.subr.bf16.mxu0 0
      %5861 = vmatpush1.bf16.msra.mxu0 %v5858
      %5862 = vmatprep.subr.bf16.mxu0 0
      %5863 = vmatpush1.bf16.msra.mxu0 0
      %5864 = vmatprep.subr.bf16.mxu0 0
      %5865 = vmatpush1.bf16.msra.mxu0 0
      %5866 = vmatprep.subr.bf16.mxu0 0
      %5867 = vmatpush1.bf16.msra.mxu0 0
      %5868 = vmatprep.subr.bf16.mxu0 0
      %5869 = vmatpush1.bf16.msra.mxu0 0
      %5870 = vmatprep.subr.bf16.mxu0 0
      %5871 = vmatpush1.bf16.msra.mxu0 0
      %5872 = vmatprep.subr.bf16.mxu0 0
      %5873 = vmatpush1.bf16.msra.mxu0 0
      %5874 = vmatprep.subr.bf16.mxu0 0
      %5875 = vmatpush1.bf16.msra.mxu0 0
      %5876 = vmatprep.subr.bf16.mxu0 0
      %5877 = vmatpush1.bf16.msra.mxu0 0
      %5878 = vmatprep.subr.bf16.mxu0 0
      %5879 = vmatpush1.bf16.msra.mxu0 0
      %5880 = vmatprep.subr.bf16.mxu0 0
      %5881 = vmatpush1.bf16.msra.mxu0 0
      %5882 = vmatprep.subr.bf16.mxu0 0
      %5883 = vmatpush1.bf16.msra.mxu0 0
      %5884 = vmatprep.subr.bf16.mxu0 0
      %5885 = vmatpush1.bf16.msra.mxu0 0
      %5886 = vmatprep.subr.bf16.mxu0 0
      %5887 = vmatpush1.bf16.msra.mxu0 0
      %5888 = vmatprep.subr.bf16.mxu0 0
      %5889 = vmatpush1.bf16.msra.mxu0 0
      %5890 = vmatprep.subr.bf16.mxu0 0
      %5891 = vmatpush1.bf16.msra.mxu0 0
      %5892 = vmatprep.mubr.bf16.mxu0 0
      %5893 = vmatmul.mubr.bf16.gmra.mrb[0].mxu0 %v5547
      %v5894 = vpop.f32.mrb[0].mxu0
      %v5895 = vadd.f32 0.0, %v5894
      %v5896 = vpop.f32.mrb[0].mxu0
      %v5897 = vpop.f32.mrb[0].mxu0
      %v5898 = vadd.f32 0.0, %v5897
      %v5899 = vpop.f32.mrb[0].mxu0
      %5900 = vdwg.mxu0
      %v5902 = vsel %vm4070, %v5533, 0
      %5904 = vmatprep.subr.bf16.mxu0 0
      %5905 = vmatpush1.bf16.msra.mxu0 %v5902
      %5906 = vmatprep.subr.bf16.mxu0 0
      %5907 = vmatpush1.bf16.msra.mxu0 0
      %5908 = vmatprep.subr.bf16.mxu0 0
      %5909 = vmatpush1.bf16.msra.mxu0 0
      %5910 = vmatprep.subr.bf16.mxu0 0
      %5911 = vmatpush1.bf16.msra.mxu0 0
      %5912 = vmatprep.subr.bf16.mxu0 0
      %5913 = vmatpush1.bf16.msra.mxu0 0
      %5914 = vmatprep.subr.bf16.mxu0 0
      %5915 = vmatpush1.bf16.msra.mxu0 0
      %5916 = vmatprep.subr.bf16.mxu0 0
      %5917 = vmatpush1.bf16.msra.mxu0 0
      %5918 = vmatprep.subr.bf16.mxu0 0
      %5919 = vmatpush1.bf16.msra.mxu0 0
      %5920 = vmatprep.subr.bf16.mxu0 0
      %5921 = vmatpush1.bf16.msra.mxu0 0
      %5922 = vmatprep.subr.bf16.mxu0 0
      %5923 = vmatpush1.bf16.msra.mxu0 0
      %5924 = vmatprep.subr.bf16.mxu0 0
      %5925 = vmatpush1.bf16.msra.mxu0 0
      %5926 = vmatprep.subr.bf16.mxu0 0
      %5927 = vmatpush1.bf16.msra.mxu0 0
      %5928 = vmatprep.subr.bf16.mxu0 0
      %5929 = vmatpush1.bf16.msra.mxu0 0
      %5930 = vmatprep.subr.bf16.mxu0 0
      %5931 = vmatpush1.bf16.msra.mxu0 0
      %5932 = vmatprep.subr.bf16.mxu0 0
      %5933 = vmatpush1.bf16.msra.mxu0 0
      %5934 = vmatprep.subr.bf16.mxu0 0
      %5935 = vmatpush1.bf16.msra.mxu0 0
      %5936 = vmatprep.mubr.bf16.mxu0 0
      %5937 = vmatmul.mubr.bf16.gmra.mrb[0].mxu0 %v5547
      %v5938 = vpop.f32.mrb[0].mxu0
      %v5939 = vadd.f32 0.0, %v5938
      %v5940 = vpop.f32.mrb[0].mxu0
      %v5941 = vpop.f32.mrb[0].mxu0
      %v5942 = vadd.f32 0.0, %v5941
      %v5943 = vpop.f32.mrb[0].mxu0
      %5944 = vdwg.mxu0
      %v5946 = vsel %vm4070, %v5534, 0
      %5948 = vmatprep.subr.bf16.mxu0 0
      %5949 = vmatpush1.bf16.msra.mxu0 %v5946
      %5950 = vmatprep.subr.bf16.mxu0 0
      %5951 = vmatpush1.bf16.msra.mxu0 0
      %5952 = vmatprep.subr.bf16.mxu0 0
      %5953 = vmatpush1.bf16.msra.mxu0 0
      %5954 = vmatprep.subr.bf16.mxu0 0
      %5955 = vmatpush1.bf16.msra.mxu0 0
      %5956 = vmatprep.subr.bf16.mxu0 0
      %5957 = vmatpush1.bf16.msra.mxu0 0
      %5958 = vmatprep.subr.bf16.mxu0 0
      %5959 = vmatpush1.bf16.msra.mxu0 0
      %5960 = vmatprep.subr.bf16.mxu0 0
      %5961 = vmatpush1.bf16.msra.mxu0 0
      %5962 = vmatprep.subr.bf16.mxu0 0
      %5963 = vmatpush1.bf16.msra.mxu0 0
      %5964 = vmatprep.subr.bf16.mxu0 0
      %5965 = vmatpush1.bf16.msra.mxu0 0
      %5966 = vmatprep.subr.bf16.mxu0 0
      %5967 = vmatpush1.bf16.msra.mxu0 0
      %5968 = vmatprep.subr.bf16.mxu0 0
      %5969 = vmatpush1.bf16.msra.mxu0 0
      %5970 = vmatprep.subr.bf16.mxu0 0
      %5971 = vmatpush1.bf16.msra.mxu0 0
      %5972 = vmatprep.subr.bf16.mxu0 0
      %5973 = vmatpush1.bf16.msra.mxu0 0
      %5974 = vmatprep.subr.bf16.mxu0 0
      %5975 = vmatpush1.bf16.msra.mxu0 0
      %5976 = vmatprep.subr.bf16.mxu0 0
      %5977 = vmatpush1.bf16.msra.mxu0 0
      %5978 = vmatprep.subr.bf16.mxu0 0
      %5979 = vmatpush1.bf16.msra.mxu0 0
      %5980 = vmatprep.mubr.bf16.mxu0 0
      %5981 = vmatmul.mubr.bf16.gmra.mrb[0].mxu0 %v5547
      %v5982 = vpop.f32.mrb[0].mxu0
      %v5983 = vadd.f32 0.0, %v5982
      %v5984 = vpop.f32.mrb[0].mxu0
      %v5985 = vpop.f32.mrb[0].mxu0
      %v5986 = vadd.f32 0.0, %v5985
      %v5987 = vpop.f32.mrb[0].mxu0
      %5988 = vdwg.mxu0
      %v5990 = vsel %vm4070, %v5535, 0
      %5992 = vmatprep.subr.bf16.mxu0 0
      %5993 = vmatpush1.bf16.msra.mxu0 %v5990
      %5994 = vmatprep.subr.bf16.mxu0 0
      %5995 = vmatpush1.bf16.msra.mxu0 0
      %5996 = vmatprep.subr.bf16.mxu0 0
      %5997 = vmatpush1.bf16.msra.mxu0 0
      %5998 = vmatprep.subr.bf16.mxu0 0
      %5999 = vmatpush1.bf16.msra.mxu0 0
      %6000 = vmatprep.subr.bf16.mxu0 0
      %6001 = vmatpush1.bf16.msra.mxu0 0
      %6002 = vmatprep.subr.bf16.mxu0 0
      %6003 = vmatpush1.bf16.msra.mxu0 0
      %6004 = vmatprep.subr.bf16.mxu0 0
      %6005 = vmatpush1.bf16.msra.mxu0 0
      %6006 = vmatprep.subr.bf16.mxu0 0
      %6007 = vmatpush1.bf16.msra.mxu0 0
      %6008 = vmatprep.subr.bf16.mxu0 0
      %6009 = vmatpush1.bf16.msra.mxu0 0
      %6010 = vmatprep.subr.bf16.mxu0 0
      %6011 = vmatpush1.bf16.msra.mxu0 0
      %6012 = vmatprep.subr.bf16.mxu0 0
      %6013 = vmatpush1.bf16.msra.mxu0 0
      %6014 = vmatprep.subr.bf16.mxu0 0
      %6015 = vmatpush1.bf16.msra.mxu0 0
      %6016 = vmatprep.subr.bf16.mxu0 0
      %6017 = vmatpush1.bf16.msra.mxu0 0
      %6018 = vmatprep.subr.bf16.mxu0 0
      %6019 = vmatpush1.bf16.msra.mxu0 0
      %6020 = vmatprep.subr.bf16.mxu0 0
      %6021 = vmatpush1.bf16.msra.mxu0 0
      %6022 = vmatprep.subr.bf16.mxu0 0
      %6023 = vmatpush1.bf16.msra.mxu0 0
      %6024 = vmatprep.mubr.bf16.mxu0 0
      %6025 = vmatmul.mubr.bf16.gmra.mrb[0].mxu0 %v5547
      %v6026 = vpop.f32.mrb[0].mxu0
      %v6027 = vadd.f32 0.0, %v6026
      %v6028 = vpop.f32.mrb[0].mxu0
      %v6029 = vpop.f32.mrb[0].mxu0
      %v6030 = vadd.f32 0.0, %v6029
      %v6031 = vpop.f32.mrb[0].mxu0
      %6032 = vdwg.mxu0
      %v6034 = vsel %vm4070, %v5536, 0
      %6036 = vmatprep.subr.bf16.mxu0 0
      %6037 = vmatpush1.bf16.msra.mxu0 %v6034
      %6038 = vmatprep.subr.bf16.mxu0 0
      %6039 = vmatpush1.bf16.msra.mxu0 0
      %6040 = vmatprep.subr.bf16.mxu0 0
      %6041 = vmatpush1.bf16.msra.mxu0 0
      %6042 = vmatprep.subr.bf16.mxu0 0
      %6043 = vmatpush1.bf16.msra.mxu0 0
      %6044 = vmatprep.subr.bf16.mxu0 0
      %6045 = vmatpush1.bf16.msra.mxu0 0
      %6046 = vmatprep.subr.bf16.mxu0 0
      %6047 = vmatpush1.bf16.msra.mxu0 0
      %6048 = vmatprep.subr.bf16.mxu0 0
      %6049 = vmatpush1.bf16.msra.mxu0 0
      %6050 = vmatprep.subr.bf16.mxu0 0
      %6051 = vmatpush1.bf16.msra.mxu0 0
      %6052 = vmatprep.subr.bf16.mxu0 0
      %6053 = vmatpush1.bf16.msra.mxu0 0
      %6054 = vmatprep.subr.bf16.mxu0 0
      %6055 = vmatpush1.bf16.msra.mxu0 0
      %6056 = vmatprep.subr.bf16.mxu0 0
      %6057 = vmatpush1.bf16.msra.mxu0 0
      %6058 = vmatprep.subr.bf16.mxu0 0
      %6059 = vmatpush1.bf16.msra.mxu0 0
      %6060 = vmatprep.subr.bf16.mxu0 0
      %6061 = vmatpush1.bf16.msra.mxu0 0
      %6062 = vmatprep.subr.bf16.mxu0 0
      %6063 = vmatpush1.bf16.msra.mxu0 0
      %6064 = vmatprep.subr.bf16.mxu0 0
      %6065 = vmatpush1.bf16.msra.mxu0 0
      %6066 = vmatprep.subr.bf16.mxu0 0
      %6067 = vmatpush1.bf16.msra.mxu0 0
      %6068 = vmatprep.mubr.bf16.mxu0 0
      %6069 = vmatmul.mubr.bf16.gmra.mrb[0].mxu0 %v5547
      %v6070 = vpop.f32.mrb[0].mxu0
      %v6071 = vadd.f32 0.0, %v6070
      %v6072 = vpop.f32.mrb[0].mxu0
      %v6073 = vpop.f32.mrb[0].mxu0
      %v6074 = vadd.f32 0.0, %v6073
      %v6075 = vpop.f32.mrb[0].mxu0
      %6076 = vdwg.mxu0
      %v6078 = vsel %vm4070, %v5537, 0
      %6080 = vmatprep.subr.bf16.mxu0 0
      %6081 = vmatpush1.bf16.msra.mxu0 %v6078
      %6082 = vmatprep.subr.bf16.mxu0 0
      %6083 = vmatpush1.bf16.msra.mxu0 0
      %6084 = vmatprep.subr.bf16.mxu0 0
      %6085 = vmatpush1.bf16.msra.mxu0 0
      %6086 = vmatprep.subr.bf16.mxu0 0
      %6087 = vmatpush1.bf16.msra.mxu0 0
      %6088 = vmatprep.subr.bf16.mxu0 0
      %6089 = vmatpush1.bf16.msra.mxu0 0
      %6090 = vmatprep.subr.bf16.mxu0 0
      %6091 = vmatpush1.bf16.msra.mxu0 0
      %6092 = vmatprep.subr.bf16.mxu0 0
      %6093 = vmatpush1.bf16.msra.mxu0 0
      %6094 = vmatprep.subr.bf16.mxu0 0
      %6095 = vmatpush1.bf16.msra.mxu0 0
      %6096 = vmatprep.subr.bf16.mxu0 0
      %6097 = vmatpush1.bf16.msra.mxu0 0
      %6098 = vmatprep.subr.bf16.mxu0 0
      %6099 = vmatpush1.bf16.msra.mxu0 0
      %6100 = vmatprep.subr.bf16.mxu0 0
      %6101 = vmatpush1.bf16.msra.mxu0 0
      %6102 = vmatprep.subr.bf16.mxu0 0
      %6103 = vmatpush1.bf16.msra.mxu0 0
      %6104 = vmatprep.subr.bf16.mxu0 0
      %6105 = vmatpush1.bf16.msra.mxu0 0
      %6106 = vmatprep.subr.bf16.mxu0 0
      %6107 = vmatpush1.bf16.msra.mxu0 0
      %6108 = vmatprep.subr.bf16.mxu0 0
      %6109 = vmatpush1.bf16.msra.mxu0 0
      %6110 = vmatprep.subr.bf16.mxu0 0
      %6111 = vmatpush1.bf16.msra.mxu0 0
      %6112 = vmatprep.mubr.bf16.mxu0 0
      %6113 = vmatmul.mubr.bf16.gmra.mrb[0].mxu0 %v5547
      %v6114 = vpop.f32.mrb[0].mxu0
      %v6115 = vadd.f32 0.0, %v6114
      %v6116 = vpop.f32.mrb[0].mxu0
      %v6117 = vpop.f32.mrb[0].mxu0
      %v6118 = vadd.f32 0.0, %v6117
      %v6119 = vpop.f32.mrb[0].mxu0
      %6120 = vdwg.mxu0
      %v6122 = vsel %vm4070, %v5538, 0
      %6124 = vmatprep.subr.bf16.mxu0 0
      %6125 = vmatpush1.bf16.msra.mxu0 %v6122
      %6126 = vmatprep.subr.bf16.mxu0 0
      %6127 = vmatpush1.bf16.msra.mxu0 0
      %6128 = vmatprep.subr.bf16.mxu0 0
      %6129 = vmatpush1.bf16.msra.mxu0 0
      %6130 = vmatprep.subr.bf16.mxu0 0
      %6131 = vmatpush1.bf16.msra.mxu0 0
      %6132 = vmatprep.subr.bf16.mxu0 0
      %6133 = vmatpush1.bf16.msra.mxu0 0
      %6134 = vmatprep.subr.bf16.mxu0 0
      %6135 = vmatpush1.bf16.msra.mxu0 0
      %6136 = vmatprep.subr.bf16.mxu0 0
      %6137 = vmatpush1.bf16.msra.mxu0 0
      %6138 = vmatprep.subr.bf16.mxu0 0
      %6139 = vmatpush1.bf16.msra.mxu0 0
      %6140 = vmatprep.subr.bf16.mxu0 0
      %6141 = vmatpush1.bf16.msra.mxu0 0
      %6142 = vmatprep.subr.bf16.mxu0 0
      %6143 = vmatpush1.bf16.msra.mxu0 0
      %6144 = vmatprep.subr.bf16.mxu0 0
      %6145 = vmatpush1.bf16.msra.mxu0 0
      %6146 = vmatprep.subr.bf16.mxu0 0
      %6147 = vmatpush1.bf16.msra.mxu0 0
      %6148 = vmatprep.subr.bf16.mxu0 0
      %6149 = vmatpush1.bf16.msra.mxu0 0
      %6150 = vmatprep.subr.bf16.mxu0 0
      %6151 = vmatpush1.bf16.msra.mxu0 0
      %6152 = vmatprep.subr.bf16.mxu0 0
      %6153 = vmatpush1.bf16.msra.mxu0 0
      %6154 = vmatprep.subr.bf16.mxu0 0
      %6155 = vmatpush1.bf16.msra.mxu0 0
      %6156 = vmatprep.mubr.bf16.mxu0 0
      %6157 = vmatmul.mubr.bf16.gmra.mrb[0].mxu0 %v5547
      %v6158 = vpop.f32.mrb[0].mxu0
      %v6159 = vadd.f32 0.0, %v6158
      %v6160 = vpop.f32.mrb[0].mxu0
      %v6161 = vpop.f32.mrb[0].mxu0
      %v6162 = vadd.f32 0.0, %v6161
      %v6163 = vpop.f32.mrb[0].mxu0
      %6164 = vdwg.mxu0
      %v6166 = vsel %vm4070, %v5539, 0
      %6168 = vmatprep.subr.bf16.mxu0 0
      %6169 = vmatpush1.bf16.msra.mxu0 %v6166
      %6170 = vmatprep.subr.bf16.mxu0 0
      %6171 = vmatpush1.bf16.msra.mxu0 0
      %6172 = vmatprep.subr.bf16.mxu0 0
      %6173 = vmatpush1.bf16.msra.mxu0 0
      %6174 = vmatprep.subr.bf16.mxu0 0
      %6175 = vmatpush1.bf16.msra.mxu0 0
      %6176 = vmatprep.subr.bf16.mxu0 0
      %6177 = vmatpush1.bf16.msra.mxu0 0
      %6178 = vmatprep.subr.bf16.mxu0 0
      %6179 = vmatpush1.bf16.msra.mxu0 0
      %6180 = vmatprep.subr.bf16.mxu0 0
      %6181 = vmatpush1.bf16.msra.mxu0 0
      %6182 = vmatprep.subr.bf16.mxu0 0
      %6183 = vmatpush1.bf16.msra.mxu0 0
      %6184 = vmatprep.subr.bf16.mxu0 0
      %6185 = vmatpush1.bf16.msra.mxu0 0
      %6186 = vmatprep.subr.bf16.mxu0 0
      %6187 = vmatpush1.bf16.msra.mxu0 0
      %6188 = vmatprep.subr.bf16.mxu0 0
      %6189 = vmatpush1.bf16.msra.mxu0 0
      %6190 = vmatprep.subr.bf16.mxu0 0
      %6191 = vmatpush1.bf16.msra.mxu0 0
      %6192 = vmatprep.subr.bf16.mxu0 0
      %6193 = vmatpush1.bf16.msra.mxu0 0
      %6194 = vmatprep.subr.bf16.mxu0 0
      %6195 = vmatpush1.bf16.msra.mxu0 0
      %6196 = vmatprep.subr.bf16.mxu0 0
      %6197 = vmatpush1.bf16.msra.mxu0 0
      %6198 = vmatprep.subr.bf16.mxu0 0
      %6199 = vmatpush1.bf16.msra.mxu0 0
      %6200 = vmatprep.mubr.bf16.mxu0 0
      %6201 = vmatmul.mubr.bf16.gmra.mrb[0].mxu0 %v5547
      %v6202 = vpop.f32.mrb[0].mxu0
      %v6203 = vadd.f32 0.0, %v6202
      %v6204 = vpop.f32.mrb[0].mxu0
      %v6205 = vpop.f32.mrb[0].mxu0
      %v6206 = vadd.f32 0.0, %v6205
      %v6207 = vpop.f32.mrb[0].mxu0
      %6208 = vdwg.mxu0
      %v6210 = vsel %vm4070, %v5540, 0
      %6212 = vmatprep.subr.bf16.mxu0 0
      %6213 = vmatpush1.bf16.msra.mxu0 %v6210
      %6214 = vmatprep.subr.bf16.mxu0 0
      %6215 = vmatpush1.bf16.msra.mxu0 0
      %6216 = vmatprep.subr.bf16.mxu0 0
      %6217 = vmatpush1.bf16.msra.mxu0 0
      %6218 = vmatprep.subr.bf16.mxu0 0
      %6219 = vmatpush1.bf16.msra.mxu0 0
      %6220 = vmatprep.subr.bf16.mxu0 0
      %6221 = vmatpush1.bf16.msra.mxu0 0
      %6222 = vmatprep.subr.bf16.mxu0 0
      %6223 = vmatpush1.bf16.msra.mxu0 0
      %6224 = vmatprep.subr.bf16.mxu0 0
      %6225 = vmatpush1.bf16.msra.mxu0 0
      %6226 = vmatprep.subr.bf16.mxu0 0
      %6227 = vmatpush1.bf16.msra.mxu0 0
      %6228 = vmatprep.subr.bf16.mxu0 0
      %6229 = vmatpush1.bf16.msra.mxu0 0
      %6230 = vmatprep.subr.bf16.mxu0 0
      %6231 = vmatpush1.bf16.msra.mxu0 0
      %6232 = vmatprep.subr.bf16.mxu0 0
      %6233 = vmatpush1.bf16.msra.mxu0 0
      %6234 = vmatprep.subr.bf16.mxu0 0
      %6235 = vmatpush1.bf16.msra.mxu0 0
      %6236 = vmatprep.subr.bf16.mxu0 0
      %6237 = vmatpush1.bf16.msra.mxu0 0
      %6238 = vmatprep.subr.bf16.mxu0 0
      %6239 = vmatpush1.bf16.msra.mxu0 0
      %6240 = vmatprep.subr.bf16.mxu0 0
      %6241 = vmatpush1.bf16.msra.mxu0 0
      %6242 = vmatprep.subr.bf16.mxu0 0
      %6243 = vmatpush1.bf16.msra.mxu0 0
      %6244 = vmatprep.mubr.bf16.mxu0 0
      %6245 = vmatmul.mubr.bf16.gmra.mrb[0].mxu0 %v5547
      %v6246 = vpop.f32.mrb[0].mxu0
      %v6247 = vadd.f32 0.0, %v6246
      %v6248 = vpop.f32.mrb[0].mxu0
      %v6249 = vpop.f32.mrb[0].mxu0
      %v6250 = vadd.f32 0.0, %v6249
      %v6251 = vpop.f32.mrb[0].mxu0
      %6252 = vdwg.mxu0
      %v6253 = vld [vmem:[%s380] sm:$0xff]
      %v6254 = vld [vmem:[%s380 + $0x8] sm:$0xff]
      %v6255 = vld [vmem:[%s380 + $0x10] sm:$0xff]
      %v6256 = vld [vmem:[%s380 + $0x18] sm:$0xff]
      %v6257 = vld [vmem:[%s380 + $0x20] sm:$0xff]
      %v6258 = vld [vmem:[%s380 + $0x28] sm:$0xff]
      %v6259 = vld [vmem:[%s380 + $0x30] sm:$0xff]
      %v6260 = vld [vmem:[%s380 + $0x38] sm:$0xff]
      %v6261 = vld [vmem:[%s380 + $0x40] sm:$0xff]
      %v6262 = vld [vmem:[%s380 + $0x48] sm:$0xff]
      %v6263 = vld [vmem:[%s380 + $0x50] sm:$0xff]
      %v6264 = vld [vmem:[%s380 + $0x58] sm:$0xff]
      %v6265 = vld [vmem:[%s380 + $0x60] sm:$0xff]
      %v6266 = vld [vmem:[%s380 + $0x68] sm:$0xff]
      %v6267 = vld [vmem:[%s380 + $0x70] sm:$0xff]
      %v6268 = vld [vmem:[%s380 + $0x78] sm:$0xff]
      %v6269 = vld [vmem:[%s380 + $0x80] sm:$0xff]
      %v6270 = vld [vmem:[%s380 + $0x88] sm:$0xff]
      %v6271 = vld [vmem:[%s380 + $0x90] sm:$0xff]
      %v6272 = vld [vmem:[%s380 + $0x98] sm:$0xff]
      %v6273 = vld [vmem:[%s380 + $0xa0] sm:$0xff]
      %v6274 = vld [vmem:[%s380 + $0xa8] sm:$0xff]
      %v6275 = vld [vmem:[%s380 + $0xb0] sm:$0xff]
      %v6276 = vld [vmem:[%s380 + $0xb8] sm:$0xff]
      %v6277 = vld [vmem:[%s380 + $0xc0] sm:$0xff]
      %v6278 = vld [vmem:[%s380 + $0xc8] sm:$0xff]
      %v6279 = vld [vmem:[%s380 + $0xd0] sm:$0xff]
      %v6280 = vld [vmem:[%s380 + $0xd8] sm:$0xff]
      %v6281 = vld [vmem:[%s380 + $0xe0] sm:$0xff]
      %v6282 = vld [vmem:[%s380 + $0xe8] sm:$0xff]
      %v6283 = vld [vmem:[%s380 + $0xf0] sm:$0xff]
      %v6284 = vld [vmem:[%s380 + $0xf8] sm:$0xff]
      %v6285 = vadd.f32 %v6253, %v5587
      %v6286 = vadd.f32 %v6254, %v5590
      %v6287 = vadd.f32 %v6255, %v5631
      %v6288 = vadd.f32 %v6256, %v5634
      %v6289 = vadd.f32 %v6257, %v5675
      %v6290 = vadd.f32 %v6258, %v5678
      %v6291 = vadd.f32 %v6259, %v5719
      %v6292 = vadd.f32 %v6260, %v5722
      %v6293 = vadd.f32 %v6261, %v5763
      %v6294 = vadd.f32 %v6262, %v5766
      %v6295 = vadd.f32 %v6263, %v5807
      %v6296 = vadd.f32 %v6264, %v5810
      %v6297 = vadd.f32 %v6265, %v5851
      %v6298 = vadd.f32 %v6266, %v5854
      %v6299 = vadd.f32 %v6267, %v5895
      %v6300 = vadd.f32 %v6268, %v5898
      %v6301 = vadd.f32 %v6269, %v5939
      %v6302 = vadd.f32 %v6270, %v5942
      %v6303 = vadd.f32 %v6271, %v5983
      %v6304 = vadd.f32 %v6272, %v5986
      %v6305 = vadd.f32 %v6273, %v6027
      %v6306 = vadd.f32 %v6274, %v6030
      %v6307 = vadd.f32 %v6275, %v6071
      %v6308 = vadd.f32 %v6276, %v6074
      %v6309 = vadd.f32 %v6277, %v6115
      %v6310 = vadd.f32 %v6278, %v6118
      %v6311 = vadd.f32 %v6279, %v6159
      %v6312 = vadd.f32 %v6280, %v6162
      %v6313 = vadd.f32 %v6281, %v6203
      %v6314 = vadd.f32 %v6282, %v6206
      %v6315 = vadd.f32 %v6283, %v6247
      %v6316 = vadd.f32 %v6284, %v6250
      %6317 = vst.msk [vmem:[%s380] sm:$0xff] %vm389, %v6285
      %6318 = vst.msk [vmem:[%s380 + $0x8] sm:$0xff] %vm389, %v6286
      %6319 = vst.msk [vmem:[%s380 + $0x10] sm:$0xff] %vm389, %v6287
      %6320 = vst.msk [vmem:[%s380 + $0x18] sm:$0xff] %vm389, %v6288
      %6321 = vst.msk [vmem:[%s380 + $0x20] sm:$0xff] %vm389, %v6289
      %6322 = vst.msk [vmem:[%s380 + $0x28] sm:$0xff] %vm389, %v6290
      %6323 = vst.msk [vmem:[%s380 + $0x30] sm:$0xff] %vm389, %v6291
      %6324 = vst.msk [vmem:[%s380 + $0x38] sm:$0xff] %vm389, %v6292
      %6325 = vst.msk [vmem:[%s380 + $0x40] sm:$0xff] %vm389, %v6293
      %6326 = vst.msk [vmem:[%s380 + $0x48] sm:$0xff] %vm389, %v6294
      %6327 = vst.msk [vmem:[%s380 + $0x50] sm:$0xff] %vm389, %v6295
      %6328 = vst.msk [vmem:[%s380 + $0x58] sm:$0xff] %vm389, %v6296
      %6329 = vst.msk [vmem:[%s380 + $0x60] sm:$0xff] %vm389, %v6297
      %6330 = vst.msk [vmem:[%s380 + $0x68] sm:$0xff] %vm389, %v6298
      %6331 = vst.msk [vmem:[%s380 + $0x70] sm:$0xff] %vm389, %v6299
      %6332 = vst.msk [vmem:[%s380 + $0x78] sm:$0xff] %vm389, %v6300
      %6333 = vst.msk [vmem:[%s380 + $0x80] sm:$0xff] %vm389, %v6301
      %6334 = vst.msk [vmem:[%s380 + $0x88] sm:$0xff] %vm389, %v6302
      %6335 = vst.msk [vmem:[%s380 + $0x90] sm:$0xff] %vm389, %v6303
      %6336 = vst.msk [vmem:[%s380 + $0x98] sm:$0xff] %vm389, %v6304
      %6337 = vst.msk [vmem:[%s380 + $0xa0] sm:$0xff] %vm389, %v6305
      %6338 = vst.msk [vmem:[%s380 + $0xa8] sm:$0xff] %vm389, %v6306
      %6339 = vst.msk [vmem:[%s380 + $0xb0] sm:$0xff] %vm389, %v6307
      %6340 = vst.msk [vmem:[%s380 + $0xb8] sm:$0xff] %vm389, %v6308
      %6341 = vst.msk [vmem:[%s380 + $0xc0] sm:$0xff] %vm389, %v6309
      %6342 = vst.msk [vmem:[%s380 + $0xc8] sm:$0xff] %vm389, %v6310
      %6343 = vst.msk [vmem:[%s380 + $0xd0] sm:$0xff] %vm389, %v6311
      %6344 = vst.msk [vmem:[%s380 + $0xd8] sm:$0xff] %vm389, %v6312
      %6345 = vst.msk [vmem:[%s380 + $0xe0] sm:$0xff] %vm389, %v6313
      %6346 = vst.msk [vmem:[%s380 + $0xe8] sm:$0xff] %vm389, %v6314
      %6347 = vst.msk [vmem:[%s380 + $0xf0] sm:$0xff] %vm389, %v6315
      %6348 = vst.msk [vmem:[%s380 + $0xf8] sm:$0xff] %vm389, %v6316
      %p6349 = scmp.lt.s32.totalorder %s20, 1
      %s6350 = scalar_select %p6349, %s20, 1
      %s6351 = smul.addr %s6350, 32
      %s6352 = smul.addr %s6351, 8
      %s6353 = scalar_lea.vmem %s9, %s6352
      // Predicated region
      $region57: #{tpu_custom_call.1} parent=55 // pred_check
        %p6354 = pneg %p247
      $region58: #{tpu_custom_call.1} parent=55 // pred_check_branch
        %6356 = sbr.rel (%p6354) target = $region60
      $region59: #{tpu_custom_call.1} parent=55 // pred_region
        _
      $region60: #{tpu_custom_call.1} parent=55 // pred_fallthru
        _
    $region56: #{tpu_custom_call.1} parent=5 // pred_fallthru
      _
    %p6357 = scmp.le.s32.totalorder 2, %s15
    // Predicated region
    $region61: #{tpu_custom_call.1} parent=5 // pred_check
      %p6358 = pneg %p6357
    $region62: #{tpu_custom_call.1} parent=5 // pred_check_branch
      %6360 = sbr.rel (%p6358) target = $region64
    $region63: #{tpu_custom_call.1} parent=5 // pred_region
      %s6361 = ssub.s32 %s15, 2
      // Predicated region
      $region65: #{tpu_custom_call.1} parent=63 // pred_check
        %p6362 = pneg %p253
      $region66: #{tpu_custom_call.1} parent=63 // pred_check_branch
        %6364 = sbr.rel (%p6362) target = $region68
      $region67: #{tpu_custom_call.1} parent=63 // pred_region
        %p6365 = scmp.lt.s32.totalorder %s21, 1
        %s6366 = scalar_select %p6365, %s21, 1
        %s6367 = smul.addr %s6366, 32
        %s6368 = smul.addr %s6367, 8
        %s6369 = scalar_lea.vmem %s9, %s6368
      $region68: #{tpu_custom_call.1} parent=63 // pred_fallthru
        _
    $region64: #{tpu_custom_call.1} parent=5 // pred_fallthru
      _
  $region6: #{tpu_custom_call.1} parent=0 // loop_footer
    %s19 = sadd.s32 1, %s15
  $region7: #{tpu_custom_call.1} parent=0 // loop_footer_branch
    %14 = sbr.rel target = $region3
  $region8: #{tpu_custom_call.1} parent=0 // loop_exit
    _

</llo_original>
